<compile_context>
chip_gen: v7x
topology: tpu7x:2x2x1
jax: 0.10.0
libtpu: 0.0.40
codegen_flags: <defaults>
</compile_context>

<pallas_src>
import functools

import jax
import jax.numpy as jnp
from jax import lax
from jax.experimental import pallas as pl
from jax.experimental.pallas import tpu as pltpu

EPS = 1e-5  # PyTorch GroupNorm default eps


def _dale_rnn_kernel(x_ref, exc_ref, inh_ref, w_ref, b_ref, mask_ref,
                     lng_ref, lnb_ref, exc_out_ref, inh_out_ref, rhs_ref,
                     *, width):
    """One batch sample per grid step.  Compute layout: (channels, H*W)."""
    C = exc_ref.shape[1]
    HW = exc_ref.shape[2]
    Cin = x_ref.shape[1]
    C2 = 2 * C
    K_lat = 49 * C2

    x = x_ref[0]                                    # (Cin, HW)
    exc = exc_ref[0]                                # (C, HW)
    inh = inh_ref[0]                                # (C, HW)
    cat = jnp.concatenate([exc, inh], axis=0)       # (2C, HW) sublane concat

    # ---- stage the fused-K RHS: [tap_0 .. tap_48 ; cat ; x] in bf16 --------
    # Tap t holds cat shifted by the (dy, dx) offset of the 7x7 grid (XLU
    # rotate), with out-of-image neighbours zeroed by the precomputed lane
    # mask, so one matmul row-block computes both the 7x7 (exc) and the
    # zero-padded 5x5 (inh) lateral convolutions.
    for ky in range(7):
        for kx in range(7):
            t = ky * 7 + kx
            off = (ky - 3) * width + (kx - 3)            # static Python int
            shift = (-off) % HW                          # roll(x,s)[q]=x[q-s]
            rolled = cat if shift == 0 else pltpu.roll(cat, shift, 1)
            masked = rolled * mask_ref[t:t + 1, :]       # (2C,HW) * (1,HW)
            rhs_ref[t * C2:(t + 1) * C2, :] = masked.astype(jnp.bfloat16)
    rhs_ref[K_lat:K_lat + C2, :] = cat.astype(jnp.bfloat16)
    rhs_ref[K_lat + C2:K_lat + C2 + Cin, :] = x.astype(jnp.bfloat16)

    # ---- single fused MXU matmul: (8C, K) @ (K, HW) + fused bias -----------
    # rows: [g_exc_x | g_inh_x | w_exc_x | w_inh_x | g_exc_e | g_inh_i |
    #        lat_exc(7x7) | lat_inh(5x5)]
    out = jnp.dot(w_ref[...], rhs_ref[...],
                  preferred_element_type=jnp.float32) + b_ref[...]

    inv_n = 1.0 / (C * HW)

    def stats(stacked, nblk):
        # GroupNorm(num_groups=1) per-C-block mean/var via one batched lane
        # reduction over [v ; v*v]; tiny sublane sums finish per group.
        both = jnp.concatenate([stacked, stacked * stacked], axis=0)
        rs = jnp.sum(both, axis=1, keepdims=True)            # (2*nblk*C, 1)
        mean, var = [], []
        for b in range(nblk):
            m = jnp.sum(rs[b * C:(b + 1) * C], axis=0, keepdims=True) * inv_n
            e2 = jnp.sum(rs[(nblk + b) * C:(nblk + b + 1) * C],
                         axis=0, keepdims=True) * inv_n
            mean.append(m)
            var.append(jnp.maximum(e2 - m * m, 0.0))         # clamp >= 0
        return mean, var

    def norm(v, m, var, g):
        return (v - m) * lax.rsqrt(var + EPS) * lng_ref[g] + lnb_ref[g]

    # gate GroupNorms (ln_e_x, ln_i_x, ln_e_e, ln_i_i) share one reduction
    gate_rows = jnp.concatenate([out[0:C2], out[4 * C:6 * C]], axis=0)
    gm, gv = stats(gate_rows, 4)   # blocks: 0=g_exc_x 1=g_inh_x 2=g_exc_e 3=g_inh_i
    g_exc = jax.nn.sigmoid(norm(out[0:C], gm[0], gv[0], 0) +
                           norm(out[4 * C:5 * C], gm[2], gv[2], 1))
    g_inh = jax.nn.sigmoid(norm(out[C:C2], gm[1], gv[1], 2) +
                           norm(out[5 * C:6 * C], gm[3], gv[3], 3))

    e_hat = jnp.maximum(out[2 * C:3 * C] + out[6 * C:7 * C], 0.0)
    i_hat = jnp.maximum(out[3 * C:4 * C] + out[7 * C:8 * C], 0.0)

    e_new = g_exc * e_hat + (1.0 - g_exc) * exc
    i_new = g_inh * i_hat + (1.0 - g_inh) * inh

    # output GroupNorms (ln_out_e, ln_out_i) share one reduction
    om, ov = stats(jnp.concatenate([e_new, i_new], axis=0), 2)
    exc_out_ref[0] = jnp.maximum(norm(e_new, om[0], ov[0], 4), 0.0)
    inh_out_ref[0] = jnp.maximum(norm(i_new, om[1], ov[1], 5), 0.0)


def _fused_weights(params, cin, c):
    """Build the single (8C, K) bf16 LHS and (8C, 1) f32 fused bias.

    K columns: [49 lateral taps (2C each) | cat (2C) | x (Cin)]
    M rows:    [g_exc_x | g_inh_x | w_exc_x | w_inh_x | g_exc_e | g_inh_i |
                lat_exc (7x7) | lat_inh (5x5 zero-padded into the 7x7 grid)]
    """
    C = c
    # input 1x1s: out-channels on rows -> (4C, Cin)
    wx_f = jnp.transpose(params['wx'], (0, 2, 1)).reshape(4 * C, cin)
    # hidden 1x1s: block-diagonal (2C, 2C) acting on cat = [exc; inh]
    wh = params['wh']
    zc = jnp.zeros((C, C), jnp.float32)
    wh_bd = jnp.concatenate(
        [jnp.concatenate([wh[0].T, zc], axis=1),
         jnp.concatenate([zc, wh[1].T], axis=1)], axis=0)
    # lateral convs: per tap a (2C_out, 2C_in) block (rows 0:C = 7x7 exc tap,
    # rows C:2C = zero-padded 5x5 inh tap), flattened lane-dense to (2C, 49*2C)
    w7t = jnp.transpose(params['w7'], (0, 1, 3, 2))                   # (7,7,C,2C)
    w5t = jnp.pad(jnp.transpose(params['w5'], (0, 1, 3, 2)),
                  ((1, 1), (1, 1), (0, 0), (0, 0)))                   # (7,7,C,2C)
    w_lat = jnp.concatenate([w7t, w5t], axis=2).reshape(49, 2 * C, 2 * C)
    w_lat_flat = jnp.transpose(w_lat, (1, 0, 2)).reshape(2 * C, 49 * 2 * C)

    K_lat = 49 * 2 * C
    K_total = K_lat + 2 * C + cin
    w_big = jnp.zeros((8 * C, K_total), jnp.float32)
    w_big = w_big.at[6 * C:8 * C, 0:K_lat].set(w_lat_flat)
    w_big = w_big.at[4 * C:6 * C, K_lat:K_lat + 2 * C].set(wh_bd)
    w_big = w_big.at[0:4 * C, K_lat + 2 * C:].set(wx_f)

    b_big = jnp.concatenate(
        [params['b1'][:4].reshape(4 * C, 1),
         params['b1'][4:6].reshape(2 * C, 1),
         jnp.concatenate([params['b7'][0], params['b5'][0]]).reshape(2 * C, 1)],
        axis=0)
    return w_big.astype(jnp.bfloat16), b_big


def dale_rnn_cell(params, x_nchw, exc_nchw, inh_nchw):
    """DaleRNNcell.forward. Inputs/outputs are NCHW like the PyTorch module."""
    B, Cin, H, W = x_nchw.shape
    C = params['wx'].shape[-1]
    HW = H * W
    K_total = 49 * 2 * C + 2 * C + Cin

    # channels-first flat layout: NCHW -> (B, C, HW) is a pure reshape.
    x = x_nchw.reshape(B, Cin, HW)
    exc = exc_nchw.reshape(B, C, HW)
    inh = inh_nchw.reshape(B, C, HW)

    w_big, b_big = _fused_weights(params, Cin, C)

    ln_g = jnp.transpose(params['ln_g'], (0, 2, 1))                   # (6, C, 1)
    ln_b = jnp.transpose(params['ln_b'], (0, 2, 1))

    # per-tap boundary masks for 'same' padding, lane-dense (49, HW)
    ii = jnp.arange(H).reshape(H, 1)
    jj = jnp.arange(W).reshape(1, W)
    masks = []
    for ky in range(7):
        for kx in range(7):
            dy, dx = ky - 3, kx - 3
            m = ((ii + dy >= 0) & (ii + dy < H) & (jj + dx >= 0) & (jj + dx < W))
            masks.append(m.reshape(HW))
    lat_mask = jnp.stack(masks).astype(jnp.float32)                   # (49, HW)

    data_spec = lambda ch: pl.BlockSpec((1, ch, HW), lambda b: (b, 0, 0))
    full_spec = lambda shape: pl.BlockSpec(shape, lambda b, _n=len(shape): (0,) * _n)

    operands = (x, exc, inh, w_big, b_big, lat_mask, ln_g, ln_b)
    flops = 2 * B * (8 * C) * K_total * HW
    transcendentals = B * (2 * C * HW + 12)
    bytes_accessed = (sum(int(a.size) * a.dtype.itemsize for a in operands)
                      + 2 * B * C * HW * 4)

    out_shape = (jax.ShapeDtypeStruct((B, C, HW), jnp.float32),
                 jax.ShapeDtypeStruct((B, C, HW), jnp.float32))

    exc_f, inh_f = pl.pallas_call(
        functools.partial(_dale_rnn_kernel, width=W),
        out_shape=out_shape,
        grid_spec=pltpu.PrefetchScalarGridSpec(
            num_scalar_prefetch=0,
            grid=(B,),
            in_specs=[
                data_spec(Cin), data_spec(C), data_spec(C),
                full_spec(w_big.shape), full_spec(b_big.shape),
                full_spec(lat_mask.shape),
                full_spec(ln_g.shape), full_spec(ln_b.shape),
            ],
            out_specs=[data_spec(C), data_spec(C)],
            # fused-K RHS staging (bf16): ~0.8 MB at HW=256 — well inside VMEM
            # on all generations; raise vmem_limit_bytes only if HW grows.
            scratch_shapes=[pltpu.VMEM((K_total, HW), jnp.bfloat16)],
        ),
        compiler_params=pltpu.CompilerParams(dimension_semantics=("parallel",)),
        cost_estimate=pl.CostEstimate(flops=flops,
                                      transcendentals=transcendentals,
                                      bytes_accessed=bytes_accessed),
    )(*operands)

    return exc_f.reshape(B, C, H, W), inh_f.reshape(B, C, H, W)


def init_params(key, cin, c):
    """Deterministic synthetic parameters (module shapes, no checkpoint)."""
    ks = jax.random.split(key, 9)
    n = lambda k, s, scale=0.1: scale * jax.random.normal(k, s, jnp.float32)
    # Note: self.ln_out is defined in __init__ but never used in forward -> omitted.
    return {
        # 1x1 weights on the input, order: [g_exc_x, g_inh_x, w_exc_x, w_inh_x]
        'wx': n(ks[0], (4, cin, c)),
        # 1x1 weights on hidden, order: [g_exc_e, g_inh_i]
        'wh': n(ks[1], (2, c, c)),
        # conv biases, order: [g_exc_x, g_inh_x, w_exc_x, w_inh_x, g_exc_e, g_inh_i]
        'b1': n(ks[2], (6, 1, c)),
        # GroupNorm affine, order: [ln_e_x, ln_e_e, ln_i_x, ln_i_i, ln_out_e, ln_out_i]
        'ln_g': 1.0 + n(ks[3], (6, 1, c)),
        'ln_b': n(ks[4], (6, 1, c)),
        # lateral convs, stored as (ky, kx, in=2C, out=C)
        'w7': n(ks[5], (7, 7, 2 * c, c)),
        'b7': n(ks[6], (1, c)),
        'w5': n(ks[7], (5, 5, 2 * c, c)),
        'b5': n(ks[8], (1, c)),
    }


def reference(params, x, exc, inh):
    """Pure-JAX NCHW f32 reference matching PyTorch semantics."""
    def conv1x1(v, w, b):  # w: (cin, cout)
        return jnp.einsum('bchw,cd->bdhw', v, w) + b.reshape(1, -1, 1, 1)

    def convKxK(v, w, b):  # w: (K, K, cin, cout)
        wk = jnp.transpose(w, (3, 2, 0, 1))  # OIHW
        K = w.shape[0]
        p = (K - 1) // 2
        out = lax.conv_general_dilated(v, wk, (1, 1), [(p, p), (p, p)],
                                       dimension_numbers=('NCHW', 'OIHW', 'NCHW'))
        return out + b.reshape(1, -1, 1, 1)

    def gn(v, i):
        g = params['ln_g'][i, 0].reshape(1, -1, 1, 1)
        bb = params['ln_b'][i, 0].reshape(1, -1, 1, 1)
        m = jnp.mean(v, axis=(1, 2, 3), keepdims=True)
        var = jnp.mean((v - m) ** 2, axis=(1, 2, 3), keepdims=True)
        return (v - m) / jnp.sqrt(var + EPS) * g + bb

    wx, wh, b1 = params['wx'], params['wh'], params['b1']
    g_exc = jax.nn.sigmoid(gn(conv1x1(x, wx[0], b1[0, 0]), 0) +
                           gn(conv1x1(exc, wh[0], b1[4, 0]), 1))
    g_inh = jax.nn.sigmoid(gn(conv1x1(x, wx[1], b1[1, 0]), 2) +
                           gn(conv1x1(inh, wh[1], b1[5, 0]), 3))
    cat = jnp.concatenate([exc, inh], axis=1)
    e_hat = jax.nn.relu(conv1x1(x, wx[2], b1[2, 0]) + convKxK(cat, params['w7'], params['b7'][0]))
    i_hat = jax.nn.relu(conv1x1(x, wx[3], b1[3, 0]) + convKxK(cat, params['w5'], params['b5'][0]))
    exc_n = jax.nn.relu(gn(g_exc * e_hat + (1 - g_exc) * exc, 4))
    inh_n = jax.nn.relu(gn(g_inh * i_hat + (1 - g_inh) * inh, 5))
    return exc_n, inh_n


if __name__ == "__main__":
    B, Cin, H, W = 2, 8, 16, 16
    C = 16  # hidden_dim

    key = jax.random.PRNGKey(0)
    k_p, k_x, k_e, k_i = jax.random.split(key, 4)
    params = init_params(k_p, Cin, C)
    x = jax.random.normal(k_x, (B, Cin, H, W), jnp.float32)
    exc0 = jax.random.normal(k_e, (B, C, H, W), jnp.float32)
    inh0 = jax.random.normal(k_i, (B, C, H, W), jnp.float32)

    fn = jax.jit(functools.partial(dale_rnn_cell, params))
    exc1, inh1 = fn(x, exc0, inh0)
    jax.block_until_ready((exc1, inh1))

    exc_r, inh_r = reference(params, x, exc0, inh0)
    # Kernel runs the fused conv matmul with bf16 MXU inputs (K ~ 1600-term
    # accumulation) against an f32 reference -> tolerance sized for bf16.
    assert jnp.allclose(exc1, exc_r, atol=2e-2, rtol=2e-2)
    assert jnp.allclose(inh1, inh_r, atol=2e-2, rtol=2e-2)

    print("KERNEL_OK")
</pallas_src>

<mosaic_0001>
module attributes {stable_mosaic.version = 11 : i64} {
  func.func @_dale_rnn_kernel(%arg0: i32, %arg1: memref<1x8x256xf32, #tpu.memory_space<vmem>>, %arg2: memref<1x16x256xf32, #tpu.memory_space<vmem>>, %arg3: memref<1x16x256xf32, #tpu.memory_space<vmem>>, %arg4: memref<128x1608xbf16, #tpu.memory_space<vmem>>, %arg5: memref<128x1xf32, #tpu.memory_space<vmem>>, %arg6: memref<49x256xf32, #tpu.memory_space<vmem>>, %arg7: memref<6x16x1xf32, #tpu.memory_space<vmem>>, %arg8: memref<6x16x1xf32, #tpu.memory_space<vmem>>, %arg9: memref<1x16x256xf32, #tpu.memory_space<vmem>>, %arg10: memref<1x16x256xf32, #tpu.memory_space<vmem>>, %arg11: memref<1608x256xbf16, #tpu.memory_space<vmem>>) attributes {dimension_semantics = [#tpu.dimension_semantics<parallel>], iteration_bounds = array<i64: 2>, scalar_prefetch = 0 : i64, scratch_operands = 1 : i64, tpu.core_type = #tpu.core_type<tc>, window_params = [{transform_indices = @transform_0, window_bounds = array<i64: 1, 8, 256>}, {transform_indices = @transform_1, window_bounds = array<i64: 1, 16, 256>}, {transform_indices = @transform_2, window_bounds = array<i64: 1, 16, 256>}, {pipeline_mode = #tpu.pipeline_mode<synchronous>, transform_indices = @transform_3, window_bounds = array<i64: 128, 1608>}, {pipeline_mode = #tpu.pipeline_mode<synchronous>, transform_indices = @transform_4, window_bounds = array<i64: 128, 1>}, {pipeline_mode = #tpu.pipeline_mode<synchronous>, transform_indices = @transform_5, window_bounds = array<i64: 49, 256>}, {pipeline_mode = #tpu.pipeline_mode<synchronous>, transform_indices = @transform_6, window_bounds = array<i64: 6, 16, 1>}, {pipeline_mode = #tpu.pipeline_mode<synchronous>, transform_indices = @transform_7, window_bounds = array<i64: 6, 16, 1>}, {transform_indices = @transform_8, window_bounds = array<i64: 1, 16, 256>}, {transform_indices = @transform_9, window_bounds = array<i64: 1, 16, 256>}]} {
    %c0 = arith.constant 0 : index
    %c0_0 = arith.constant 0 : index
    %c0_1 = arith.constant 0 : index
    %0 = vector.load %arg1[%c0, %c0_0, %c0_1] : memref<1x8x256xf32, #tpu.memory_space<vmem>>, vector<1x8x256xf32>
    %1 = vector.shape_cast %0 : vector<1x8x256xf32> to vector<8x256xf32>
    %c0_2 = arith.constant 0 : index
    %c0_3 = arith.constant 0 : index
    %c0_4 = arith.constant 0 : index
    %2 = vector.load %arg2[%c0_2, %c0_3, %c0_4] : memref<1x16x256xf32, #tpu.memory_space<vmem>>, vector<1x16x256xf32>
    %3 = vector.shape_cast %2 : vector<1x16x256xf32> to vector<16x256xf32>
    %c0_5 = arith.constant 0 : index
    %c0_6 = arith.constant 0 : index
    %c0_7 = arith.constant 0 : index
    %4 = vector.load %arg3[%c0_5, %c0_6, %c0_7] : memref<1x16x256xf32, #tpu.memory_space<vmem>>, vector<1x16x256xf32>
    %5 = vector.shape_cast %4 : vector<1x16x256xf32> to vector<16x256xf32>
    %6 = tpu.concatenate %3, %5 in 0 : vector<16x256xf32>, vector<16x256xf32> -> vector<32x256xf32>
    %c51_i32 = arith.constant 51 : i32
    %7 = tpu.dynamic_rotate %6 by %c51_i32 dim 1 : vector<32x256xf32>, i32 -> vector<32x256xf32>
    %c0_8 = arith.constant 0 : index
    %c0_9 = arith.constant 0 : index
    %8 = vector.load %arg6[%c0_8, %c0_9] : memref<49x256xf32, #tpu.memory_space<vmem>>, vector<1x256xf32>
    %9 = vector.broadcast %8 : vector<1x256xf32> to vector<32x256xf32>
    %10 = arith.mulf %7, %9 : vector<32x256xf32>
    %11 = arith.truncf %10 : vector<32x256xf32> to vector<32x256xbf16>
    %c0_10 = arith.constant 0 : index
    %c0_11 = arith.constant 0 : index
    %12 = vector.load %arg11[%c0_10, %c0_11] : memref<1608x256xbf16, #tpu.memory_space<vmem>>, vector<32x256xbf16>
    tpu.vector_store %arg11[%c0_10, %c0_11], %11 {strides = array<i32>} : memref<1608x256xbf16, #tpu.memory_space<vmem>>, vector<32x256xbf16>,
    %c50_i32 = arith.constant 50 : i32
    %13 = tpu.dynamic_rotate %6 by %c50_i32 dim 1 : vector<32x256xf32>, i32 -> vector<32x256xf32>
    %c1 = arith.constant 1 : index
    %c0_12 = arith.constant 0 : index
    %14 = vector.load %arg6[%c1, %c0_12] : memref<49x256xf32, #tpu.memory_space<vmem>>, vector<1x256xf32>
    %15 = vector.broadcast %14 : vector<1x256xf32> to vector<32x256xf32>
    %16 = arith.mulf %13, %15 : vector<32x256xf32>
    %17 = arith.truncf %16 : vector<32x256xf32> to vector<32x256xbf16>
    %c32 = arith.constant 32 : index
    %c0_13 = arith.constant 0 : index
    %18 = vector.load %arg11[%c32, %c0_13] : memref<1608x256xbf16, #tpu.memory_space<vmem>>, vector<32x256xbf16>
    tpu.vector_store %arg11[%c32, %c0_13], %17 {strides = array<i32>} : memref<1608x256xbf16, #tpu.memory_space<vmem>>, vector<32x256xbf16>,
    %c49_i32 = arith.constant 49 : i32
    %19 = tpu.dynamic_rotate %6 by %c49_i32 dim 1 : vector<32x256xf32>, i32 -> vector<32x256xf32>
    %c2 = arith.constant 2 : index
    %c0_14 = arith.constant 0 : index
    %20 = vector.load %arg6[%c2, %c0_14] : memref<49x256xf32, #tpu.memory_space<vmem>>, vector<1x256xf32>
    %21 = vector.broadcast %20 : vector<1x256xf32> to vector<32x256xf32>
    %22 = arith.mulf %19, %21 : vector<32x256xf32>
    %23 = arith.truncf %22 : vector<32x256xf32> to vector<32x256xbf16>
    %c64 = arith.constant 64 : index
    %c0_15 = arith.constant 0 : index
    %24 = vector.load %arg11[%c64, %c0_15] : memref<1608x256xbf16, #tpu.memory_space<vmem>>, vector<32x256xbf16>
    tpu.vector_store %arg11[%c64, %c0_15], %23 {strides = array<i32>} : memref<1608x256xbf16, #tpu.memory_space<vmem>>, vector<32x256xbf16>,
    %c48_i32 = arith.constant 48 : i32
    %25 = tpu.dynamic_rotate %6 by %c48_i32 dim 1 : vector<32x256xf32>, i32 -> vector<32x256xf32>
    %c3 = arith.constant 3 : index
    %c0_16 = arith.constant 0 : index
    %26 = vector.load %arg6[%c3, %c0_16] : memref<49x256xf32, #tpu.memory_space<vmem>>, vector<1x256xf32>
    %27 = vector.broadcast %26 : vector<1x256xf32> to vector<32x256xf32>
    %28 = arith.mulf %25, %27 : vector<32x256xf32>
    %29 = arith.truncf %28 : vector<32x256xf32> to vector<32x256xbf16>
    %c96 = arith.constant 96 : index
    %c0_17 = arith.constant 0 : index
    %30 = vector.load %arg11[%c96, %c0_17] : memref<1608x256xbf16, #tpu.memory_space<vmem>>, vector<32x256xbf16>
    tpu.vector_store %arg11[%c96, %c0_17], %29 {strides = array<i32>} : memref<1608x256xbf16, #tpu.memory_space<vmem>>, vector<32x256xbf16>,
    %c47_i32 = arith.constant 47 : i32
    %31 = tpu.dynamic_rotate %6 by %c47_i32 dim 1 : vector<32x256xf32>, i32 -> vector<32x256xf32>
    %c4 = arith.constant 4 : index
    %c0_18 = arith.constant 0 : index
    %32 = vector.load %arg6[%c4, %c0_18] : memref<49x256xf32, #tpu.memory_space<vmem>>, vector<1x256xf32>
    %33 = vector.broadcast %32 : vector<1x256xf32> to vector<32x256xf32>
    %34 = arith.mulf %31, %33 : vector<32x256xf32>
    %35 = arith.truncf %34 : vector<32x256xf32> to vector<32x256xbf16>
    %c128 = arith.constant 128 : index
    %c0_19 = arith.constant 0 : index
    %36 = vector.load %arg11[%c128, %c0_19] : memref<1608x256xbf16, #tpu.memory_space<vmem>>, vector<32x256xbf16>
    tpu.vector_store %arg11[%c128, %c0_19], %35 {strides = array<i32>} : memref<1608x256xbf16, #tpu.memory_space<vmem>>, vector<32x256xbf16>,
    %c46_i32 = arith.constant 46 : i32
    %37 = tpu.dynamic_rotate %6 by %c46_i32 dim 1 : vector<32x256xf32>, i32 -> vector<32x256xf32>
    %c5 = arith.constant 5 : index
    %c0_20 = arith.constant 0 : index
    %38 = vector.load %arg6[%c5, %c0_20] : memref<49x256xf32, #tpu.memory_space<vmem>>, vector<1x256xf32>
    %39 = vector.broadcast %38 : vector<1x256xf32> to vector<32x256xf32>
    %40 = arith.mulf %37, %39 : vector<32x256xf32>
    %41 = arith.truncf %40 : vector<32x256xf32> to vector<32x256xbf16>
    %c160 = arith.constant 160 : index
    %c0_21 = arith.constant 0 : index
    %42 = vector.load %arg11[%c160, %c0_21] : memref<1608x256xbf16, #tpu.memory_space<vmem>>, vector<32x256xbf16>
    tpu.vector_store %arg11[%c160, %c0_21], %41 {strides = array<i32>} : memref<1608x256xbf16, #tpu.memory_space<vmem>>, vector<32x256xbf16>,
    %c45_i32 = arith.constant 45 : i32
    %43 = tpu.dynamic_rotate %6 by %c45_i32 dim 1 : vector<32x256xf32>, i32 -> vector<32x256xf32>
    %c6 = arith.constant 6 : index
    %c0_22 = arith.constant 0 : index
    %44 = vector.load %arg6[%c6, %c0_22] : memref<49x256xf32, #tpu.memory_space<vmem>>, vector<1x256xf32>
    %45 = vector.broadcast %44 : vector<1x256xf32> to vector<32x256xf32>
    %46 = arith.mulf %43, %45 : vector<32x256xf32>
    %47 = arith.truncf %46 : vector<32x256xf32> to vector<32x256xbf16>
    %c192 = arith.constant 192 : index
    %c0_23 = arith.constant 0 : index
    %48 = vector.load %arg11[%c192, %c0_23] : memref<1608x256xbf16, #tpu.memory_space<vmem>>, vector<32x256xbf16>
    tpu.vector_store %arg11[%c192, %c0_23], %47 {strides = array<i32>} : memref<1608x256xbf16, #tpu.memory_space<vmem>>, vector<32x256xbf16>,
    %c35_i32 = arith.constant 35 : i32
    %49 = tpu.dynamic_rotate %6 by %c35_i32 dim 1 : vector<32x256xf32>, i32 -> vector<32x256xf32>
    %c7 = arith.constant 7 : index
    %c0_24 = arith.constant 0 : index
    %50 = vector.load %arg6[%c7, %c0_24] : memref<49x256xf32, #tpu.memory_space<vmem>>, vector<1x256xf32>
    %51 = vector.broadcast %50 : vector<1x256xf32> to vector<32x256xf32>
    %52 = arith.mulf %49, %51 : vector<32x256xf32>
    %53 = arith.truncf %52 : vector<32x256xf32> to vector<32x256xbf16>
    %c224 = arith.constant 224 : index
    %c0_25 = arith.constant 0 : index
    %54 = vector.load %arg11[%c224, %c0_25] : memref<1608x256xbf16, #tpu.memory_space<vmem>>, vector<32x256xbf16>
    tpu.vector_store %arg11[%c224, %c0_25], %53 {strides = array<i32>} : memref<1608x256xbf16, #tpu.memory_space<vmem>>, vector<32x256xbf16>,
    %c34_i32 = arith.constant 34 : i32
    %55 = tpu.dynamic_rotate %6 by %c34_i32 dim 1 : vector<32x256xf32>, i32 -> vector<32x256xf32>
    %c8 = arith.constant 8 : index
    %c0_26 = arith.constant 0 : index
    %56 = vector.load %arg6[%c8, %c0_26] : memref<49x256xf32, #tpu.memory_space<vmem>>, vector<1x256xf32>
    %57 = vector.broadcast %56 : vector<1x256xf32> to vector<32x256xf32>
    %58 = arith.mulf %55, %57 : vector<32x256xf32>
    %59 = arith.truncf %58 : vector<32x256xf32> to vector<32x256xbf16>
    %c256 = arith.constant 256 : index
    %c0_27 = arith.constant 0 : index
    %60 = vector.load %arg11[%c256, %c0_27] : memref<1608x256xbf16, #tpu.memory_space<vmem>>, vector<32x256xbf16>
    tpu.vector_store %arg11[%c256, %c0_27], %59 {strides = array<i32>} : memref<1608x256xbf16, #tpu.memory_space<vmem>>, vector<32x256xbf16>,
    %c33_i32 = arith.constant 33 : i32
    %61 = tpu.dynamic_rotate %6 by %c33_i32 dim 1 : vector<32x256xf32>, i32 -> vector<32x256xf32>
    %c9 = arith.constant 9 : index
    %c0_28 = arith.constant 0 : index
    %62 = vector.load %arg6[%c9, %c0_28] : memref<49x256xf32, #tpu.memory_space<vmem>>, vector<1x256xf32>
    %63 = vector.broadcast %62 : vector<1x256xf32> to vector<32x256xf32>
    %64 = arith.mulf %61, %63 : vector<32x256xf32>
    %65 = arith.truncf %64 : vector<32x256xf32> to vector<32x256xbf16>
    %c288 = arith.constant 288 : index
    %c0_29 = arith.constant 0 : index
    %66 = vector.load %arg11[%c288, %c0_29] : memref<1608x256xbf16, #tpu.memory_space<vmem>>, vector<32x256xbf16>
    tpu.vector_store %arg11[%c288, %c0_29], %65 {strides = array<i32>} : memref<1608x256xbf16, #tpu.memory_space<vmem>>, vector<32x256xbf16>,
    %c32_i32 = arith.constant 32 : i32
    %67 = tpu.dynamic_rotate %6 by %c32_i32 dim 1 : vector<32x256xf32>, i32 -> vector<32x256xf32>
    %c10 = arith.constant 10 : index
    %c0_30 = arith.constant 0 : index
    %68 = vector.load %arg6[%c10, %c0_30] : memref<49x256xf32, #tpu.memory_space<vmem>>, vector<1x256xf32>
    %69 = vector.broadcast %68 : vector<1x256xf32> to vector<32x256xf32>
    %70 = arith.mulf %67, %69 : vector<32x256xf32>
    %71 = arith.truncf %70 : vector<32x256xf32> to vector<32x256xbf16>
    %c320 = arith.constant 320 : index
    %c0_31 = arith.constant 0 : index
    %72 = vector.load %arg11[%c320, %c0_31] : memref<1608x256xbf16, #tpu.memory_space<vmem>>, vector<32x256xbf16>
    tpu.vector_store %arg11[%c320, %c0_31], %71 {strides = array<i32>} : memref<1608x256xbf16, #tpu.memory_space<vmem>>, vector<32x256xbf16>,
    %c31_i32 = arith.constant 31 : i32
    %73 = tpu.dynamic_rotate %6 by %c31_i32 dim 1 : vector<32x256xf32>, i32 -> vector<32x256xf32>
    %c11 = arith.constant 11 : index
    %c0_32 = arith.constant 0 : index
    %74 = vector.load %arg6[%c11, %c0_32] : memref<49x256xf32, #tpu.memory_space<vmem>>, vector<1x256xf32>
    %75 = vector.broadcast %74 : vector<1x256xf32> to vector<32x256xf32>
    %76 = arith.mulf %73, %75 : vector<32x256xf32>
    %77 = arith.truncf %76 : vector<32x256xf32> to vector<32x256xbf16>
    %c352 = arith.constant 352 : index
    %c0_33 = arith.constant 0 : index
    %78 = vector.load %arg11[%c352, %c0_33] : memref<1608x256xbf16, #tpu.memory_space<vmem>>, vector<32x256xbf16>
    tpu.vector_store %arg11[%c352, %c0_33], %77 {strides = array<i32>} : memref<1608x256xbf16, #tpu.memory_space<vmem>>, vector<32x256xbf16>,
    %c30_i32 = arith.constant 30 : i32
    %79 = tpu.dynamic_rotate %6 by %c30_i32 dim 1 : vector<32x256xf32>, i32 -> vector<32x256xf32>
    %c12 = arith.constant 12 : index
    %c0_34 = arith.constant 0 : index
    %80 = vector.load %arg6[%c12, %c0_34] : memref<49x256xf32, #tpu.memory_space<vmem>>, vector<1x256xf32>
    %81 = vector.broadcast %80 : vector<1x256xf32> to vector<32x256xf32>
    %82 = arith.mulf %79, %81 : vector<32x256xf32>
    %83 = arith.truncf %82 : vector<32x256xf32> to vector<32x256xbf16>
    %c384 = arith.constant 384 : index
    %c0_35 = arith.constant 0 : index
    %84 = vector.load %arg11[%c384, %c0_35] : memref<1608x256xbf16, #tpu.memory_space<vmem>>, vector<32x256xbf16>
    tpu.vector_store %arg11[%c384, %c0_35], %83 {strides = array<i32>} : memref<1608x256xbf16, #tpu.memory_space<vmem>>, vector<32x256xbf16>,
    %c29_i32 = arith.constant 29 : i32
    %85 = tpu.dynamic_rotate %6 by %c29_i32 dim 1 : vector<32x256xf32>, i32 -> vector<32x256xf32>
    %c13 = arith.constant 13 : index
    %c0_36 = arith.constant 0 : index
    %86 = vector.load %arg6[%c13, %c0_36] : memref<49x256xf32, #tpu.memory_space<vmem>>, vector<1x256xf32>
    %87 = vector.broadcast %86 : vector<1x256xf32> to vector<32x256xf32>
    %88 = arith.mulf %85, %87 : vector<32x256xf32>
    %89 = arith.truncf %88 : vector<32x256xf32> to vector<32x256xbf16>
    %c416 = arith.constant 416 : index
    %c0_37 = arith.constant 0 : index
    %90 = vector.load %arg11[%c416, %c0_37] : memref<1608x256xbf16, #tpu.memory_space<vmem>>, vector<32x256xbf16>
    tpu.vector_store %arg11[%c416, %c0_37], %89 {strides = array<i32>} : memref<1608x256xbf16, #tpu.memory_space<vmem>>, vector<32x256xbf16>,
    %c19_i32 = arith.constant 19 : i32
    %91 = tpu.dynamic_rotate %6 by %c19_i32 dim 1 : vector<32x256xf32>, i32 -> vector<32x256xf32>
    %c14 = arith.constant 14 : index
    %c0_38 = arith.constant 0 : index
    %92 = vector.load %arg6[%c14, %c0_38] : memref<49x256xf32, #tpu.memory_space<vmem>>, vector<1x256xf32>
    %93 = vector.broadcast %92 : vector<1x256xf32> to vector<32x256xf32>
    %94 = arith.mulf %91, %93 : vector<32x256xf32>
    %95 = arith.truncf %94 : vector<32x256xf32> to vector<32x256xbf16>
    %c448 = arith.constant 448 : index
    %c0_39 = arith.constant 0 : index
    %96 = vector.load %arg11[%c448, %c0_39] : memref<1608x256xbf16, #tpu.memory_space<vmem>>, vector<32x256xbf16>
    tpu.vector_store %arg11[%c448, %c0_39], %95 {strides = array<i32>} : memref<1608x256xbf16, #tpu.memory_space<vmem>>, vector<32x256xbf16>,
    %c18_i32 = arith.constant 18 : i32
    %97 = tpu.dynamic_rotate %6 by %c18_i32 dim 1 : vector<32x256xf32>, i32 -> vector<32x256xf32>
    %c15 = arith.constant 15 : index
    %c0_40 = arith.constant 0 : index
    %98 = vector.load %arg6[%c15, %c0_40] : memref<49x256xf32, #tpu.memory_space<vmem>>, vector<1x256xf32>
    %99 = vector.broadcast %98 : vector<1x256xf32> to vector<32x256xf32>
    %100 = arith.mulf %97, %99 : vector<32x256xf32>
    %101 = arith.truncf %100 : vector<32x256xf32> to vector<32x256xbf16>
    %c480 = arith.constant 480 : index
    %c0_41 = arith.constant 0 : index
    %102 = vector.load %arg11[%c480, %c0_41] : memref<1608x256xbf16, #tpu.memory_space<vmem>>, vector<32x256xbf16>
    tpu.vector_store %arg11[%c480, %c0_41], %101 {strides = array<i32>} : memref<1608x256xbf16, #tpu.memory_space<vmem>>, vector<32x256xbf16>,
    %c17_i32 = arith.constant 17 : i32
    %103 = tpu.dynamic_rotate %6 by %c17_i32 dim 1 : vector<32x256xf32>, i32 -> vector<32x256xf32>
    %c16 = arith.constant 16 : index
    %c0_42 = arith.constant 0 : index
    %104 = vector.load %arg6[%c16, %c0_42] : memref<49x256xf32, #tpu.memory_space<vmem>>, vector<1x256xf32>
    %105 = vector.broadcast %104 : vector<1x256xf32> to vector<32x256xf32>
    %106 = arith.mulf %103, %105 : vector<32x256xf32>
    %107 = arith.truncf %106 : vector<32x256xf32> to vector<32x256xbf16>
    %c512 = arith.constant 512 : index
    %c0_43 = arith.constant 0 : index
    %108 = vector.load %arg11[%c512, %c0_43] : memref<1608x256xbf16, #tpu.memory_space<vmem>>, vector<32x256xbf16>
    tpu.vector_store %arg11[%c512, %c0_43], %107 {strides = array<i32>} : memref<1608x256xbf16, #tpu.memory_space<vmem>>, vector<32x256xbf16>,
    %c16_i32 = arith.constant 16 : i32
    %109 = tpu.dynamic_rotate %6 by %c16_i32 dim 1 : vector<32x256xf32>, i32 -> vector<32x256xf32>
    %c17 = arith.constant 17 : index
    %c0_44 = arith.constant 0 : index
    %110 = vector.load %arg6[%c17, %c0_44] : memref<49x256xf32, #tpu.memory_space<vmem>>, vector<1x256xf32>
    %111 = vector.broadcast %110 : vector<1x256xf32> to vector<32x256xf32>
    %112 = arith.mulf %109, %111 : vector<32x256xf32>
    %113 = arith.truncf %112 : vector<32x256xf32> to vector<32x256xbf16>
    %c544 = arith.constant 544 : index
    %c0_45 = arith.constant 0 : index
    %114 = vector.load %arg11[%c544, %c0_45] : memref<1608x256xbf16, #tpu.memory_space<vmem>>, vector<32x256xbf16>
    tpu.vector_store %arg11[%c544, %c0_45], %113 {strides = array<i32>} : memref<1608x256xbf16, #tpu.memory_space<vmem>>, vector<32x256xbf16>,
    %c15_i32 = arith.constant 15 : i32
    %115 = tpu.dynamic_rotate %6 by %c15_i32 dim 1 : vector<32x256xf32>, i32 -> vector<32x256xf32>
    %c18 = arith.constant 18 : index
    %c0_46 = arith.constant 0 : index
    %116 = vector.load %arg6[%c18, %c0_46] : memref<49x256xf32, #tpu.memory_space<vmem>>, vector<1x256xf32>
    %117 = vector.broadcast %116 : vector<1x256xf32> to vector<32x256xf32>
    %118 = arith.mulf %115, %117 : vector<32x256xf32>
    %119 = arith.truncf %118 : vector<32x256xf32> to vector<32x256xbf16>
    %c576 = arith.constant 576 : index
    %c0_47 = arith.constant 0 : index
    %120 = vector.load %arg11[%c576, %c0_47] : memref<1608x256xbf16, #tpu.memory_space<vmem>>, vector<32x256xbf16>
    tpu.vector_store %arg11[%c576, %c0_47], %119 {strides = array<i32>} : memref<1608x256xbf16, #tpu.memory_space<vmem>>, vector<32x256xbf16>,
    %c14_i32 = arith.constant 14 : i32
    %121 = tpu.dynamic_rotate %6 by %c14_i32 dim 1 : vector<32x256xf32>, i32 -> vector<32x256xf32>
    %c19 = arith.constant 19 : index
    %c0_48 = arith.constant 0 : index
    %122 = vector.load %arg6[%c19, %c0_48] : memref<49x256xf32, #tpu.memory_space<vmem>>, vector<1x256xf32>
    %123 = vector.broadcast %122 : vector<1x256xf32> to vector<32x256xf32>
    %124 = arith.mulf %121, %123 : vector<32x256xf32>
    %125 = arith.truncf %124 : vector<32x256xf32> to vector<32x256xbf16>
    %c608 = arith.constant 608 : index
    %c0_49 = arith.constant 0 : index
    %126 = vector.load %arg11[%c608, %c0_49] : memref<1608x256xbf16, #tpu.memory_space<vmem>>, vector<32x256xbf16>
    tpu.vector_store %arg11[%c608, %c0_49], %125 {strides = array<i32>} : memref<1608x256xbf16, #tpu.memory_space<vmem>>, vector<32x256xbf16>,
    %c13_i32 = arith.constant 13 : i32
    %127 = tpu.dynamic_rotate %6 by %c13_i32 dim 1 : vector<32x256xf32>, i32 -> vector<32x256xf32>
    %c20 = arith.constant 20 : index
    %c0_50 = arith.constant 0 : index
    %128 = vector.load %arg6[%c20, %c0_50] : memref<49x256xf32, #tpu.memory_space<vmem>>, vector<1x256xf32>
    %129 = vector.broadcast %128 : vector<1x256xf32> to vector<32x256xf32>
    %130 = arith.mulf %127, %129 : vector<32x256xf32>
    %131 = arith.truncf %130 : vector<32x256xf32> to vector<32x256xbf16>
    %c640 = arith.constant 640 : index
    %c0_51 = arith.constant 0 : index
    %132 = vector.load %arg11[%c640, %c0_51] : memref<1608x256xbf16, #tpu.memory_space<vmem>>, vector<32x256xbf16>
    tpu.vector_store %arg11[%c640, %c0_51], %131 {strides = array<i32>} : memref<1608x256xbf16, #tpu.memory_space<vmem>>, vector<32x256xbf16>,
    %c3_i32 = arith.constant 3 : i32
    %133 = tpu.dynamic_rotate %6 by %c3_i32 dim 1 : vector<32x256xf32>, i32 -> vector<32x256xf32>
    %c21 = arith.constant 21 : index
    %c0_52 = arith.constant 0 : index
    %134 = vector.load %arg6[%c21, %c0_52] : memref<49x256xf32, #tpu.memory_space<vmem>>, vector<1x256xf32>
    %135 = vector.broadcast %134 : vector<1x256xf32> to vector<32x256xf32>
    %136 = arith.mulf %133, %135 : vector<32x256xf32>
    %137 = arith.truncf %136 : vector<32x256xf32> to vector<32x256xbf16>
    %c672 = arith.constant 672 : index
    %c0_53 = arith.constant 0 : index
    %138 = vector.load %arg11[%c672, %c0_53] : memref<1608x256xbf16, #tpu.memory_space<vmem>>, vector<32x256xbf16>
    tpu.vector_store %arg11[%c672, %c0_53], %137 {strides = array<i32>} : memref<1608x256xbf16, #tpu.memory_space<vmem>>, vector<32x256xbf16>,
    %c2_i32 = arith.constant 2 : i32
    %139 = tpu.dynamic_rotate %6 by %c2_i32 dim 1 : vector<32x256xf32>, i32 -> vector<32x256xf32>
    %c22 = arith.constant 22 : index
    %c0_54 = arith.constant 0 : index
    %140 = vector.load %arg6[%c22, %c0_54] : memref<49x256xf32, #tpu.memory_space<vmem>>, vector<1x256xf32>
    %141 = vector.broadcast %140 : vector<1x256xf32> to vector<32x256xf32>
    %142 = arith.mulf %139, %141 : vector<32x256xf32>
    %143 = arith.truncf %142 : vector<32x256xf32> to vector<32x256xbf16>
    %c704 = arith.constant 704 : index
    %c0_55 = arith.constant 0 : index
    %144 = vector.load %arg11[%c704, %c0_55] : memref<1608x256xbf16, #tpu.memory_space<vmem>>, vector<32x256xbf16>
    tpu.vector_store %arg11[%c704, %c0_55], %143 {strides = array<i32>} : memref<1608x256xbf16, #tpu.memory_space<vmem>>, vector<32x256xbf16>,
    %c1_i32 = arith.constant 1 : i32
    %145 = tpu.dynamic_rotate %6 by %c1_i32 dim 1 : vector<32x256xf32>, i32 -> vector<32x256xf32>
    %c23 = arith.constant 23 : index
    %c0_56 = arith.constant 0 : index
    %146 = vector.load %arg6[%c23, %c0_56] : memref<49x256xf32, #tpu.memory_space<vmem>>, vector<1x256xf32>
    %147 = vector.broadcast %146 : vector<1x256xf32> to vector<32x256xf32>
    %148 = arith.mulf %145, %147 : vector<32x256xf32>
    %149 = arith.truncf %148 : vector<32x256xf32> to vector<32x256xbf16>
    %c736 = arith.constant 736 : index
    %c0_57 = arith.constant 0 : index
    %150 = vector.load %arg11[%c736, %c0_57] : memref<1608x256xbf16, #tpu.memory_space<vmem>>, vector<32x256xbf16>
    tpu.vector_store %arg11[%c736, %c0_57], %149 {strides = array<i32>} : memref<1608x256xbf16, #tpu.memory_space<vmem>>, vector<32x256xbf16>,
    %c24 = arith.constant 24 : index
    %c0_58 = arith.constant 0 : index
    %151 = vector.load %arg6[%c24, %c0_58] : memref<49x256xf32, #tpu.memory_space<vmem>>, vector<1x256xf32>
    %152 = vector.broadcast %151 : vector<1x256xf32> to vector<32x256xf32>
    %153 = arith.mulf %6, %152 : vector<32x256xf32>
    %154 = arith.truncf %153 : vector<32x256xf32> to vector<32x256xbf16>
    %c768 = arith.constant 768 : index
    %c0_59 = arith.constant 0 : index
    %155 = vector.load %arg11[%c768, %c0_59] : memref<1608x256xbf16, #tpu.memory_space<vmem>>, vector<32x256xbf16>
    tpu.vector_store %arg11[%c768, %c0_59], %154 {strides = array<i32>} : memref<1608x256xbf16, #tpu.memory_space<vmem>>, vector<32x256xbf16>,
    %c255_i32 = arith.constant 255 : i32
    %156 = tpu.dynamic_rotate %6 by %c255_i32 dim 1 : vector<32x256xf32>, i32 -> vector<32x256xf32>
    %c25 = arith.constant 25 : index
    %c0_60 = arith.constant 0 : index
    %157 = vector.load %arg6[%c25, %c0_60] : memref<49x256xf32, #tpu.memory_space<vmem>>, vector<1x256xf32>
    %158 = vector.broadcast %157 : vector<1x256xf32> to vector<32x256xf32>
    %159 = arith.mulf %156, %158 : vector<32x256xf32>
    %160 = arith.truncf %159 : vector<32x256xf32> to vector<32x256xbf16>
    %c800 = arith.constant 800 : index
    %c0_61 = arith.constant 0 : index
    %161 = vector.load %arg11[%c800, %c0_61] : memref<1608x256xbf16, #tpu.memory_space<vmem>>, vector<32x256xbf16>
    tpu.vector_store %arg11[%c800, %c0_61], %160 {strides = array<i32>} : memref<1608x256xbf16, #tpu.memory_space<vmem>>, vector<32x256xbf16>,
    %c254_i32 = arith.constant 254 : i32
    %162 = tpu.dynamic_rotate %6 by %c254_i32 dim 1 : vector<32x256xf32>, i32 -> vector<32x256xf32>
    %c26 = arith.constant 26 : index
    %c0_62 = arith.constant 0 : index
    %163 = vector.load %arg6[%c26, %c0_62] : memref<49x256xf32, #tpu.memory_space<vmem>>, vector<1x256xf32>
    %164 = vector.broadcast %163 : vector<1x256xf32> to vector<32x256xf32>
    %165 = arith.mulf %162, %164 : vector<32x256xf32>
    %166 = arith.truncf %165 : vector<32x256xf32> to vector<32x256xbf16>
    %c832 = arith.constant 832 : index
    %c0_63 = arith.constant 0 : index
    %167 = vector.load %arg11[%c832, %c0_63] : memref<1608x256xbf16, #tpu.memory_space<vmem>>, vector<32x256xbf16>
    tpu.vector_store %arg11[%c832, %c0_63], %166 {strides = array<i32>} : memref<1608x256xbf16, #tpu.memory_space<vmem>>, vector<32x256xbf16>,
    %c253_i32 = arith.constant 253 : i32
    %168 = tpu.dynamic_rotate %6 by %c253_i32 dim 1 : vector<32x256xf32>, i32 -> vector<32x256xf32>
    %c27 = arith.constant 27 : index
    %c0_64 = arith.constant 0 : index
    %169 = vector.load %arg6[%c27, %c0_64] : memref<49x256xf32, #tpu.memory_space<vmem>>, vector<1x256xf32>
    %170 = vector.broadcast %169 : vector<1x256xf32> to vector<32x256xf32>
    %171 = arith.mulf %168, %170 : vector<32x256xf32>
    %172 = arith.truncf %171 : vector<32x256xf32> to vector<32x256xbf16>
    %c864 = arith.constant 864 : index
    %c0_65 = arith.constant 0 : index
    %173 = vector.load %arg11[%c864, %c0_65] : memref<1608x256xbf16, #tpu.memory_space<vmem>>, vector<32x256xbf16>
    tpu.vector_store %arg11[%c864, %c0_65], %172 {strides = array<i32>} : memref<1608x256xbf16, #tpu.memory_space<vmem>>, vector<32x256xbf16>,
    %c243_i32 = arith.constant 243 : i32
    %174 = tpu.dynamic_rotate %6 by %c243_i32 dim 1 : vector<32x256xf32>, i32 -> vector<32x256xf32>
    %c28 = arith.constant 28 : index
    %c0_66 = arith.constant 0 : index
    %175 = vector.load %arg6[%c28, %c0_66] : memref<49x256xf32, #tpu.memory_space<vmem>>, vector<1x256xf32>
    %176 = vector.broadcast %175 : vector<1x256xf32> to vector<32x256xf32>
    %177 = arith.mulf %174, %176 : vector<32x256xf32>
    %178 = arith.truncf %177 : vector<32x256xf32> to vector<32x256xbf16>
    %c896 = arith.constant 896 : index
    %c0_67 = arith.constant 0 : index
    %179 = vector.load %arg11[%c896, %c0_67] : memref<1608x256xbf16, #tpu.memory_space<vmem>>, vector<32x256xbf16>
    tpu.vector_store %arg11[%c896, %c0_67], %178 {strides = array<i32>} : memref<1608x256xbf16, #tpu.memory_space<vmem>>, vector<32x256xbf16>,
    %c242_i32 = arith.constant 242 : i32
    %180 = tpu.dynamic_rotate %6 by %c242_i32 dim 1 : vector<32x256xf32>, i32 -> vector<32x256xf32>
    %c29 = arith.constant 29 : index
    %c0_68 = arith.constant 0 : index
    %181 = vector.load %arg6[%c29, %c0_68] : memref<49x256xf32, #tpu.memory_space<vmem>>, vector<1x256xf32>
    %182 = vector.broadcast %181 : vector<1x256xf32> to vector<32x256xf32>
    %183 = arith.mulf %180, %182 : vector<32x256xf32>
    %184 = arith.truncf %183 : vector<32x256xf32> to vector<32x256xbf16>
    %c928 = arith.constant 928 : index
    %c0_69 = arith.constant 0 : index
    %185 = vector.load %arg11[%c928, %c0_69] : memref<1608x256xbf16, #tpu.memory_space<vmem>>, vector<32x256xbf16>
    tpu.vector_store %arg11[%c928, %c0_69], %184 {strides = array<i32>} : memref<1608x256xbf16, #tpu.memory_space<vmem>>, vector<32x256xbf16>,
    %c241_i32 = arith.constant 241 : i32
    %186 = tpu.dynamic_rotate %6 by %c241_i32 dim 1 : vector<32x256xf32>, i32 -> vector<32x256xf32>
    %c30 = arith.constant 30 : index
    %c0_70 = arith.constant 0 : index
    %187 = vector.load %arg6[%c30, %c0_70] : memref<49x256xf32, #tpu.memory_space<vmem>>, vector<1x256xf32>
    %188 = vector.broadcast %187 : vector<1x256xf32> to vector<32x256xf32>
    %189 = arith.mulf %186, %188 : vector<32x256xf32>
    %190 = arith.truncf %189 : vector<32x256xf32> to vector<32x256xbf16>
    %c960 = arith.constant 960 : index
    %c0_71 = arith.constant 0 : index
    %191 = vector.load %arg11[%c960, %c0_71] : memref<1608x256xbf16, #tpu.memory_space<vmem>>, vector<32x256xbf16>
    tpu.vector_store %arg11[%c960, %c0_71], %190 {strides = array<i32>} : memref<1608x256xbf16, #tpu.memory_space<vmem>>, vector<32x256xbf16>,
    %c240_i32 = arith.constant 240 : i32
    %192 = tpu.dynamic_rotate %6 by %c240_i32 dim 1 : vector<32x256xf32>, i32 -> vector<32x256xf32>
    %c31 = arith.constant 31 : index
    %c0_72 = arith.constant 0 : index
    %193 = vector.load %arg6[%c31, %c0_72] : memref<49x256xf32, #tpu.memory_space<vmem>>, vector<1x256xf32>
    %194 = vector.broadcast %193 : vector<1x256xf32> to vector<32x256xf32>
    %195 = arith.mulf %192, %194 : vector<32x256xf32>
    %196 = arith.truncf %195 : vector<32x256xf32> to vector<32x256xbf16>
    %c992 = arith.constant 992 : index
    %c0_73 = arith.constant 0 : index
    %197 = vector.load %arg11[%c992, %c0_73] : memref<1608x256xbf16, #tpu.memory_space<vmem>>, vector<32x256xbf16>
    tpu.vector_store %arg11[%c992, %c0_73], %196 {strides = array<i32>} : memref<1608x256xbf16, #tpu.memory_space<vmem>>, vector<32x256xbf16>,
    %c239_i32 = arith.constant 239 : i32
    %198 = tpu.dynamic_rotate %6 by %c239_i32 dim 1 : vector<32x256xf32>, i32 -> vector<32x256xf32>
    %c32_74 = arith.constant 32 : index
    %c0_75 = arith.constant 0 : index
    %199 = vector.load %arg6[%c32_74, %c0_75] : memref<49x256xf32, #tpu.memory_space<vmem>>, vector<1x256xf32>
    %200 = vector.broadcast %199 : vector<1x256xf32> to vector<32x256xf32>
    %201 = arith.mulf %198, %200 : vector<32x256xf32>
    %202 = arith.truncf %201 : vector<32x256xf32> to vector<32x256xbf16>
    %c1024 = arith.constant 1024 : index
    %c0_76 = arith.constant 0 : index
    %203 = vector.load %arg11[%c1024, %c0_76] : memref<1608x256xbf16, #tpu.memory_space<vmem>>, vector<32x256xbf16>
    tpu.vector_store %arg11[%c1024, %c0_76], %202 {strides = array<i32>} : memref<1608x256xbf16, #tpu.memory_space<vmem>>, vector<32x256xbf16>,
    %c238_i32 = arith.constant 238 : i32
    %204 = tpu.dynamic_rotate %6 by %c238_i32 dim 1 : vector<32x256xf32>, i32 -> vector<32x256xf32>
    %c33 = arith.constant 33 : index
    %c0_77 = arith.constant 0 : index
    %205 = vector.load %arg6[%c33, %c0_77] : memref<49x256xf32, #tpu.memory_space<vmem>>, vector<1x256xf32>
    %206 = vector.broadcast %205 : vector<1x256xf32> to vector<32x256xf32>
    %207 = arith.mulf %204, %206 : vector<32x256xf32>
    %208 = arith.truncf %207 : vector<32x256xf32> to vector<32x256xbf16>
    %c1056 = arith.constant 1056 : index
    %c0_78 = arith.constant 0 : index
    %209 = vector.load %arg11[%c1056, %c0_78] : memref<1608x256xbf16, #tpu.memory_space<vmem>>, vector<32x256xbf16>
    tpu.vector_store %arg11[%c1056, %c0_78], %208 {strides = array<i32>} : memref<1608x256xbf16, #tpu.memory_space<vmem>>, vector<32x256xbf16>,
    %c237_i32 = arith.constant 237 : i32
    %210 = tpu.dynamic_rotate %6 by %c237_i32 dim 1 : vector<32x256xf32>, i32 -> vector<32x256xf32>
    %c34 = arith.constant 34 : index
    %c0_79 = arith.constant 0 : index
    %211 = vector.load %arg6[%c34, %c0_79] : memref<49x256xf32, #tpu.memory_space<vmem>>, vector<1x256xf32>
    %212 = vector.broadcast %211 : vector<1x256xf32> to vector<32x256xf32>
    %213 = arith.mulf %210, %212 : vector<32x256xf32>
    %214 = arith.truncf %213 : vector<32x256xf32> to vector<32x256xbf16>
    %c1088 = arith.constant 1088 : index
    %c0_80 = arith.constant 0 : index
    %215 = vector.load %arg11[%c1088, %c0_80] : memref<1608x256xbf16, #tpu.memory_space<vmem>>, vector<32x256xbf16>
    tpu.vector_store %arg11[%c1088, %c0_80], %214 {strides = array<i32>} : memref<1608x256xbf16, #tpu.memory_space<vmem>>, vector<32x256xbf16>,
    %c227_i32 = arith.constant 227 : i32
    %216 = tpu.dynamic_rotate %6 by %c227_i32 dim 1 : vector<32x256xf32>, i32 -> vector<32x256xf32>
    %c35 = arith.constant 35 : index
    %c0_81 = arith.constant 0 : index
    %217 = vector.load %arg6[%c35, %c0_81] : memref<49x256xf32, #tpu.memory_space<vmem>>, vector<1x256xf32>
    %218 = vector.broadcast %217 : vector<1x256xf32> to vector<32x256xf32>
    %219 = arith.mulf %216, %218 : vector<32x256xf32>
    %220 = arith.truncf %219 : vector<32x256xf32> to vector<32x256xbf16>
    %c1120 = arith.constant 1120 : index
    %c0_82 = arith.constant 0 : index
    %221 = vector.load %arg11[%c1120, %c0_82] : memref<1608x256xbf16, #tpu.memory_space<vmem>>, vector<32x256xbf16>
    tpu.vector_store %arg11[%c1120, %c0_82], %220 {strides = array<i32>} : memref<1608x256xbf16, #tpu.memory_space<vmem>>, vector<32x256xbf16>,
    %c226_i32 = arith.constant 226 : i32
    %222 = tpu.dynamic_rotate %6 by %c226_i32 dim 1 : vector<32x256xf32>, i32 -> vector<32x256xf32>
    %c36 = arith.constant 36 : index
    %c0_83 = arith.constant 0 : index
    %223 = vector.load %arg6[%c36, %c0_83] : memref<49x256xf32, #tpu.memory_space<vmem>>, vector<1x256xf32>
    %224 = vector.broadcast %223 : vector<1x256xf32> to vector<32x256xf32>
    %225 = arith.mulf %222, %224 : vector<32x256xf32>
    %226 = arith.truncf %225 : vector<32x256xf32> to vector<32x256xbf16>
    %c1152 = arith.constant 1152 : index
    %c0_84 = arith.constant 0 : index
    %227 = vector.load %arg11[%c1152, %c0_84] : memref<1608x256xbf16, #tpu.memory_space<vmem>>, vector<32x256xbf16>
    tpu.vector_store %arg11[%c1152, %c0_84], %226 {strides = array<i32>} : memref<1608x256xbf16, #tpu.memory_space<vmem>>, vector<32x256xbf16>,
    %c225_i32 = arith.constant 225 : i32
    %228 = tpu.dynamic_rotate %6 by %c225_i32 dim 1 : vector<32x256xf32>, i32 -> vector<32x256xf32>
    %c37 = arith.constant 37 : index
    %c0_85 = arith.constant 0 : index
    %229 = vector.load %arg6[%c37, %c0_85] : memref<49x256xf32, #tpu.memory_space<vmem>>, vector<1x256xf32>
    %230 = vector.broadcast %229 : vector<1x256xf32> to vector<32x256xf32>
    %231 = arith.mulf %228, %230 : vector<32x256xf32>
    %232 = arith.truncf %231 : vector<32x256xf32> to vector<32x256xbf16>
    %c1184 = arith.constant 1184 : index
    %c0_86 = arith.constant 0 : index
    %233 = vector.load %arg11[%c1184, %c0_86] : memref<1608x256xbf16, #tpu.memory_space<vmem>>, vector<32x256xbf16>
    tpu.vector_store %arg11[%c1184, %c0_86], %232 {strides = array<i32>} : memref<1608x256xbf16, #tpu.memory_space<vmem>>, vector<32x256xbf16>,
    %c224_i32 = arith.constant 224 : i32
    %234 = tpu.dynamic_rotate %6 by %c224_i32 dim 1 : vector<32x256xf32>, i32 -> vector<32x256xf32>
    %c38 = arith.constant 38 : index
    %c0_87 = arith.constant 0 : index
    %235 = vector.load %arg6[%c38, %c0_87] : memref<49x256xf32, #tpu.memory_space<vmem>>, vector<1x256xf32>
    %236 = vector.broadcast %235 : vector<1x256xf32> to vector<32x256xf32>
    %237 = arith.mulf %234, %236 : vector<32x256xf32>
    %238 = arith.truncf %237 : vector<32x256xf32> to vector<32x256xbf16>
    %c1216 = arith.constant 1216 : index
    %c0_88 = arith.constant 0 : index
    %239 = vector.load %arg11[%c1216, %c0_88] : memref<1608x256xbf16, #tpu.memory_space<vmem>>, vector<32x256xbf16>
    tpu.vector_store %arg11[%c1216, %c0_88], %238 {strides = array<i32>} : memref<1608x256xbf16, #tpu.memory_space<vmem>>, vector<32x256xbf16>,
    %c223_i32 = arith.constant 223 : i32
    %240 = tpu.dynamic_rotate %6 by %c223_i32 dim 1 : vector<32x256xf32>, i32 -> vector<32x256xf32>
    %c39 = arith.constant 39 : index
    %c0_89 = arith.constant 0 : index
    %241 = vector.load %arg6[%c39, %c0_89] : memref<49x256xf32, #tpu.memory_space<vmem>>, vector<1x256xf32>
    %242 = vector.broadcast %241 : vector<1x256xf32> to vector<32x256xf32>
    %243 = arith.mulf %240, %242 : vector<32x256xf32>
    %244 = arith.truncf %243 : vector<32x256xf32> to vector<32x256xbf16>
    %c1248 = arith.constant 1248 : index
    %c0_90 = arith.constant 0 : index
    %245 = vector.load %arg11[%c1248, %c0_90] : memref<1608x256xbf16, #tpu.memory_space<vmem>>, vector<32x256xbf16>
    tpu.vector_store %arg11[%c1248, %c0_90], %244 {strides = array<i32>} : memref<1608x256xbf16, #tpu.memory_space<vmem>>, vector<32x256xbf16>,
    %c222_i32 = arith.constant 222 : i32
    %246 = tpu.dynamic_rotate %6 by %c222_i32 dim 1 : vector<32x256xf32>, i32 -> vector<32x256xf32>
    %c40 = arith.constant 40 : index
    %c0_91 = arith.constant 0 : index
    %247 = vector.load %arg6[%c40, %c0_91] : memref<49x256xf32, #tpu.memory_space<vmem>>, vector<1x256xf32>
    %248 = vector.broadcast %247 : vector<1x256xf32> to vector<32x256xf32>
    %249 = arith.mulf %246, %248 : vector<32x256xf32>
    %250 = arith.truncf %249 : vector<32x256xf32> to vector<32x256xbf16>
    %c1280 = arith.constant 1280 : index
    %c0_92 = arith.constant 0 : index
    %251 = vector.load %arg11[%c1280, %c0_92] : memref<1608x256xbf16, #tpu.memory_space<vmem>>, vector<32x256xbf16>
    tpu.vector_store %arg11[%c1280, %c0_92], %250 {strides = array<i32>} : memref<1608x256xbf16, #tpu.memory_space<vmem>>, vector<32x256xbf16>,
    %c221_i32 = arith.constant 221 : i32
    %252 = tpu.dynamic_rotate %6 by %c221_i32 dim 1 : vector<32x256xf32>, i32 -> vector<32x256xf32>
    %c41 = arith.constant 41 : index
    %c0_93 = arith.constant 0 : index
    %253 = vector.load %arg6[%c41, %c0_93] : memref<49x256xf32, #tpu.memory_space<vmem>>, vector<1x256xf32>
    %254 = vector.broadcast %253 : vector<1x256xf32> to vector<32x256xf32>
    %255 = arith.mulf %252, %254 : vector<32x256xf32>
    %256 = arith.truncf %255 : vector<32x256xf32> to vector<32x256xbf16>
    %c1312 = arith.constant 1312 : index
    %c0_94 = arith.constant 0 : index
    %257 = vector.load %arg11[%c1312, %c0_94] : memref<1608x256xbf16, #tpu.memory_space<vmem>>, vector<32x256xbf16>
    tpu.vector_store %arg11[%c1312, %c0_94], %256 {strides = array<i32>} : memref<1608x256xbf16, #tpu.memory_space<vmem>>, vector<32x256xbf16>,
    %c211_i32 = arith.constant 211 : i32
    %258 = tpu.dynamic_rotate %6 by %c211_i32 dim 1 : vector<32x256xf32>, i32 -> vector<32x256xf32>
    %c42 = arith.constant 42 : index
    %c0_95 = arith.constant 0 : index
    %259 = vector.load %arg6[%c42, %c0_95] : memref<49x256xf32, #tpu.memory_space<vmem>>, vector<1x256xf32>
    %260 = vector.broadcast %259 : vector<1x256xf32> to vector<32x256xf32>
    %261 = arith.mulf %258, %260 : vector<32x256xf32>
    %262 = arith.truncf %261 : vector<32x256xf32> to vector<32x256xbf16>
    %c1344 = arith.constant 1344 : index
    %c0_96 = arith.constant 0 : index
    %263 = vector.load %arg11[%c1344, %c0_96] : memref<1608x256xbf16, #tpu.memory_space<vmem>>, vector<32x256xbf16>
    tpu.vector_store %arg11[%c1344, %c0_96], %262 {strides = array<i32>} : memref<1608x256xbf16, #tpu.memory_space<vmem>>, vector<32x256xbf16>,
    %c210_i32 = arith.constant 210 : i32
    %264 = tpu.dynamic_rotate %6 by %c210_i32 dim 1 : vector<32x256xf32>, i32 -> vector<32x256xf32>
    %c43 = arith.constant 43 : index
    %c0_97 = arith.constant 0 : index
    %265 = vector.load %arg6[%c43, %c0_97] : memref<49x256xf32, #tpu.memory_space<vmem>>, vector<1x256xf32>
    %266 = vector.broadcast %265 : vector<1x256xf32> to vector<32x256xf32>
    %267 = arith.mulf %264, %266 : vector<32x256xf32>
    %268 = arith.truncf %267 : vector<32x256xf32> to vector<32x256xbf16>
    %c1376 = arith.constant 1376 : index
    %c0_98 = arith.constant 0 : index
    %269 = vector.load %arg11[%c1376, %c0_98] : memref<1608x256xbf16, #tpu.memory_space<vmem>>, vector<32x256xbf16>
    tpu.vector_store %arg11[%c1376, %c0_98], %268 {strides = array<i32>} : memref<1608x256xbf16, #tpu.memory_space<vmem>>, vector<32x256xbf16>,
    %c209_i32 = arith.constant 209 : i32
    %270 = tpu.dynamic_rotate %6 by %c209_i32 dim 1 : vector<32x256xf32>, i32 -> vector<32x256xf32>
    %c44 = arith.constant 44 : index
    %c0_99 = arith.constant 0 : index
    %271 = vector.load %arg6[%c44, %c0_99] : memref<49x256xf32, #tpu.memory_space<vmem>>, vector<1x256xf32>
    %272 = vector.broadcast %271 : vector<1x256xf32> to vector<32x256xf32>
    %273 = arith.mulf %270, %272 : vector<32x256xf32>
    %274 = arith.truncf %273 : vector<32x256xf32> to vector<32x256xbf16>
    %c1408 = arith.constant 1408 : index
    %c0_100 = arith.constant 0 : index
    %275 = vector.load %arg11[%c1408, %c0_100] : memref<1608x256xbf16, #tpu.memory_space<vmem>>, vector<32x256xbf16>
    tpu.vector_store %arg11[%c1408, %c0_100], %274 {strides = array<i32>} : memref<1608x256xbf16, #tpu.memory_space<vmem>>, vector<32x256xbf16>,
    %c208_i32 = arith.constant 208 : i32
    %276 = tpu.dynamic_rotate %6 by %c208_i32 dim 1 : vector<32x256xf32>, i32 -> vector<32x256xf32>
    %c45 = arith.constant 45 : index
    %c0_101 = arith.constant 0 : index
    %277 = vector.load %arg6[%c45, %c0_101] : memref<49x256xf32, #tpu.memory_space<vmem>>, vector<1x256xf32>
    %278 = vector.broadcast %277 : vector<1x256xf32> to vector<32x256xf32>
    %279 = arith.mulf %276, %278 : vector<32x256xf32>
    %280 = arith.truncf %279 : vector<32x256xf32> to vector<32x256xbf16>
    %c1440 = arith.constant 1440 : index
    %c0_102 = arith.constant 0 : index
    %281 = vector.load %arg11[%c1440, %c0_102] : memref<1608x256xbf16, #tpu.memory_space<vmem>>, vector<32x256xbf16>
    tpu.vector_store %arg11[%c1440, %c0_102], %280 {strides = array<i32>} : memref<1608x256xbf16, #tpu.memory_space<vmem>>, vector<32x256xbf16>,
    %c207_i32 = arith.constant 207 : i32
    %282 = tpu.dynamic_rotate %6 by %c207_i32 dim 1 : vector<32x256xf32>, i32 -> vector<32x256xf32>
    %c46 = arith.constant 46 : index
    %c0_103 = arith.constant 0 : index
    %283 = vector.load %arg6[%c46, %c0_103] : memref<49x256xf32, #tpu.memory_space<vmem>>, vector<1x256xf32>
    %284 = vector.broadcast %283 : vector<1x256xf32> to vector<32x256xf32>
    %285 = arith.mulf %282, %284 : vector<32x256xf32>
    %286 = arith.truncf %285 : vector<32x256xf32> to vector<32x256xbf16>
    %c1472 = arith.constant 1472 : index
    %c0_104 = arith.constant 0 : index
    %287 = vector.load %arg11[%c1472, %c0_104] : memref<1608x256xbf16, #tpu.memory_space<vmem>>, vector<32x256xbf16>
    tpu.vector_store %arg11[%c1472, %c0_104], %286 {strides = array<i32>} : memref<1608x256xbf16, #tpu.memory_space<vmem>>, vector<32x256xbf16>,
    %c206_i32 = arith.constant 206 : i32
    %288 = tpu.dynamic_rotate %6 by %c206_i32 dim 1 : vector<32x256xf32>, i32 -> vector<32x256xf32>
    %c47 = arith.constant 47 : index
    %c0_105 = arith.constant 0 : index
    %289 = vector.load %arg6[%c47, %c0_105] : memref<49x256xf32, #tpu.memory_space<vmem>>, vector<1x256xf32>
    %290 = vector.broadcast %289 : vector<1x256xf32> to vector<32x256xf32>
    %291 = arith.mulf %288, %290 : vector<32x256xf32>
    %292 = arith.truncf %291 : vector<32x256xf32> to vector<32x256xbf16>
    %c1504 = arith.constant 1504 : index
    %c0_106 = arith.constant 0 : index
    %293 = vector.load %arg11[%c1504, %c0_106] : memref<1608x256xbf16, #tpu.memory_space<vmem>>, vector<32x256xbf16>
    tpu.vector_store %arg11[%c1504, %c0_106], %292 {strides = array<i32>} : memref<1608x256xbf16, #tpu.memory_space<vmem>>, vector<32x256xbf16>,
    %c205_i32 = arith.constant 205 : i32
    %294 = tpu.dynamic_rotate %6 by %c205_i32 dim 1 : vector<32x256xf32>, i32 -> vector<32x256xf32>
    %c48 = arith.constant 48 : index
    %c0_107 = arith.constant 0 : index
    %295 = vector.load %arg6[%c48, %c0_107] : memref<49x256xf32, #tpu.memory_space<vmem>>, vector<1x256xf32>
    %296 = vector.broadcast %295 : vector<1x256xf32> to vector<32x256xf32>
    %297 = arith.mulf %294, %296 : vector<32x256xf32>
    %298 = arith.truncf %297 : vector<32x256xf32> to vector<32x256xbf16>
    %c1536 = arith.constant 1536 : index
    %c0_108 = arith.constant 0 : index
    %299 = vector.load %arg11[%c1536, %c0_108] : memref<1608x256xbf16, #tpu.memory_space<vmem>>, vector<32x256xbf16>
    tpu.vector_store %arg11[%c1536, %c0_108], %298 {strides = array<i32>} : memref<1608x256xbf16, #tpu.memory_space<vmem>>, vector<32x256xbf16>,
    %300 = arith.truncf %6 : vector<32x256xf32> to vector<32x256xbf16>
    %c1568 = arith.constant 1568 : index
    %c0_109 = arith.constant 0 : index
    %301 = vector.load %arg11[%c1568, %c0_109] : memref<1608x256xbf16, #tpu.memory_space<vmem>>, vector<32x256xbf16>
    tpu.vector_store %arg11[%c1568, %c0_109], %300 {strides = array<i32>} : memref<1608x256xbf16, #tpu.memory_space<vmem>>, vector<32x256xbf16>,
    %302 = arith.truncf %1 : vector<8x256xf32> to vector<8x256xbf16>
    %c1600 = arith.constant 1600 : index
    %c0_110 = arith.constant 0 : index
    %303 = vector.load %arg11[%c1600, %c0_110] : memref<1608x256xbf16, #tpu.memory_space<vmem>>, vector<8x256xbf16>
    tpu.vector_store %arg11[%c1600, %c0_110], %302 {strides = array<i32>} : memref<1608x256xbf16, #tpu.memory_space<vmem>>, vector<8x256xbf16>,
    %c0_111 = arith.constant 0 : index
    %c0_112 = arith.constant 0 : index
    %304 = vector.load %arg4[%c0_111, %c0_112] : memref<128x1608xbf16, #tpu.memory_space<vmem>>, vector<128x1608xbf16>
    %c0_113 = arith.constant 0 : index
    %c0_114 = arith.constant 0 : index
    %305 = vector.load %arg11[%c0_113, %c0_114] : memref<1608x256xbf16, #tpu.memory_space<vmem>>, vector<1608x256xbf16>
    %cst = arith.constant dense<0.000000e+00> : vector<128x256xf32>
    %306 = tpu.matmul %304, %305, %cst {dimension_numbers = #tpu.dot_dimension_numbers<[1], [0], [0], [1], [0, 0, 1, 1], [], []>} : vector<128x1608xbf16>, vector<1608x256xbf16>, vector<128x256xf32> -> vector<128x256xf32>
    %c0_115 = arith.constant 0 : index
    %c0_116 = arith.constant 0 : index
    %307 = vector.load %arg5[%c0_115, %c0_116] : memref<128x1xf32, #tpu.memory_space<vmem>>, vector<128x1xf32>
    %308 = vector.broadcast %307 : vector<128x1xf32> to vector<128x256xf32>
    %309 = arith.addf %306, %308 : vector<128x256xf32>
    %310 = vector.extract_strided_slice %309 {offsets = [0, 0], sizes = [32, 256], strides = [1, 1]} : vector<128x256xf32> to vector<32x256xf32>
    %311 = vector.extract_strided_slice %309 {offsets = [64, 0], sizes = [32, 256], strides = [1, 1]} : vector<128x256xf32> to vector<32x256xf32>
    %312 = tpu.concatenate %310, %311 in 0 : vector<32x256xf32>, vector<32x256xf32> -> vector<64x256xf32>
    %313 = arith.mulf %312, %312 : vector<64x256xf32>
    %314 = tpu.concatenate %312, %313 in 0 : vector<64x256xf32>, vector<64x256xf32> -> vector<128x256xf32>
    %cst_117 = arith.constant dense<0.000000e+00> : vector<128xf32>
    %315 = vector.multi_reduction <add>, %314, %cst_117 [1] : vector<128x256xf32> to vector<128xf32>
    %316 = vector.shape_cast %315 : vector<128xf32> to vector<128x1xf32>
    %317 = vector.extract_strided_slice %316 {offsets = [0, 0], sizes = [16, 1], strides = [1, 1]} : vector<128x1xf32> to vector<16x1xf32>
    %cst_118 = arith.constant dense<0.000000e+00> : vector<1xf32>
    %318 = vector.multi_reduction <add>, %317, %cst_118 [0] : vector<16x1xf32> to vector<1xf32>
    %319 = vector.shape_cast %318 : vector<1xf32> to vector<1x1xf32>
    %cst_119 = arith.constant 2.44140625E-4 : f32
    %320 = vector.broadcast %cst_119 : f32 to vector<1x1xf32>
    %321 = arith.mulf %319, %320 : vector<1x1xf32>
    %322 = vector.extract_strided_slice %316 {offsets = [64, 0], sizes = [16, 1], strides = [1, 1]} : vector<128x1xf32> to vector<16x1xf32>
    %cst_120 = arith.constant dense<0.000000e+00> : vector<1xf32>
    %323 = vector.multi_reduction <add>, %322, %cst_120 [0] : vector<16x1xf32> to vector<1xf32>
    %324 = vector.shape_cast %323 : vector<1xf32> to vector<1x1xf32>
    %cst_121 = arith.constant 2.44140625E-4 : f32
    %325 = vector.broadcast %cst_121 : f32 to vector<1x1xf32>
    %326 = arith.mulf %324, %325 : vector<1x1xf32>
    %327 = arith.mulf %321, %321 : vector<1x1xf32>
    %328 = arith.subf %326, %327 : vector<1x1xf32>
    %cst_122 = arith.constant 0.000000e+00 : f32
    %329 = vector.broadcast %cst_122 : f32 to vector<1x1xf32>
    %330 = arith.maximumf %328, %329 : vector<1x1xf32>
    %331 = vector.extract_strided_slice %316 {offsets = [16, 0], sizes = [16, 1], strides = [1, 1]} : vector<128x1xf32> to vector<16x1xf32>
    %cst_123 = arith.constant dense<0.000000e+00> : vector<1xf32>
    %332 = vector.multi_reduction <add>, %331, %cst_123 [0] : vector<16x1xf32> to vector<1xf32>
    %333 = vector.shape_cast %332 : vector<1xf32> to vector<1x1xf32>
    %cst_124 = arith.constant 2.44140625E-4 : f32
    %334 = vector.broadcast %cst_124 : f32 to vector<1x1xf32>
    %335 = arith.mulf %333, %334 : vector<1x1xf32>
    %336 = vector.extract_strided_slice %316 {offsets = [80, 0], sizes = [16, 1], strides = [1, 1]} : vector<128x1xf32> to vector<16x1xf32>
    %cst_125 = arith.constant dense<0.000000e+00> : vector<1xf32>
    %337 = vector.multi_reduction <add>, %336, %cst_125 [0] : vector<16x1xf32> to vector<1xf32>
    %338 = vector.shape_cast %337 : vector<1xf32> to vector<1x1xf32>
    %cst_126 = arith.constant 2.44140625E-4 : f32
    %339 = vector.broadcast %cst_126 : f32 to vector<1x1xf32>
    %340 = arith.mulf %338, %339 : vector<1x1xf32>
    %341 = arith.mulf %335, %335 : vector<1x1xf32>
    %342 = arith.subf %340, %341 : vector<1x1xf32>
    %cst_127 = arith.constant 0.000000e+00 : f32
    %343 = vector.broadcast %cst_127 : f32 to vector<1x1xf32>
    %344 = arith.maximumf %342, %343 : vector<1x1xf32>
    %345 = vector.extract_strided_slice %316 {offsets = [32, 0], sizes = [16, 1], strides = [1, 1]} : vector<128x1xf32> to vector<16x1xf32>
    %cst_128 = arith.constant dense<0.000000e+00> : vector<1xf32>
    %346 = vector.multi_reduction <add>, %345, %cst_128 [0] : vector<16x1xf32> to vector<1xf32>
    %347 = vector.shape_cast %346 : vector<1xf32> to vector<1x1xf32>
    %cst_129 = arith.constant 2.44140625E-4 : f32
    %348 = vector.broadcast %cst_129 : f32 to vector<1x1xf32>
    %349 = arith.mulf %347, %348 : vector<1x1xf32>
    %350 = vector.extract_strided_slice %316 {offsets = [96, 0], sizes = [16, 1], strides = [1, 1]} : vector<128x1xf32> to vector<16x1xf32>
    %cst_130 = arith.constant dense<0.000000e+00> : vector<1xf32>
    %351 = vector.multi_reduction <add>, %350, %cst_130 [0] : vector<16x1xf32> to vector<1xf32>
    %352 = vector.shape_cast %351 : vector<1xf32> to vector<1x1xf32>
    %cst_131 = arith.constant 2.44140625E-4 : f32
    %353 = vector.broadcast %cst_131 : f32 to vector<1x1xf32>
    %354 = arith.mulf %352, %353 : vector<1x1xf32>
    %355 = arith.mulf %349, %349 : vector<1x1xf32>
    %356 = arith.subf %354, %355 : vector<1x1xf32>
    %cst_132 = arith.constant 0.000000e+00 : f32
    %357 = vector.broadcast %cst_132 : f32 to vector<1x1xf32>
    %358 = arith.maximumf %356, %357 : vector<1x1xf32>
    %359 = vector.extract_strided_slice %316 {offsets = [48, 0], sizes = [16, 1], strides = [1, 1]} : vector<128x1xf32> to vector<16x1xf32>
    %cst_133 = arith.constant dense<0.000000e+00> : vector<1xf32>
    %360 = vector.multi_reduction <add>, %359, %cst_133 [0] : vector<16x1xf32> to vector<1xf32>
    %361 = vector.shape_cast %360 : vector<1xf32> to vector<1x1xf32>
    %cst_134 = arith.constant 2.44140625E-4 : f32
    %362 = vector.broadcast %cst_134 : f32 to vector<1x1xf32>
    %363 = arith.mulf %361, %362 : vector<1x1xf32>
    %364 = vector.extract_strided_slice %316 {offsets = [112, 0], sizes = [16, 1], strides = [1, 1]} : vector<128x1xf32> to vector<16x1xf32>
    %cst_135 = arith.constant dense<0.000000e+00> : vector<1xf32>
    %365 = vector.multi_reduction <add>, %364, %cst_135 [0] : vector<16x1xf32> to vector<1xf32>
    %366 = vector.shape_cast %365 : vector<1xf32> to vector<1x1xf32>
    %cst_136 = arith.constant 2.44140625E-4 : f32
    %367 = vector.broadcast %cst_136 : f32 to vector<1x1xf32>
    %368 = arith.mulf %366, %367 : vector<1x1xf32>
    %369 = arith.mulf %363, %363 : vector<1x1xf32>
    %370 = arith.subf %368, %369 : vector<1x1xf32>
    %cst_137 = arith.constant 0.000000e+00 : f32
    %371 = vector.broadcast %cst_137 : f32 to vector<1x1xf32>
    %372 = arith.maximumf %370, %371 : vector<1x1xf32>
    %373 = vector.extract_strided_slice %309 {offsets = [0, 0], sizes = [16, 256], strides = [1, 1]} : vector<128x256xf32> to vector<16x256xf32>
    %374 = vector.broadcast %321 : vector<1x1xf32> to vector<16x256xf32>
    %375 = arith.subf %373, %374 : vector<16x256xf32>
    %cst_138 = arith.constant 9.99999974E-6 : f32
    %376 = vector.broadcast %cst_138 : f32 to vector<1x1xf32>
    %377 = arith.addf %330, %376 : vector<1x1xf32>
    %378 = math.rsqrt %377 : vector<1x1xf32>
    %379 = vector.broadcast %378 : vector<1x1xf32> to vector<16x256xf32>
    %380 = arith.mulf %375, %379 : vector<16x256xf32>
    %c0_139 = arith.constant 0 : index
    %c0_140 = arith.constant 0 : index
    %c0_141 = arith.constant 0 : index
    %381 = vector.load %arg7[%c0_139, %c0_140, %c0_141] : memref<6x16x1xf32, #tpu.memory_space<vmem>>, vector<1x16x1xf32>
    %382 = vector.shape_cast %381 : vector<1x16x1xf32> to vector<16x1xf32>
    %383 = vector.broadcast %382 : vector<16x1xf32> to vector<16x256xf32>
    %384 = arith.mulf %380, %383 : vector<16x256xf32>
    %c0_142 = arith.constant 0 : index
    %c0_143 = arith.constant 0 : index
    %c0_144 = arith.constant 0 : index
    %385 = vector.load %arg8[%c0_142, %c0_143, %c0_144] : memref<6x16x1xf32, #tpu.memory_space<vmem>>, vector<1x16x1xf32>
    %386 = vector.shape_cast %385 : vector<1x16x1xf32> to vector<16x1xf32>
    %387 = vector.broadcast %386 : vector<16x1xf32> to vector<16x256xf32>
    %388 = arith.addf %384, %387 : vector<16x256xf32>
    %389 = vector.extract_strided_slice %309 {offsets = [64, 0], sizes = [16, 256], strides = [1, 1]} : vector<128x256xf32> to vector<16x256xf32>
    %390 = vector.broadcast %349 : vector<1x1xf32> to vector<16x256xf32>
    %391 = arith.subf %389, %390 : vector<16x256xf32>
    %cst_145 = arith.constant 9.99999974E-6 : f32
    %392 = vector.broadcast %cst_145 : f32 to vector<1x1xf32>
    %393 = arith.addf %358, %392 : vector<1x1xf32>
    %394 = math.rsqrt %393 : vector<1x1xf32>
    %395 = vector.broadcast %394 : vector<1x1xf32> to vector<16x256xf32>
    %396 = arith.mulf %391, %395 : vector<16x256xf32>
    %c1_146 = arith.constant 1 : index
    %c0_147 = arith.constant 0 : index
    %c0_148 = arith.constant 0 : index
    %397 = vector.load %arg7[%c1_146, %c0_147, %c0_148] : memref<6x16x1xf32, #tpu.memory_space<vmem>>, vector<1x16x1xf32>
    %398 = vector.shape_cast %397 : vector<1x16x1xf32> to vector<16x1xf32>
    %399 = vector.broadcast %398 : vector<16x1xf32> to vector<16x256xf32>
    %400 = arith.mulf %396, %399 : vector<16x256xf32>
    %c1_149 = arith.constant 1 : index
    %c0_150 = arith.constant 0 : index
    %c0_151 = arith.constant 0 : index
    %401 = vector.load %arg8[%c1_149, %c0_150, %c0_151] : memref<6x16x1xf32, #tpu.memory_space<vmem>>, vector<1x16x1xf32>
    %402 = vector.shape_cast %401 : vector<1x16x1xf32> to vector<16x1xf32>
    %403 = vector.broadcast %402 : vector<16x1xf32> to vector<16x256xf32>
    %404 = arith.addf %400, %403 : vector<16x256xf32>
    %405 = arith.addf %388, %404 : vector<16x256xf32>
    %406 = arith.negf %405 : vector<16x256xf32>
    %407 = math.exp %406 : vector<16x256xf32>
    %cst_152 = arith.constant 1.000000e+00 : f32
    %408 = vector.broadcast %cst_152 : f32 to vector<16x256xf32>
    %409 = arith.addf %408, %407 : vector<16x256xf32>
    %410 = arith.divf %408, %409 : vector<16x256xf32>
    %411 = vector.extract_strided_slice %309 {offsets = [16, 0], sizes = [16, 256], strides = [1, 1]} : vector<128x256xf32> to vector<16x256xf32>
    %412 = vector.broadcast %335 : vector<1x1xf32> to vector<16x256xf32>
    %413 = arith.subf %411, %412 : vector<16x256xf32>
    %cst_153 = arith.constant 9.99999974E-6 : f32
    %414 = vector.broadcast %cst_153 : f32 to vector<1x1xf32>
    %415 = arith.addf %344, %414 : vector<1x1xf32>
    %416 = math.rsqrt %415 : vector<1x1xf32>
    %417 = vector.broadcast %416 : vector<1x1xf32> to vector<16x256xf32>
    %418 = arith.mulf %413, %417 : vector<16x256xf32>
    %c2_154 = arith.constant 2 : index
    %c0_155 = arith.constant 0 : index
    %c0_156 = arith.constant 0 : index
    %419 = vector.load %arg7[%c2_154, %c0_155, %c0_156] : memref<6x16x1xf32, #tpu.memory_space<vmem>>, vector<1x16x1xf32>
    %420 = vector.shape_cast %419 : vector<1x16x1xf32> to vector<16x1xf32>
    %421 = vector.broadcast %420 : vector<16x1xf32> to vector<16x256xf32>
    %422 = arith.mulf %418, %421 : vector<16x256xf32>
    %c2_157 = arith.constant 2 : index
    %c0_158 = arith.constant 0 : index
    %c0_159 = arith.constant 0 : index
    %423 = vector.load %arg8[%c2_157, %c0_158, %c0_159] : memref<6x16x1xf32, #tpu.memory_space<vmem>>, vector<1x16x1xf32>
    %424 = vector.shape_cast %423 : vector<1x16x1xf32> to vector<16x1xf32>
    %425 = vector.broadcast %424 : vector<16x1xf32> to vector<16x256xf32>
    %426 = arith.addf %422, %425 : vector<16x256xf32>
    %427 = vector.extract_strided_slice %309 {offsets = [80, 0], sizes = [16, 256], strides = [1, 1]} : vector<128x256xf32> to vector<16x256xf32>
    %428 = vector.broadcast %363 : vector<1x1xf32> to vector<16x256xf32>
    %429 = arith.subf %427, %428 : vector<16x256xf32>
    %cst_160 = arith.constant 9.99999974E-6 : f32
    %430 = vector.broadcast %cst_160 : f32 to vector<1x1xf32>
    %431 = arith.addf %372, %430 : vector<1x1xf32>
    %432 = math.rsqrt %431 : vector<1x1xf32>
    %433 = vector.broadcast %432 : vector<1x1xf32> to vector<16x256xf32>
    %434 = arith.mulf %429, %433 : vector<16x256xf32>
    %c3_161 = arith.constant 3 : index
    %c0_162 = arith.constant 0 : index
    %c0_163 = arith.constant 0 : index
    %435 = vector.load %arg7[%c3_161, %c0_162, %c0_163] : memref<6x16x1xf32, #tpu.memory_space<vmem>>, vector<1x16x1xf32>
    %436 = vector.shape_cast %435 : vector<1x16x1xf32> to vector<16x1xf32>
    %437 = vector.broadcast %436 : vector<16x1xf32> to vector<16x256xf32>
    %438 = arith.mulf %434, %437 : vector<16x256xf32>
    %c3_164 = arith.constant 3 : index
    %c0_165 = arith.constant 0 : index
    %c0_166 = arith.constant 0 : index
    %439 = vector.load %arg8[%c3_164, %c0_165, %c0_166] : memref<6x16x1xf32, #tpu.memory_space<vmem>>, vector<1x16x1xf32>
    %440 = vector.shape_cast %439 : vector<1x16x1xf32> to vector<16x1xf32>
    %441 = vector.broadcast %440 : vector<16x1xf32> to vector<16x256xf32>
    %442 = arith.addf %438, %441 : vector<16x256xf32>
    %443 = arith.addf %426, %442 : vector<16x256xf32>
    %444 = arith.negf %443 : vector<16x256xf32>
    %445 = math.exp %444 : vector<16x256xf32>
    %cst_167 = arith.constant 1.000000e+00 : f32
    %446 = vector.broadcast %cst_167 : f32 to vector<16x256xf32>
    %447 = arith.addf %446, %445 : vector<16x256xf32>
    %448 = arith.divf %446, %447 : vector<16x256xf32>
    %449 = vector.extract_strided_slice %309 {offsets = [32, 0], sizes = [16, 256], strides = [1, 1]} : vector<128x256xf32> to vector<16x256xf32>
    %450 = vector.extract_strided_slice %309 {offsets = [96, 0], sizes = [16, 256], strides = [1, 1]} : vector<128x256xf32> to vector<16x256xf32>
    %451 = arith.addf %449, %450 : vector<16x256xf32>
    %cst_168 = arith.constant 0.000000e+00 : f32
    %452 = vector.broadcast %cst_168 : f32 to vector<16x256xf32>
    %453 = arith.maximumf %451, %452 : vector<16x256xf32>
    %454 = vector.extract_strided_slice %309 {offsets = [48, 0], sizes = [16, 256], strides = [1, 1]} : vector<128x256xf32> to vector<16x256xf32>
    %455 = vector.extract_strided_slice %309 {offsets = [112, 0], sizes = [16, 256], strides = [1, 1]} : vector<128x256xf32> to vector<16x256xf32>
    %456 = arith.addf %454, %455 : vector<16x256xf32>
    %cst_169 = arith.constant 0.000000e+00 : f32
    %457 = vector.broadcast %cst_169 : f32 to vector<16x256xf32>
    %458 = arith.maximumf %456, %457 : vector<16x256xf32>
    %459 = arith.mulf %410, %453 : vector<16x256xf32>
    %cst_170 = arith.constant 1.000000e+00 : f32
    %460 = vector.broadcast %cst_170 : f32 to vector<16x256xf32>
    %461 = arith.subf %460, %410 : vector<16x256xf32>
    %462 = arith.mulf %461, %3 : vector<16x256xf32>
    %463 = arith.addf %459, %462 : vector<16x256xf32>
    %464 = arith.mulf %448, %458 : vector<16x256xf32>
    %cst_171 = arith.constant 1.000000e+00 : f32
    %465 = vector.broadcast %cst_171 : f32 to vector<16x256xf32>
    %466 = arith.subf %465, %448 : vector<16x256xf32>
    %467 = arith.mulf %466, %5 : vector<16x256xf32>
    %468 = arith.addf %464, %467 : vector<16x256xf32>
    %469 = tpu.concatenate %463, %468 in 0 : vector<16x256xf32>, vector<16x256xf32> -> vector<32x256xf32>
    %470 = arith.mulf %469, %469 : vector<32x256xf32>
    %471 = tpu.concatenate %469, %470 in 0 : vector<32x256xf32>, vector<32x256xf32> -> vector<64x256xf32>
    %cst_172 = arith.constant dense<0.000000e+00> : vector<64xf32>
    %472 = vector.multi_reduction <add>, %471, %cst_172 [1] : vector<64x256xf32> to vector<64xf32>
    %473 = vector.shape_cast %472 : vector<64xf32> to vector<64x1xf32>
    %474 = vector.extract_strided_slice %473 {offsets = [0, 0], sizes = [16, 1], strides = [1, 1]} : vector<64x1xf32> to vector<16x1xf32>
    %cst_173 = arith.constant dense<0.000000e+00> : vector<1xf32>
    %475 = vector.multi_reduction <add>, %474, %cst_173 [0] : vector<16x1xf32> to vector<1xf32>
    %476 = vector.shape_cast %475 : vector<1xf32> to vector<1x1xf32>
    %cst_174 = arith.constant 2.44140625E-4 : f32
    %477 = vector.broadcast %cst_174 : f32 to vector<1x1xf32>
    %478 = arith.mulf %476, %477 : vector<1x1xf32>
    %479 = vector.extract_strided_slice %473 {offsets = [32, 0], sizes = [16, 1], strides = [1, 1]} : vector<64x1xf32> to vector<16x1xf32>
    %cst_175 = arith.constant dense<0.000000e+00> : vector<1xf32>
    %480 = vector.multi_reduction <add>, %479, %cst_175 [0] : vector<16x1xf32> to vector<1xf32>
    %481 = vector.shape_cast %480 : vector<1xf32> to vector<1x1xf32>
    %cst_176 = arith.constant 2.44140625E-4 : f32
    %482 = vector.broadcast %cst_176 : f32 to vector<1x1xf32>
    %483 = arith.mulf %481, %482 : vector<1x1xf32>
    %484 = arith.mulf %478, %478 : vector<1x1xf32>
    %485 = arith.subf %483, %484 : vector<1x1xf32>
    %cst_177 = arith.constant 0.000000e+00 : f32
    %486 = vector.broadcast %cst_177 : f32 to vector<1x1xf32>
    %487 = arith.maximumf %485, %486 : vector<1x1xf32>
    %488 = vector.extract_strided_slice %473 {offsets = [16, 0], sizes = [16, 1], strides = [1, 1]} : vector<64x1xf32> to vector<16x1xf32>
    %cst_178 = arith.constant dense<0.000000e+00> : vector<1xf32>
    %489 = vector.multi_reduction <add>, %488, %cst_178 [0] : vector<16x1xf32> to vector<1xf32>
    %490 = vector.shape_cast %489 : vector<1xf32> to vector<1x1xf32>
    %cst_179 = arith.constant 2.44140625E-4 : f32
    %491 = vector.broadcast %cst_179 : f32 to vector<1x1xf32>
    %492 = arith.mulf %490, %491 : vector<1x1xf32>
    %493 = vector.extract_strided_slice %473 {offsets = [48, 0], sizes = [16, 1], strides = [1, 1]} : vector<64x1xf32> to vector<16x1xf32>
    %cst_180 = arith.constant dense<0.000000e+00> : vector<1xf32>
    %494 = vector.multi_reduction <add>, %493, %cst_180 [0] : vector<16x1xf32> to vector<1xf32>
    %495 = vector.shape_cast %494 : vector<1xf32> to vector<1x1xf32>
    %cst_181 = arith.constant 2.44140625E-4 : f32
    %496 = vector.broadcast %cst_181 : f32 to vector<1x1xf32>
    %497 = arith.mulf %495, %496 : vector<1x1xf32>
    %498 = arith.mulf %492, %492 : vector<1x1xf32>
    %499 = arith.subf %497, %498 : vector<1x1xf32>
    %cst_182 = arith.constant 0.000000e+00 : f32
    %500 = vector.broadcast %cst_182 : f32 to vector<1x1xf32>
    %501 = arith.maximumf %499, %500 : vector<1x1xf32>
    %502 = vector.broadcast %478 : vector<1x1xf32> to vector<16x256xf32>
    %503 = arith.subf %463, %502 : vector<16x256xf32>
    %cst_183 = arith.constant 9.99999974E-6 : f32
    %504 = vector.broadcast %cst_183 : f32 to vector<1x1xf32>
    %505 = arith.addf %487, %504 : vector<1x1xf32>
    %506 = math.rsqrt %505 : vector<1x1xf32>
    %507 = vector.broadcast %506 : vector<1x1xf32> to vector<16x256xf32>
    %508 = arith.mulf %503, %507 : vector<16x256xf32>
    %c4_184 = arith.constant 4 : index
    %c0_185 = arith.constant 0 : index
    %c0_186 = arith.constant 0 : index
    %509 = vector.load %arg7[%c4_184, %c0_185, %c0_186] : memref<6x16x1xf32, #tpu.memory_space<vmem>>, vector<1x16x1xf32>
    %510 = vector.shape_cast %509 : vector<1x16x1xf32> to vector<16x1xf32>
    %511 = vector.broadcast %510 : vector<16x1xf32> to vector<16x256xf32>
    %512 = arith.mulf %508, %511 : vector<16x256xf32>
    %c4_187 = arith.constant 4 : index
    %c0_188 = arith.constant 0 : index
    %c0_189 = arith.constant 0 : index
    %513 = vector.load %arg8[%c4_187, %c0_188, %c0_189] : memref<6x16x1xf32, #tpu.memory_space<vmem>>, vector<1x16x1xf32>
    %514 = vector.shape_cast %513 : vector<1x16x1xf32> to vector<16x1xf32>
    %515 = vector.broadcast %514 : vector<16x1xf32> to vector<16x256xf32>
    %516 = arith.addf %512, %515 : vector<16x256xf32>
    %cst_190 = arith.constant 0.000000e+00 : f32
    %517 = vector.broadcast %cst_190 : f32 to vector<16x256xf32>
    %518 = arith.maximumf %516, %517 : vector<16x256xf32>
    %c0_191 = arith.constant 0 : index
    %c0_192 = arith.constant 0 : index
    %c0_193 = arith.constant 0 : index
    %519 = vector.load %arg9[%c0_191, %c0_192, %c0_193] : memref<1x16x256xf32, #tpu.memory_space<vmem>>, vector<1x16x256xf32>
    %520 = vector.shape_cast %519 : vector<1x16x256xf32> to vector<16x256xf32>
    %521 = vector.shape_cast %518 : vector<16x256xf32> to vector<1x16x256xf32>
    tpu.vector_store %arg9[%c0_191, %c0_192, %c0_193], %521 {strides = array<i32>} : memref<1x16x256xf32, #tpu.memory_space<vmem>>, vector<1x16x256xf32>,
    %522 = vector.broadcast %492 : vector<1x1xf32> to vector<16x256xf32>
    %523 = arith.subf %468, %522 : vector<16x256xf32>
    %cst_194 = arith.constant 9.99999974E-6 : f32
    %524 = vector.broadcast %cst_194 : f32 to vector<1x1xf32>
    %525 = arith.addf %501, %524 : vector<1x1xf32>
    %526 = math.rsqrt %525 : vector<1x1xf32>
    %527 = vector.broadcast %526 : vector<1x1xf32> to vector<16x256xf32>
    %528 = arith.mulf %523, %527 : vector<16x256xf32>
    %c5_195 = arith.constant 5 : index
    %c0_196 = arith.constant 0 : index
    %c0_197 = arith.constant 0 : index
    %529 = vector.load %arg7[%c5_195, %c0_196, %c0_197] : memref<6x16x1xf32, #tpu.memory_space<vmem>>, vector<1x16x1xf32>
    %530 = vector.shape_cast %529 : vector<1x16x1xf32> to vector<16x1xf32>
    %531 = vector.broadcast %530 : vector<16x1xf32> to vector<16x256xf32>
    %532 = arith.mulf %528, %531 : vector<16x256xf32>
    %c5_198 = arith.constant 5 : index
    %c0_199 = arith.constant 0 : index
    %c0_200 = arith.constant 0 : index
    %533 = vector.load %arg8[%c5_198, %c0_199, %c0_200] : memref<6x16x1xf32, #tpu.memory_space<vmem>>, vector<1x16x1xf32>
    %534 = vector.shape_cast %533 : vector<1x16x1xf32> to vector<16x1xf32>
    %535 = vector.broadcast %534 : vector<16x1xf32> to vector<16x256xf32>
    %536 = arith.addf %532, %535 : vector<16x256xf32>
    %cst_201 = arith.constant 0.000000e+00 : f32
    %537 = vector.broadcast %cst_201 : f32 to vector<16x256xf32>
    %538 = arith.maximumf %536, %537 : vector<16x256xf32>
    %c0_202 = arith.constant 0 : index
    %c0_203 = arith.constant 0 : index
    %c0_204 = arith.constant 0 : index
    %539 = vector.load %arg10[%c0_202, %c0_203, %c0_204] : memref<1x16x256xf32, #tpu.memory_space<vmem>>, vector<1x16x256xf32>
    %540 = vector.shape_cast %539 : vector<1x16x256xf32> to vector<16x256xf32>
    %541 = vector.shape_cast %538 : vector<16x256xf32> to vector<1x16x256xf32>
    tpu.vector_store %arg10[%c0_202, %c0_203, %c0_204], %541 {strides = array<i32>} : memref<1x16x256xf32, #tpu.memory_space<vmem>>, vector<1x16x256xf32>,
    return
  }
  func.func @transform_0(%arg0: i32) -> (i32, i32, i32) {
    %c0_i32 = arith.constant 0 : i32
    %c0_i32_0 = arith.constant 0 : i32
    %c0_i32_1 = arith.constant 0 : i32
    return %arg0, %c0_i32, %c0_i32_0 : i32, i32, i32
  }
  func.func @transform_1(%arg0: i32) -> (i32, i32, i32) {
    %c0_i32 = arith.constant 0 : i32
    %c0_i32_0 = arith.constant 0 : i32
    %c0_i32_1 = arith.constant 0 : i32
    return %arg0, %c0_i32, %c0_i32_0 : i32, i32, i32
  }
  func.func @transform_2(%arg0: i32) -> (i32, i32, i32) {
    %c0_i32 = arith.constant 0 : i32
    %c0_i32_0 = arith.constant 0 : i32
    %c0_i32_1 = arith.constant 0 : i32
    return %arg0, %c0_i32, %c0_i32_0 : i32, i32, i32
  }
  func.func @transform_3(%arg0: i32) -> (i32, i32) {
    %c0_i32 = arith.constant 0 : i32
    %c0_i32_0 = arith.constant 0 : i32
    %c0_i32_1 = arith.constant 0 : i32
    return %c0_i32, %c0_i32_0 : i32, i32
  }
  func.func @transform_4(%arg0: i32) -> (i32, i32) {
    %c0_i32 = arith.constant 0 : i32
    %c0_i32_0 = arith.constant 0 : i32
    %c0_i32_1 = arith.constant 0 : i32
    return %c0_i32, %c0_i32_0 : i32, i32
  }
  func.func @transform_5(%arg0: i32) -> (i32, i32) {
    %c0_i32 = arith.constant 0 : i32
    %c0_i32_0 = arith.constant 0 : i32
    %c0_i32_1 = arith.constant 0 : i32
    return %c0_i32, %c0_i32_0 : i32, i32
  }
  func.func @transform_6(%arg0: i32) -> (i32, i32, i32) {
    %c0_i32 = arith.constant 0 : i32
    %c0_i32_0 = arith.constant 0 : i32
    %c0_i32_1 = arith.constant 0 : i32
    %c0_i32_2 = arith.constant 0 : i32
    return %c0_i32, %c0_i32_0, %c0_i32_1 : i32, i32, i32
  }
  func.func @transform_7(%arg0: i32) -> (i32, i32, i32) {
    %c0_i32 = arith.constant 0 : i32
    %c0_i32_0 = arith.constant 0 : i32
    %c0_i32_1 = arith.constant 0 : i32
    %c0_i32_2 = arith.constant 0 : i32
    return %c0_i32, %c0_i32_0, %c0_i32_1 : i32, i32, i32
  }
  func.func @transform_8(%arg0: i32) -> (i32, i32, i32) {
    %c0_i32 = arith.constant 0 : i32
    %c0_i32_0 = arith.constant 0 : i32
    %c0_i32_1 = arith.constant 0 : i32
    return %arg0, %c0_i32, %c0_i32_0 : i32, i32, i32
  }
  func.func @transform_9(%arg0: i32) -> (i32, i32, i32) {
    %c0_i32 = arith.constant 0 : i32
    %c0_i32_0 = arith.constant 0 : i32
    %c0_i32_1 = arith.constant 0 : i32
    return %arg0, %c0_i32, %c0_i32_0 : i32, i32, i32
  }
}

</mosaic_0001>

<llo_original>
// kernel: dale_rnn_cell.1
$region0: #{dale_rnn_cell.1}
  #allocation0 [shape = 'u32[]', space=smem, size = 0x4, offset = 0x4, fixed_abs, tag = 'smem constant byte address 0x4 - core index']
  #allocation1 [shape = 'u32[144,128]{1,0:T(1,128)}', space=vmem, size = 0x12000, scoped, tag = 'internal scratch']
  #allocation2 [shape = 'bf16[1608,256]{1,0:T(8,128)(2,1)}', space=vmem, size = 0xc9000, scoped, tag = 'scratch operand']
  %s0 = inlined_call_operand.vmem [shape: f32[2,8,256], index: 0, kind: input, shape index: {}]
  %s1 = inlined_call_operand.vmem [shape: f32[2,16,256], index: 1, kind: input, shape index: {}]
  %s2 = inlined_call_operand.vmem [shape: f32[2,16,256], index: 2, kind: input, shape index: {}]
  %s3 = inlined_call_operand.vmem [shape: bf16[128,1608], index: 3, kind: input, shape index: {}]
  %s4 = inlined_call_operand.vmem [shape: f32[128,1], index: 4, kind: input, shape index: {}]
  %s5 = inlined_call_operand.vmem [shape: f32[49,256], index: 5, kind: input, shape index: {}]
  %s6 = inlined_call_operand.vmem [shape: f32[6,16,1], index: 6, kind: input, shape index: {}]
  %s7 = inlined_call_operand.vmem [shape: f32[6,16,1], index: 7, kind: input, shape index: {}]
  %s8 = inlined_call_operand.vmem [shape: f32[2,16,256], index: 8, kind: output, shape index: {0}]
  %s9 = inlined_call_operand.vmem [shape: f32[2,16,256], index: 9, kind: output, shape index: {1}]
  %10 = xla_tuple %s8, %s9
  %s11 = sld [smem:[#allocation0]]
  $region73: #{dale_rnn_cell.1} parent=0
    _
  %s13 = ssub.s32 1, %s11
  %s14 = scalar_select 0, %s13, %s11
  loop: start=0, step=1, limit=4
  $region2: #{dale_rnn_cell.1} parent=0 // loop_pre_header
    _
  $region3: #{dale_rnn_cell.1} parent=0 // loop_header
    %s16 = sphi 0, %s20
    %p17 = scmp.ge.s32.totalorder %s16, 4
    %s26 = sphi 0, %s28
    %s29 = sphi 0, %s26
    %s30 = sphi 0, %s29
    %s46 = sphi 0, %s30
    %s52 = sphi 0, %s54
    %s55 = sphi 0, %s52
    %s56 = sphi 0, %s55
    %s72 = sphi 0, %s56
    %s78 = sphi 0, %s80
    %s81 = sphi 0, %s78
    %s82 = sphi 0, %s81
    %s98 = sphi 0, %s82
    %s102 = sphi 0, %s102
    %s104 = sphi 0, %s102
    %s105 = sphi 0, %s104
    %s119 = sphi 0, %s105
    %s123 = sphi 0, %s123
    %s125 = sphi 0, %s123
    %s126 = sphi 0, %s125
    %s140 = sphi 0, %s126
    %s144 = sphi 0, %s144
    %s146 = sphi 0, %s144
    %s147 = sphi 0, %s146
    %s161 = sphi 0, %s147
    %s165 = sphi 0, %s165
    %s167 = sphi 0, %s165
    %s168 = sphi 0, %s167
    %s182 = sphi 0, %s168
    %s186 = sphi 0, %s186
    %s188 = sphi 0, %s186
    %s189 = sphi 0, %s188
    %s203 = sphi 0, %s189
    %s209 = sphi 0, %s211
    %s212 = sphi 0, %s209
    %s213 = sphi 0, %s212
    %s229 = sphi 0, %s213
    %s235 = sphi 0, %s237
    %s238 = sphi 0, %s235
    %s239 = sphi 0, %s238
    %s255 = sphi 0, %s239
  $region4: #{dale_rnn_cell.1} parent=0 // loop_header_branch
    %19 = sbr.rel (%p17) target = $region8
  $region5: #{dale_rnn_cell.1} parent=0 // loop_body
    %s21 = ssub.s32 %s16, 1
    %s22 = ssub.s32 %s16, 2
    %s23 = sadd.s32 %s16, 1
    %s24 = ssub.s32 %s16, %s23
    %p25 = scmp.eq.s32.totalorder %s24, 0
    %s27 = sadd.s32 %s26, 1
    %s28 = scalar_select %p25, %s26, %s27
    %p31 = pneg %p25
    %p32 = scmp.eq.s32.totalorder %s16, 1
    %p33 = por %p31, %p32
    %p34 = scmp.ne.s32.totalorder %s26, %s29
    %p35 = scmp.eq.s32.totalorder %s16, 0
    %p36 = por %p34, %p35
    %p37 = scmp.ne.s32.totalorder %s26, %s29
    %p38 = scmp.eq.s32.totalorder %s21, 1
    %p39 = por %p37, %p38
    %p40 = scmp.ne.s32.totalorder %s29, %s30
    %p41 = scmp.eq.s32.totalorder %s21, 0
    %p42 = por %p40, %p41
    %p43 = scmp.ne.s32.totalorder %s29, %s30
    %p44 = scmp.eq.s32.totalorder %s22, 1
    %p45 = por %p43, %p44
    %p47 = scmp.ne.s32.totalorder %s30, %s46
    %p48 = scmp.eq.s32.totalorder %s22, 0
    %p49 = por %p47, %p48
    %s50 = ssub.s32 %s16, %s23
    %p51 = scmp.eq.s32.totalorder %s50, 0
    %s53 = sadd.s32 %s52, 1
    %s54 = scalar_select %p51, %s52, %s53
    %p57 = pneg %p51
    %p58 = scmp.eq.s32.totalorder %s16, 1
    %p59 = por %p57, %p58
    %p60 = scmp.ne.s32.totalorder %s52, %s55
    %p61 = scmp.eq.s32.totalorder %s16, 0
    %p62 = por %p60, %p61
    %p63 = scmp.ne.s32.totalorder %s52, %s55
    %p64 = scmp.eq.s32.totalorder %s21, 1
    %p65 = por %p63, %p64
    %p66 = scmp.ne.s32.totalorder %s55, %s56
    %p67 = scmp.eq.s32.totalorder %s21, 0
    %p68 = por %p66, %p67
    %p69 = scmp.ne.s32.totalorder %s55, %s56
    %p70 = scmp.eq.s32.totalorder %s22, 1
    %p71 = por %p69, %p70
    %p73 = scmp.ne.s32.totalorder %s56, %s72
    %p74 = scmp.eq.s32.totalorder %s22, 0
    %p75 = por %p73, %p74
    %s76 = ssub.s32 %s16, %s23
    %p77 = scmp.eq.s32.totalorder %s76, 0
    %s79 = sadd.s32 %s78, 1
    %s80 = scalar_select %p77, %s78, %s79
    %p83 = pneg %p77
    %p84 = scmp.eq.s32.totalorder %s16, 1
    %p85 = por %p83, %p84
    %p86 = scmp.ne.s32.totalorder %s78, %s81
    %p87 = scmp.eq.s32.totalorder %s16, 0
    %p88 = por %p86, %p87
    %p89 = scmp.ne.s32.totalorder %s78, %s81
    %p90 = scmp.eq.s32.totalorder %s21, 1
    %p91 = por %p89, %p90
    %p92 = scmp.ne.s32.totalorder %s81, %s82
    %p93 = scmp.eq.s32.totalorder %s21, 0
    %p94 = por %p92, %p93
    %p95 = scmp.ne.s32.totalorder %s81, %s82
    %p96 = scmp.eq.s32.totalorder %s22, 1
    %p97 = por %p95, %p96
    %p99 = scmp.ne.s32.totalorder %s82, %s98
    %p100 = scmp.eq.s32.totalorder %s22, 0
    %p101 = por %p99, %p100
    %s103 = sadd.s32 %s102, 1
    %p106 = scmp.eq.s32.totalorder %s16, 1
    %p107 = scmp.ne.s32.totalorder %s102, %s104
    %p108 = scmp.eq.s32.totalorder %s16, 0
    %p109 = por %p107, %p108
    %p110 = scmp.ne.s32.totalorder %s102, %s104
    %p111 = scmp.eq.s32.totalorder %s21, 1
    %p112 = por %p110, %p111
    %p113 = scmp.ne.s32.totalorder %s104, %s105
    %p114 = scmp.eq.s32.totalorder %s21, 0
    %p115 = por %p113, %p114
    %p116 = scmp.ne.s32.totalorder %s104, %s105
    %p117 = scmp.eq.s32.totalorder %s22, 1
    %p118 = por %p116, %p117
    %p120 = scmp.ne.s32.totalorder %s105, %s119
    %p121 = scmp.eq.s32.totalorder %s22, 0
    %p122 = por %p120, %p121
    %s124 = sadd.s32 %s123, 1
    %p127 = scmp.eq.s32.totalorder %s16, 1
    %p128 = scmp.ne.s32.totalorder %s123, %s125
    %p129 = scmp.eq.s32.totalorder %s16, 0
    %p130 = por %p128, %p129
    %p131 = scmp.ne.s32.totalorder %s123, %s125
    %p132 = scmp.eq.s32.totalorder %s21, 1
    %p133 = por %p131, %p132
    %p134 = scmp.ne.s32.totalorder %s125, %s126
    %p135 = scmp.eq.s32.totalorder %s21, 0
    %p136 = por %p134, %p135
    %p137 = scmp.ne.s32.totalorder %s125, %s126
    %p138 = scmp.eq.s32.totalorder %s22, 1
    %p139 = por %p137, %p138
    %p141 = scmp.ne.s32.totalorder %s126, %s140
    %p142 = scmp.eq.s32.totalorder %s22, 0
    %p143 = por %p141, %p142
    %s145 = sadd.s32 %s144, 1
    %p148 = scmp.eq.s32.totalorder %s16, 1
    %p149 = scmp.ne.s32.totalorder %s144, %s146
    %p150 = scmp.eq.s32.totalorder %s16, 0
    %p151 = por %p149, %p150
    %p152 = scmp.ne.s32.totalorder %s144, %s146
    %p153 = scmp.eq.s32.totalorder %s21, 1
    %p154 = por %p152, %p153
    %p155 = scmp.ne.s32.totalorder %s146, %s147
    %p156 = scmp.eq.s32.totalorder %s21, 0
    %p157 = por %p155, %p156
    %p158 = scmp.ne.s32.totalorder %s146, %s147
    %p159 = scmp.eq.s32.totalorder %s22, 1
    %p160 = por %p158, %p159
    %p162 = scmp.ne.s32.totalorder %s147, %s161
    %p163 = scmp.eq.s32.totalorder %s22, 0
    %p164 = por %p162, %p163
    %s166 = sadd.s32 %s165, 1
    %p169 = scmp.eq.s32.totalorder %s16, 1
    %p170 = scmp.ne.s32.totalorder %s165, %s167
    %p171 = scmp.eq.s32.totalorder %s16, 0
    %p172 = por %p170, %p171
    %p173 = scmp.ne.s32.totalorder %s165, %s167
    %p174 = scmp.eq.s32.totalorder %s21, 1
    %p175 = por %p173, %p174
    %p176 = scmp.ne.s32.totalorder %s167, %s168
    %p177 = scmp.eq.s32.totalorder %s21, 0
    %p178 = por %p176, %p177
    %p179 = scmp.ne.s32.totalorder %s167, %s168
    %p180 = scmp.eq.s32.totalorder %s22, 1
    %p181 = por %p179, %p180
    %p183 = scmp.ne.s32.totalorder %s168, %s182
    %p184 = scmp.eq.s32.totalorder %s22, 0
    %p185 = por %p183, %p184
    %s187 = sadd.s32 %s186, 1
    %p190 = scmp.eq.s32.totalorder %s16, 1
    %p191 = scmp.ne.s32.totalorder %s186, %s188
    %p192 = scmp.eq.s32.totalorder %s16, 0
    %p193 = por %p191, %p192
    %p194 = scmp.ne.s32.totalorder %s186, %s188
    %p195 = scmp.eq.s32.totalorder %s21, 1
    %p196 = por %p194, %p195
    %p197 = scmp.ne.s32.totalorder %s188, %s189
    %p198 = scmp.eq.s32.totalorder %s21, 0
    %p199 = por %p197, %p198
    %p200 = scmp.ne.s32.totalorder %s188, %s189
    %p201 = scmp.eq.s32.totalorder %s22, 1
    %p202 = por %p200, %p201
    %p204 = scmp.ne.s32.totalorder %s189, %s203
    %p205 = scmp.eq.s32.totalorder %s22, 0
    %p206 = por %p204, %p205
    %s207 = ssub.s32 %s16, %s23
    %p208 = scmp.eq.s32.totalorder %s207, 0
    %s210 = sadd.s32 %s209, 1
    %s211 = scalar_select %p208, %s209, %s210
    %p214 = pneg %p208
    %p215 = scmp.eq.s32.totalorder %s16, 1
    %p216 = por %p214, %p215
    %p217 = scmp.ne.s32.totalorder %s209, %s212
    %p218 = scmp.eq.s32.totalorder %s16, 0
    %p219 = por %p217, %p218
    %p220 = scmp.ne.s32.totalorder %s209, %s212
    %p221 = scmp.eq.s32.totalorder %s21, 1
    %p222 = por %p220, %p221
    %p223 = scmp.ne.s32.totalorder %s212, %s213
    %p224 = scmp.eq.s32.totalorder %s21, 0
    %p225 = por %p223, %p224
    %p226 = scmp.ne.s32.totalorder %s212, %s213
    %p227 = scmp.eq.s32.totalorder %s22, 1
    %p228 = por %p226, %p227
    %p230 = scmp.ne.s32.totalorder %s213, %s229
    %p231 = scmp.eq.s32.totalorder %s22, 0
    %p232 = por %p230, %p231
    %s233 = ssub.s32 %s16, %s23
    %p234 = scmp.eq.s32.totalorder %s233, 0
    %s236 = sadd.s32 %s235, 1
    %s237 = scalar_select %p234, %s235, %s236
    %p240 = pneg %p234
    %p241 = scmp.eq.s32.totalorder %s16, 1
    %p242 = por %p240, %p241
    %p243 = scmp.ne.s32.totalorder %s235, %s238
    %p244 = scmp.eq.s32.totalorder %s16, 0
    %p245 = por %p243, %p244
    %p246 = scmp.ne.s32.totalorder %s235, %s238
    %p247 = scmp.eq.s32.totalorder %s21, 1
    %p248 = por %p246, %p247
    %p249 = scmp.ne.s32.totalorder %s238, %s239
    %p250 = scmp.eq.s32.totalorder %s21, 0
    %p251 = por %p249, %p250
    %p252 = scmp.ne.s32.totalorder %s238, %s239
    %p253 = scmp.eq.s32.totalorder %s22, 1
    %p254 = por %p252, %p253
    %p256 = scmp.ne.s32.totalorder %s239, %s255
    %p257 = scmp.eq.s32.totalorder %s22, 0
    %p258 = por %p256, %p257
    %p259 = scmp.le.s32.totalorder 1, %s16
    %p260 = scmp.lt.s32.totalorder %s16, 3
    %p261 = pnand %p259, %p260
    %p262 = pneg %p261
    // Predicated region
    $region9: #{dale_rnn_cell.1} parent=5 // pred_check
      _
    $region10: #{dale_rnn_cell.1} parent=5 // pred_check_branch
      %264 = sbr.rel (%p261) target = $region12
    $region11: #{dale_rnn_cell.1} parent=5 // pred_region
      %s265 = ssub.s32 %s16, 1
      // Predicated region
      $region13: #{dale_rnn_cell.1} parent=11 // pred_check
        %p266 = pneg %p115
      $region14: #{dale_rnn_cell.1} parent=11 // pred_check_branch
        %268 = sbr.rel (%p266) target = $region16
      $region15: #{dale_rnn_cell.1} parent=11 // pred_region
        _
      $region16: #{dale_rnn_cell.1} parent=11 // pred_fallthru
        _
      // Predicated region
      $region17: #{dale_rnn_cell.1} parent=11 // pred_check
        %p269 = pneg %p136
      $region18: #{dale_rnn_cell.1} parent=11 // pred_check_branch
        %271 = sbr.rel (%p269) target = $region20
      $region19: #{dale_rnn_cell.1} parent=11 // pred_region
        _
      $region20: #{dale_rnn_cell.1} parent=11 // pred_fallthru
        _
      // Predicated region
      $region21: #{dale_rnn_cell.1} parent=11 // pred_check
        %p272 = pneg %p157
      $region22: #{dale_rnn_cell.1} parent=11 // pred_check_branch
        %274 = sbr.rel (%p272) target = $region24
      $region23: #{dale_rnn_cell.1} parent=11 // pred_region
        _
      $region24: #{dale_rnn_cell.1} parent=11 // pred_fallthru
        _
      // Predicated region
      $region25: #{dale_rnn_cell.1} parent=11 // pred_check
        %p275 = pneg %p178
      $region26: #{dale_rnn_cell.1} parent=11 // pred_check_branch
        %277 = sbr.rel (%p275) target = $region28
      $region27: #{dale_rnn_cell.1} parent=11 // pred_region
        _
      $region28: #{dale_rnn_cell.1} parent=11 // pred_fallthru
        _
      // Predicated region
      $region29: #{dale_rnn_cell.1} parent=11 // pred_check
        %p278 = pneg %p199
      $region30: #{dale_rnn_cell.1} parent=11 // pred_check_branch
        %280 = sbr.rel (%p278) target = $region32
      $region31: #{dale_rnn_cell.1} parent=11 // pred_region
        _
      $region32: #{dale_rnn_cell.1} parent=11 // pred_fallthru
        _
    $region12: #{dale_rnn_cell.1} parent=5 // pred_fallthru
      _
    %p281 = scmp.lt.s32.totalorder %s16, 2
    // Predicated region
    $region33: #{dale_rnn_cell.1} parent=5 // pred_check
      %p282 = pneg %p281
    $region34: #{dale_rnn_cell.1} parent=5 // pred_check_branch
      %284 = sbr.rel (%p282) target = $region36
    $region35: #{dale_rnn_cell.1} parent=5 // pred_region
      // Predicated region
      $region37: #{dale_rnn_cell.1} parent=35 // pred_check
        %p285 = pneg %p36
      $region38: #{dale_rnn_cell.1} parent=35 // pred_check_branch
        %287 = sbr.rel (%p285) target = $region40
      $region39: #{dale_rnn_cell.1} parent=35 // pred_region
        %p288 = scmp.lt.s32.totalorder %s16, 1
        %s289 = scalar_select %p288, %s16, 1
        %s290 = smul.addr %s289, 2
        %s291 = smul.addr %s290, 8
        %s292 = scalar_lea.vmem %s0, %s291
      $region40: #{dale_rnn_cell.1} parent=35 // pred_fallthru
        _
      // Predicated region
      $region41: #{dale_rnn_cell.1} parent=35 // pred_check
        %p293 = pneg %p62
      $region42: #{dale_rnn_cell.1} parent=35 // pred_check_branch
        %295 = sbr.rel (%p293) target = $region44
      $region43: #{dale_rnn_cell.1} parent=35 // pred_region
        %p296 = scmp.lt.s32.totalorder %s16, 1
        %s297 = scalar_select %p296, %s16, 1
        %s298 = smul.addr %s297, 4
        %s299 = smul.addr %s298, 8
        %s300 = scalar_lea.vmem %s1, %s299
      $region44: #{dale_rnn_cell.1} parent=35 // pred_fallthru
        _
      // Predicated region
      $region45: #{dale_rnn_cell.1} parent=35 // pred_check
        %p301 = pneg %p88
      $region46: #{dale_rnn_cell.1} parent=35 // pred_check_branch
        %303 = sbr.rel (%p301) target = $region48
      $region47: #{dale_rnn_cell.1} parent=35 // pred_region
        %p304 = scmp.lt.s32.totalorder %s16, 1
        %s305 = scalar_select %p304, %s16, 1
        %s306 = smul.addr %s305, 4
        %s307 = smul.addr %s306, 8
        %s308 = scalar_lea.vmem %s2, %s307
      $region48: #{dale_rnn_cell.1} parent=35 // pred_fallthru
        _
    $region36: #{dale_rnn_cell.1} parent=5 // pred_fallthru
      _
    %p309 = scmp.le.s32.totalorder 1, %s16
    %p310 = scmp.lt.s32.totalorder %s16, 3
    %p311 = pnand %p309, %p310
    %p312 = pneg %p311
    // Predicated region
    $region49: #{dale_rnn_cell.1} parent=5 // pred_check
      _
    $region50: #{dale_rnn_cell.1} parent=5 // pred_check_branch
      %314 = sbr.rel (%p311) target = $region52
    $region51: #{dale_rnn_cell.1} parent=5 // pred_region
      %s315 = ssub.s32 %s16, 1
      %p316 = scmp.lt.s32.totalorder %s21, 1
      %s317 = scalar_select %p316, %s21, 1
      %s318 = smul.addr %s317, 2
      %s319 = smul.addr %s318, 8
      %s320 = scalar_lea.vmem %s0, %s319
      %p321 = pneg %p42
      %p322 = pneg %p39
      %p323 = scmp.lt.s32.totalorder %s21, 1
      %s324 = scalar_select %p323, %s21, 1
      %s325 = smul.addr %s324, 4
      %s326 = smul.addr %s325, 8
      %s327 = scalar_lea.vmem %s1, %s326
      %p328 = pneg %p68
      %p329 = pneg %p65
      %p330 = scmp.lt.s32.totalorder %s21, 1
      %s331 = scalar_select %p330, %s21, 1
      %s332 = smul.addr %s331, 4
      %s333 = smul.addr %s332, 8
      %s334 = scalar_lea.vmem %s2, %s333
      %p335 = pneg %p94
      %p336 = pneg %p91
      %p337 = pneg %p115
      %p338 = pneg %p112
      %p339 = pneg %p136
      %p340 = pneg %p133
      %p341 = pneg %p157
      %p342 = pneg %p154
      %p343 = pneg %p178
      %p344 = pneg %p175
      %p345 = pneg %p199
      %p346 = pneg %p196
      %p347 = pneg %p225
      %p348 = pneg %p222
      %p349 = scmp.lt.s32.totalorder %s21, 1
      %s350 = scalar_select %p349, %s21, 1
      %s351 = smul.addr %s350, 4
      %s352 = smul.addr %s351, 8
      %s353 = scalar_lea.vmem %s8, %s352
      %p354 = pneg %p251
      %p355 = pneg %p248
      %p356 = scmp.lt.s32.totalorder %s21, 1
      %s357 = scalar_select %p356, %s21, 1
      %s358 = smul.addr %s357, 4
      %s359 = smul.addr %s358, 8
      %s360 = scalar_lea.vmem %s9, %s359
      %p361 = scmp.lt.s32.totalorder %s21, 1
      %s362 = scalar_select %p361, %s21, 1
      %s363 = smul.addr %s362, 2
      %s364 = smul.addr %s363, 8
      %s365 = scalar_lea.vmem %s0, %s364
      %p366 = scmp.lt.s32.totalorder %s21, 1
      %s367 = scalar_select %p366, %s21, 1
      %s368 = smul.addr %s367, 4
      %s369 = smul.addr %s368, 8
      %s370 = scalar_lea.vmem %s1, %s369
      %p371 = scmp.lt.s32.totalorder %s21, 1
      %s372 = scalar_select %p371, %s21, 1
      %s373 = smul.addr %s372, 4
      %s374 = smul.addr %s373, 8
      %s375 = scalar_lea.vmem %s2, %s374
      %p376 = scmp.lt.s32.totalorder %s21, 1
      %s377 = scalar_select %p376, %s21, 1
      %s378 = smul.addr %s377, 4
      %s379 = smul.addr %s378, 8
      %s380 = scalar_lea.vmem %s8, %s379
      %p381 = scmp.lt.s32.totalorder %s21, 1
      %s382 = scalar_select %p381, %s21, 1
      %s383 = smul.addr %s382, 4
      %s384 = smul.addr %s383, 8
      %s385 = scalar_lea.vmem %s9, %s384
      %v387 = vld [vmem:[%s365] sm:$0xff]
      %v388 = vld [vmem:[%s365 + $0x8] sm:$0xff]
      %v389 = vld [vmem:[%s370] sm:$0xff]
      %v390 = vld [vmem:[%s370 + $0x8] sm:$0xff]
      %v391 = vld [vmem:[%s370 + $0x10] sm:$0xff]
      %v392 = vld [vmem:[%s370 + $0x18] sm:$0xff]
      %v393 = vld [vmem:[%s375] sm:$0xff]
      %v394 = vld [vmem:[%s375 + $0x8] sm:$0xff]
      %v395 = vld [vmem:[%s375 + $0x10] sm:$0xff]
      %v396 = vld [vmem:[%s375 + $0x18] sm:$0xff]
      %397 = vrot.lane.b32.xlu0 %v389, 51
      %v398 = vpop.permute.xlu0 %397
      %399 = vrot.lane.b32.xlu0 %v391, 51
      %v400 = vpop.permute.xlu0 %399
      %401 = vrot.lane.b32.xlu0 %v393, 51
      %v402 = vpop.permute.xlu0 %401
      %403 = vrot.lane.b32.xlu0 %v395, 51
      %v404 = vpop.permute.xlu0 %403
      %405 = vrot.lane.b32.xlu0 %v390, 51
      %v406 = vpop.permute.xlu0 %405
      %407 = vrot.lane.b32.xlu0 %v392, 51
      %v408 = vpop.permute.xlu0 %407
      %409 = vrot.lane.b32.xlu0 %v394, 51
      %v410 = vpop.permute.xlu0 %409
      %411 = vrot.lane.b32.xlu0 %v396, 51
      %v412 = vpop.permute.xlu0 %411
      %v413 = vlaneseq
      %v414 = vand.u32 %v413, 127
      %vm415 = vcmp.lt.s32.totalorder %v414, 51
      %v416 = vsel %vm415, %v398, %v406
      %v417 = vsel %vm415, %v400, %v408
      %v418 = vsel %vm415, %v402, %v410
      %v419 = vsel %vm415, %v404, %v412
      %v420 = vsel %vm415, %v406, %v398
      %v421 = vsel %vm415, %v408, %v400
      %v422 = vsel %vm415, %v410, %v402
      %v423 = vsel %vm415, %v412, %v404
      %v424 = vld [vmem:[%s5] ss:$8 sm:$0x3]
      %v426 = vlaneseq
      %v427 = vshrl.u32 %v426, 7
      %v428 = vsub.s32 0, %v427
      %v429 = vrot.slane %v424, %v428
      %v430 = vlaneseq
      %v431 = vshrl.u32 %v430, 7
      %v432 = vsub.s32 1, %v431
      %v433 = vrot.slane %v424, %v432
      %v436 = vmul.f32 %v420, %v429
      %v437 = vmul.f32 %v416, %v433
      %v438 = vmul.f32 %v421, %v429
      %v439 = vmul.f32 %v417, %v433
      %v440 = vmul.f32 %v422, %v429
      %v441 = vmul.f32 %v418, %v433
      %v442 = vmul.f32 %v423, %v429
      %v443 = vmul.f32 %v419, %v433
      %v444 = vpack.c.bf16 %v438, %v436
      %v445 = vpack.c.bf16 %v439, %v437
      %v446 = vpack.c.bf16 %v442, %v440
      %v447 = vpack.c.bf16 %v443, %v441
      %v452 = vunpack.c.l.b16 %v444
      %v453 = vunpack.c.l.b16 %v445
      %v454 = vunpack.c.h.b16 %v444
      %v455 = vunpack.c.h.b16 %v445
      %v456 = vunpack.c.l.b16 %v446
      %v457 = vunpack.c.l.b16 %v447
      %v458 = vunpack.c.h.b16 %v446
      %v459 = vunpack.c.h.b16 %v447
      %v460 = vpack.c.b16 %v453, %v452
      %v461 = vpack.c.b16 %v455, %v454
      %v462 = vpack.c.b16 %v457, %v456
      %v463 = vpack.c.b16 %v459, %v458
      %468 = vst [vmem:[#allocation2] sm:$0xff] %v460
      %469 = vst [vmem:[#allocation2 + $0x8] sm:$0xff] %v461
      %470 = vst [vmem:[#allocation2 + $0x10] sm:$0xff] %v462
      %471 = vst [vmem:[#allocation2 + $0x18] sm:$0xff] %v463
      %472 = vrot.lane.b32.xlu0 %v389, 50
      %v473 = vpop.permute.xlu0 %472
      %474 = vrot.lane.b32.xlu0 %v391, 50
      %v475 = vpop.permute.xlu0 %474
      %476 = vrot.lane.b32.xlu0 %v393, 50
      %v477 = vpop.permute.xlu0 %476
      %478 = vrot.lane.b32.xlu0 %v395, 50
      %v479 = vpop.permute.xlu0 %478
      %480 = vrot.lane.b32.xlu0 %v390, 50
      %v481 = vpop.permute.xlu0 %480
      %482 = vrot.lane.b32.xlu0 %v392, 50
      %v483 = vpop.permute.xlu0 %482
      %484 = vrot.lane.b32.xlu0 %v394, 50
      %v485 = vpop.permute.xlu0 %484
      %486 = vrot.lane.b32.xlu0 %v396, 50
      %v487 = vpop.permute.xlu0 %486
      %vm488 = vcmp.lt.s32.totalorder %v414, 50
      %v489 = vsel %vm488, %v473, %v481
      %v490 = vsel %vm488, %v475, %v483
      %v491 = vsel %vm488, %v477, %v485
      %v492 = vsel %vm488, %v479, %v487
      %v493 = vsel %vm488, %v481, %v473
      %v494 = vsel %vm488, %v483, %v475
      %v495 = vsel %vm488, %v485, %v477
      %v496 = vsel %vm488, %v487, %v479
      %s497 = scalar_lea.vmem %s5, 1
      %v498 = vld [vmem:[%s497] ss:$8 sm:$0x3]
      %v500 = vlaneseq
      %v501 = vshrl.u32 %v500, 7
      %v502 = vsub.s32 0, %v501
      %v503 = vrot.slane %v498, %v502
      %v504 = vlaneseq
      %v505 = vshrl.u32 %v504, 7
      %v506 = vsub.s32 1, %v505
      %v507 = vrot.slane %v498, %v506
      %v510 = vmul.f32 %v493, %v503
      %v511 = vmul.f32 %v489, %v507
      %v512 = vmul.f32 %v494, %v503
      %v513 = vmul.f32 %v490, %v507
      %v514 = vmul.f32 %v495, %v503
      %v515 = vmul.f32 %v491, %v507
      %v516 = vmul.f32 %v496, %v503
      %v517 = vmul.f32 %v492, %v507
      %v518 = vpack.c.bf16 %v512, %v510
      %v519 = vpack.c.bf16 %v513, %v511
      %v520 = vpack.c.bf16 %v516, %v514
      %v521 = vpack.c.bf16 %v517, %v515
      %v526 = vunpack.c.l.b16 %v518
      %v527 = vunpack.c.l.b16 %v519
      %v528 = vunpack.c.h.b16 %v518
      %v529 = vunpack.c.h.b16 %v519
      %v530 = vunpack.c.l.b16 %v520
      %v531 = vunpack.c.l.b16 %v521
      %v532 = vunpack.c.h.b16 %v520
      %v533 = vunpack.c.h.b16 %v521
      %v534 = vpack.c.b16 %v527, %v526
      %v535 = vpack.c.b16 %v529, %v528
      %v536 = vpack.c.b16 %v531, %v530
      %v537 = vpack.c.b16 %v533, %v532
      %542 = vst [vmem:[#allocation2 + $0x20] sm:$0xff] %v534
      %543 = vst [vmem:[#allocation2 + $0x28] sm:$0xff] %v535
      %544 = vst [vmem:[#allocation2 + $0x30] sm:$0xff] %v536
      %545 = vst [vmem:[#allocation2 + $0x38] sm:$0xff] %v537
      %546 = vrot.lane.b32.xlu0 %v389, 49
      %v547 = vpop.permute.xlu0 %546
      %548 = vrot.lane.b32.xlu0 %v391, 49
      %v549 = vpop.permute.xlu0 %548
      %550 = vrot.lane.b32.xlu0 %v393, 49
      %v551 = vpop.permute.xlu0 %550
      %552 = vrot.lane.b32.xlu0 %v395, 49
      %v553 = vpop.permute.xlu0 %552
      %554 = vrot.lane.b32.xlu0 %v390, 49
      %v555 = vpop.permute.xlu0 %554
      %556 = vrot.lane.b32.xlu0 %v392, 49
      %v557 = vpop.permute.xlu0 %556
      %558 = vrot.lane.b32.xlu0 %v394, 49
      %v559 = vpop.permute.xlu0 %558
      %560 = vrot.lane.b32.xlu0 %v396, 49
      %v561 = vpop.permute.xlu0 %560
      %vm562 = vcmp.lt.s32.totalorder %v414, 49
      %v563 = vsel %vm562, %v547, %v555
      %v564 = vsel %vm562, %v549, %v557
      %v565 = vsel %vm562, %v551, %v559
      %v566 = vsel %vm562, %v553, %v561
      %v567 = vsel %vm562, %v555, %v547
      %v568 = vsel %vm562, %v557, %v549
      %v569 = vsel %vm562, %v559, %v551
      %v570 = vsel %vm562, %v561, %v553
      %s571 = scalar_lea.vmem %s5, 2
      %v572 = vld [vmem:[%s571] ss:$8 sm:$0x3]
      %v574 = vlaneseq
      %v575 = vshrl.u32 %v574, 7
      %v576 = vsub.s32 0, %v575
      %v577 = vrot.slane %v572, %v576
      %v578 = vlaneseq
      %v579 = vshrl.u32 %v578, 7
      %v580 = vsub.s32 1, %v579
      %v581 = vrot.slane %v572, %v580
      %v584 = vmul.f32 %v567, %v577
      %v585 = vmul.f32 %v563, %v581
      %v586 = vmul.f32 %v568, %v577
      %v587 = vmul.f32 %v564, %v581
      %v588 = vmul.f32 %v569, %v577
      %v589 = vmul.f32 %v565, %v581
      %v590 = vmul.f32 %v570, %v577
      %v591 = vmul.f32 %v566, %v581
      %v592 = vpack.c.bf16 %v586, %v584
      %v593 = vpack.c.bf16 %v587, %v585
      %v594 = vpack.c.bf16 %v590, %v588
      %v595 = vpack.c.bf16 %v591, %v589
      %v600 = vunpack.c.l.b16 %v592
      %v601 = vunpack.c.l.b16 %v593
      %v602 = vunpack.c.h.b16 %v592
      %v603 = vunpack.c.h.b16 %v593
      %v604 = vunpack.c.l.b16 %v594
      %v605 = vunpack.c.l.b16 %v595
      %v606 = vunpack.c.h.b16 %v594
      %v607 = vunpack.c.h.b16 %v595
      %v608 = vpack.c.b16 %v601, %v600
      %v609 = vpack.c.b16 %v603, %v602
      %v610 = vpack.c.b16 %v605, %v604
      %v611 = vpack.c.b16 %v607, %v606
      %616 = vst [vmem:[#allocation2 + $0x40] sm:$0xff] %v608
      %617 = vst [vmem:[#allocation2 + $0x48] sm:$0xff] %v609
      %618 = vst [vmem:[#allocation2 + $0x50] sm:$0xff] %v610
      %619 = vst [vmem:[#allocation2 + $0x58] sm:$0xff] %v611
      %620 = vrot.lane.b32.xlu0 %v389, 48
      %v621 = vpop.permute.xlu0 %620
      %622 = vrot.lane.b32.xlu0 %v391, 48
      %v623 = vpop.permute.xlu0 %622
      %624 = vrot.lane.b32.xlu0 %v393, 48
      %v625 = vpop.permute.xlu0 %624
      %626 = vrot.lane.b32.xlu0 %v395, 48
      %v627 = vpop.permute.xlu0 %626
      %628 = vrot.lane.b32.xlu0 %v390, 48
      %v629 = vpop.permute.xlu0 %628
      %630 = vrot.lane.b32.xlu0 %v392, 48
      %v631 = vpop.permute.xlu0 %630
      %632 = vrot.lane.b32.xlu0 %v394, 48
      %v633 = vpop.permute.xlu0 %632
      %634 = vrot.lane.b32.xlu0 %v396, 48
      %v635 = vpop.permute.xlu0 %634
      %vm636 = vcmp.lt.s32.totalorder %v414, 48
      %v637 = vsel %vm636, %v621, %v629
      %v638 = vsel %vm636, %v623, %v631
      %v639 = vsel %vm636, %v625, %v633
      %v640 = vsel %vm636, %v627, %v635
      %v641 = vsel %vm636, %v629, %v621
      %v642 = vsel %vm636, %v631, %v623
      %v643 = vsel %vm636, %v633, %v625
      %v644 = vsel %vm636, %v635, %v627
      %s645 = scalar_lea.vmem %s5, 3
      %v646 = vld [vmem:[%s645] ss:$8 sm:$0x3]
      %v648 = vlaneseq
      %v649 = vshrl.u32 %v648, 7
      %v650 = vsub.s32 0, %v649
      %v651 = vrot.slane %v646, %v650
      %v652 = vlaneseq
      %v653 = vshrl.u32 %v652, 7
      %v654 = vsub.s32 1, %v653
      %v655 = vrot.slane %v646, %v654
      %v658 = vmul.f32 %v641, %v651
      %v659 = vmul.f32 %v637, %v655
      %v660 = vmul.f32 %v642, %v651
      %v661 = vmul.f32 %v638, %v655
      %v662 = vmul.f32 %v643, %v651
      %v663 = vmul.f32 %v639, %v655
      %v664 = vmul.f32 %v644, %v651
      %v665 = vmul.f32 %v640, %v655
      %v666 = vpack.c.bf16 %v660, %v658
      %v667 = vpack.c.bf16 %v661, %v659
      %v668 = vpack.c.bf16 %v664, %v662
      %v669 = vpack.c.bf16 %v665, %v663
      %v674 = vunpack.c.l.b16 %v666
      %v675 = vunpack.c.l.b16 %v667
      %v676 = vunpack.c.h.b16 %v666
      %v677 = vunpack.c.h.b16 %v667
      %v678 = vunpack.c.l.b16 %v668
      %v679 = vunpack.c.l.b16 %v669
      %v680 = vunpack.c.h.b16 %v668
      %v681 = vunpack.c.h.b16 %v669
      %v682 = vpack.c.b16 %v675, %v674
      %v683 = vpack.c.b16 %v677, %v676
      %v684 = vpack.c.b16 %v679, %v678
      %v685 = vpack.c.b16 %v681, %v680
      %690 = vst [vmem:[#allocation2 + $0x60] sm:$0xff] %v682
      %691 = vst [vmem:[#allocation2 + $0x68] sm:$0xff] %v683
      %692 = vst [vmem:[#allocation2 + $0x70] sm:$0xff] %v684
      %693 = vst [vmem:[#allocation2 + $0x78] sm:$0xff] %v685
      %694 = vrot.lane.b32.xlu0 %v389, 47
      %v695 = vpop.permute.xlu0 %694
      %696 = vrot.lane.b32.xlu0 %v391, 47
      %v697 = vpop.permute.xlu0 %696
      %698 = vrot.lane.b32.xlu0 %v393, 47
      %v699 = vpop.permute.xlu0 %698
      %700 = vrot.lane.b32.xlu0 %v395, 47
      %v701 = vpop.permute.xlu0 %700
      %702 = vrot.lane.b32.xlu0 %v390, 47
      %v703 = vpop.permute.xlu0 %702
      %704 = vrot.lane.b32.xlu0 %v392, 47
      %v705 = vpop.permute.xlu0 %704
      %706 = vrot.lane.b32.xlu0 %v394, 47
      %v707 = vpop.permute.xlu0 %706
      %708 = vrot.lane.b32.xlu0 %v396, 47
      %v709 = vpop.permute.xlu0 %708
      %vm710 = vcmp.lt.s32.totalorder %v414, 47
      %v711 = vsel %vm710, %v695, %v703
      %v712 = vsel %vm710, %v697, %v705
      %v713 = vsel %vm710, %v699, %v707
      %v714 = vsel %vm710, %v701, %v709
      %v715 = vsel %vm710, %v703, %v695
      %v716 = vsel %vm710, %v705, %v697
      %v717 = vsel %vm710, %v707, %v699
      %v718 = vsel %vm710, %v709, %v701
      %s719 = scalar_lea.vmem %s5, 4
      %v720 = vld [vmem:[%s719] ss:$8 sm:$0x3]
      %v722 = vlaneseq
      %v723 = vshrl.u32 %v722, 7
      %v724 = vsub.s32 0, %v723
      %v725 = vrot.slane %v720, %v724
      %v726 = vlaneseq
      %v727 = vshrl.u32 %v726, 7
      %v728 = vsub.s32 1, %v727
      %v729 = vrot.slane %v720, %v728
      %v732 = vmul.f32 %v715, %v725
      %v733 = vmul.f32 %v711, %v729
      %v734 = vmul.f32 %v716, %v725
      %v735 = vmul.f32 %v712, %v729
      %v736 = vmul.f32 %v717, %v725
      %v737 = vmul.f32 %v713, %v729
      %v738 = vmul.f32 %v718, %v725
      %v739 = vmul.f32 %v714, %v729
      %v740 = vpack.c.bf16 %v734, %v732
      %v741 = vpack.c.bf16 %v735, %v733
      %v742 = vpack.c.bf16 %v738, %v736
      %v743 = vpack.c.bf16 %v739, %v737
      %v748 = vunpack.c.l.b16 %v740
      %v749 = vunpack.c.l.b16 %v741
      %v750 = vunpack.c.h.b16 %v740
      %v751 = vunpack.c.h.b16 %v741
      %v752 = vunpack.c.l.b16 %v742
      %v753 = vunpack.c.l.b16 %v743
      %v754 = vunpack.c.h.b16 %v742
      %v755 = vunpack.c.h.b16 %v743
      %v756 = vpack.c.b16 %v749, %v748
      %v757 = vpack.c.b16 %v751, %v750
      %v758 = vpack.c.b16 %v753, %v752
      %v759 = vpack.c.b16 %v755, %v754
      %764 = vst [vmem:[#allocation2 + $0x80] sm:$0xff] %v756
      %765 = vst [vmem:[#allocation2 + $0x88] sm:$0xff] %v757
      %766 = vst [vmem:[#allocation2 + $0x90] sm:$0xff] %v758
      %767 = vst [vmem:[#allocation2 + $0x98] sm:$0xff] %v759
      %768 = vrot.lane.b32.xlu0 %v389, 46
      %v769 = vpop.permute.xlu0 %768
      %770 = vrot.lane.b32.xlu0 %v391, 46
      %v771 = vpop.permute.xlu0 %770
      %772 = vrot.lane.b32.xlu0 %v393, 46
      %v773 = vpop.permute.xlu0 %772
      %774 = vrot.lane.b32.xlu0 %v395, 46
      %v775 = vpop.permute.xlu0 %774
      %776 = vrot.lane.b32.xlu0 %v390, 46
      %v777 = vpop.permute.xlu0 %776
      %778 = vrot.lane.b32.xlu0 %v392, 46
      %v779 = vpop.permute.xlu0 %778
      %780 = vrot.lane.b32.xlu0 %v394, 46
      %v781 = vpop.permute.xlu0 %780
      %782 = vrot.lane.b32.xlu0 %v396, 46
      %v783 = vpop.permute.xlu0 %782
      %vm784 = vcmp.lt.s32.totalorder %v414, 46
      %v785 = vsel %vm784, %v769, %v777
      %v786 = vsel %vm784, %v771, %v779
      %v787 = vsel %vm784, %v773, %v781
      %v788 = vsel %vm784, %v775, %v783
      %v789 = vsel %vm784, %v777, %v769
      %v790 = vsel %vm784, %v779, %v771
      %v791 = vsel %vm784, %v781, %v773
      %v792 = vsel %vm784, %v783, %v775
      %s793 = scalar_lea.vmem %s5, 5
      %v794 = vld [vmem:[%s793] ss:$8 sm:$0x3]
      %v796 = vlaneseq
      %v797 = vshrl.u32 %v796, 7
      %v798 = vsub.s32 0, %v797
      %v799 = vrot.slane %v794, %v798
      %v800 = vlaneseq
      %v801 = vshrl.u32 %v800, 7
      %v802 = vsub.s32 1, %v801
      %v803 = vrot.slane %v794, %v802
      %v806 = vmul.f32 %v789, %v799
      %v807 = vmul.f32 %v785, %v803
      %v808 = vmul.f32 %v790, %v799
      %v809 = vmul.f32 %v786, %v803
      %v810 = vmul.f32 %v791, %v799
      %v811 = vmul.f32 %v787, %v803
      %v812 = vmul.f32 %v792, %v799
      %v813 = vmul.f32 %v788, %v803
      %v814 = vpack.c.bf16 %v808, %v806
      %v815 = vpack.c.bf16 %v809, %v807
      %v816 = vpack.c.bf16 %v812, %v810
      %v817 = vpack.c.bf16 %v813, %v811
      %v822 = vunpack.c.l.b16 %v814
      %v823 = vunpack.c.l.b16 %v815
      %v824 = vunpack.c.h.b16 %v814
      %v825 = vunpack.c.h.b16 %v815
      %v826 = vunpack.c.l.b16 %v816
      %v827 = vunpack.c.l.b16 %v817
      %v828 = vunpack.c.h.b16 %v816
      %v829 = vunpack.c.h.b16 %v817
      %v830 = vpack.c.b16 %v823, %v822
      %v831 = vpack.c.b16 %v825, %v824
      %v832 = vpack.c.b16 %v827, %v826
      %v833 = vpack.c.b16 %v829, %v828
      %838 = vst [vmem:[#allocation2 + $0xa0] sm:$0xff] %v830
      %839 = vst [vmem:[#allocation2 + $0xa8] sm:$0xff] %v831
      %840 = vst [vmem:[#allocation2 + $0xb0] sm:$0xff] %v832
      %841 = vst [vmem:[#allocation2 + $0xb8] sm:$0xff] %v833
      %842 = vrot.lane.b32.xlu0 %v389, 45
      %v843 = vpop.permute.xlu0 %842
      %844 = vrot.lane.b32.xlu0 %v391, 45
      %v845 = vpop.permute.xlu0 %844
      %846 = vrot.lane.b32.xlu0 %v393, 45
      %v847 = vpop.permute.xlu0 %846
      %848 = vrot.lane.b32.xlu0 %v395, 45
      %v849 = vpop.permute.xlu0 %848
      %850 = vrot.lane.b32.xlu0 %v390, 45
      %v851 = vpop.permute.xlu0 %850
      %852 = vrot.lane.b32.xlu0 %v392, 45
      %v853 = vpop.permute.xlu0 %852
      %854 = vrot.lane.b32.xlu0 %v394, 45
      %v855 = vpop.permute.xlu0 %854
      %856 = vrot.lane.b32.xlu0 %v396, 45
      %v857 = vpop.permute.xlu0 %856
      %vm858 = vcmp.lt.s32.totalorder %v414, 45
      %v859 = vsel %vm858, %v843, %v851
      %v860 = vsel %vm858, %v845, %v853
      %v861 = vsel %vm858, %v847, %v855
      %v862 = vsel %vm858, %v849, %v857
      %v863 = vsel %vm858, %v851, %v843
      %v864 = vsel %vm858, %v853, %v845
      %v865 = vsel %vm858, %v855, %v847
      %v866 = vsel %vm858, %v857, %v849
      %s867 = scalar_lea.vmem %s5, 6
      %v868 = vld [vmem:[%s867] ss:$8 sm:$0x3]
      %v870 = vlaneseq
      %v871 = vshrl.u32 %v870, 7
      %v872 = vsub.s32 0, %v871
      %v873 = vrot.slane %v868, %v872
      %v874 = vlaneseq
      %v875 = vshrl.u32 %v874, 7
      %v876 = vsub.s32 1, %v875
      %v877 = vrot.slane %v868, %v876
      %v880 = vmul.f32 %v863, %v873
      %v881 = vmul.f32 %v859, %v877
      %v882 = vmul.f32 %v864, %v873
      %v883 = vmul.f32 %v860, %v877
      %v884 = vmul.f32 %v865, %v873
      %v885 = vmul.f32 %v861, %v877
      %v886 = vmul.f32 %v866, %v873
      %v887 = vmul.f32 %v862, %v877
      %v888 = vpack.c.bf16 %v882, %v880
      %v889 = vpack.c.bf16 %v883, %v881
      %v890 = vpack.c.bf16 %v886, %v884
      %v891 = vpack.c.bf16 %v887, %v885
      %v896 = vunpack.c.l.b16 %v888
      %v897 = vunpack.c.l.b16 %v889
      %v898 = vunpack.c.h.b16 %v888
      %v899 = vunpack.c.h.b16 %v889
      %v900 = vunpack.c.l.b16 %v890
      %v901 = vunpack.c.l.b16 %v891
      %v902 = vunpack.c.h.b16 %v890
      %v903 = vunpack.c.h.b16 %v891
      %v904 = vpack.c.b16 %v897, %v896
      %v905 = vpack.c.b16 %v899, %v898
      %v906 = vpack.c.b16 %v901, %v900
      %v907 = vpack.c.b16 %v903, %v902
      %912 = vst [vmem:[#allocation2 + $0xc0] sm:$0xff] %v904
      %913 = vst [vmem:[#allocation2 + $0xc8] sm:$0xff] %v905
      %914 = vst [vmem:[#allocation2 + $0xd0] sm:$0xff] %v906
      %915 = vst [vmem:[#allocation2 + $0xd8] sm:$0xff] %v907
      %916 = vrot.lane.b32.xlu0 %v389, 35
      %v917 = vpop.permute.xlu0 %916
      %918 = vrot.lane.b32.xlu0 %v391, 35
      %v919 = vpop.permute.xlu0 %918
      %920 = vrot.lane.b32.xlu0 %v393, 35
      %v921 = vpop.permute.xlu0 %920
      %922 = vrot.lane.b32.xlu0 %v395, 35
      %v923 = vpop.permute.xlu0 %922
      %924 = vrot.lane.b32.xlu0 %v390, 35
      %v925 = vpop.permute.xlu0 %924
      %926 = vrot.lane.b32.xlu0 %v392, 35
      %v927 = vpop.permute.xlu0 %926
      %928 = vrot.lane.b32.xlu0 %v394, 35
      %v929 = vpop.permute.xlu0 %928
      %930 = vrot.lane.b32.xlu0 %v396, 35
      %v931 = vpop.permute.xlu0 %930
      %vm932 = vcmp.lt.s32.totalorder %v414, 35
      %v933 = vsel %vm932, %v917, %v925
      %v934 = vsel %vm932, %v919, %v927
      %v935 = vsel %vm932, %v921, %v929
      %v936 = vsel %vm932, %v923, %v931
      %v937 = vsel %vm932, %v925, %v917
      %v938 = vsel %vm932, %v927, %v919
      %v939 = vsel %vm932, %v929, %v921
      %v940 = vsel %vm932, %v931, %v923
      %s941 = scalar_lea.vmem %s5, 7
      %v942 = vld [vmem:[%s941] ss:$8 sm:$0x3]
      %v944 = vlaneseq
      %v945 = vshrl.u32 %v944, 7
      %v946 = vsub.s32 0, %v945
      %v947 = vrot.slane %v942, %v946
      %v948 = vlaneseq
      %v949 = vshrl.u32 %v948, 7
      %v950 = vsub.s32 1, %v949
      %v951 = vrot.slane %v942, %v950
      %v954 = vmul.f32 %v937, %v947
      %v955 = vmul.f32 %v933, %v951
      %v956 = vmul.f32 %v938, %v947
      %v957 = vmul.f32 %v934, %v951
      %v958 = vmul.f32 %v939, %v947
      %v959 = vmul.f32 %v935, %v951
      %v960 = vmul.f32 %v940, %v947
      %v961 = vmul.f32 %v936, %v951
      %v962 = vpack.c.bf16 %v956, %v954
      %v963 = vpack.c.bf16 %v957, %v955
      %v964 = vpack.c.bf16 %v960, %v958
      %v965 = vpack.c.bf16 %v961, %v959
      %v970 = vunpack.c.l.b16 %v962
      %v971 = vunpack.c.l.b16 %v963
      %v972 = vunpack.c.h.b16 %v962
      %v973 = vunpack.c.h.b16 %v963
      %v974 = vunpack.c.l.b16 %v964
      %v975 = vunpack.c.l.b16 %v965
      %v976 = vunpack.c.h.b16 %v964
      %v977 = vunpack.c.h.b16 %v965
      %v978 = vpack.c.b16 %v971, %v970
      %v979 = vpack.c.b16 %v973, %v972
      %v980 = vpack.c.b16 %v975, %v974
      %v981 = vpack.c.b16 %v977, %v976
      %986 = vst [vmem:[#allocation2 + $0xe0] sm:$0xff] %v978
      %987 = vst [vmem:[#allocation2 + $0xe8] sm:$0xff] %v979
      %988 = vst [vmem:[#allocation2 + $0xf0] sm:$0xff] %v980
      %989 = vst [vmem:[#allocation2 + $0xf8] sm:$0xff] %v981
      %990 = vrot.lane.b32.xlu0 %v389, 34
      %v991 = vpop.permute.xlu0 %990
      %992 = vrot.lane.b32.xlu0 %v391, 34
      %v993 = vpop.permute.xlu0 %992
      %994 = vrot.lane.b32.xlu0 %v393, 34
      %v995 = vpop.permute.xlu0 %994
      %996 = vrot.lane.b32.xlu0 %v395, 34
      %v997 = vpop.permute.xlu0 %996
      %998 = vrot.lane.b32.xlu0 %v390, 34
      %v999 = vpop.permute.xlu0 %998
      %1000 = vrot.lane.b32.xlu0 %v392, 34
      %v1001 = vpop.permute.xlu0 %1000
      %1002 = vrot.lane.b32.xlu0 %v394, 34
      %v1003 = vpop.permute.xlu0 %1002
      %1004 = vrot.lane.b32.xlu0 %v396, 34
      %v1005 = vpop.permute.xlu0 %1004
      %vm1006 = vcmp.lt.s32.totalorder %v414, 34
      %v1007 = vsel %vm1006, %v991, %v999
      %v1008 = vsel %vm1006, %v993, %v1001
      %v1009 = vsel %vm1006, %v995, %v1003
      %v1010 = vsel %vm1006, %v997, %v1005
      %v1011 = vsel %vm1006, %v999, %v991
      %v1012 = vsel %vm1006, %v1001, %v993
      %v1013 = vsel %vm1006, %v1003, %v995
      %v1014 = vsel %vm1006, %v1005, %v997
      %s1015 = scalar_lea.vmem %s5, 16
      %v1016 = vld [vmem:[%s1015] ss:$8 sm:$0x3]
      %v1018 = vlaneseq
      %v1019 = vshrl.u32 %v1018, 7
      %v1020 = vsub.s32 0, %v1019
      %v1021 = vrot.slane %v1016, %v1020
      %v1022 = vlaneseq
      %v1023 = vshrl.u32 %v1022, 7
      %v1024 = vsub.s32 1, %v1023
      %v1025 = vrot.slane %v1016, %v1024
      %v1028 = vmul.f32 %v1011, %v1021
      %v1029 = vmul.f32 %v1007, %v1025
      %v1030 = vmul.f32 %v1012, %v1021
      %v1031 = vmul.f32 %v1008, %v1025
      %v1032 = vmul.f32 %v1013, %v1021
      %v1033 = vmul.f32 %v1009, %v1025
      %v1034 = vmul.f32 %v1014, %v1021
      %v1035 = vmul.f32 %v1010, %v1025
      %v1036 = vpack.c.bf16 %v1030, %v1028
      %v1037 = vpack.c.bf16 %v1031, %v1029
      %v1038 = vpack.c.bf16 %v1034, %v1032
      %v1039 = vpack.c.bf16 %v1035, %v1033
      %v1044 = vunpack.c.l.b16 %v1036
      %v1045 = vunpack.c.l.b16 %v1037
      %v1046 = vunpack.c.h.b16 %v1036
      %v1047 = vunpack.c.h.b16 %v1037
      %v1048 = vunpack.c.l.b16 %v1038
      %v1049 = vunpack.c.l.b16 %v1039
      %v1050 = vunpack.c.h.b16 %v1038
      %v1051 = vunpack.c.h.b16 %v1039
      %v1052 = vpack.c.b16 %v1045, %v1044
      %v1053 = vpack.c.b16 %v1047, %v1046
      %v1054 = vpack.c.b16 %v1049, %v1048
      %v1055 = vpack.c.b16 %v1051, %v1050
      %1060 = vst [vmem:[#allocation2 + $0x100] sm:$0xff] %v1052
      %1061 = vst [vmem:[#allocation2 + $0x108] sm:$0xff] %v1053
      %1062 = vst [vmem:[#allocation2 + $0x110] sm:$0xff] %v1054
      %1063 = vst [vmem:[#allocation2 + $0x118] sm:$0xff] %v1055
      %1064 = vrot.lane.b32.xlu0 %v389, 33
      %v1065 = vpop.permute.xlu0 %1064
      %1066 = vrot.lane.b32.xlu0 %v391, 33
      %v1067 = vpop.permute.xlu0 %1066
      %1068 = vrot.lane.b32.xlu0 %v393, 33
      %v1069 = vpop.permute.xlu0 %1068
      %1070 = vrot.lane.b32.xlu0 %v395, 33
      %v1071 = vpop.permute.xlu0 %1070
      %1072 = vrot.lane.b32.xlu0 %v390, 33
      %v1073 = vpop.permute.xlu0 %1072
      %1074 = vrot.lane.b32.xlu0 %v392, 33
      %v1075 = vpop.permute.xlu0 %1074
      %1076 = vrot.lane.b32.xlu0 %v394, 33
      %v1077 = vpop.permute.xlu0 %1076
      %1078 = vrot.lane.b32.xlu0 %v396, 33
      %v1079 = vpop.permute.xlu0 %1078
      %vm1080 = vcmp.lt.s32.totalorder %v414, 33
      %v1081 = vsel %vm1080, %v1065, %v1073
      %v1082 = vsel %vm1080, %v1067, %v1075
      %v1083 = vsel %vm1080, %v1069, %v1077
      %v1084 = vsel %vm1080, %v1071, %v1079
      %v1085 = vsel %vm1080, %v1073, %v1065
      %v1086 = vsel %vm1080, %v1075, %v1067
      %v1087 = vsel %vm1080, %v1077, %v1069
      %v1088 = vsel %vm1080, %v1079, %v1071
      %s1089 = scalar_lea.vmem %s5, 17
      %v1090 = vld [vmem:[%s1089] ss:$8 sm:$0x3]
      %v1092 = vlaneseq
      %v1093 = vshrl.u32 %v1092, 7
      %v1094 = vsub.s32 0, %v1093
      %v1095 = vrot.slane %v1090, %v1094
      %v1096 = vlaneseq
      %v1097 = vshrl.u32 %v1096, 7
      %v1098 = vsub.s32 1, %v1097
      %v1099 = vrot.slane %v1090, %v1098
      %v1102 = vmul.f32 %v1085, %v1095
      %v1103 = vmul.f32 %v1081, %v1099
      %v1104 = vmul.f32 %v1086, %v1095
      %v1105 = vmul.f32 %v1082, %v1099
      %v1106 = vmul.f32 %v1087, %v1095
      %v1107 = vmul.f32 %v1083, %v1099
      %v1108 = vmul.f32 %v1088, %v1095
      %v1109 = vmul.f32 %v1084, %v1099
      %v1110 = vpack.c.bf16 %v1104, %v1102
      %v1111 = vpack.c.bf16 %v1105, %v1103
      %v1112 = vpack.c.bf16 %v1108, %v1106
      %v1113 = vpack.c.bf16 %v1109, %v1107
      %v1118 = vunpack.c.l.b16 %v1110
      %v1119 = vunpack.c.l.b16 %v1111
      %v1120 = vunpack.c.h.b16 %v1110
      %v1121 = vunpack.c.h.b16 %v1111
      %v1122 = vunpack.c.l.b16 %v1112
      %v1123 = vunpack.c.l.b16 %v1113
      %v1124 = vunpack.c.h.b16 %v1112
      %v1125 = vunpack.c.h.b16 %v1113
      %v1126 = vpack.c.b16 %v1119, %v1118
      %v1127 = vpack.c.b16 %v1121, %v1120
      %v1128 = vpack.c.b16 %v1123, %v1122
      %v1129 = vpack.c.b16 %v1125, %v1124
      %1134 = vst [vmem:[#allocation2 + $0x120] sm:$0xff] %v1126
      %1135 = vst [vmem:[#allocation2 + $0x128] sm:$0xff] %v1127
      %1136 = vst [vmem:[#allocation2 + $0x130] sm:$0xff] %v1128
      %1137 = vst [vmem:[#allocation2 + $0x138] sm:$0xff] %v1129
      %1138 = vrot.lane.b32.xlu0 %v389, 32
      %v1139 = vpop.permute.xlu0 %1138
      %1140 = vrot.lane.b32.xlu0 %v391, 32
      %v1141 = vpop.permute.xlu0 %1140
      %1142 = vrot.lane.b32.xlu0 %v393, 32
      %v1143 = vpop.permute.xlu0 %1142
      %1144 = vrot.lane.b32.xlu0 %v395, 32
      %v1145 = vpop.permute.xlu0 %1144
      %1146 = vrot.lane.b32.xlu0 %v390, 32
      %v1147 = vpop.permute.xlu0 %1146
      %1148 = vrot.lane.b32.xlu0 %v392, 32
      %v1149 = vpop.permute.xlu0 %1148
      %1150 = vrot.lane.b32.xlu0 %v394, 32
      %v1151 = vpop.permute.xlu0 %1150
      %1152 = vrot.lane.b32.xlu0 %v396, 32
      %v1153 = vpop.permute.xlu0 %1152
      %vm1154 = vcmp.lt.s32.totalorder %v414, 32
      %v1155 = vsel %vm1154, %v1139, %v1147
      %v1156 = vsel %vm1154, %v1141, %v1149
      %v1157 = vsel %vm1154, %v1143, %v1151
      %v1158 = vsel %vm1154, %v1145, %v1153
      %v1159 = vsel %vm1154, %v1147, %v1139
      %v1160 = vsel %vm1154, %v1149, %v1141
      %v1161 = vsel %vm1154, %v1151, %v1143
      %v1162 = vsel %vm1154, %v1153, %v1145
      %s1163 = scalar_lea.vmem %s5, 18
      %v1164 = vld [vmem:[%s1163] ss:$8 sm:$0x3]
      %v1166 = vlaneseq
      %v1167 = vshrl.u32 %v1166, 7
      %v1168 = vsub.s32 0, %v1167
      %v1169 = vrot.slane %v1164, %v1168
      %v1170 = vlaneseq
      %v1171 = vshrl.u32 %v1170, 7
      %v1172 = vsub.s32 1, %v1171
      %v1173 = vrot.slane %v1164, %v1172
      %v1176 = vmul.f32 %v1159, %v1169
      %v1177 = vmul.f32 %v1155, %v1173
      %v1178 = vmul.f32 %v1160, %v1169
      %v1179 = vmul.f32 %v1156, %v1173
      %v1180 = vmul.f32 %v1161, %v1169
      %v1181 = vmul.f32 %v1157, %v1173
      %v1182 = vmul.f32 %v1162, %v1169
      %v1183 = vmul.f32 %v1158, %v1173
      %v1184 = vpack.c.bf16 %v1178, %v1176
      %v1185 = vpack.c.bf16 %v1179, %v1177
      %v1186 = vpack.c.bf16 %v1182, %v1180
      %v1187 = vpack.c.bf16 %v1183, %v1181
      %v1192 = vunpack.c.l.b16 %v1184
      %v1193 = vunpack.c.l.b16 %v1185
      %v1194 = vunpack.c.h.b16 %v1184
      %v1195 = vunpack.c.h.b16 %v1185
      %v1196 = vunpack.c.l.b16 %v1186
      %v1197 = vunpack.c.l.b16 %v1187
      %v1198 = vunpack.c.h.b16 %v1186
      %v1199 = vunpack.c.h.b16 %v1187
      %v1200 = vpack.c.b16 %v1193, %v1192
      %v1201 = vpack.c.b16 %v1195, %v1194
      %v1202 = vpack.c.b16 %v1197, %v1196
      %v1203 = vpack.c.b16 %v1199, %v1198
      %1208 = vst [vmem:[#allocation2 + $0x140] sm:$0xff] %v1200
      %1209 = vst [vmem:[#allocation2 + $0x148] sm:$0xff] %v1201
      %1210 = vst [vmem:[#allocation2 + $0x150] sm:$0xff] %v1202
      %1211 = vst [vmem:[#allocation2 + $0x158] sm:$0xff] %v1203
      %1212 = vrot.lane.b32.xlu0 %v389, 31
      %v1213 = vpop.permute.xlu0 %1212
      %1214 = vrot.lane.b32.xlu0 %v391, 31
      %v1215 = vpop.permute.xlu0 %1214
      %1216 = vrot.lane.b32.xlu0 %v393, 31
      %v1217 = vpop.permute.xlu0 %1216
      %1218 = vrot.lane.b32.xlu0 %v395, 31
      %v1219 = vpop.permute.xlu0 %1218
      %1220 = vrot.lane.b32.xlu0 %v390, 31
      %v1221 = vpop.permute.xlu0 %1220
      %1222 = vrot.lane.b32.xlu0 %v392, 31
      %v1223 = vpop.permute.xlu0 %1222
      %1224 = vrot.lane.b32.xlu0 %v394, 31
      %v1225 = vpop.permute.xlu0 %1224
      %1226 = vrot.lane.b32.xlu0 %v396, 31
      %v1227 = vpop.permute.xlu0 %1226
      %vm1228 = vcmp.lt.s32.totalorder %v414, 31
      %v1229 = vsel %vm1228, %v1213, %v1221
      %v1230 = vsel %vm1228, %v1215, %v1223
      %v1231 = vsel %vm1228, %v1217, %v1225
      %v1232 = vsel %vm1228, %v1219, %v1227
      %v1233 = vsel %vm1228, %v1221, %v1213
      %v1234 = vsel %vm1228, %v1223, %v1215
      %v1235 = vsel %vm1228, %v1225, %v1217
      %v1236 = vsel %vm1228, %v1227, %v1219
      %s1237 = scalar_lea.vmem %s5, 19
      %v1238 = vld [vmem:[%s1237] ss:$8 sm:$0x3]
      %v1240 = vlaneseq
      %v1241 = vshrl.u32 %v1240, 7
      %v1242 = vsub.s32 0, %v1241
      %v1243 = vrot.slane %v1238, %v1242
      %v1244 = vlaneseq
      %v1245 = vshrl.u32 %v1244, 7
      %v1246 = vsub.s32 1, %v1245
      %v1247 = vrot.slane %v1238, %v1246
      %v1250 = vmul.f32 %v1233, %v1243
      %v1251 = vmul.f32 %v1229, %v1247
      %v1252 = vmul.f32 %v1234, %v1243
      %v1253 = vmul.f32 %v1230, %v1247
      %v1254 = vmul.f32 %v1235, %v1243
      %v1255 = vmul.f32 %v1231, %v1247
      %v1256 = vmul.f32 %v1236, %v1243
      %v1257 = vmul.f32 %v1232, %v1247
      %v1258 = vpack.c.bf16 %v1252, %v1250
      %v1259 = vpack.c.bf16 %v1253, %v1251
      %v1260 = vpack.c.bf16 %v1256, %v1254
      %v1261 = vpack.c.bf16 %v1257, %v1255
      %v1266 = vunpack.c.l.b16 %v1258
      %v1267 = vunpack.c.l.b16 %v1259
      %v1268 = vunpack.c.h.b16 %v1258
      %v1269 = vunpack.c.h.b16 %v1259
      %v1270 = vunpack.c.l.b16 %v1260
      %v1271 = vunpack.c.l.b16 %v1261
      %v1272 = vunpack.c.h.b16 %v1260
      %v1273 = vunpack.c.h.b16 %v1261
      %v1274 = vpack.c.b16 %v1267, %v1266
      %v1275 = vpack.c.b16 %v1269, %v1268
      %v1276 = vpack.c.b16 %v1271, %v1270
      %v1277 = vpack.c.b16 %v1273, %v1272
      %1282 = vst [vmem:[#allocation2 + $0x160] sm:$0xff] %v1274
      %1283 = vst [vmem:[#allocation2 + $0x168] sm:$0xff] %v1275
      %1284 = vst [vmem:[#allocation2 + $0x170] sm:$0xff] %v1276
      %1285 = vst [vmem:[#allocation2 + $0x178] sm:$0xff] %v1277
      %1286 = vrot.lane.b32.xlu0 %v389, 30
      %v1287 = vpop.permute.xlu0 %1286
      %1288 = vrot.lane.b32.xlu0 %v391, 30
      %v1289 = vpop.permute.xlu0 %1288
      %1290 = vrot.lane.b32.xlu0 %v393, 30
      %v1291 = vpop.permute.xlu0 %1290
      %1292 = vrot.lane.b32.xlu0 %v395, 30
      %v1293 = vpop.permute.xlu0 %1292
      %1294 = vrot.lane.b32.xlu0 %v390, 30
      %v1295 = vpop.permute.xlu0 %1294
      %1296 = vrot.lane.b32.xlu0 %v392, 30
      %v1297 = vpop.permute.xlu0 %1296
      %1298 = vrot.lane.b32.xlu0 %v394, 30
      %v1299 = vpop.permute.xlu0 %1298
      %1300 = vrot.lane.b32.xlu0 %v396, 30
      %v1301 = vpop.permute.xlu0 %1300
      %vm1302 = vcmp.lt.s32.totalorder %v414, 30
      %v1303 = vsel %vm1302, %v1287, %v1295
      %v1304 = vsel %vm1302, %v1289, %v1297
      %v1305 = vsel %vm1302, %v1291, %v1299
      %v1306 = vsel %vm1302, %v1293, %v1301
      %v1307 = vsel %vm1302, %v1295, %v1287
      %v1308 = vsel %vm1302, %v1297, %v1289
      %v1309 = vsel %vm1302, %v1299, %v1291
      %v1310 = vsel %vm1302, %v1301, %v1293
      %s1311 = scalar_lea.vmem %s5, 20
      %v1312 = vld [vmem:[%s1311] ss:$8 sm:$0x3]
      %v1314 = vlaneseq
      %v1315 = vshrl.u32 %v1314, 7
      %v1316 = vsub.s32 0, %v1315
      %v1317 = vrot.slane %v1312, %v1316
      %v1318 = vlaneseq
      %v1319 = vshrl.u32 %v1318, 7
      %v1320 = vsub.s32 1, %v1319
      %v1321 = vrot.slane %v1312, %v1320
      %v1324 = vmul.f32 %v1307, %v1317
      %v1325 = vmul.f32 %v1303, %v1321
      %v1326 = vmul.f32 %v1308, %v1317
      %v1327 = vmul.f32 %v1304, %v1321
      %v1328 = vmul.f32 %v1309, %v1317
      %v1329 = vmul.f32 %v1305, %v1321
      %v1330 = vmul.f32 %v1310, %v1317
      %v1331 = vmul.f32 %v1306, %v1321
      %v1332 = vpack.c.bf16 %v1326, %v1324
      %v1333 = vpack.c.bf16 %v1327, %v1325
      %v1334 = vpack.c.bf16 %v1330, %v1328
      %v1335 = vpack.c.bf16 %v1331, %v1329
      %v1340 = vunpack.c.l.b16 %v1332
      %v1341 = vunpack.c.l.b16 %v1333
      %v1342 = vunpack.c.h.b16 %v1332
      %v1343 = vunpack.c.h.b16 %v1333
      %v1344 = vunpack.c.l.b16 %v1334
      %v1345 = vunpack.c.l.b16 %v1335
      %v1346 = vunpack.c.h.b16 %v1334
      %v1347 = vunpack.c.h.b16 %v1335
      %v1348 = vpack.c.b16 %v1341, %v1340
      %v1349 = vpack.c.b16 %v1343, %v1342
      %v1350 = vpack.c.b16 %v1345, %v1344
      %v1351 = vpack.c.b16 %v1347, %v1346
      %1356 = vst [vmem:[#allocation2 + $0x180] sm:$0xff] %v1348
      %1357 = vst [vmem:[#allocation2 + $0x188] sm:$0xff] %v1349
      %1358 = vst [vmem:[#allocation2 + $0x190] sm:$0xff] %v1350
      %1359 = vst [vmem:[#allocation2 + $0x198] sm:$0xff] %v1351
      %1360 = vrot.lane.b32.xlu0 %v389, 29
      %v1361 = vpop.permute.xlu0 %1360
      %1362 = vrot.lane.b32.xlu0 %v391, 29
      %v1363 = vpop.permute.xlu0 %1362
      %1364 = vrot.lane.b32.xlu0 %v393, 29
      %v1365 = vpop.permute.xlu0 %1364
      %1366 = vrot.lane.b32.xlu0 %v395, 29
      %v1367 = vpop.permute.xlu0 %1366
      %1368 = vrot.lane.b32.xlu0 %v390, 29
      %v1369 = vpop.permute.xlu0 %1368
      %1370 = vrot.lane.b32.xlu0 %v392, 29
      %v1371 = vpop.permute.xlu0 %1370
      %1372 = vrot.lane.b32.xlu0 %v394, 29
      %v1373 = vpop.permute.xlu0 %1372
      %1374 = vrot.lane.b32.xlu0 %v396, 29
      %v1375 = vpop.permute.xlu0 %1374
      %vm1376 = vcmp.lt.s32.totalorder %v414, 29
      %v1377 = vsel %vm1376, %v1361, %v1369
      %v1378 = vsel %vm1376, %v1363, %v1371
      %v1379 = vsel %vm1376, %v1365, %v1373
      %v1380 = vsel %vm1376, %v1367, %v1375
      %v1381 = vsel %vm1376, %v1369, %v1361
      %v1382 = vsel %vm1376, %v1371, %v1363
      %v1383 = vsel %vm1376, %v1373, %v1365
      %v1384 = vsel %vm1376, %v1375, %v1367
      %s1385 = scalar_lea.vmem %s5, 21
      %v1386 = vld [vmem:[%s1385] ss:$8 sm:$0x3]
      %v1388 = vlaneseq
      %v1389 = vshrl.u32 %v1388, 7
      %v1390 = vsub.s32 0, %v1389
      %v1391 = vrot.slane %v1386, %v1390
      %v1392 = vlaneseq
      %v1393 = vshrl.u32 %v1392, 7
      %v1394 = vsub.s32 1, %v1393
      %v1395 = vrot.slane %v1386, %v1394
      %v1398 = vmul.f32 %v1381, %v1391
      %v1399 = vmul.f32 %v1377, %v1395
      %v1400 = vmul.f32 %v1382, %v1391
      %v1401 = vmul.f32 %v1378, %v1395
      %v1402 = vmul.f32 %v1383, %v1391
      %v1403 = vmul.f32 %v1379, %v1395
      %v1404 = vmul.f32 %v1384, %v1391
      %v1405 = vmul.f32 %v1380, %v1395
      %v1406 = vpack.c.bf16 %v1400, %v1398
      %v1407 = vpack.c.bf16 %v1401, %v1399
      %v1408 = vpack.c.bf16 %v1404, %v1402
      %v1409 = vpack.c.bf16 %v1405, %v1403
      %v1414 = vunpack.c.l.b16 %v1406
      %v1415 = vunpack.c.l.b16 %v1407
      %v1416 = vunpack.c.h.b16 %v1406
      %v1417 = vunpack.c.h.b16 %v1407
      %v1418 = vunpack.c.l.b16 %v1408
      %v1419 = vunpack.c.l.b16 %v1409
      %v1420 = vunpack.c.h.b16 %v1408
      %v1421 = vunpack.c.h.b16 %v1409
      %v1422 = vpack.c.b16 %v1415, %v1414
      %v1423 = vpack.c.b16 %v1417, %v1416
      %v1424 = vpack.c.b16 %v1419, %v1418
      %v1425 = vpack.c.b16 %v1421, %v1420
      %1430 = vst [vmem:[#allocation2 + $0x1a0] sm:$0xff] %v1422
      %1431 = vst [vmem:[#allocation2 + $0x1a8] sm:$0xff] %v1423
      %1432 = vst [vmem:[#allocation2 + $0x1b0] sm:$0xff] %v1424
      %1433 = vst [vmem:[#allocation2 + $0x1b8] sm:$0xff] %v1425
      %1434 = vrot.lane.b32.xlu0 %v389, 19
      %v1435 = vpop.permute.xlu0 %1434
      %1436 = vrot.lane.b32.xlu0 %v391, 19
      %v1437 = vpop.permute.xlu0 %1436
      %1438 = vrot.lane.b32.xlu0 %v393, 19
      %v1439 = vpop.permute.xlu0 %1438
      %1440 = vrot.lane.b32.xlu0 %v395, 19
      %v1441 = vpop.permute.xlu0 %1440
      %1442 = vrot.lane.b32.xlu0 %v390, 19
      %v1443 = vpop.permute.xlu0 %1442
      %1444 = vrot.lane.b32.xlu0 %v392, 19
      %v1445 = vpop.permute.xlu0 %1444
      %1446 = vrot.lane.b32.xlu0 %v394, 19
      %v1447 = vpop.permute.xlu0 %1446
      %1448 = vrot.lane.b32.xlu0 %v396, 19
      %v1449 = vpop.permute.xlu0 %1448
      %vm1450 = vcmp.lt.s32.totalorder %v414, 19
      %v1451 = vsel %vm1450, %v1435, %v1443
      %v1452 = vsel %vm1450, %v1437, %v1445
      %v1453 = vsel %vm1450, %v1439, %v1447
      %v1454 = vsel %vm1450, %v1441, %v1449
      %v1455 = vsel %vm1450, %v1443, %v1435
      %v1456 = vsel %vm1450, %v1445, %v1437
      %v1457 = vsel %vm1450, %v1447, %v1439
      %v1458 = vsel %vm1450, %v1449, %v1441
      %s1459 = scalar_lea.vmem %s5, 22
      %v1460 = vld [vmem:[%s1459] ss:$8 sm:$0x3]
      %v1462 = vlaneseq
      %v1463 = vshrl.u32 %v1462, 7
      %v1464 = vsub.s32 0, %v1463
      %v1465 = vrot.slane %v1460, %v1464
      %v1466 = vlaneseq
      %v1467 = vshrl.u32 %v1466, 7
      %v1468 = vsub.s32 1, %v1467
      %v1469 = vrot.slane %v1460, %v1468
      %v1472 = vmul.f32 %v1455, %v1465
      %v1473 = vmul.f32 %v1451, %v1469
      %v1474 = vmul.f32 %v1456, %v1465
      %v1475 = vmul.f32 %v1452, %v1469
      %v1476 = vmul.f32 %v1457, %v1465
      %v1477 = vmul.f32 %v1453, %v1469
      %v1478 = vmul.f32 %v1458, %v1465
      %v1479 = vmul.f32 %v1454, %v1469
      %v1480 = vpack.c.bf16 %v1474, %v1472
      %v1481 = vpack.c.bf16 %v1475, %v1473
      %v1482 = vpack.c.bf16 %v1478, %v1476
      %v1483 = vpack.c.bf16 %v1479, %v1477
      %v1488 = vunpack.c.l.b16 %v1480
      %v1489 = vunpack.c.l.b16 %v1481
      %v1490 = vunpack.c.h.b16 %v1480
      %v1491 = vunpack.c.h.b16 %v1481
      %v1492 = vunpack.c.l.b16 %v1482
      %v1493 = vunpack.c.l.b16 %v1483
      %v1494 = vunpack.c.h.b16 %v1482
      %v1495 = vunpack.c.h.b16 %v1483
      %v1496 = vpack.c.b16 %v1489, %v1488
      %v1497 = vpack.c.b16 %v1491, %v1490
      %v1498 = vpack.c.b16 %v1493, %v1492
      %v1499 = vpack.c.b16 %v1495, %v1494
      %1504 = vst [vmem:[#allocation2 + $0x1c0] sm:$0xff] %v1496
      %1505 = vst [vmem:[#allocation2 + $0x1c8] sm:$0xff] %v1497
      %1506 = vst [vmem:[#allocation2 + $0x1d0] sm:$0xff] %v1498
      %1507 = vst [vmem:[#allocation2 + $0x1d8] sm:$0xff] %v1499
      %1508 = vrot.lane.b32.xlu0 %v389, 18
      %v1509 = vpop.permute.xlu0 %1508
      %1510 = vrot.lane.b32.xlu0 %v391, 18
      %v1511 = vpop.permute.xlu0 %1510
      %1512 = vrot.lane.b32.xlu0 %v393, 18
      %v1513 = vpop.permute.xlu0 %1512
      %1514 = vrot.lane.b32.xlu0 %v395, 18
      %v1515 = vpop.permute.xlu0 %1514
      %1516 = vrot.lane.b32.xlu0 %v390, 18
      %v1517 = vpop.permute.xlu0 %1516
      %1518 = vrot.lane.b32.xlu0 %v392, 18
      %v1519 = vpop.permute.xlu0 %1518
      %1520 = vrot.lane.b32.xlu0 %v394, 18
      %v1521 = vpop.permute.xlu0 %1520
      %1522 = vrot.lane.b32.xlu0 %v396, 18
      %v1523 = vpop.permute.xlu0 %1522
      %vm1524 = vcmp.lt.s32.totalorder %v414, 18
      %v1525 = vsel %vm1524, %v1509, %v1517
      %v1526 = vsel %vm1524, %v1511, %v1519
      %v1527 = vsel %vm1524, %v1513, %v1521
      %v1528 = vsel %vm1524, %v1515, %v1523
      %v1529 = vsel %vm1524, %v1517, %v1509
      %v1530 = vsel %vm1524, %v1519, %v1511
      %v1531 = vsel %vm1524, %v1521, %v1513
      %v1532 = vsel %vm1524, %v1523, %v1515
      %s1533 = scalar_lea.vmem %s5, 23
      %v1534 = vld [vmem:[%s1533] ss:$8 sm:$0x3]
      %v1536 = vlaneseq
      %v1537 = vshrl.u32 %v1536, 7
      %v1538 = vsub.s32 0, %v1537
      %v1539 = vrot.slane %v1534, %v1538
      %v1540 = vlaneseq
      %v1541 = vshrl.u32 %v1540, 7
      %v1542 = vsub.s32 1, %v1541
      %v1543 = vrot.slane %v1534, %v1542
      %v1546 = vmul.f32 %v1529, %v1539
      %v1547 = vmul.f32 %v1525, %v1543
      %v1548 = vmul.f32 %v1530, %v1539
      %v1549 = vmul.f32 %v1526, %v1543
      %v1550 = vmul.f32 %v1531, %v1539
      %v1551 = vmul.f32 %v1527, %v1543
      %v1552 = vmul.f32 %v1532, %v1539
      %v1553 = vmul.f32 %v1528, %v1543
      %v1554 = vpack.c.bf16 %v1548, %v1546
      %v1555 = vpack.c.bf16 %v1549, %v1547
      %v1556 = vpack.c.bf16 %v1552, %v1550
      %v1557 = vpack.c.bf16 %v1553, %v1551
      %v1562 = vunpack.c.l.b16 %v1554
      %v1563 = vunpack.c.l.b16 %v1555
      %v1564 = vunpack.c.h.b16 %v1554
      %v1565 = vunpack.c.h.b16 %v1555
      %v1566 = vunpack.c.l.b16 %v1556
      %v1567 = vunpack.c.l.b16 %v1557
      %v1568 = vunpack.c.h.b16 %v1556
      %v1569 = vunpack.c.h.b16 %v1557
      %v1570 = vpack.c.b16 %v1563, %v1562
      %v1571 = vpack.c.b16 %v1565, %v1564
      %v1572 = vpack.c.b16 %v1567, %v1566
      %v1573 = vpack.c.b16 %v1569, %v1568
      %1578 = vst [vmem:[#allocation2 + $0x1e0] sm:$0xff] %v1570
      %1579 = vst [vmem:[#allocation2 + $0x1e8] sm:$0xff] %v1571
      %1580 = vst [vmem:[#allocation2 + $0x1f0] sm:$0xff] %v1572
      %1581 = vst [vmem:[#allocation2 + $0x1f8] sm:$0xff] %v1573
      %1582 = vrot.lane.b32.xlu0 %v389, 17
      %v1583 = vpop.permute.xlu0 %1582
      %1584 = vrot.lane.b32.xlu0 %v391, 17
      %v1585 = vpop.permute.xlu0 %1584
      %1586 = vrot.lane.b32.xlu0 %v393, 17
      %v1587 = vpop.permute.xlu0 %1586
      %1588 = vrot.lane.b32.xlu0 %v395, 17
      %v1589 = vpop.permute.xlu0 %1588
      %1590 = vrot.lane.b32.xlu0 %v390, 17
      %v1591 = vpop.permute.xlu0 %1590
      %1592 = vrot.lane.b32.xlu0 %v392, 17
      %v1593 = vpop.permute.xlu0 %1592
      %1594 = vrot.lane.b32.xlu0 %v394, 17
      %v1595 = vpop.permute.xlu0 %1594
      %1596 = vrot.lane.b32.xlu0 %v396, 17
      %v1597 = vpop.permute.xlu0 %1596
      %vm1598 = vcmp.lt.s32.totalorder %v414, 17
      %v1599 = vsel %vm1598, %v1583, %v1591
      %v1600 = vsel %vm1598, %v1585, %v1593
      %v1601 = vsel %vm1598, %v1587, %v1595
      %v1602 = vsel %vm1598, %v1589, %v1597
      %v1603 = vsel %vm1598, %v1591, %v1583
      %v1604 = vsel %vm1598, %v1593, %v1585
      %v1605 = vsel %vm1598, %v1595, %v1587
      %v1606 = vsel %vm1598, %v1597, %v1589
      %s1607 = scalar_lea.vmem %s5, 32
      %v1608 = vld [vmem:[%s1607] ss:$8 sm:$0x3]
      %v1610 = vlaneseq
      %v1611 = vshrl.u32 %v1610, 7
      %v1612 = vsub.s32 0, %v1611
      %v1613 = vrot.slane %v1608, %v1612
      %v1614 = vlaneseq
      %v1615 = vshrl.u32 %v1614, 7
      %v1616 = vsub.s32 1, %v1615
      %v1617 = vrot.slane %v1608, %v1616
      %v1620 = vmul.f32 %v1603, %v1613
      %v1621 = vmul.f32 %v1599, %v1617
      %v1622 = vmul.f32 %v1604, %v1613
      %v1623 = vmul.f32 %v1600, %v1617
      %v1624 = vmul.f32 %v1605, %v1613
      %v1625 = vmul.f32 %v1601, %v1617
      %v1626 = vmul.f32 %v1606, %v1613
      %v1627 = vmul.f32 %v1602, %v1617
      %v1628 = vpack.c.bf16 %v1622, %v1620
      %v1629 = vpack.c.bf16 %v1623, %v1621
      %v1630 = vpack.c.bf16 %v1626, %v1624
      %v1631 = vpack.c.bf16 %v1627, %v1625
      %v1636 = vunpack.c.l.b16 %v1628
      %v1637 = vunpack.c.l.b16 %v1629
      %v1638 = vunpack.c.h.b16 %v1628
      %v1639 = vunpack.c.h.b16 %v1629
      %v1640 = vunpack.c.l.b16 %v1630
      %v1641 = vunpack.c.l.b16 %v1631
      %v1642 = vunpack.c.h.b16 %v1630
      %v1643 = vunpack.c.h.b16 %v1631
      %v1644 = vpack.c.b16 %v1637, %v1636
      %v1645 = vpack.c.b16 %v1639, %v1638
      %v1646 = vpack.c.b16 %v1641, %v1640
      %v1647 = vpack.c.b16 %v1643, %v1642
      %1652 = vst [vmem:[#allocation2 + $0x200] sm:$0xff] %v1644
      %1653 = vst [vmem:[#allocation2 + $0x208] sm:$0xff] %v1645
      %1654 = vst [vmem:[#allocation2 + $0x210] sm:$0xff] %v1646
      %1655 = vst [vmem:[#allocation2 + $0x218] sm:$0xff] %v1647
      %1656 = vrot.lane.b32.xlu0 %v389, 16
      %v1657 = vpop.permute.xlu0 %1656
      %1658 = vrot.lane.b32.xlu0 %v391, 16
      %v1659 = vpop.permute.xlu0 %1658
      %1660 = vrot.lane.b32.xlu0 %v393, 16
      %v1661 = vpop.permute.xlu0 %1660
      %1662 = vrot.lane.b32.xlu0 %v395, 16
      %v1663 = vpop.permute.xlu0 %1662
      %1664 = vrot.lane.b32.xlu0 %v390, 16
      %v1665 = vpop.permute.xlu0 %1664
      %1666 = vrot.lane.b32.xlu0 %v392, 16
      %v1667 = vpop.permute.xlu0 %1666
      %1668 = vrot.lane.b32.xlu0 %v394, 16
      %v1669 = vpop.permute.xlu0 %1668
      %1670 = vrot.lane.b32.xlu0 %v396, 16
      %v1671 = vpop.permute.xlu0 %1670
      %vm1672 = vcmp.lt.s32.totalorder %v414, 16
      %v1673 = vsel %vm1672, %v1657, %v1665
      %v1674 = vsel %vm1672, %v1659, %v1667
      %v1675 = vsel %vm1672, %v1661, %v1669
      %v1676 = vsel %vm1672, %v1663, %v1671
      %v1677 = vsel %vm1672, %v1665, %v1657
      %v1678 = vsel %vm1672, %v1667, %v1659
      %v1679 = vsel %vm1672, %v1669, %v1661
      %v1680 = vsel %vm1672, %v1671, %v1663
      %s1681 = scalar_lea.vmem %s5, 33
      %v1682 = vld [vmem:[%s1681] ss:$8 sm:$0x3]
      %v1684 = vlaneseq
      %v1685 = vshrl.u32 %v1684, 7
      %v1686 = vsub.s32 0, %v1685
      %v1687 = vrot.slane %v1682, %v1686
      %v1688 = vlaneseq
      %v1689 = vshrl.u32 %v1688, 7
      %v1690 = vsub.s32 1, %v1689
      %v1691 = vrot.slane %v1682, %v1690
      %v1694 = vmul.f32 %v1677, %v1687
      %v1695 = vmul.f32 %v1673, %v1691
      %v1696 = vmul.f32 %v1678, %v1687
      %v1697 = vmul.f32 %v1674, %v1691
      %v1698 = vmul.f32 %v1679, %v1687
      %v1699 = vmul.f32 %v1675, %v1691
      %v1700 = vmul.f32 %v1680, %v1687
      %v1701 = vmul.f32 %v1676, %v1691
      %v1702 = vpack.c.bf16 %v1696, %v1694
      %v1703 = vpack.c.bf16 %v1697, %v1695
      %v1704 = vpack.c.bf16 %v1700, %v1698
      %v1705 = vpack.c.bf16 %v1701, %v1699
      %v1710 = vunpack.c.l.b16 %v1702
      %v1711 = vunpack.c.l.b16 %v1703
      %v1712 = vunpack.c.h.b16 %v1702
      %v1713 = vunpack.c.h.b16 %v1703
      %v1714 = vunpack.c.l.b16 %v1704
      %v1715 = vunpack.c.l.b16 %v1705
      %v1716 = vunpack.c.h.b16 %v1704
      %v1717 = vunpack.c.h.b16 %v1705
      %v1718 = vpack.c.b16 %v1711, %v1710
      %v1719 = vpack.c.b16 %v1713, %v1712
      %v1720 = vpack.c.b16 %v1715, %v1714
      %v1721 = vpack.c.b16 %v1717, %v1716
      %1726 = vst [vmem:[#allocation2 + $0x220] sm:$0xff] %v1718
      %1727 = vst [vmem:[#allocation2 + $0x228] sm:$0xff] %v1719
      %1728 = vst [vmem:[#allocation2 + $0x230] sm:$0xff] %v1720
      %1729 = vst [vmem:[#allocation2 + $0x238] sm:$0xff] %v1721
      %1730 = vrot.lane.b32.xlu0 %v389, 15
      %v1731 = vpop.permute.xlu0 %1730
      %1732 = vrot.lane.b32.xlu0 %v391, 15
      %v1733 = vpop.permute.xlu0 %1732
      %1734 = vrot.lane.b32.xlu0 %v393, 15
      %v1735 = vpop.permute.xlu0 %1734
      %1736 = vrot.lane.b32.xlu0 %v395, 15
      %v1737 = vpop.permute.xlu0 %1736
      %1738 = vrot.lane.b32.xlu0 %v390, 15
      %v1739 = vpop.permute.xlu0 %1738
      %1740 = vrot.lane.b32.xlu0 %v392, 15
      %v1741 = vpop.permute.xlu0 %1740
      %1742 = vrot.lane.b32.xlu0 %v394, 15
      %v1743 = vpop.permute.xlu0 %1742
      %1744 = vrot.lane.b32.xlu0 %v396, 15
      %v1745 = vpop.permute.xlu0 %1744
      %vm1746 = vcmp.lt.s32.totalorder %v414, 15
      %v1747 = vsel %vm1746, %v1731, %v1739
      %v1748 = vsel %vm1746, %v1733, %v1741
      %v1749 = vsel %vm1746, %v1735, %v1743
      %v1750 = vsel %vm1746, %v1737, %v1745
      %v1751 = vsel %vm1746, %v1739, %v1731
      %v1752 = vsel %vm1746, %v1741, %v1733
      %v1753 = vsel %vm1746, %v1743, %v1735
      %v1754 = vsel %vm1746, %v1745, %v1737
      %s1755 = scalar_lea.vmem %s5, 34
      %v1756 = vld [vmem:[%s1755] ss:$8 sm:$0x3]
      %v1758 = vlaneseq
      %v1759 = vshrl.u32 %v1758, 7
      %v1760 = vsub.s32 0, %v1759
      %v1761 = vrot.slane %v1756, %v1760
      %v1762 = vlaneseq
      %v1763 = vshrl.u32 %v1762, 7
      %v1764 = vsub.s32 1, %v1763
      %v1765 = vrot.slane %v1756, %v1764
      %v1768 = vmul.f32 %v1751, %v1761
      %v1769 = vmul.f32 %v1747, %v1765
      %v1770 = vmul.f32 %v1752, %v1761
      %v1771 = vmul.f32 %v1748, %v1765
      %v1772 = vmul.f32 %v1753, %v1761
      %v1773 = vmul.f32 %v1749, %v1765
      %v1774 = vmul.f32 %v1754, %v1761
      %v1775 = vmul.f32 %v1750, %v1765
      %v1776 = vpack.c.bf16 %v1770, %v1768
      %v1777 = vpack.c.bf16 %v1771, %v1769
      %v1778 = vpack.c.bf16 %v1774, %v1772
      %v1779 = vpack.c.bf16 %v1775, %v1773
      %v1784 = vunpack.c.l.b16 %v1776
      %v1785 = vunpack.c.l.b16 %v1777
      %v1786 = vunpack.c.h.b16 %v1776
      %v1787 = vunpack.c.h.b16 %v1777
      %v1788 = vunpack.c.l.b16 %v1778
      %v1789 = vunpack.c.l.b16 %v1779
      %v1790 = vunpack.c.h.b16 %v1778
      %v1791 = vunpack.c.h.b16 %v1779
      %v1792 = vpack.c.b16 %v1785, %v1784
      %v1793 = vpack.c.b16 %v1787, %v1786
      %v1794 = vpack.c.b16 %v1789, %v1788
      %v1795 = vpack.c.b16 %v1791, %v1790
      %1800 = vst [vmem:[#allocation2 + $0x240] sm:$0xff] %v1792
      %1801 = vst [vmem:[#allocation2 + $0x248] sm:$0xff] %v1793
      %1802 = vst [vmem:[#allocation2 + $0x250] sm:$0xff] %v1794
      %1803 = vst [vmem:[#allocation2 + $0x258] sm:$0xff] %v1795
      %1804 = vrot.lane.b32.xlu0 %v389, 14
      %v1805 = vpop.permute.xlu0 %1804
      %1806 = vrot.lane.b32.xlu0 %v391, 14
      %v1807 = vpop.permute.xlu0 %1806
      %1808 = vrot.lane.b32.xlu0 %v393, 14
      %v1809 = vpop.permute.xlu0 %1808
      %1810 = vrot.lane.b32.xlu0 %v395, 14
      %v1811 = vpop.permute.xlu0 %1810
      %1812 = vrot.lane.b32.xlu0 %v390, 14
      %v1813 = vpop.permute.xlu0 %1812
      %1814 = vrot.lane.b32.xlu0 %v392, 14
      %v1815 = vpop.permute.xlu0 %1814
      %1816 = vrot.lane.b32.xlu0 %v394, 14
      %v1817 = vpop.permute.xlu0 %1816
      %1818 = vrot.lane.b32.xlu0 %v396, 14
      %v1819 = vpop.permute.xlu0 %1818
      %vm1820 = vcmp.lt.s32.totalorder %v414, 14
      %v1821 = vsel %vm1820, %v1805, %v1813
      %v1822 = vsel %vm1820, %v1807, %v1815
      %v1823 = vsel %vm1820, %v1809, %v1817
      %v1824 = vsel %vm1820, %v1811, %v1819
      %v1825 = vsel %vm1820, %v1813, %v1805
      %v1826 = vsel %vm1820, %v1815, %v1807
      %v1827 = vsel %vm1820, %v1817, %v1809
      %v1828 = vsel %vm1820, %v1819, %v1811
      %s1829 = scalar_lea.vmem %s5, 35
      %v1830 = vld [vmem:[%s1829] ss:$8 sm:$0x3]
      %v1832 = vlaneseq
      %v1833 = vshrl.u32 %v1832, 7
      %v1834 = vsub.s32 0, %v1833
      %v1835 = vrot.slane %v1830, %v1834
      %v1836 = vlaneseq
      %v1837 = vshrl.u32 %v1836, 7
      %v1838 = vsub.s32 1, %v1837
      %v1839 = vrot.slane %v1830, %v1838
      %v1842 = vmul.f32 %v1825, %v1835
      %v1843 = vmul.f32 %v1821, %v1839
      %v1844 = vmul.f32 %v1826, %v1835
      %v1845 = vmul.f32 %v1822, %v1839
      %v1846 = vmul.f32 %v1827, %v1835
      %v1847 = vmul.f32 %v1823, %v1839
      %v1848 = vmul.f32 %v1828, %v1835
      %v1849 = vmul.f32 %v1824, %v1839
      %v1850 = vpack.c.bf16 %v1844, %v1842
      %v1851 = vpack.c.bf16 %v1845, %v1843
      %v1852 = vpack.c.bf16 %v1848, %v1846
      %v1853 = vpack.c.bf16 %v1849, %v1847
      %v1858 = vunpack.c.l.b16 %v1850
      %v1859 = vunpack.c.l.b16 %v1851
      %v1860 = vunpack.c.h.b16 %v1850
      %v1861 = vunpack.c.h.b16 %v1851
      %v1862 = vunpack.c.l.b16 %v1852
      %v1863 = vunpack.c.l.b16 %v1853
      %v1864 = vunpack.c.h.b16 %v1852
      %v1865 = vunpack.c.h.b16 %v1853
      %v1866 = vpack.c.b16 %v1859, %v1858
      %v1867 = vpack.c.b16 %v1861, %v1860
      %v1868 = vpack.c.b16 %v1863, %v1862
      %v1869 = vpack.c.b16 %v1865, %v1864
      %1874 = vst [vmem:[#allocation2 + $0x260] sm:$0xff] %v1866
      %1875 = vst [vmem:[#allocation2 + $0x268] sm:$0xff] %v1867
      %1876 = vst [vmem:[#allocation2 + $0x270] sm:$0xff] %v1868
      %1877 = vst [vmem:[#allocation2 + $0x278] sm:$0xff] %v1869
      %1878 = vrot.lane.b32.xlu0 %v389, 13
      %v1879 = vpop.permute.xlu0 %1878
      %1880 = vrot.lane.b32.xlu0 %v391, 13
      %v1881 = vpop.permute.xlu0 %1880
      %1882 = vrot.lane.b32.xlu0 %v393, 13
      %v1883 = vpop.permute.xlu0 %1882
      %1884 = vrot.lane.b32.xlu0 %v395, 13
      %v1885 = vpop.permute.xlu0 %1884
      %1886 = vrot.lane.b32.xlu0 %v390, 13
      %v1887 = vpop.permute.xlu0 %1886
      %1888 = vrot.lane.b32.xlu0 %v392, 13
      %v1889 = vpop.permute.xlu0 %1888
      %1890 = vrot.lane.b32.xlu0 %v394, 13
      %v1891 = vpop.permute.xlu0 %1890
      %1892 = vrot.lane.b32.xlu0 %v396, 13
      %v1893 = vpop.permute.xlu0 %1892
      %vm1894 = vcmp.lt.s32.totalorder %v414, 13
      %v1895 = vsel %vm1894, %v1879, %v1887
      %v1896 = vsel %vm1894, %v1881, %v1889
      %v1897 = vsel %vm1894, %v1883, %v1891
      %v1898 = vsel %vm1894, %v1885, %v1893
      %v1899 = vsel %vm1894, %v1887, %v1879
      %v1900 = vsel %vm1894, %v1889, %v1881
      %v1901 = vsel %vm1894, %v1891, %v1883
      %v1902 = vsel %vm1894, %v1893, %v1885
      %s1903 = scalar_lea.vmem %s5, 36
      %v1904 = vld [vmem:[%s1903] ss:$8 sm:$0x3]
      %v1906 = vlaneseq
      %v1907 = vshrl.u32 %v1906, 7
      %v1908 = vsub.s32 0, %v1907
      %v1909 = vrot.slane %v1904, %v1908
      %v1910 = vlaneseq
      %v1911 = vshrl.u32 %v1910, 7
      %v1912 = vsub.s32 1, %v1911
      %v1913 = vrot.slane %v1904, %v1912
      %v1916 = vmul.f32 %v1899, %v1909
      %v1917 = vmul.f32 %v1895, %v1913
      %v1918 = vmul.f32 %v1900, %v1909
      %v1919 = vmul.f32 %v1896, %v1913
      %v1920 = vmul.f32 %v1901, %v1909
      %v1921 = vmul.f32 %v1897, %v1913
      %v1922 = vmul.f32 %v1902, %v1909
      %v1923 = vmul.f32 %v1898, %v1913
      %v1924 = vpack.c.bf16 %v1918, %v1916
      %v1925 = vpack.c.bf16 %v1919, %v1917
      %v1926 = vpack.c.bf16 %v1922, %v1920
      %v1927 = vpack.c.bf16 %v1923, %v1921
      %v1932 = vunpack.c.l.b16 %v1924
      %v1933 = vunpack.c.l.b16 %v1925
      %v1934 = vunpack.c.h.b16 %v1924
      %v1935 = vunpack.c.h.b16 %v1925
      %v1936 = vunpack.c.l.b16 %v1926
      %v1937 = vunpack.c.l.b16 %v1927
      %v1938 = vunpack.c.h.b16 %v1926
      %v1939 = vunpack.c.h.b16 %v1927
      %v1940 = vpack.c.b16 %v1933, %v1932
      %v1941 = vpack.c.b16 %v1935, %v1934
      %v1942 = vpack.c.b16 %v1937, %v1936
      %v1943 = vpack.c.b16 %v1939, %v1938
      %1948 = vst [vmem:[#allocation2 + $0x280] sm:$0xff] %v1940
      %1949 = vst [vmem:[#allocation2 + $0x288] sm:$0xff] %v1941
      %1950 = vst [vmem:[#allocation2 + $0x290] sm:$0xff] %v1942
      %1951 = vst [vmem:[#allocation2 + $0x298] sm:$0xff] %v1943
      %1952 = vrot.lane.b32.xlu0 %v389, 3
      %v1953 = vpop.permute.xlu0 %1952
      %1954 = vrot.lane.b32.xlu0 %v391, 3
      %v1955 = vpop.permute.xlu0 %1954
      %1956 = vrot.lane.b32.xlu0 %v393, 3
      %v1957 = vpop.permute.xlu0 %1956
      %1958 = vrot.lane.b32.xlu0 %v395, 3
      %v1959 = vpop.permute.xlu0 %1958
      %1960 = vrot.lane.b32.xlu0 %v390, 3
      %v1961 = vpop.permute.xlu0 %1960
      %1962 = vrot.lane.b32.xlu0 %v392, 3
      %v1963 = vpop.permute.xlu0 %1962
      %1964 = vrot.lane.b32.xlu0 %v394, 3
      %v1965 = vpop.permute.xlu0 %1964
      %1966 = vrot.lane.b32.xlu0 %v396, 3
      %v1967 = vpop.permute.xlu0 %1966
      %vm1968 = vcmp.lt.s32.totalorder %v414, 3
      %v1969 = vsel %vm1968, %v1953, %v1961
      %v1970 = vsel %vm1968, %v1955, %v1963
      %v1971 = vsel %vm1968, %v1957, %v1965
      %v1972 = vsel %vm1968, %v1959, %v1967
      %v1973 = vsel %vm1968, %v1961, %v1953
      %v1974 = vsel %vm1968, %v1963, %v1955
      %v1975 = vsel %vm1968, %v1965, %v1957
      %v1976 = vsel %vm1968, %v1967, %v1959
      %s1977 = scalar_lea.vmem %s5, 37
      %v1978 = vld [vmem:[%s1977] ss:$8 sm:$0x3]
      %v1980 = vlaneseq
      %v1981 = vshrl.u32 %v1980, 7
      %v1982 = vsub.s32 0, %v1981
      %v1983 = vrot.slane %v1978, %v1982
      %v1984 = vlaneseq
      %v1985 = vshrl.u32 %v1984, 7
      %v1986 = vsub.s32 1, %v1985
      %v1987 = vrot.slane %v1978, %v1986
      %v1990 = vmul.f32 %v1973, %v1983
      %v1991 = vmul.f32 %v1969, %v1987
      %v1992 = vmul.f32 %v1974, %v1983
      %v1993 = vmul.f32 %v1970, %v1987
      %v1994 = vmul.f32 %v1975, %v1983
      %v1995 = vmul.f32 %v1971, %v1987
      %v1996 = vmul.f32 %v1976, %v1983
      %v1997 = vmul.f32 %v1972, %v1987
      %v1998 = vpack.c.bf16 %v1992, %v1990
      %v1999 = vpack.c.bf16 %v1993, %v1991
      %v2000 = vpack.c.bf16 %v1996, %v1994
      %v2001 = vpack.c.bf16 %v1997, %v1995
      %v2006 = vunpack.c.l.b16 %v1998
      %v2007 = vunpack.c.l.b16 %v1999
      %v2008 = vunpack.c.h.b16 %v1998
      %v2009 = vunpack.c.h.b16 %v1999
      %v2010 = vunpack.c.l.b16 %v2000
      %v2011 = vunpack.c.l.b16 %v2001
      %v2012 = vunpack.c.h.b16 %v2000
      %v2013 = vunpack.c.h.b16 %v2001
      %v2014 = vpack.c.b16 %v2007, %v2006
      %v2015 = vpack.c.b16 %v2009, %v2008
      %v2016 = vpack.c.b16 %v2011, %v2010
      %v2017 = vpack.c.b16 %v2013, %v2012
      %2022 = vst [vmem:[#allocation2 + $0x2a0] sm:$0xff] %v2014
      %2023 = vst [vmem:[#allocation2 + $0x2a8] sm:$0xff] %v2015
      %2024 = vst [vmem:[#allocation2 + $0x2b0] sm:$0xff] %v2016
      %2025 = vst [vmem:[#allocation2 + $0x2b8] sm:$0xff] %v2017
      %2026 = vrot.lane.b32.xlu0 %v389, 2
      %v2027 = vpop.permute.xlu0 %2026
      %2028 = vrot.lane.b32.xlu0 %v391, 2
      %v2029 = vpop.permute.xlu0 %2028
      %2030 = vrot.lane.b32.xlu0 %v393, 2
      %v2031 = vpop.permute.xlu0 %2030
      %2032 = vrot.lane.b32.xlu0 %v395, 2
      %v2033 = vpop.permute.xlu0 %2032
      %2034 = vrot.lane.b32.xlu0 %v390, 2
      %v2035 = vpop.permute.xlu0 %2034
      %2036 = vrot.lane.b32.xlu0 %v392, 2
      %v2037 = vpop.permute.xlu0 %2036
      %2038 = vrot.lane.b32.xlu0 %v394, 2
      %v2039 = vpop.permute.xlu0 %2038
      %2040 = vrot.lane.b32.xlu0 %v396, 2
      %v2041 = vpop.permute.xlu0 %2040
      %vm2042 = vcmp.lt.s32.totalorder %v414, 2
      %v2043 = vsel %vm2042, %v2027, %v2035
      %v2044 = vsel %vm2042, %v2029, %v2037
      %v2045 = vsel %vm2042, %v2031, %v2039
      %v2046 = vsel %vm2042, %v2033, %v2041
      %v2047 = vsel %vm2042, %v2035, %v2027
      %v2048 = vsel %vm2042, %v2037, %v2029
      %v2049 = vsel %vm2042, %v2039, %v2031
      %v2050 = vsel %vm2042, %v2041, %v2033
      %s2051 = scalar_lea.vmem %s5, 38
      %v2052 = vld [vmem:[%s2051] ss:$8 sm:$0x3]
      %v2054 = vlaneseq
      %v2055 = vshrl.u32 %v2054, 7
      %v2056 = vsub.s32 0, %v2055
      %v2057 = vrot.slane %v2052, %v2056
      %v2058 = vlaneseq
      %v2059 = vshrl.u32 %v2058, 7
      %v2060 = vsub.s32 1, %v2059
      %v2061 = vrot.slane %v2052, %v2060
      %v2064 = vmul.f32 %v2047, %v2057
      %v2065 = vmul.f32 %v2043, %v2061
      %v2066 = vmul.f32 %v2048, %v2057
      %v2067 = vmul.f32 %v2044, %v2061
      %v2068 = vmul.f32 %v2049, %v2057
      %v2069 = vmul.f32 %v2045, %v2061
      %v2070 = vmul.f32 %v2050, %v2057
      %v2071 = vmul.f32 %v2046, %v2061
      %v2072 = vpack.c.bf16 %v2066, %v2064
      %v2073 = vpack.c.bf16 %v2067, %v2065
      %v2074 = vpack.c.bf16 %v2070, %v2068
      %v2075 = vpack.c.bf16 %v2071, %v2069
      %v2080 = vunpack.c.l.b16 %v2072
      %v2081 = vunpack.c.l.b16 %v2073
      %v2082 = vunpack.c.h.b16 %v2072
      %v2083 = vunpack.c.h.b16 %v2073
      %v2084 = vunpack.c.l.b16 %v2074
      %v2085 = vunpack.c.l.b16 %v2075
      %v2086 = vunpack.c.h.b16 %v2074
      %v2087 = vunpack.c.h.b16 %v2075
      %v2088 = vpack.c.b16 %v2081, %v2080
      %v2089 = vpack.c.b16 %v2083, %v2082
      %v2090 = vpack.c.b16 %v2085, %v2084
      %v2091 = vpack.c.b16 %v2087, %v2086
      %2096 = vst [vmem:[#allocation2 + $0x2c0] sm:$0xff] %v2088
      %2097 = vst [vmem:[#allocation2 + $0x2c8] sm:$0xff] %v2089
      %2098 = vst [vmem:[#allocation2 + $0x2d0] sm:$0xff] %v2090
      %2099 = vst [vmem:[#allocation2 + $0x2d8] sm:$0xff] %v2091
      %2100 = vrot.lane.b32.xlu0 %v389, 1
      %v2101 = vpop.permute.xlu0 %2100
      %2102 = vrot.lane.b32.xlu0 %v391, 1
      %v2103 = vpop.permute.xlu0 %2102
      %2104 = vrot.lane.b32.xlu0 %v393, 1
      %v2105 = vpop.permute.xlu0 %2104
      %2106 = vrot.lane.b32.xlu0 %v395, 1
      %v2107 = vpop.permute.xlu0 %2106
      %2108 = vrot.lane.b32.xlu0 %v390, 1
      %v2109 = vpop.permute.xlu0 %2108
      %2110 = vrot.lane.b32.xlu0 %v392, 1
      %v2111 = vpop.permute.xlu0 %2110
      %2112 = vrot.lane.b32.xlu0 %v394, 1
      %v2113 = vpop.permute.xlu0 %2112
      %2114 = vrot.lane.b32.xlu0 %v396, 1
      %v2115 = vpop.permute.xlu0 %2114
      %vm2116 = vcmp.lt.s32.totalorder %v414, 1
      %v2117 = vsel %vm2116, %v2101, %v2109
      %v2118 = vsel %vm2116, %v2103, %v2111
      %v2119 = vsel %vm2116, %v2105, %v2113
      %v2120 = vsel %vm2116, %v2107, %v2115
      %v2121 = vsel %vm2116, %v2109, %v2101
      %v2122 = vsel %vm2116, %v2111, %v2103
      %v2123 = vsel %vm2116, %v2113, %v2105
      %v2124 = vsel %vm2116, %v2115, %v2107
      %s2125 = scalar_lea.vmem %s5, 39
      %v2126 = vld [vmem:[%s2125] ss:$8 sm:$0x3]
      %v2128 = vlaneseq
      %v2129 = vshrl.u32 %v2128, 7
      %v2130 = vsub.s32 0, %v2129
      %v2131 = vrot.slane %v2126, %v2130
      %v2132 = vlaneseq
      %v2133 = vshrl.u32 %v2132, 7
      %v2134 = vsub.s32 1, %v2133
      %v2135 = vrot.slane %v2126, %v2134
      %v2138 = vmul.f32 %v2121, %v2131
      %v2139 = vmul.f32 %v2117, %v2135
      %v2140 = vmul.f32 %v2122, %v2131
      %v2141 = vmul.f32 %v2118, %v2135
      %v2142 = vmul.f32 %v2123, %v2131
      %v2143 = vmul.f32 %v2119, %v2135
      %v2144 = vmul.f32 %v2124, %v2131
      %v2145 = vmul.f32 %v2120, %v2135
      %v2146 = vpack.c.bf16 %v2140, %v2138
      %v2147 = vpack.c.bf16 %v2141, %v2139
      %v2148 = vpack.c.bf16 %v2144, %v2142
      %v2149 = vpack.c.bf16 %v2145, %v2143
      %v2154 = vunpack.c.l.b16 %v2146
      %v2155 = vunpack.c.l.b16 %v2147
      %v2156 = vunpack.c.h.b16 %v2146
      %v2157 = vunpack.c.h.b16 %v2147
      %v2158 = vunpack.c.l.b16 %v2148
      %v2159 = vunpack.c.l.b16 %v2149
      %v2160 = vunpack.c.h.b16 %v2148
      %v2161 = vunpack.c.h.b16 %v2149
      %v2162 = vpack.c.b16 %v2155, %v2154
      %v2163 = vpack.c.b16 %v2157, %v2156
      %v2164 = vpack.c.b16 %v2159, %v2158
      %v2165 = vpack.c.b16 %v2161, %v2160
      %2170 = vst [vmem:[#allocation2 + $0x2e0] sm:$0xff] %v2162
      %2171 = vst [vmem:[#allocation2 + $0x2e8] sm:$0xff] %v2163
      %2172 = vst [vmem:[#allocation2 + $0x2f0] sm:$0xff] %v2164
      %2173 = vst [vmem:[#allocation2 + $0x2f8] sm:$0xff] %v2165
      %s2174 = scalar_lea.vmem %s5, 48
      %v2175 = vld [vmem:[%s2174] ss:$8 sm:$0x3]
      %v2177 = vlaneseq
      %v2178 = vshrl.u32 %v2177, 7
      %v2179 = vsub.s32 0, %v2178
      %v2180 = vrot.slane %v2175, %v2179
      %v2181 = vlaneseq
      %v2182 = vshrl.u32 %v2181, 7
      %v2183 = vsub.s32 1, %v2182
      %v2184 = vrot.slane %v2175, %v2183
      %v2187 = vmul.f32 %v389, %v2180
      %v2188 = vmul.f32 %v390, %v2184
      %v2189 = vmul.f32 %v391, %v2180
      %v2190 = vmul.f32 %v392, %v2184
      %v2191 = vmul.f32 %v393, %v2180
      %v2192 = vmul.f32 %v394, %v2184
      %v2193 = vmul.f32 %v395, %v2180
      %v2194 = vmul.f32 %v396, %v2184
      %v2195 = vpack.c.bf16 %v2189, %v2187
      %v2196 = vpack.c.bf16 %v2190, %v2188
      %v2197 = vpack.c.bf16 %v2193, %v2191
      %v2198 = vpack.c.bf16 %v2194, %v2192
      %v2203 = vunpack.c.l.b16 %v2195
      %v2204 = vunpack.c.l.b16 %v2196
      %v2205 = vunpack.c.h.b16 %v2195
      %v2206 = vunpack.c.h.b16 %v2196
      %v2207 = vunpack.c.l.b16 %v2197
      %v2208 = vunpack.c.l.b16 %v2198
      %v2209 = vunpack.c.h.b16 %v2197
      %v2210 = vunpack.c.h.b16 %v2198
      %v2211 = vpack.c.b16 %v2204, %v2203
      %v2212 = vpack.c.b16 %v2206, %v2205
      %v2213 = vpack.c.b16 %v2208, %v2207
      %v2214 = vpack.c.b16 %v2210, %v2209
      %2219 = vst [vmem:[#allocation2 + $0x300] sm:$0xff] %v2211
      %2220 = vst [vmem:[#allocation2 + $0x308] sm:$0xff] %v2212
      %2221 = vst [vmem:[#allocation2 + $0x310] sm:$0xff] %v2213
      %2222 = vst [vmem:[#allocation2 + $0x318] sm:$0xff] %v2214
      %2223 = vrot.lane.b32.xlu0 %v389, 127
      %v2224 = vpop.permute.xlu0 %2223
      %2225 = vrot.lane.b32.xlu0 %v391, 127
      %v2226 = vpop.permute.xlu0 %2225
      %2227 = vrot.lane.b32.xlu0 %v393, 127
      %v2228 = vpop.permute.xlu0 %2227
      %2229 = vrot.lane.b32.xlu0 %v395, 127
      %v2230 = vpop.permute.xlu0 %2229
      %2231 = vrot.lane.b32.xlu0 %v390, 127
      %v2232 = vpop.permute.xlu0 %2231
      %2233 = vrot.lane.b32.xlu0 %v392, 127
      %v2234 = vpop.permute.xlu0 %2233
      %2235 = vrot.lane.b32.xlu0 %v394, 127
      %v2236 = vpop.permute.xlu0 %2235
      %2237 = vrot.lane.b32.xlu0 %v396, 127
      %v2238 = vpop.permute.xlu0 %2237
      %vm2239 = vcmp.lt.s32.totalorder %v414, 127
      %v2240 = vsel %vm2239, %v2224, %v2232
      %v2241 = vsel %vm2239, %v2226, %v2234
      %v2242 = vsel %vm2239, %v2228, %v2236
      %v2243 = vsel %vm2239, %v2230, %v2238
      %v2244 = vsel %vm2239, %v2232, %v2224
      %v2245 = vsel %vm2239, %v2234, %v2226
      %v2246 = vsel %vm2239, %v2236, %v2228
      %v2247 = vsel %vm2239, %v2238, %v2230
      %s2248 = scalar_lea.vmem %s5, 49
      %v2249 = vld [vmem:[%s2248] ss:$8 sm:$0x3]
      %v2251 = vlaneseq
      %v2252 = vshrl.u32 %v2251, 7
      %v2253 = vsub.s32 0, %v2252
      %v2254 = vrot.slane %v2249, %v2253
      %v2255 = vlaneseq
      %v2256 = vshrl.u32 %v2255, 7
      %v2257 = vsub.s32 1, %v2256
      %v2258 = vrot.slane %v2249, %v2257
      %v2261 = vmul.f32 %v2240, %v2254
      %v2262 = vmul.f32 %v2244, %v2258
      %v2263 = vmul.f32 %v2241, %v2254
      %v2264 = vmul.f32 %v2245, %v2258
      %v2265 = vmul.f32 %v2242, %v2254
      %v2266 = vmul.f32 %v2246, %v2258
      %v2267 = vmul.f32 %v2243, %v2254
      %v2268 = vmul.f32 %v2247, %v2258
      %v2269 = vpack.c.bf16 %v2263, %v2261
      %v2270 = vpack.c.bf16 %v2264, %v2262
      %v2271 = vpack.c.bf16 %v2267, %v2265
      %v2272 = vpack.c.bf16 %v2268, %v2266
      %v2277 = vunpack.c.l.b16 %v2269
      %v2278 = vunpack.c.l.b16 %v2270
      %v2279 = vunpack.c.h.b16 %v2269
      %v2280 = vunpack.c.h.b16 %v2270
      %v2281 = vunpack.c.l.b16 %v2271
      %v2282 = vunpack.c.l.b16 %v2272
      %v2283 = vunpack.c.h.b16 %v2271
      %v2284 = vunpack.c.h.b16 %v2272
      %v2285 = vpack.c.b16 %v2278, %v2277
      %v2286 = vpack.c.b16 %v2280, %v2279
      %v2287 = vpack.c.b16 %v2282, %v2281
      %v2288 = vpack.c.b16 %v2284, %v2283
      %2293 = vst [vmem:[#allocation2 + $0x320] sm:$0xff] %v2285
      %2294 = vst [vmem:[#allocation2 + $0x328] sm:$0xff] %v2286
      %2295 = vst [vmem:[#allocation2 + $0x330] sm:$0xff] %v2287
      %2296 = vst [vmem:[#allocation2 + $0x338] sm:$0xff] %v2288
      %2297 = vrot.lane.b32.xlu0 %v389, 126
      %v2298 = vpop.permute.xlu0 %2297
      %2299 = vrot.lane.b32.xlu0 %v391, 126
      %v2300 = vpop.permute.xlu0 %2299
      %2301 = vrot.lane.b32.xlu0 %v393, 126
      %v2302 = vpop.permute.xlu0 %2301
      %2303 = vrot.lane.b32.xlu0 %v395, 126
      %v2304 = vpop.permute.xlu0 %2303
      %2305 = vrot.lane.b32.xlu0 %v390, 126
      %v2306 = vpop.permute.xlu0 %2305
      %2307 = vrot.lane.b32.xlu0 %v392, 126
      %v2308 = vpop.permute.xlu0 %2307
      %2309 = vrot.lane.b32.xlu0 %v394, 126
      %v2310 = vpop.permute.xlu0 %2309
      %2311 = vrot.lane.b32.xlu0 %v396, 126
      %v2312 = vpop.permute.xlu0 %2311
      %vm2313 = vcmp.lt.s32.totalorder %v414, 126
      %v2314 = vsel %vm2313, %v2298, %v2306
      %v2315 = vsel %vm2313, %v2300, %v2308
      %v2316 = vsel %vm2313, %v2302, %v2310
      %v2317 = vsel %vm2313, %v2304, %v2312
      %v2318 = vsel %vm2313, %v2306, %v2298
      %v2319 = vsel %vm2313, %v2308, %v2300
      %v2320 = vsel %vm2313, %v2310, %v2302
      %v2321 = vsel %vm2313, %v2312, %v2304
      %s2322 = scalar_lea.vmem %s5, 50
      %v2323 = vld [vmem:[%s2322] ss:$8 sm:$0x3]
      %v2325 = vlaneseq
      %v2326 = vshrl.u32 %v2325, 7
      %v2327 = vsub.s32 0, %v2326
      %v2328 = vrot.slane %v2323, %v2327
      %v2329 = vlaneseq
      %v2330 = vshrl.u32 %v2329, 7
      %v2331 = vsub.s32 1, %v2330
      %v2332 = vrot.slane %v2323, %v2331
      %v2335 = vmul.f32 %v2314, %v2328
      %v2336 = vmul.f32 %v2318, %v2332
      %v2337 = vmul.f32 %v2315, %v2328
      %v2338 = vmul.f32 %v2319, %v2332
      %v2339 = vmul.f32 %v2316, %v2328
      %v2340 = vmul.f32 %v2320, %v2332
      %v2341 = vmul.f32 %v2317, %v2328
      %v2342 = vmul.f32 %v2321, %v2332
      %v2343 = vpack.c.bf16 %v2337, %v2335
      %v2344 = vpack.c.bf16 %v2338, %v2336
      %v2345 = vpack.c.bf16 %v2341, %v2339
      %v2346 = vpack.c.bf16 %v2342, %v2340
      %v2351 = vunpack.c.l.b16 %v2343
      %v2352 = vunpack.c.l.b16 %v2344
      %v2353 = vunpack.c.h.b16 %v2343
      %v2354 = vunpack.c.h.b16 %v2344
      %v2355 = vunpack.c.l.b16 %v2345
      %v2356 = vunpack.c.l.b16 %v2346
      %v2357 = vunpack.c.h.b16 %v2345
      %v2358 = vunpack.c.h.b16 %v2346
      %v2359 = vpack.c.b16 %v2352, %v2351
      %v2360 = vpack.c.b16 %v2354, %v2353
      %v2361 = vpack.c.b16 %v2356, %v2355
      %v2362 = vpack.c.b16 %v2358, %v2357
      %2367 = vst [vmem:[#allocation2 + $0x340] sm:$0xff] %v2359
      %2368 = vst [vmem:[#allocation2 + $0x348] sm:$0xff] %v2360
      %2369 = vst [vmem:[#allocation2 + $0x350] sm:$0xff] %v2361
      %2370 = vst [vmem:[#allocation2 + $0x358] sm:$0xff] %v2362
      %2371 = vrot.lane.b32.xlu0 %v389, 125
      %v2372 = vpop.permute.xlu0 %2371
      %2373 = vrot.lane.b32.xlu0 %v391, 125
      %v2374 = vpop.permute.xlu0 %2373
      %2375 = vrot.lane.b32.xlu0 %v393, 125
      %v2376 = vpop.permute.xlu0 %2375
      %2377 = vrot.lane.b32.xlu0 %v395, 125
      %v2378 = vpop.permute.xlu0 %2377
      %2379 = vrot.lane.b32.xlu0 %v390, 125
      %v2380 = vpop.permute.xlu0 %2379
      %2381 = vrot.lane.b32.xlu0 %v392, 125
      %v2382 = vpop.permute.xlu0 %2381
      %2383 = vrot.lane.b32.xlu0 %v394, 125
      %v2384 = vpop.permute.xlu0 %2383
      %2385 = vrot.lane.b32.xlu0 %v396, 125
      %v2386 = vpop.permute.xlu0 %2385
      %vm2387 = vcmp.lt.s32.totalorder %v414, 125
      %v2388 = vsel %vm2387, %v2372, %v2380
      %v2389 = vsel %vm2387, %v2374, %v2382
      %v2390 = vsel %vm2387, %v2376, %v2384
      %v2391 = vsel %vm2387, %v2378, %v2386
      %v2392 = vsel %vm2387, %v2380, %v2372
      %v2393 = vsel %vm2387, %v2382, %v2374
      %v2394 = vsel %vm2387, %v2384, %v2376
      %v2395 = vsel %vm2387, %v2386, %v2378
      %s2396 = scalar_lea.vmem %s5, 51
      %v2397 = vld [vmem:[%s2396] ss:$8 sm:$0x3]
      %v2399 = vlaneseq
      %v2400 = vshrl.u32 %v2399, 7
      %v2401 = vsub.s32 0, %v2400
      %v2402 = vrot.slane %v2397, %v2401
      %v2403 = vlaneseq
      %v2404 = vshrl.u32 %v2403, 7
      %v2405 = vsub.s32 1, %v2404
      %v2406 = vrot.slane %v2397, %v2405
      %v2409 = vmul.f32 %v2388, %v2402
      %v2410 = vmul.f32 %v2392, %v2406
      %v2411 = vmul.f32 %v2389, %v2402
      %v2412 = vmul.f32 %v2393, %v2406
      %v2413 = vmul.f32 %v2390, %v2402
      %v2414 = vmul.f32 %v2394, %v2406
      %v2415 = vmul.f32 %v2391, %v2402
      %v2416 = vmul.f32 %v2395, %v2406
      %v2417 = vpack.c.bf16 %v2411, %v2409
      %v2418 = vpack.c.bf16 %v2412, %v2410
      %v2419 = vpack.c.bf16 %v2415, %v2413
      %v2420 = vpack.c.bf16 %v2416, %v2414
      %v2425 = vunpack.c.l.b16 %v2417
      %v2426 = vunpack.c.l.b16 %v2418
      %v2427 = vunpack.c.h.b16 %v2417
      %v2428 = vunpack.c.h.b16 %v2418
      %v2429 = vunpack.c.l.b16 %v2419
      %v2430 = vunpack.c.l.b16 %v2420
      %v2431 = vunpack.c.h.b16 %v2419
      %v2432 = vunpack.c.h.b16 %v2420
      %v2433 = vpack.c.b16 %v2426, %v2425
      %v2434 = vpack.c.b16 %v2428, %v2427
      %v2435 = vpack.c.b16 %v2430, %v2429
      %v2436 = vpack.c.b16 %v2432, %v2431
      %2441 = vst [vmem:[#allocation2 + $0x360] sm:$0xff] %v2433
      %2442 = vst [vmem:[#allocation2 + $0x368] sm:$0xff] %v2434
      %2443 = vst [vmem:[#allocation2 + $0x370] sm:$0xff] %v2435
      %2444 = vst [vmem:[#allocation2 + $0x378] sm:$0xff] %v2436
      %2445 = vrot.lane.b32.xlu0 %v389, 115
      %v2446 = vpop.permute.xlu0 %2445
      %2447 = vrot.lane.b32.xlu0 %v391, 115
      %v2448 = vpop.permute.xlu0 %2447
      %2449 = vrot.lane.b32.xlu0 %v393, 115
      %v2450 = vpop.permute.xlu0 %2449
      %2451 = vrot.lane.b32.xlu0 %v395, 115
      %v2452 = vpop.permute.xlu0 %2451
      %2453 = vrot.lane.b32.xlu0 %v390, 115
      %v2454 = vpop.permute.xlu0 %2453
      %2455 = vrot.lane.b32.xlu0 %v392, 115
      %v2456 = vpop.permute.xlu0 %2455
      %2457 = vrot.lane.b32.xlu0 %v394, 115
      %v2458 = vpop.permute.xlu0 %2457
      %2459 = vrot.lane.b32.xlu0 %v396, 115
      %v2460 = vpop.permute.xlu0 %2459
      %vm2461 = vcmp.lt.s32.totalorder %v414, 115
      %v2462 = vsel %vm2461, %v2446, %v2454
      %v2463 = vsel %vm2461, %v2448, %v2456
      %v2464 = vsel %vm2461, %v2450, %v2458
      %v2465 = vsel %vm2461, %v2452, %v2460
      %v2466 = vsel %vm2461, %v2454, %v2446
      %v2467 = vsel %vm2461, %v2456, %v2448
      %v2468 = vsel %vm2461, %v2458, %v2450
      %v2469 = vsel %vm2461, %v2460, %v2452
      %s2470 = scalar_lea.vmem %s5, 52
      %v2471 = vld [vmem:[%s2470] ss:$8 sm:$0x3]
      %v2473 = vlaneseq
      %v2474 = vshrl.u32 %v2473, 7
      %v2475 = vsub.s32 0, %v2474
      %v2476 = vrot.slane %v2471, %v2475
      %v2477 = vlaneseq
      %v2478 = vshrl.u32 %v2477, 7
      %v2479 = vsub.s32 1, %v2478
      %v2480 = vrot.slane %v2471, %v2479
      %v2483 = vmul.f32 %v2462, %v2476
      %v2484 = vmul.f32 %v2466, %v2480
      %v2485 = vmul.f32 %v2463, %v2476
      %v2486 = vmul.f32 %v2467, %v2480
      %v2487 = vmul.f32 %v2464, %v2476
      %v2488 = vmul.f32 %v2468, %v2480
      %v2489 = vmul.f32 %v2465, %v2476
      %v2490 = vmul.f32 %v2469, %v2480
      %v2491 = vpack.c.bf16 %v2485, %v2483
      %v2492 = vpack.c.bf16 %v2486, %v2484
      %v2493 = vpack.c.bf16 %v2489, %v2487
      %v2494 = vpack.c.bf16 %v2490, %v2488
      %v2499 = vunpack.c.l.b16 %v2491
      %v2500 = vunpack.c.l.b16 %v2492
      %v2501 = vunpack.c.h.b16 %v2491
      %v2502 = vunpack.c.h.b16 %v2492
      %v2503 = vunpack.c.l.b16 %v2493
      %v2504 = vunpack.c.l.b16 %v2494
      %v2505 = vunpack.c.h.b16 %v2493
      %v2506 = vunpack.c.h.b16 %v2494
      %v2507 = vpack.c.b16 %v2500, %v2499
      %v2508 = vpack.c.b16 %v2502, %v2501
      %v2509 = vpack.c.b16 %v2504, %v2503
      %v2510 = vpack.c.b16 %v2506, %v2505
      %2515 = vst [vmem:[#allocation2 + $0x380] sm:$0xff] %v2507
      %2516 = vst [vmem:[#allocation2 + $0x388] sm:$0xff] %v2508
      %2517 = vst [vmem:[#allocation2 + $0x390] sm:$0xff] %v2509
      %2518 = vst [vmem:[#allocation2 + $0x398] sm:$0xff] %v2510
      %2519 = vrot.lane.b32.xlu0 %v389, 114
      %v2520 = vpop.permute.xlu0 %2519
      %2521 = vrot.lane.b32.xlu0 %v391, 114
      %v2522 = vpop.permute.xlu0 %2521
      %2523 = vrot.lane.b32.xlu0 %v393, 114
      %v2524 = vpop.permute.xlu0 %2523
      %2525 = vrot.lane.b32.xlu0 %v395, 114
      %v2526 = vpop.permute.xlu0 %2525
      %2527 = vrot.lane.b32.xlu0 %v390, 114
      %v2528 = vpop.permute.xlu0 %2527
      %2529 = vrot.lane.b32.xlu0 %v392, 114
      %v2530 = vpop.permute.xlu0 %2529
      %2531 = vrot.lane.b32.xlu0 %v394, 114
      %v2532 = vpop.permute.xlu0 %2531
      %2533 = vrot.lane.b32.xlu0 %v396, 114
      %v2534 = vpop.permute.xlu0 %2533
      %vm2535 = vcmp.lt.s32.totalorder %v414, 114
      %v2536 = vsel %vm2535, %v2520, %v2528
      %v2537 = vsel %vm2535, %v2522, %v2530
      %v2538 = vsel %vm2535, %v2524, %v2532
      %v2539 = vsel %vm2535, %v2526, %v2534
      %v2540 = vsel %vm2535, %v2528, %v2520
      %v2541 = vsel %vm2535, %v2530, %v2522
      %v2542 = vsel %vm2535, %v2532, %v2524
      %v2543 = vsel %vm2535, %v2534, %v2526
      %s2544 = scalar_lea.vmem %s5, 53
      %v2545 = vld [vmem:[%s2544] ss:$8 sm:$0x3]
      %v2547 = vlaneseq
      %v2548 = vshrl.u32 %v2547, 7
      %v2549 = vsub.s32 0, %v2548
      %v2550 = vrot.slane %v2545, %v2549
      %v2551 = vlaneseq
      %v2552 = vshrl.u32 %v2551, 7
      %v2553 = vsub.s32 1, %v2552
      %v2554 = vrot.slane %v2545, %v2553
      %v2557 = vmul.f32 %v2536, %v2550
      %v2558 = vmul.f32 %v2540, %v2554
      %v2559 = vmul.f32 %v2537, %v2550
      %v2560 = vmul.f32 %v2541, %v2554
      %v2561 = vmul.f32 %v2538, %v2550
      %v2562 = vmul.f32 %v2542, %v2554
      %v2563 = vmul.f32 %v2539, %v2550
      %v2564 = vmul.f32 %v2543, %v2554
      %v2565 = vpack.c.bf16 %v2559, %v2557
      %v2566 = vpack.c.bf16 %v2560, %v2558
      %v2567 = vpack.c.bf16 %v2563, %v2561
      %v2568 = vpack.c.bf16 %v2564, %v2562
      %v2573 = vunpack.c.l.b16 %v2565
      %v2574 = vunpack.c.l.b16 %v2566
      %v2575 = vunpack.c.h.b16 %v2565
      %v2576 = vunpack.c.h.b16 %v2566
      %v2577 = vunpack.c.l.b16 %v2567
      %v2578 = vunpack.c.l.b16 %v2568
      %v2579 = vunpack.c.h.b16 %v2567
      %v2580 = vunpack.c.h.b16 %v2568
      %v2581 = vpack.c.b16 %v2574, %v2573
      %v2582 = vpack.c.b16 %v2576, %v2575
      %v2583 = vpack.c.b16 %v2578, %v2577
      %v2584 = vpack.c.b16 %v2580, %v2579
      %2589 = vst [vmem:[#allocation2 + $0x3a0] sm:$0xff] %v2581
      %2590 = vst [vmem:[#allocation2 + $0x3a8] sm:$0xff] %v2582
      %2591 = vst [vmem:[#allocation2 + $0x3b0] sm:$0xff] %v2583
      %2592 = vst [vmem:[#allocation2 + $0x3b8] sm:$0xff] %v2584
      %2593 = vrot.lane.b32.xlu0 %v389, 113
      %v2594 = vpop.permute.xlu0 %2593
      %2595 = vrot.lane.b32.xlu0 %v391, 113
      %v2596 = vpop.permute.xlu0 %2595
      %2597 = vrot.lane.b32.xlu0 %v393, 113
      %v2598 = vpop.permute.xlu0 %2597
      %2599 = vrot.lane.b32.xlu0 %v395, 113
      %v2600 = vpop.permute.xlu0 %2599
      %2601 = vrot.lane.b32.xlu0 %v390, 113
      %v2602 = vpop.permute.xlu0 %2601
      %2603 = vrot.lane.b32.xlu0 %v392, 113
      %v2604 = vpop.permute.xlu0 %2603
      %2605 = vrot.lane.b32.xlu0 %v394, 113
      %v2606 = vpop.permute.xlu0 %2605
      %2607 = vrot.lane.b32.xlu0 %v396, 113
      %v2608 = vpop.permute.xlu0 %2607
      %vm2609 = vcmp.lt.s32.totalorder %v414, 113
      %v2610 = vsel %vm2609, %v2594, %v2602
      %v2611 = vsel %vm2609, %v2596, %v2604
      %v2612 = vsel %vm2609, %v2598, %v2606
      %v2613 = vsel %vm2609, %v2600, %v2608
      %v2614 = vsel %vm2609, %v2602, %v2594
      %v2615 = vsel %vm2609, %v2604, %v2596
      %v2616 = vsel %vm2609, %v2606, %v2598
      %v2617 = vsel %vm2609, %v2608, %v2600
      %s2618 = scalar_lea.vmem %s5, 54
      %v2619 = vld [vmem:[%s2618] ss:$8 sm:$0x3]
      %v2621 = vlaneseq
      %v2622 = vshrl.u32 %v2621, 7
      %v2623 = vsub.s32 0, %v2622
      %v2624 = vrot.slane %v2619, %v2623
      %v2625 = vlaneseq
      %v2626 = vshrl.u32 %v2625, 7
      %v2627 = vsub.s32 1, %v2626
      %v2628 = vrot.slane %v2619, %v2627
      %v2631 = vmul.f32 %v2610, %v2624
      %v2632 = vmul.f32 %v2614, %v2628
      %v2633 = vmul.f32 %v2611, %v2624
      %v2634 = vmul.f32 %v2615, %v2628
      %v2635 = vmul.f32 %v2612, %v2624
      %v2636 = vmul.f32 %v2616, %v2628
      %v2637 = vmul.f32 %v2613, %v2624
      %v2638 = vmul.f32 %v2617, %v2628
      %v2639 = vpack.c.bf16 %v2633, %v2631
      %v2640 = vpack.c.bf16 %v2634, %v2632
      %v2641 = vpack.c.bf16 %v2637, %v2635
      %v2642 = vpack.c.bf16 %v2638, %v2636
      %v2647 = vunpack.c.l.b16 %v2639
      %v2648 = vunpack.c.l.b16 %v2640
      %v2649 = vunpack.c.h.b16 %v2639
      %v2650 = vunpack.c.h.b16 %v2640
      %v2651 = vunpack.c.l.b16 %v2641
      %v2652 = vunpack.c.l.b16 %v2642
      %v2653 = vunpack.c.h.b16 %v2641
      %v2654 = vunpack.c.h.b16 %v2642
      %v2655 = vpack.c.b16 %v2648, %v2647
      %v2656 = vpack.c.b16 %v2650, %v2649
      %v2657 = vpack.c.b16 %v2652, %v2651
      %v2658 = vpack.c.b16 %v2654, %v2653
      %2663 = vst [vmem:[#allocation2 + $0x3c0] sm:$0xff] %v2655
      %2664 = vst [vmem:[#allocation2 + $0x3c8] sm:$0xff] %v2656
      %2665 = vst [vmem:[#allocation2 + $0x3d0] sm:$0xff] %v2657
      %2666 = vst [vmem:[#allocation2 + $0x3d8] sm:$0xff] %v2658
      %2667 = vrot.lane.b32.xlu0 %v389, 112
      %v2668 = vpop.permute.xlu0 %2667
      %2669 = vrot.lane.b32.xlu0 %v391, 112
      %v2670 = vpop.permute.xlu0 %2669
      %2671 = vrot.lane.b32.xlu0 %v393, 112
      %v2672 = vpop.permute.xlu0 %2671
      %2673 = vrot.lane.b32.xlu0 %v395, 112
      %v2674 = vpop.permute.xlu0 %2673
      %2675 = vrot.lane.b32.xlu0 %v390, 112
      %v2676 = vpop.permute.xlu0 %2675
      %2677 = vrot.lane.b32.xlu0 %v392, 112
      %v2678 = vpop.permute.xlu0 %2677
      %2679 = vrot.lane.b32.xlu0 %v394, 112
      %v2680 = vpop.permute.xlu0 %2679
      %2681 = vrot.lane.b32.xlu0 %v396, 112
      %v2682 = vpop.permute.xlu0 %2681
      %vm2683 = vcmp.lt.s32.totalorder %v414, 112
      %v2684 = vsel %vm2683, %v2668, %v2676
      %v2685 = vsel %vm2683, %v2670, %v2678
      %v2686 = vsel %vm2683, %v2672, %v2680
      %v2687 = vsel %vm2683, %v2674, %v2682
      %v2688 = vsel %vm2683, %v2676, %v2668
      %v2689 = vsel %vm2683, %v2678, %v2670
      %v2690 = vsel %vm2683, %v2680, %v2672
      %v2691 = vsel %vm2683, %v2682, %v2674
      %s2692 = scalar_lea.vmem %s5, 55
      %v2693 = vld [vmem:[%s2692] ss:$8 sm:$0x3]
      %v2695 = vlaneseq
      %v2696 = vshrl.u32 %v2695, 7
      %v2697 = vsub.s32 0, %v2696
      %v2698 = vrot.slane %v2693, %v2697
      %v2699 = vlaneseq
      %v2700 = vshrl.u32 %v2699, 7
      %v2701 = vsub.s32 1, %v2700
      %v2702 = vrot.slane %v2693, %v2701
      %v2705 = vmul.f32 %v2684, %v2698
      %v2706 = vmul.f32 %v2688, %v2702
      %v2707 = vmul.f32 %v2685, %v2698
      %v2708 = vmul.f32 %v2689, %v2702
      %v2709 = vmul.f32 %v2686, %v2698
      %v2710 = vmul.f32 %v2690, %v2702
      %v2711 = vmul.f32 %v2687, %v2698
      %v2712 = vmul.f32 %v2691, %v2702
      %v2713 = vpack.c.bf16 %v2707, %v2705
      %v2714 = vpack.c.bf16 %v2708, %v2706
      %v2715 = vpack.c.bf16 %v2711, %v2709
      %v2716 = vpack.c.bf16 %v2712, %v2710
      %v2721 = vunpack.c.l.b16 %v2713
      %v2722 = vunpack.c.l.b16 %v2714
      %v2723 = vunpack.c.h.b16 %v2713
      %v2724 = vunpack.c.h.b16 %v2714
      %v2725 = vunpack.c.l.b16 %v2715
      %v2726 = vunpack.c.l.b16 %v2716
      %v2727 = vunpack.c.h.b16 %v2715
      %v2728 = vunpack.c.h.b16 %v2716
      %v2729 = vpack.c.b16 %v2722, %v2721
      %v2730 = vpack.c.b16 %v2724, %v2723
      %v2731 = vpack.c.b16 %v2726, %v2725
      %v2732 = vpack.c.b16 %v2728, %v2727
      %2737 = vst [vmem:[#allocation2 + $0x3e0] sm:$0xff] %v2729
      %2738 = vst [vmem:[#allocation2 + $0x3e8] sm:$0xff] %v2730
      %2739 = vst [vmem:[#allocation2 + $0x3f0] sm:$0xff] %v2731
      %2740 = vst [vmem:[#allocation2 + $0x3f8] sm:$0xff] %v2732
      %2741 = vrot.lane.b32.xlu0 %v389, 111
      %v2742 = vpop.permute.xlu0 %2741
      %2743 = vrot.lane.b32.xlu0 %v391, 111
      %v2744 = vpop.permute.xlu0 %2743
      %2745 = vrot.lane.b32.xlu0 %v393, 111
      %v2746 = vpop.permute.xlu0 %2745
      %2747 = vrot.lane.b32.xlu0 %v395, 111
      %v2748 = vpop.permute.xlu0 %2747
      %2749 = vrot.lane.b32.xlu0 %v390, 111
      %v2750 = vpop.permute.xlu0 %2749
      %2751 = vrot.lane.b32.xlu0 %v392, 111
      %v2752 = vpop.permute.xlu0 %2751
      %2753 = vrot.lane.b32.xlu0 %v394, 111
      %v2754 = vpop.permute.xlu0 %2753
      %2755 = vrot.lane.b32.xlu0 %v396, 111
      %v2756 = vpop.permute.xlu0 %2755
      %vm2757 = vcmp.lt.s32.totalorder %v414, 111
      %v2758 = vsel %vm2757, %v2742, %v2750
      %v2759 = vsel %vm2757, %v2744, %v2752
      %v2760 = vsel %vm2757, %v2746, %v2754
      %v2761 = vsel %vm2757, %v2748, %v2756
      %v2762 = vsel %vm2757, %v2750, %v2742
      %v2763 = vsel %vm2757, %v2752, %v2744
      %v2764 = vsel %vm2757, %v2754, %v2746
      %v2765 = vsel %vm2757, %v2756, %v2748
      %s2766 = scalar_lea.vmem %s5, 64
      %v2767 = vld [vmem:[%s2766] ss:$8 sm:$0x3]
      %v2769 = vlaneseq
      %v2770 = vshrl.u32 %v2769, 7
      %v2771 = vsub.s32 0, %v2770
      %v2772 = vrot.slane %v2767, %v2771
      %v2773 = vlaneseq
      %v2774 = vshrl.u32 %v2773, 7
      %v2775 = vsub.s32 1, %v2774
      %v2776 = vrot.slane %v2767, %v2775
      %v2779 = vmul.f32 %v2758, %v2772
      %v2780 = vmul.f32 %v2762, %v2776
      %v2781 = vmul.f32 %v2759, %v2772
      %v2782 = vmul.f32 %v2763, %v2776
      %v2783 = vmul.f32 %v2760, %v2772
      %v2784 = vmul.f32 %v2764, %v2776
      %v2785 = vmul.f32 %v2761, %v2772
      %v2786 = vmul.f32 %v2765, %v2776
      %v2787 = vpack.c.bf16 %v2781, %v2779
      %v2788 = vpack.c.bf16 %v2782, %v2780
      %v2789 = vpack.c.bf16 %v2785, %v2783
      %v2790 = vpack.c.bf16 %v2786, %v2784
      %v2795 = vunpack.c.l.b16 %v2787
      %v2796 = vunpack.c.l.b16 %v2788
      %v2797 = vunpack.c.h.b16 %v2787
      %v2798 = vunpack.c.h.b16 %v2788
      %v2799 = vunpack.c.l.b16 %v2789
      %v2800 = vunpack.c.l.b16 %v2790
      %v2801 = vunpack.c.h.b16 %v2789
      %v2802 = vunpack.c.h.b16 %v2790
      %v2803 = vpack.c.b16 %v2796, %v2795
      %v2804 = vpack.c.b16 %v2798, %v2797
      %v2805 = vpack.c.b16 %v2800, %v2799
      %v2806 = vpack.c.b16 %v2802, %v2801
      %2811 = vst [vmem:[#allocation2 + $0x400] sm:$0xff] %v2803
      %2812 = vst [vmem:[#allocation2 + $0x408] sm:$0xff] %v2804
      %2813 = vst [vmem:[#allocation2 + $0x410] sm:$0xff] %v2805
      %2814 = vst [vmem:[#allocation2 + $0x418] sm:$0xff] %v2806
      %2815 = vrot.lane.b32.xlu0 %v389, 110
      %v2816 = vpop.permute.xlu0 %2815
      %2817 = vrot.lane.b32.xlu0 %v391, 110
      %v2818 = vpop.permute.xlu0 %2817
      %2819 = vrot.lane.b32.xlu0 %v393, 110
      %v2820 = vpop.permute.xlu0 %2819
      %2821 = vrot.lane.b32.xlu0 %v395, 110
      %v2822 = vpop.permute.xlu0 %2821
      %2823 = vrot.lane.b32.xlu0 %v390, 110
      %v2824 = vpop.permute.xlu0 %2823
      %2825 = vrot.lane.b32.xlu0 %v392, 110
      %v2826 = vpop.permute.xlu0 %2825
      %2827 = vrot.lane.b32.xlu0 %v394, 110
      %v2828 = vpop.permute.xlu0 %2827
      %2829 = vrot.lane.b32.xlu0 %v396, 110
      %v2830 = vpop.permute.xlu0 %2829
      %vm2831 = vcmp.lt.s32.totalorder %v414, 110
      %v2832 = vsel %vm2831, %v2816, %v2824
      %v2833 = vsel %vm2831, %v2818, %v2826
      %v2834 = vsel %vm2831, %v2820, %v2828
      %v2835 = vsel %vm2831, %v2822, %v2830
      %v2836 = vsel %vm2831, %v2824, %v2816
      %v2837 = vsel %vm2831, %v2826, %v2818
      %v2838 = vsel %vm2831, %v2828, %v2820
      %v2839 = vsel %vm2831, %v2830, %v2822
      %s2840 = scalar_lea.vmem %s5, 65
      %v2841 = vld [vmem:[%s2840] ss:$8 sm:$0x3]
      %v2843 = vlaneseq
      %v2844 = vshrl.u32 %v2843, 7
      %v2845 = vsub.s32 0, %v2844
      %v2846 = vrot.slane %v2841, %v2845
      %v2847 = vlaneseq
      %v2848 = vshrl.u32 %v2847, 7
      %v2849 = vsub.s32 1, %v2848
      %v2850 = vrot.slane %v2841, %v2849
      %v2853 = vmul.f32 %v2832, %v2846
      %v2854 = vmul.f32 %v2836, %v2850
      %v2855 = vmul.f32 %v2833, %v2846
      %v2856 = vmul.f32 %v2837, %v2850
      %v2857 = vmul.f32 %v2834, %v2846
      %v2858 = vmul.f32 %v2838, %v2850
      %v2859 = vmul.f32 %v2835, %v2846
      %v2860 = vmul.f32 %v2839, %v2850
      %v2861 = vpack.c.bf16 %v2855, %v2853
      %v2862 = vpack.c.bf16 %v2856, %v2854
      %v2863 = vpack.c.bf16 %v2859, %v2857
      %v2864 = vpack.c.bf16 %v2860, %v2858
      %v2869 = vunpack.c.l.b16 %v2861
      %v2870 = vunpack.c.l.b16 %v2862
      %v2871 = vunpack.c.h.b16 %v2861
      %v2872 = vunpack.c.h.b16 %v2862
      %v2873 = vunpack.c.l.b16 %v2863
      %v2874 = vunpack.c.l.b16 %v2864
      %v2875 = vunpack.c.h.b16 %v2863
      %v2876 = vunpack.c.h.b16 %v2864
      %v2877 = vpack.c.b16 %v2870, %v2869
      %v2878 = vpack.c.b16 %v2872, %v2871
      %v2879 = vpack.c.b16 %v2874, %v2873
      %v2880 = vpack.c.b16 %v2876, %v2875
      %2885 = vst [vmem:[#allocation2 + $0x420] sm:$0xff] %v2877
      %2886 = vst [vmem:[#allocation2 + $0x428] sm:$0xff] %v2878
      %2887 = vst [vmem:[#allocation2 + $0x430] sm:$0xff] %v2879
      %2888 = vst [vmem:[#allocation2 + $0x438] sm:$0xff] %v2880
      %2889 = vrot.lane.b32.xlu0 %v389, 109
      %v2890 = vpop.permute.xlu0 %2889
      %2891 = vrot.lane.b32.xlu0 %v391, 109
      %v2892 = vpop.permute.xlu0 %2891
      %2893 = vrot.lane.b32.xlu0 %v393, 109
      %v2894 = vpop.permute.xlu0 %2893
      %2895 = vrot.lane.b32.xlu0 %v395, 109
      %v2896 = vpop.permute.xlu0 %2895
      %2897 = vrot.lane.b32.xlu0 %v390, 109
      %v2898 = vpop.permute.xlu0 %2897
      %2899 = vrot.lane.b32.xlu0 %v392, 109
      %v2900 = vpop.permute.xlu0 %2899
      %2901 = vrot.lane.b32.xlu0 %v394, 109
      %v2902 = vpop.permute.xlu0 %2901
      %2903 = vrot.lane.b32.xlu0 %v396, 109
      %v2904 = vpop.permute.xlu0 %2903
      %vm2905 = vcmp.lt.s32.totalorder %v414, 109
      %v2906 = vsel %vm2905, %v2890, %v2898
      %v2907 = vsel %vm2905, %v2892, %v2900
      %v2908 = vsel %vm2905, %v2894, %v2902
      %v2909 = vsel %vm2905, %v2896, %v2904
      %v2910 = vsel %vm2905, %v2898, %v2890
      %v2911 = vsel %vm2905, %v2900, %v2892
      %v2912 = vsel %vm2905, %v2902, %v2894
      %v2913 = vsel %vm2905, %v2904, %v2896
      %s2914 = scalar_lea.vmem %s5, 66
      %v2915 = vld [vmem:[%s2914] ss:$8 sm:$0x3]
      %v2917 = vlaneseq
      %v2918 = vshrl.u32 %v2917, 7
      %v2919 = vsub.s32 0, %v2918
      %v2920 = vrot.slane %v2915, %v2919
      %v2921 = vlaneseq
      %v2922 = vshrl.u32 %v2921, 7
      %v2923 = vsub.s32 1, %v2922
      %v2924 = vrot.slane %v2915, %v2923
      %v2927 = vmul.f32 %v2906, %v2920
      %v2928 = vmul.f32 %v2910, %v2924
      %v2929 = vmul.f32 %v2907, %v2920
      %v2930 = vmul.f32 %v2911, %v2924
      %v2931 = vmul.f32 %v2908, %v2920
      %v2932 = vmul.f32 %v2912, %v2924
      %v2933 = vmul.f32 %v2909, %v2920
      %v2934 = vmul.f32 %v2913, %v2924
      %v2935 = vpack.c.bf16 %v2929, %v2927
      %v2936 = vpack.c.bf16 %v2930, %v2928
      %v2937 = vpack.c.bf16 %v2933, %v2931
      %v2938 = vpack.c.bf16 %v2934, %v2932
      %v2943 = vunpack.c.l.b16 %v2935
      %v2944 = vunpack.c.l.b16 %v2936
      %v2945 = vunpack.c.h.b16 %v2935
      %v2946 = vunpack.c.h.b16 %v2936
      %v2947 = vunpack.c.l.b16 %v2937
      %v2948 = vunpack.c.l.b16 %v2938
      %v2949 = vunpack.c.h.b16 %v2937
      %v2950 = vunpack.c.h.b16 %v2938
      %v2951 = vpack.c.b16 %v2944, %v2943
      %v2952 = vpack.c.b16 %v2946, %v2945
      %v2953 = vpack.c.b16 %v2948, %v2947
      %v2954 = vpack.c.b16 %v2950, %v2949
      %2959 = vst [vmem:[#allocation2 + $0x440] sm:$0xff] %v2951
      %2960 = vst [vmem:[#allocation2 + $0x448] sm:$0xff] %v2952
      %2961 = vst [vmem:[#allocation2 + $0x450] sm:$0xff] %v2953
      %2962 = vst [vmem:[#allocation2 + $0x458] sm:$0xff] %v2954
      %2963 = vrot.lane.b32.xlu0 %v389, 99
      %v2964 = vpop.permute.xlu0 %2963
      %2965 = vrot.lane.b32.xlu0 %v391, 99
      %v2966 = vpop.permute.xlu0 %2965
      %2967 = vrot.lane.b32.xlu0 %v393, 99
      %v2968 = vpop.permute.xlu0 %2967
      %2969 = vrot.lane.b32.xlu0 %v395, 99
      %v2970 = vpop.permute.xlu0 %2969
      %2971 = vrot.lane.b32.xlu0 %v390, 99
      %v2972 = vpop.permute.xlu0 %2971
      %2973 = vrot.lane.b32.xlu0 %v392, 99
      %v2974 = vpop.permute.xlu0 %2973
      %2975 = vrot.lane.b32.xlu0 %v394, 99
      %v2976 = vpop.permute.xlu0 %2975
      %2977 = vrot.lane.b32.xlu0 %v396, 99
      %v2978 = vpop.permute.xlu0 %2977
      %vm2979 = vcmp.lt.s32.totalorder %v414, 99
      %v2980 = vsel %vm2979, %v2964, %v2972
      %v2981 = vsel %vm2979, %v2966, %v2974
      %v2982 = vsel %vm2979, %v2968, %v2976
      %v2983 = vsel %vm2979, %v2970, %v2978
      %v2984 = vsel %vm2979, %v2972, %v2964
      %v2985 = vsel %vm2979, %v2974, %v2966
      %v2986 = vsel %vm2979, %v2976, %v2968
      %v2987 = vsel %vm2979, %v2978, %v2970
      %s2988 = scalar_lea.vmem %s5, 67
      %v2989 = vld [vmem:[%s2988] ss:$8 sm:$0x3]
      %v2991 = vlaneseq
      %v2992 = vshrl.u32 %v2991, 7
      %v2993 = vsub.s32 0, %v2992
      %v2994 = vrot.slane %v2989, %v2993
      %v2995 = vlaneseq
      %v2996 = vshrl.u32 %v2995, 7
      %v2997 = vsub.s32 1, %v2996
      %v2998 = vrot.slane %v2989, %v2997
      %v3001 = vmul.f32 %v2980, %v2994
      %v3002 = vmul.f32 %v2984, %v2998
      %v3003 = vmul.f32 %v2981, %v2994
      %v3004 = vmul.f32 %v2985, %v2998
      %v3005 = vmul.f32 %v2982, %v2994
      %v3006 = vmul.f32 %v2986, %v2998
      %v3007 = vmul.f32 %v2983, %v2994
      %v3008 = vmul.f32 %v2987, %v2998
      %v3009 = vpack.c.bf16 %v3003, %v3001
      %v3010 = vpack.c.bf16 %v3004, %v3002
      %v3011 = vpack.c.bf16 %v3007, %v3005
      %v3012 = vpack.c.bf16 %v3008, %v3006
      %v3017 = vunpack.c.l.b16 %v3009
      %v3018 = vunpack.c.l.b16 %v3010
      %v3019 = vunpack.c.h.b16 %v3009
      %v3020 = vunpack.c.h.b16 %v3010
      %v3021 = vunpack.c.l.b16 %v3011
      %v3022 = vunpack.c.l.b16 %v3012
      %v3023 = vunpack.c.h.b16 %v3011
      %v3024 = vunpack.c.h.b16 %v3012
      %v3025 = vpack.c.b16 %v3018, %v3017
      %v3026 = vpack.c.b16 %v3020, %v3019
      %v3027 = vpack.c.b16 %v3022, %v3021
      %v3028 = vpack.c.b16 %v3024, %v3023
      %3033 = vst [vmem:[#allocation2 + $0x460] sm:$0xff] %v3025
      %3034 = vst [vmem:[#allocation2 + $0x468] sm:$0xff] %v3026
      %3035 = vst [vmem:[#allocation2 + $0x470] sm:$0xff] %v3027
      %3036 = vst [vmem:[#allocation2 + $0x478] sm:$0xff] %v3028
      %3037 = vrot.lane.b32.xlu0 %v389, 98
      %v3038 = vpop.permute.xlu0 %3037
      %3039 = vrot.lane.b32.xlu0 %v391, 98
      %v3040 = vpop.permute.xlu0 %3039
      %3041 = vrot.lane.b32.xlu0 %v393, 98
      %v3042 = vpop.permute.xlu0 %3041
      %3043 = vrot.lane.b32.xlu0 %v395, 98
      %v3044 = vpop.permute.xlu0 %3043
      %3045 = vrot.lane.b32.xlu0 %v390, 98
      %v3046 = vpop.permute.xlu0 %3045
      %3047 = vrot.lane.b32.xlu0 %v392, 98
      %v3048 = vpop.permute.xlu0 %3047
      %3049 = vrot.lane.b32.xlu0 %v394, 98
      %v3050 = vpop.permute.xlu0 %3049
      %3051 = vrot.lane.b32.xlu0 %v396, 98
      %v3052 = vpop.permute.xlu0 %3051
      %vm3053 = vcmp.lt.s32.totalorder %v414, 98
      %v3054 = vsel %vm3053, %v3038, %v3046
      %v3055 = vsel %vm3053, %v3040, %v3048
      %v3056 = vsel %vm3053, %v3042, %v3050
      %v3057 = vsel %vm3053, %v3044, %v3052
      %v3058 = vsel %vm3053, %v3046, %v3038
      %v3059 = vsel %vm3053, %v3048, %v3040
      %v3060 = vsel %vm3053, %v3050, %v3042
      %v3061 = vsel %vm3053, %v3052, %v3044
      %s3062 = scalar_lea.vmem %s5, 68
      %v3063 = vld [vmem:[%s3062] ss:$8 sm:$0x3]
      %v3065 = vlaneseq
      %v3066 = vshrl.u32 %v3065, 7
      %v3067 = vsub.s32 0, %v3066
      %v3068 = vrot.slane %v3063, %v3067
      %v3069 = vlaneseq
      %v3070 = vshrl.u32 %v3069, 7
      %v3071 = vsub.s32 1, %v3070
      %v3072 = vrot.slane %v3063, %v3071
      %v3075 = vmul.f32 %v3054, %v3068
      %v3076 = vmul.f32 %v3058, %v3072
      %v3077 = vmul.f32 %v3055, %v3068
      %v3078 = vmul.f32 %v3059, %v3072
      %v3079 = vmul.f32 %v3056, %v3068
      %v3080 = vmul.f32 %v3060, %v3072
      %v3081 = vmul.f32 %v3057, %v3068
      %v3082 = vmul.f32 %v3061, %v3072
      %v3083 = vpack.c.bf16 %v3077, %v3075
      %v3084 = vpack.c.bf16 %v3078, %v3076
      %v3085 = vpack.c.bf16 %v3081, %v3079
      %v3086 = vpack.c.bf16 %v3082, %v3080
      %v3091 = vunpack.c.l.b16 %v3083
      %v3092 = vunpack.c.l.b16 %v3084
      %v3093 = vunpack.c.h.b16 %v3083
      %v3094 = vunpack.c.h.b16 %v3084
      %v3095 = vunpack.c.l.b16 %v3085
      %v3096 = vunpack.c.l.b16 %v3086
      %v3097 = vunpack.c.h.b16 %v3085
      %v3098 = vunpack.c.h.b16 %v3086
      %v3099 = vpack.c.b16 %v3092, %v3091
      %v3100 = vpack.c.b16 %v3094, %v3093
      %v3101 = vpack.c.b16 %v3096, %v3095
      %v3102 = vpack.c.b16 %v3098, %v3097
      %3107 = vst [vmem:[#allocation2 + $0x480] sm:$0xff] %v3099
      %3108 = vst [vmem:[#allocation2 + $0x488] sm:$0xff] %v3100
      %3109 = vst [vmem:[#allocation2 + $0x490] sm:$0xff] %v3101
      %3110 = vst [vmem:[#allocation2 + $0x498] sm:$0xff] %v3102
      %3111 = vrot.lane.b32.xlu0 %v389, 97
      %v3112 = vpop.permute.xlu0 %3111
      %3113 = vrot.lane.b32.xlu0 %v391, 97
      %v3114 = vpop.permute.xlu0 %3113
      %3115 = vrot.lane.b32.xlu0 %v393, 97
      %v3116 = vpop.permute.xlu0 %3115
      %3117 = vrot.lane.b32.xlu0 %v395, 97
      %v3118 = vpop.permute.xlu0 %3117
      %3119 = vrot.lane.b32.xlu0 %v390, 97
      %v3120 = vpop.permute.xlu0 %3119
      %3121 = vrot.lane.b32.xlu0 %v392, 97
      %v3122 = vpop.permute.xlu0 %3121
      %3123 = vrot.lane.b32.xlu0 %v394, 97
      %v3124 = vpop.permute.xlu0 %3123
      %3125 = vrot.lane.b32.xlu0 %v396, 97
      %v3126 = vpop.permute.xlu0 %3125
      %vm3127 = vcmp.lt.s32.totalorder %v414, 97
      %v3128 = vsel %vm3127, %v3112, %v3120
      %v3129 = vsel %vm3127, %v3114, %v3122
      %v3130 = vsel %vm3127, %v3116, %v3124
      %v3131 = vsel %vm3127, %v3118, %v3126
      %v3132 = vsel %vm3127, %v3120, %v3112
      %v3133 = vsel %vm3127, %v3122, %v3114
      %v3134 = vsel %vm3127, %v3124, %v3116
      %v3135 = vsel %vm3127, %v3126, %v3118
      %s3136 = scalar_lea.vmem %s5, 69
      %v3137 = vld [vmem:[%s3136] ss:$8 sm:$0x3]
      %v3139 = vlaneseq
      %v3140 = vshrl.u32 %v3139, 7
      %v3141 = vsub.s32 0, %v3140
      %v3142 = vrot.slane %v3137, %v3141
      %v3143 = vlaneseq
      %v3144 = vshrl.u32 %v3143, 7
      %v3145 = vsub.s32 1, %v3144
      %v3146 = vrot.slane %v3137, %v3145
      %v3149 = vmul.f32 %v3128, %v3142
      %v3150 = vmul.f32 %v3132, %v3146
      %v3151 = vmul.f32 %v3129, %v3142
      %v3152 = vmul.f32 %v3133, %v3146
      %v3153 = vmul.f32 %v3130, %v3142
      %v3154 = vmul.f32 %v3134, %v3146
      %v3155 = vmul.f32 %v3131, %v3142
      %v3156 = vmul.f32 %v3135, %v3146
      %v3157 = vpack.c.bf16 %v3151, %v3149
      %v3158 = vpack.c.bf16 %v3152, %v3150
      %v3159 = vpack.c.bf16 %v3155, %v3153
      %v3160 = vpack.c.bf16 %v3156, %v3154
      %v3165 = vunpack.c.l.b16 %v3157
      %v3166 = vunpack.c.l.b16 %v3158
      %v3167 = vunpack.c.h.b16 %v3157
      %v3168 = vunpack.c.h.b16 %v3158
      %v3169 = vunpack.c.l.b16 %v3159
      %v3170 = vunpack.c.l.b16 %v3160
      %v3171 = vunpack.c.h.b16 %v3159
      %v3172 = vunpack.c.h.b16 %v3160
      %v3173 = vpack.c.b16 %v3166, %v3165
      %v3174 = vpack.c.b16 %v3168, %v3167
      %v3175 = vpack.c.b16 %v3170, %v3169
      %v3176 = vpack.c.b16 %v3172, %v3171
      %3181 = vst [vmem:[#allocation2 + $0x4a0] sm:$0xff] %v3173
      %3182 = vst [vmem:[#allocation2 + $0x4a8] sm:$0xff] %v3174
      %3183 = vst [vmem:[#allocation2 + $0x4b0] sm:$0xff] %v3175
      %3184 = vst [vmem:[#allocation2 + $0x4b8] sm:$0xff] %v3176
      %3185 = vrot.lane.b32.xlu0 %v389, 96
      %v3186 = vpop.permute.xlu0 %3185
      %3187 = vrot.lane.b32.xlu0 %v391, 96
      %v3188 = vpop.permute.xlu0 %3187
      %3189 = vrot.lane.b32.xlu0 %v393, 96
      %v3190 = vpop.permute.xlu0 %3189
      %3191 = vrot.lane.b32.xlu0 %v395, 96
      %v3192 = vpop.permute.xlu0 %3191
      %3193 = vrot.lane.b32.xlu0 %v390, 96
      %v3194 = vpop.permute.xlu0 %3193
      %3195 = vrot.lane.b32.xlu0 %v392, 96
      %v3196 = vpop.permute.xlu0 %3195
      %3197 = vrot.lane.b32.xlu0 %v394, 96
      %v3198 = vpop.permute.xlu0 %3197
      %3199 = vrot.lane.b32.xlu0 %v396, 96
      %v3200 = vpop.permute.xlu0 %3199
      %vm3201 = vcmp.lt.s32.totalorder %v414, 96
      %v3202 = vsel %vm3201, %v3186, %v3194
      %v3203 = vsel %vm3201, %v3188, %v3196
      %v3204 = vsel %vm3201, %v3190, %v3198
      %v3205 = vsel %vm3201, %v3192, %v3200
      %v3206 = vsel %vm3201, %v3194, %v3186
      %v3207 = vsel %vm3201, %v3196, %v3188
      %v3208 = vsel %vm3201, %v3198, %v3190
      %v3209 = vsel %vm3201, %v3200, %v3192
      %s3210 = scalar_lea.vmem %s5, 70
      %v3211 = vld [vmem:[%s3210] ss:$8 sm:$0x3]
      %v3213 = vlaneseq
      %v3214 = vshrl.u32 %v3213, 7
      %v3215 = vsub.s32 0, %v3214
      %v3216 = vrot.slane %v3211, %v3215
      %v3217 = vlaneseq
      %v3218 = vshrl.u32 %v3217, 7
      %v3219 = vsub.s32 1, %v3218
      %v3220 = vrot.slane %v3211, %v3219
      %v3223 = vmul.f32 %v3202, %v3216
      %v3224 = vmul.f32 %v3206, %v3220
      %v3225 = vmul.f32 %v3203, %v3216
      %v3226 = vmul.f32 %v3207, %v3220
      %v3227 = vmul.f32 %v3204, %v3216
      %v3228 = vmul.f32 %v3208, %v3220
      %v3229 = vmul.f32 %v3205, %v3216
      %v3230 = vmul.f32 %v3209, %v3220
      %v3231 = vpack.c.bf16 %v3225, %v3223
      %v3232 = vpack.c.bf16 %v3226, %v3224
      %v3233 = vpack.c.bf16 %v3229, %v3227
      %v3234 = vpack.c.bf16 %v3230, %v3228
      %v3239 = vunpack.c.l.b16 %v3231
      %v3240 = vunpack.c.l.b16 %v3232
      %v3241 = vunpack.c.h.b16 %v3231
      %v3242 = vunpack.c.h.b16 %v3232
      %v3243 = vunpack.c.l.b16 %v3233
      %v3244 = vunpack.c.l.b16 %v3234
      %v3245 = vunpack.c.h.b16 %v3233
      %v3246 = vunpack.c.h.b16 %v3234
      %v3247 = vpack.c.b16 %v3240, %v3239
      %v3248 = vpack.c.b16 %v3242, %v3241
      %v3249 = vpack.c.b16 %v3244, %v3243
      %v3250 = vpack.c.b16 %v3246, %v3245
      %3255 = vst [vmem:[#allocation2 + $0x4c0] sm:$0xff] %v3247
      %3256 = vst [vmem:[#allocation2 + $0x4c8] sm:$0xff] %v3248
      %3257 = vst [vmem:[#allocation2 + $0x4d0] sm:$0xff] %v3249
      %3258 = vst [vmem:[#allocation2 + $0x4d8] sm:$0xff] %v3250
      %3259 = vrot.lane.b32.xlu0 %v389, 95
      %v3260 = vpop.permute.xlu0 %3259
      %3261 = vrot.lane.b32.xlu0 %v391, 95
      %v3262 = vpop.permute.xlu0 %3261
      %3263 = vrot.lane.b32.xlu0 %v393, 95
      %v3264 = vpop.permute.xlu0 %3263
      %3265 = vrot.lane.b32.xlu0 %v395, 95
      %v3266 = vpop.permute.xlu0 %3265
      %3267 = vrot.lane.b32.xlu0 %v390, 95
      %v3268 = vpop.permute.xlu0 %3267
      %3269 = vrot.lane.b32.xlu0 %v392, 95
      %v3270 = vpop.permute.xlu0 %3269
      %3271 = vrot.lane.b32.xlu0 %v394, 95
      %v3272 = vpop.permute.xlu0 %3271
      %3273 = vrot.lane.b32.xlu0 %v396, 95
      %v3274 = vpop.permute.xlu0 %3273
      %vm3275 = vcmp.lt.s32.totalorder %v414, 95
      %v3276 = vsel %vm3275, %v3260, %v3268
      %v3277 = vsel %vm3275, %v3262, %v3270
      %v3278 = vsel %vm3275, %v3264, %v3272
      %v3279 = vsel %vm3275, %v3266, %v3274
      %v3280 = vsel %vm3275, %v3268, %v3260
      %v3281 = vsel %vm3275, %v3270, %v3262
      %v3282 = vsel %vm3275, %v3272, %v3264
      %v3283 = vsel %vm3275, %v3274, %v3266
      %s3284 = scalar_lea.vmem %s5, 71
      %v3285 = vld [vmem:[%s3284] ss:$8 sm:$0x3]
      %v3287 = vlaneseq
      %v3288 = vshrl.u32 %v3287, 7
      %v3289 = vsub.s32 0, %v3288
      %v3290 = vrot.slane %v3285, %v3289
      %v3291 = vlaneseq
      %v3292 = vshrl.u32 %v3291, 7
      %v3293 = vsub.s32 1, %v3292
      %v3294 = vrot.slane %v3285, %v3293
      %v3297 = vmul.f32 %v3276, %v3290
      %v3298 = vmul.f32 %v3280, %v3294
      %v3299 = vmul.f32 %v3277, %v3290
      %v3300 = vmul.f32 %v3281, %v3294
      %v3301 = vmul.f32 %v3278, %v3290
      %v3302 = vmul.f32 %v3282, %v3294
      %v3303 = vmul.f32 %v3279, %v3290
      %v3304 = vmul.f32 %v3283, %v3294
      %v3305 = vpack.c.bf16 %v3299, %v3297
      %v3306 = vpack.c.bf16 %v3300, %v3298
      %v3307 = vpack.c.bf16 %v3303, %v3301
      %v3308 = vpack.c.bf16 %v3304, %v3302
      %v3313 = vunpack.c.l.b16 %v3305
      %v3314 = vunpack.c.l.b16 %v3306
      %v3315 = vunpack.c.h.b16 %v3305
      %v3316 = vunpack.c.h.b16 %v3306
      %v3317 = vunpack.c.l.b16 %v3307
      %v3318 = vunpack.c.l.b16 %v3308
      %v3319 = vunpack.c.h.b16 %v3307
      %v3320 = vunpack.c.h.b16 %v3308
      %v3321 = vpack.c.b16 %v3314, %v3313
      %v3322 = vpack.c.b16 %v3316, %v3315
      %v3323 = vpack.c.b16 %v3318, %v3317
      %v3324 = vpack.c.b16 %v3320, %v3319
      %3329 = vst [vmem:[#allocation2 + $0x4e0] sm:$0xff] %v3321
      %3330 = vst [vmem:[#allocation2 + $0x4e8] sm:$0xff] %v3322
      %3331 = vst [vmem:[#allocation2 + $0x4f0] sm:$0xff] %v3323
      %3332 = vst [vmem:[#allocation2 + $0x4f8] sm:$0xff] %v3324
      %3333 = vrot.lane.b32.xlu0 %v389, 94
      %v3334 = vpop.permute.xlu0 %3333
      %3335 = vrot.lane.b32.xlu0 %v391, 94
      %v3336 = vpop.permute.xlu0 %3335
      %3337 = vrot.lane.b32.xlu0 %v393, 94
      %v3338 = vpop.permute.xlu0 %3337
      %3339 = vrot.lane.b32.xlu0 %v395, 94
      %v3340 = vpop.permute.xlu0 %3339
      %3341 = vrot.lane.b32.xlu0 %v390, 94
      %v3342 = vpop.permute.xlu0 %3341
      %3343 = vrot.lane.b32.xlu0 %v392, 94
      %v3344 = vpop.permute.xlu0 %3343
      %3345 = vrot.lane.b32.xlu0 %v394, 94
      %v3346 = vpop.permute.xlu0 %3345
      %3347 = vrot.lane.b32.xlu0 %v396, 94
      %v3348 = vpop.permute.xlu0 %3347
      %vm3349 = vcmp.lt.s32.totalorder %v414, 94
      %v3350 = vsel %vm3349, %v3334, %v3342
      %v3351 = vsel %vm3349, %v3336, %v3344
      %v3352 = vsel %vm3349, %v3338, %v3346
      %v3353 = vsel %vm3349, %v3340, %v3348
      %v3354 = vsel %vm3349, %v3342, %v3334
      %v3355 = vsel %vm3349, %v3344, %v3336
      %v3356 = vsel %vm3349, %v3346, %v3338
      %v3357 = vsel %vm3349, %v3348, %v3340
      %s3358 = scalar_lea.vmem %s5, 80
      %v3359 = vld [vmem:[%s3358] ss:$8 sm:$0x3]
      %v3361 = vlaneseq
      %v3362 = vshrl.u32 %v3361, 7
      %v3363 = vsub.s32 0, %v3362
      %v3364 = vrot.slane %v3359, %v3363
      %v3365 = vlaneseq
      %v3366 = vshrl.u32 %v3365, 7
      %v3367 = vsub.s32 1, %v3366
      %v3368 = vrot.slane %v3359, %v3367
      %v3371 = vmul.f32 %v3350, %v3364
      %v3372 = vmul.f32 %v3354, %v3368
      %v3373 = vmul.f32 %v3351, %v3364
      %v3374 = vmul.f32 %v3355, %v3368
      %v3375 = vmul.f32 %v3352, %v3364
      %v3376 = vmul.f32 %v3356, %v3368
      %v3377 = vmul.f32 %v3353, %v3364
      %v3378 = vmul.f32 %v3357, %v3368
      %v3379 = vpack.c.bf16 %v3373, %v3371
      %v3380 = vpack.c.bf16 %v3374, %v3372
      %v3381 = vpack.c.bf16 %v3377, %v3375
      %v3382 = vpack.c.bf16 %v3378, %v3376
      %v3387 = vunpack.c.l.b16 %v3379
      %v3388 = vunpack.c.l.b16 %v3380
      %v3389 = vunpack.c.h.b16 %v3379
      %v3390 = vunpack.c.h.b16 %v3380
      %v3391 = vunpack.c.l.b16 %v3381
      %v3392 = vunpack.c.l.b16 %v3382
      %v3393 = vunpack.c.h.b16 %v3381
      %v3394 = vunpack.c.h.b16 %v3382
      %v3395 = vpack.c.b16 %v3388, %v3387
      %v3396 = vpack.c.b16 %v3390, %v3389
      %v3397 = vpack.c.b16 %v3392, %v3391
      %v3398 = vpack.c.b16 %v3394, %v3393
      %3403 = vst [vmem:[#allocation2 + $0x500] sm:$0xff] %v3395
      %3404 = vst [vmem:[#allocation2 + $0x508] sm:$0xff] %v3396
      %3405 = vst [vmem:[#allocation2 + $0x510] sm:$0xff] %v3397
      %3406 = vst [vmem:[#allocation2 + $0x518] sm:$0xff] %v3398
      %3407 = vrot.lane.b32.xlu0 %v389, 93
      %v3408 = vpop.permute.xlu0 %3407
      %3409 = vrot.lane.b32.xlu0 %v391, 93
      %v3410 = vpop.permute.xlu0 %3409
      %3411 = vrot.lane.b32.xlu0 %v393, 93
      %v3412 = vpop.permute.xlu0 %3411
      %3413 = vrot.lane.b32.xlu0 %v395, 93
      %v3414 = vpop.permute.xlu0 %3413
      %3415 = vrot.lane.b32.xlu0 %v390, 93
      %v3416 = vpop.permute.xlu0 %3415
      %3417 = vrot.lane.b32.xlu0 %v392, 93
      %v3418 = vpop.permute.xlu0 %3417
      %3419 = vrot.lane.b32.xlu0 %v394, 93
      %v3420 = vpop.permute.xlu0 %3419
      %3421 = vrot.lane.b32.xlu0 %v396, 93
      %v3422 = vpop.permute.xlu0 %3421
      %vm3423 = vcmp.lt.s32.totalorder %v414, 93
      %v3424 = vsel %vm3423, %v3408, %v3416
      %v3425 = vsel %vm3423, %v3410, %v3418
      %v3426 = vsel %vm3423, %v3412, %v3420
      %v3427 = vsel %vm3423, %v3414, %v3422
      %v3428 = vsel %vm3423, %v3416, %v3408
      %v3429 = vsel %vm3423, %v3418, %v3410
      %v3430 = vsel %vm3423, %v3420, %v3412
      %v3431 = vsel %vm3423, %v3422, %v3414
      %s3432 = scalar_lea.vmem %s5, 81
      %v3433 = vld [vmem:[%s3432] ss:$8 sm:$0x3]
      %v3435 = vlaneseq
      %v3436 = vshrl.u32 %v3435, 7
      %v3437 = vsub.s32 0, %v3436
      %v3438 = vrot.slane %v3433, %v3437
      %v3439 = vlaneseq
      %v3440 = vshrl.u32 %v3439, 7
      %v3441 = vsub.s32 1, %v3440
      %v3442 = vrot.slane %v3433, %v3441
      %v3445 = vmul.f32 %v3424, %v3438
      %v3446 = vmul.f32 %v3428, %v3442
      %v3447 = vmul.f32 %v3425, %v3438
      %v3448 = vmul.f32 %v3429, %v3442
      %v3449 = vmul.f32 %v3426, %v3438
      %v3450 = vmul.f32 %v3430, %v3442
      %v3451 = vmul.f32 %v3427, %v3438
      %v3452 = vmul.f32 %v3431, %v3442
      %v3453 = vpack.c.bf16 %v3447, %v3445
      %v3454 = vpack.c.bf16 %v3448, %v3446
      %v3455 = vpack.c.bf16 %v3451, %v3449
      %v3456 = vpack.c.bf16 %v3452, %v3450
      %v3461 = vunpack.c.l.b16 %v3453
      %v3462 = vunpack.c.l.b16 %v3454
      %v3463 = vunpack.c.h.b16 %v3453
      %v3464 = vunpack.c.h.b16 %v3454
      %v3465 = vunpack.c.l.b16 %v3455
      %v3466 = vunpack.c.l.b16 %v3456
      %v3467 = vunpack.c.h.b16 %v3455
      %v3468 = vunpack.c.h.b16 %v3456
      %v3469 = vpack.c.b16 %v3462, %v3461
      %v3470 = vpack.c.b16 %v3464, %v3463
      %v3471 = vpack.c.b16 %v3466, %v3465
      %v3472 = vpack.c.b16 %v3468, %v3467
      %3477 = vst [vmem:[#allocation2 + $0x520] sm:$0xff] %v3469
      %3478 = vst [vmem:[#allocation2 + $0x528] sm:$0xff] %v3470
      %3479 = vst [vmem:[#allocation2 + $0x530] sm:$0xff] %v3471
      %3480 = vst [vmem:[#allocation2 + $0x538] sm:$0xff] %v3472
      %3481 = vrot.lane.b32.xlu0 %v389, 83
      %v3482 = vpop.permute.xlu0 %3481
      %3483 = vrot.lane.b32.xlu0 %v391, 83
      %v3484 = vpop.permute.xlu0 %3483
      %3485 = vrot.lane.b32.xlu0 %v393, 83
      %v3486 = vpop.permute.xlu0 %3485
      %3487 = vrot.lane.b32.xlu0 %v395, 83
      %v3488 = vpop.permute.xlu0 %3487
      %3489 = vrot.lane.b32.xlu0 %v390, 83
      %v3490 = vpop.permute.xlu0 %3489
      %3491 = vrot.lane.b32.xlu0 %v392, 83
      %v3492 = vpop.permute.xlu0 %3491
      %3493 = vrot.lane.b32.xlu0 %v394, 83
      %v3494 = vpop.permute.xlu0 %3493
      %3495 = vrot.lane.b32.xlu0 %v396, 83
      %v3496 = vpop.permute.xlu0 %3495
      %vm3497 = vcmp.lt.s32.totalorder %v414, 83
      %v3498 = vsel %vm3497, %v3482, %v3490
      %v3499 = vsel %vm3497, %v3484, %v3492
      %v3500 = vsel %vm3497, %v3486, %v3494
      %v3501 = vsel %vm3497, %v3488, %v3496
      %v3502 = vsel %vm3497, %v3490, %v3482
      %v3503 = vsel %vm3497, %v3492, %v3484
      %v3504 = vsel %vm3497, %v3494, %v3486
      %v3505 = vsel %vm3497, %v3496, %v3488
      %s3506 = scalar_lea.vmem %s5, 82
      %v3507 = vld [vmem:[%s3506] ss:$8 sm:$0x3]
      %v3509 = vlaneseq
      %v3510 = vshrl.u32 %v3509, 7
      %v3511 = vsub.s32 0, %v3510
      %v3512 = vrot.slane %v3507, %v3511
      %v3513 = vlaneseq
      %v3514 = vshrl.u32 %v3513, 7
      %v3515 = vsub.s32 1, %v3514
      %v3516 = vrot.slane %v3507, %v3515
      %v3519 = vmul.f32 %v3498, %v3512
      %v3520 = vmul.f32 %v3502, %v3516
      %v3521 = vmul.f32 %v3499, %v3512
      %v3522 = vmul.f32 %v3503, %v3516
      %v3523 = vmul.f32 %v3500, %v3512
      %v3524 = vmul.f32 %v3504, %v3516
      %v3525 = vmul.f32 %v3501, %v3512
      %v3526 = vmul.f32 %v3505, %v3516
      %v3527 = vpack.c.bf16 %v3521, %v3519
      %v3528 = vpack.c.bf16 %v3522, %v3520
      %v3529 = vpack.c.bf16 %v3525, %v3523
      %v3530 = vpack.c.bf16 %v3526, %v3524
      %v3535 = vunpack.c.l.b16 %v3527
      %v3536 = vunpack.c.l.b16 %v3528
      %v3537 = vunpack.c.h.b16 %v3527
      %v3538 = vunpack.c.h.b16 %v3528
      %v3539 = vunpack.c.l.b16 %v3529
      %v3540 = vunpack.c.l.b16 %v3530
      %v3541 = vunpack.c.h.b16 %v3529
      %v3542 = vunpack.c.h.b16 %v3530
      %v3543 = vpack.c.b16 %v3536, %v3535
      %v3544 = vpack.c.b16 %v3538, %v3537
      %v3545 = vpack.c.b16 %v3540, %v3539
      %v3546 = vpack.c.b16 %v3542, %v3541
      %3551 = vst [vmem:[#allocation2 + $0x540] sm:$0xff] %v3543
      %3552 = vst [vmem:[#allocation2 + $0x548] sm:$0xff] %v3544
      %3553 = vst [vmem:[#allocation2 + $0x550] sm:$0xff] %v3545
      %3554 = vst [vmem:[#allocation2 + $0x558] sm:$0xff] %v3546
      %3555 = vrot.lane.b32.xlu0 %v389, 82
      %v3556 = vpop.permute.xlu0 %3555
      %3557 = vrot.lane.b32.xlu0 %v391, 82
      %v3558 = vpop.permute.xlu0 %3557
      %3559 = vrot.lane.b32.xlu0 %v393, 82
      %v3560 = vpop.permute.xlu0 %3559
      %3561 = vrot.lane.b32.xlu0 %v395, 82
      %v3562 = vpop.permute.xlu0 %3561
      %3563 = vrot.lane.b32.xlu0 %v390, 82
      %v3564 = vpop.permute.xlu0 %3563
      %3565 = vrot.lane.b32.xlu0 %v392, 82
      %v3566 = vpop.permute.xlu0 %3565
      %3567 = vrot.lane.b32.xlu0 %v394, 82
      %v3568 = vpop.permute.xlu0 %3567
      %3569 = vrot.lane.b32.xlu0 %v396, 82
      %v3570 = vpop.permute.xlu0 %3569
      %vm3571 = vcmp.lt.s32.totalorder %v414, 82
      %v3572 = vsel %vm3571, %v3556, %v3564
      %v3573 = vsel %vm3571, %v3558, %v3566
      %v3574 = vsel %vm3571, %v3560, %v3568
      %v3575 = vsel %vm3571, %v3562, %v3570
      %v3576 = vsel %vm3571, %v3564, %v3556
      %v3577 = vsel %vm3571, %v3566, %v3558
      %v3578 = vsel %vm3571, %v3568, %v3560
      %v3579 = vsel %vm3571, %v3570, %v3562
      %s3580 = scalar_lea.vmem %s5, 83
      %v3581 = vld [vmem:[%s3580] ss:$8 sm:$0x3]
      %v3583 = vlaneseq
      %v3584 = vshrl.u32 %v3583, 7
      %v3585 = vsub.s32 0, %v3584
      %v3586 = vrot.slane %v3581, %v3585
      %v3587 = vlaneseq
      %v3588 = vshrl.u32 %v3587, 7
      %v3589 = vsub.s32 1, %v3588
      %v3590 = vrot.slane %v3581, %v3589
      %v3593 = vmul.f32 %v3572, %v3586
      %v3594 = vmul.f32 %v3576, %v3590
      %v3595 = vmul.f32 %v3573, %v3586
      %v3596 = vmul.f32 %v3577, %v3590
      %v3597 = vmul.f32 %v3574, %v3586
      %v3598 = vmul.f32 %v3578, %v3590
      %v3599 = vmul.f32 %v3575, %v3586
      %v3600 = vmul.f32 %v3579, %v3590
      %v3601 = vpack.c.bf16 %v3595, %v3593
      %v3602 = vpack.c.bf16 %v3596, %v3594
      %v3603 = vpack.c.bf16 %v3599, %v3597
      %v3604 = vpack.c.bf16 %v3600, %v3598
      %v3609 = vunpack.c.l.b16 %v3601
      %v3610 = vunpack.c.l.b16 %v3602
      %v3611 = vunpack.c.h.b16 %v3601
      %v3612 = vunpack.c.h.b16 %v3602
      %v3613 = vunpack.c.l.b16 %v3603
      %v3614 = vunpack.c.l.b16 %v3604
      %v3615 = vunpack.c.h.b16 %v3603
      %v3616 = vunpack.c.h.b16 %v3604
      %v3617 = vpack.c.b16 %v3610, %v3609
      %v3618 = vpack.c.b16 %v3612, %v3611
      %v3619 = vpack.c.b16 %v3614, %v3613
      %v3620 = vpack.c.b16 %v3616, %v3615
      %3625 = vst [vmem:[#allocation2 + $0x560] sm:$0xff] %v3617
      %3626 = vst [vmem:[#allocation2 + $0x568] sm:$0xff] %v3618
      %3627 = vst [vmem:[#allocation2 + $0x570] sm:$0xff] %v3619
      %3628 = vst [vmem:[#allocation2 + $0x578] sm:$0xff] %v3620
      %3629 = vrot.lane.b32.xlu0 %v389, 81
      %v3630 = vpop.permute.xlu0 %3629
      %3631 = vrot.lane.b32.xlu0 %v391, 81
      %v3632 = vpop.permute.xlu0 %3631
      %3633 = vrot.lane.b32.xlu0 %v393, 81
      %v3634 = vpop.permute.xlu0 %3633
      %3635 = vrot.lane.b32.xlu0 %v395, 81
      %v3636 = vpop.permute.xlu0 %3635
      %3637 = vrot.lane.b32.xlu0 %v390, 81
      %v3638 = vpop.permute.xlu0 %3637
      %3639 = vrot.lane.b32.xlu0 %v392, 81
      %v3640 = vpop.permute.xlu0 %3639
      %3641 = vrot.lane.b32.xlu0 %v394, 81
      %v3642 = vpop.permute.xlu0 %3641
      %3643 = vrot.lane.b32.xlu0 %v396, 81
      %v3644 = vpop.permute.xlu0 %3643
      %vm3645 = vcmp.lt.s32.totalorder %v414, 81
      %v3646 = vsel %vm3645, %v3630, %v3638
      %v3647 = vsel %vm3645, %v3632, %v3640
      %v3648 = vsel %vm3645, %v3634, %v3642
      %v3649 = vsel %vm3645, %v3636, %v3644
      %v3650 = vsel %vm3645, %v3638, %v3630
      %v3651 = vsel %vm3645, %v3640, %v3632
      %v3652 = vsel %vm3645, %v3642, %v3634
      %v3653 = vsel %vm3645, %v3644, %v3636
      %s3654 = scalar_lea.vmem %s5, 84
      %v3655 = vld [vmem:[%s3654] ss:$8 sm:$0x3]
      %v3657 = vlaneseq
      %v3658 = vshrl.u32 %v3657, 7
      %v3659 = vsub.s32 0, %v3658
      %v3660 = vrot.slane %v3655, %v3659
      %v3661 = vlaneseq
      %v3662 = vshrl.u32 %v3661, 7
      %v3663 = vsub.s32 1, %v3662
      %v3664 = vrot.slane %v3655, %v3663
      %v3667 = vmul.f32 %v3646, %v3660
      %v3668 = vmul.f32 %v3650, %v3664
      %v3669 = vmul.f32 %v3647, %v3660
      %v3670 = vmul.f32 %v3651, %v3664
      %v3671 = vmul.f32 %v3648, %v3660
      %v3672 = vmul.f32 %v3652, %v3664
      %v3673 = vmul.f32 %v3649, %v3660
      %v3674 = vmul.f32 %v3653, %v3664
      %v3675 = vpack.c.bf16 %v3669, %v3667
      %v3676 = vpack.c.bf16 %v3670, %v3668
      %v3677 = vpack.c.bf16 %v3673, %v3671
      %v3678 = vpack.c.bf16 %v3674, %v3672
      %v3683 = vunpack.c.l.b16 %v3675
      %v3684 = vunpack.c.l.b16 %v3676
      %v3685 = vunpack.c.h.b16 %v3675
      %v3686 = vunpack.c.h.b16 %v3676
      %v3687 = vunpack.c.l.b16 %v3677
      %v3688 = vunpack.c.l.b16 %v3678
      %v3689 = vunpack.c.h.b16 %v3677
      %v3690 = vunpack.c.h.b16 %v3678
      %v3691 = vpack.c.b16 %v3684, %v3683
      %v3692 = vpack.c.b16 %v3686, %v3685
      %v3693 = vpack.c.b16 %v3688, %v3687
      %v3694 = vpack.c.b16 %v3690, %v3689
      %3699 = vst [vmem:[#allocation2 + $0x580] sm:$0xff] %v3691
      %3700 = vst [vmem:[#allocation2 + $0x588] sm:$0xff] %v3692
      %3701 = vst [vmem:[#allocation2 + $0x590] sm:$0xff] %v3693
      %3702 = vst [vmem:[#allocation2 + $0x598] sm:$0xff] %v3694
      %3703 = vrot.lane.b32.xlu0 %v389, 80
      %v3704 = vpop.permute.xlu0 %3703
      %3705 = vrot.lane.b32.xlu0 %v391, 80
      %v3706 = vpop.permute.xlu0 %3705
      %3707 = vrot.lane.b32.xlu0 %v393, 80
      %v3708 = vpop.permute.xlu0 %3707
      %3709 = vrot.lane.b32.xlu0 %v395, 80
      %v3710 = vpop.permute.xlu0 %3709
      %3711 = vrot.lane.b32.xlu0 %v390, 80
      %v3712 = vpop.permute.xlu0 %3711
      %3713 = vrot.lane.b32.xlu0 %v392, 80
      %v3714 = vpop.permute.xlu0 %3713
      %3715 = vrot.lane.b32.xlu0 %v394, 80
      %v3716 = vpop.permute.xlu0 %3715
      %3717 = vrot.lane.b32.xlu0 %v396, 80
      %v3718 = vpop.permute.xlu0 %3717
      %vm3719 = vcmp.lt.s32.totalorder %v414, 80
      %v3720 = vsel %vm3719, %v3704, %v3712
      %v3721 = vsel %vm3719, %v3706, %v3714
      %v3722 = vsel %vm3719, %v3708, %v3716
      %v3723 = vsel %vm3719, %v3710, %v3718
      %v3724 = vsel %vm3719, %v3712, %v3704
      %v3725 = vsel %vm3719, %v3714, %v3706
      %v3726 = vsel %vm3719, %v3716, %v3708
      %v3727 = vsel %vm3719, %v3718, %v3710
      %s3728 = scalar_lea.vmem %s5, 85
      %v3729 = vld [vmem:[%s3728] ss:$8 sm:$0x3]
      %v3731 = vlaneseq
      %v3732 = vshrl.u32 %v3731, 7
      %v3733 = vsub.s32 0, %v3732
      %v3734 = vrot.slane %v3729, %v3733
      %v3735 = vlaneseq
      %v3736 = vshrl.u32 %v3735, 7
      %v3737 = vsub.s32 1, %v3736
      %v3738 = vrot.slane %v3729, %v3737
      %v3741 = vmul.f32 %v3720, %v3734
      %v3742 = vmul.f32 %v3724, %v3738
      %v3743 = vmul.f32 %v3721, %v3734
      %v3744 = vmul.f32 %v3725, %v3738
      %v3745 = vmul.f32 %v3722, %v3734
      %v3746 = vmul.f32 %v3726, %v3738
      %v3747 = vmul.f32 %v3723, %v3734
      %v3748 = vmul.f32 %v3727, %v3738
      %v3749 = vpack.c.bf16 %v3743, %v3741
      %v3750 = vpack.c.bf16 %v3744, %v3742
      %v3751 = vpack.c.bf16 %v3747, %v3745
      %v3752 = vpack.c.bf16 %v3748, %v3746
      %v3757 = vunpack.c.l.b16 %v3749
      %v3758 = vunpack.c.l.b16 %v3750
      %v3759 = vunpack.c.h.b16 %v3749
      %v3760 = vunpack.c.h.b16 %v3750
      %v3761 = vunpack.c.l.b16 %v3751
      %v3762 = vunpack.c.l.b16 %v3752
      %v3763 = vunpack.c.h.b16 %v3751
      %v3764 = vunpack.c.h.b16 %v3752
      %v3765 = vpack.c.b16 %v3758, %v3757
      %v3766 = vpack.c.b16 %v3760, %v3759
      %v3767 = vpack.c.b16 %v3762, %v3761
      %v3768 = vpack.c.b16 %v3764, %v3763
      %3773 = vst [vmem:[#allocation2 + $0x5a0] sm:$0xff] %v3765
      %3774 = vst [vmem:[#allocation2 + $0x5a8] sm:$0xff] %v3766
      %3775 = vst [vmem:[#allocation2 + $0x5b0] sm:$0xff] %v3767
      %3776 = vst [vmem:[#allocation2 + $0x5b8] sm:$0xff] %v3768
      %3777 = vrot.lane.b32.xlu0 %v389, 79
      %v3778 = vpop.permute.xlu0 %3777
      %3779 = vrot.lane.b32.xlu0 %v391, 79
      %v3780 = vpop.permute.xlu0 %3779
      %3781 = vrot.lane.b32.xlu0 %v393, 79
      %v3782 = vpop.permute.xlu0 %3781
      %3783 = vrot.lane.b32.xlu0 %v395, 79
      %v3784 = vpop.permute.xlu0 %3783
      %3785 = vrot.lane.b32.xlu0 %v390, 79
      %v3786 = vpop.permute.xlu0 %3785
      %3787 = vrot.lane.b32.xlu0 %v392, 79
      %v3788 = vpop.permute.xlu0 %3787
      %3789 = vrot.lane.b32.xlu0 %v394, 79
      %v3790 = vpop.permute.xlu0 %3789
      %3791 = vrot.lane.b32.xlu0 %v396, 79
      %v3792 = vpop.permute.xlu0 %3791
      %vm3793 = vcmp.lt.s32.totalorder %v414, 79
      %v3794 = vsel %vm3793, %v3778, %v3786
      %v3795 = vsel %vm3793, %v3780, %v3788
      %v3796 = vsel %vm3793, %v3782, %v3790
      %v3797 = vsel %vm3793, %v3784, %v3792
      %v3798 = vsel %vm3793, %v3786, %v3778
      %v3799 = vsel %vm3793, %v3788, %v3780
      %v3800 = vsel %vm3793, %v3790, %v3782
      %v3801 = vsel %vm3793, %v3792, %v3784
      %s3802 = scalar_lea.vmem %s5, 86
      %v3803 = vld [vmem:[%s3802] ss:$8 sm:$0x3]
      %v3805 = vlaneseq
      %v3806 = vshrl.u32 %v3805, 7
      %v3807 = vsub.s32 0, %v3806
      %v3808 = vrot.slane %v3803, %v3807
      %v3809 = vlaneseq
      %v3810 = vshrl.u32 %v3809, 7
      %v3811 = vsub.s32 1, %v3810
      %v3812 = vrot.slane %v3803, %v3811
      %v3815 = vmul.f32 %v3794, %v3808
      %v3816 = vmul.f32 %v3798, %v3812
      %v3817 = vmul.f32 %v3795, %v3808
      %v3818 = vmul.f32 %v3799, %v3812
      %v3819 = vmul.f32 %v3796, %v3808
      %v3820 = vmul.f32 %v3800, %v3812
      %v3821 = vmul.f32 %v3797, %v3808
      %v3822 = vmul.f32 %v3801, %v3812
      %v3823 = vpack.c.bf16 %v3817, %v3815
      %v3824 = vpack.c.bf16 %v3818, %v3816
      %v3825 = vpack.c.bf16 %v3821, %v3819
      %v3826 = vpack.c.bf16 %v3822, %v3820
      %v3831 = vunpack.c.l.b16 %v3823
      %v3832 = vunpack.c.l.b16 %v3824
      %v3833 = vunpack.c.h.b16 %v3823
      %v3834 = vunpack.c.h.b16 %v3824
      %v3835 = vunpack.c.l.b16 %v3825
      %v3836 = vunpack.c.l.b16 %v3826
      %v3837 = vunpack.c.h.b16 %v3825
      %v3838 = vunpack.c.h.b16 %v3826
      %v3839 = vpack.c.b16 %v3832, %v3831
      %v3840 = vpack.c.b16 %v3834, %v3833
      %v3841 = vpack.c.b16 %v3836, %v3835
      %v3842 = vpack.c.b16 %v3838, %v3837
      %3847 = vst [vmem:[#allocation2 + $0x5c0] sm:$0xff] %v3839
      %3848 = vst [vmem:[#allocation2 + $0x5c8] sm:$0xff] %v3840
      %3849 = vst [vmem:[#allocation2 + $0x5d0] sm:$0xff] %v3841
      %3850 = vst [vmem:[#allocation2 + $0x5d8] sm:$0xff] %v3842
      %3851 = vrot.lane.b32.xlu0 %v389, 78
      %v3852 = vpop.permute.xlu0 %3851
      %3853 = vrot.lane.b32.xlu0 %v391, 78
      %v3854 = vpop.permute.xlu0 %3853
      %3855 = vrot.lane.b32.xlu0 %v393, 78
      %v3856 = vpop.permute.xlu0 %3855
      %3857 = vrot.lane.b32.xlu0 %v395, 78
      %v3858 = vpop.permute.xlu0 %3857
      %3859 = vrot.lane.b32.xlu0 %v390, 78
      %v3860 = vpop.permute.xlu0 %3859
      %3861 = vrot.lane.b32.xlu0 %v392, 78
      %v3862 = vpop.permute.xlu0 %3861
      %3863 = vrot.lane.b32.xlu0 %v394, 78
      %v3864 = vpop.permute.xlu0 %3863
      %3865 = vrot.lane.b32.xlu0 %v396, 78
      %v3866 = vpop.permute.xlu0 %3865
      %vm3867 = vcmp.lt.s32.totalorder %v414, 78
      %v3868 = vsel %vm3867, %v3852, %v3860
      %v3869 = vsel %vm3867, %v3854, %v3862
      %v3870 = vsel %vm3867, %v3856, %v3864
      %v3871 = vsel %vm3867, %v3858, %v3866
      %v3872 = vsel %vm3867, %v3860, %v3852
      %v3873 = vsel %vm3867, %v3862, %v3854
      %v3874 = vsel %vm3867, %v3864, %v3856
      %v3875 = vsel %vm3867, %v3866, %v3858
      %s3876 = scalar_lea.vmem %s5, 87
      %v3877 = vld [vmem:[%s3876] ss:$8 sm:$0x3]
      %v3879 = vlaneseq
      %v3880 = vshrl.u32 %v3879, 7
      %v3881 = vsub.s32 0, %v3880
      %v3882 = vrot.slane %v3877, %v3881
      %v3883 = vlaneseq
      %v3884 = vshrl.u32 %v3883, 7
      %v3885 = vsub.s32 1, %v3884
      %v3886 = vrot.slane %v3877, %v3885
      %v3889 = vmul.f32 %v3868, %v3882
      %v3890 = vmul.f32 %v3872, %v3886
      %v3891 = vmul.f32 %v3869, %v3882
      %v3892 = vmul.f32 %v3873, %v3886
      %v3893 = vmul.f32 %v3870, %v3882
      %v3894 = vmul.f32 %v3874, %v3886
      %v3895 = vmul.f32 %v3871, %v3882
      %v3896 = vmul.f32 %v3875, %v3886
      %v3897 = vpack.c.bf16 %v3891, %v3889
      %v3898 = vpack.c.bf16 %v3892, %v3890
      %v3899 = vpack.c.bf16 %v3895, %v3893
      %v3900 = vpack.c.bf16 %v3896, %v3894
      %v3905 = vunpack.c.l.b16 %v3897
      %v3906 = vunpack.c.l.b16 %v3898
      %v3907 = vunpack.c.h.b16 %v3897
      %v3908 = vunpack.c.h.b16 %v3898
      %v3909 = vunpack.c.l.b16 %v3899
      %v3910 = vunpack.c.l.b16 %v3900
      %v3911 = vunpack.c.h.b16 %v3899
      %v3912 = vunpack.c.h.b16 %v3900
      %v3913 = vpack.c.b16 %v3906, %v3905
      %v3914 = vpack.c.b16 %v3908, %v3907
      %v3915 = vpack.c.b16 %v3910, %v3909
      %v3916 = vpack.c.b16 %v3912, %v3911
      %3921 = vst [vmem:[#allocation2 + $0x5e0] sm:$0xff] %v3913
      %3922 = vst [vmem:[#allocation2 + $0x5e8] sm:$0xff] %v3914
      %3923 = vst [vmem:[#allocation2 + $0x5f0] sm:$0xff] %v3915
      %3924 = vst [vmem:[#allocation2 + $0x5f8] sm:$0xff] %v3916
      %3925 = vrot.lane.b32.xlu0 %v389, 77
      %v3926 = vpop.permute.xlu0 %3925
      %3927 = vrot.lane.b32.xlu0 %v391, 77
      %v3928 = vpop.permute.xlu0 %3927
      %3929 = vrot.lane.b32.xlu0 %v393, 77
      %v3930 = vpop.permute.xlu0 %3929
      %3931 = vrot.lane.b32.xlu0 %v395, 77
      %v3932 = vpop.permute.xlu0 %3931
      %3933 = vrot.lane.b32.xlu0 %v390, 77
      %v3934 = vpop.permute.xlu0 %3933
      %3935 = vrot.lane.b32.xlu0 %v392, 77
      %v3936 = vpop.permute.xlu0 %3935
      %3937 = vrot.lane.b32.xlu0 %v394, 77
      %v3938 = vpop.permute.xlu0 %3937
      %3939 = vrot.lane.b32.xlu0 %v396, 77
      %v3940 = vpop.permute.xlu0 %3939
      %vm3941 = vcmp.lt.s32.totalorder %v414, 77
      %v3942 = vsel %vm3941, %v3926, %v3934
      %v3943 = vsel %vm3941, %v3928, %v3936
      %v3944 = vsel %vm3941, %v3930, %v3938
      %v3945 = vsel %vm3941, %v3932, %v3940
      %v3946 = vsel %vm3941, %v3934, %v3926
      %v3947 = vsel %vm3941, %v3936, %v3928
      %v3948 = vsel %vm3941, %v3938, %v3930
      %v3949 = vsel %vm3941, %v3940, %v3932
      %s3950 = scalar_lea.vmem %s5, 96
      %v3951 = vld [vmem:[%s3950] ss:$8 sm:$0x3]
      %v3953 = vlaneseq
      %v3954 = vshrl.u32 %v3953, 7
      %v3955 = vsub.s32 0, %v3954
      %v3956 = vrot.slane %v3951, %v3955
      %v3957 = vlaneseq
      %v3958 = vshrl.u32 %v3957, 7
      %v3959 = vsub.s32 1, %v3958
      %v3960 = vrot.slane %v3951, %v3959
      %v3963 = vmul.f32 %v3942, %v3956
      %v3964 = vmul.f32 %v3946, %v3960
      %v3965 = vmul.f32 %v3943, %v3956
      %v3966 = vmul.f32 %v3947, %v3960
      %v3967 = vmul.f32 %v3944, %v3956
      %v3968 = vmul.f32 %v3948, %v3960
      %v3969 = vmul.f32 %v3945, %v3956
      %v3970 = vmul.f32 %v3949, %v3960
      %v3971 = vpack.c.bf16 %v3965, %v3963
      %v3972 = vpack.c.bf16 %v3966, %v3964
      %v3973 = vpack.c.bf16 %v3969, %v3967
      %v3974 = vpack.c.bf16 %v3970, %v3968
      %v3979 = vunpack.c.l.b16 %v3971
      %v3980 = vunpack.c.l.b16 %v3972
      %v3981 = vunpack.c.h.b16 %v3971
      %v3982 = vunpack.c.h.b16 %v3972
      %v3983 = vunpack.c.l.b16 %v3973
      %v3984 = vunpack.c.l.b16 %v3974
      %v3985 = vunpack.c.h.b16 %v3973
      %v3986 = vunpack.c.h.b16 %v3974
      %v3987 = vpack.c.b16 %v3980, %v3979
      %v3988 = vpack.c.b16 %v3982, %v3981
      %v3989 = vpack.c.b16 %v3984, %v3983
      %v3990 = vpack.c.b16 %v3986, %v3985
      %3995 = vst [vmem:[#allocation2 + $0x600] sm:$0xff] %v3987
      %3996 = vst [vmem:[#allocation2 + $0x608] sm:$0xff] %v3988
      %3997 = vst [vmem:[#allocation2 + $0x610] sm:$0xff] %v3989
      %3998 = vst [vmem:[#allocation2 + $0x618] sm:$0xff] %v3990
      %v3999 = vpack.c.bf16 %v391, %v389
      %v4000 = vpack.c.bf16 %v392, %v390
      %v4001 = vpack.c.bf16 %v395, %v393
      %v4002 = vpack.c.bf16 %v396, %v394
      %v4007 = vunpack.c.l.b16 %v3999
      %v4008 = vunpack.c.l.b16 %v4000
      %v4009 = vunpack.c.h.b16 %v3999
      %v4010 = vunpack.c.h.b16 %v4000
      %v4011 = vunpack.c.l.b16 %v4001
      %v4012 = vunpack.c.l.b16 %v4002
      %v4013 = vunpack.c.h.b16 %v4001
      %v4014 = vunpack.c.h.b16 %v4002
      %v4015 = vpack.c.b16 %v4008, %v4007
      %v4016 = vpack.c.b16 %v4010, %v4009
      %v4017 = vpack.c.b16 %v4012, %v4011
      %v4018 = vpack.c.b16 %v4014, %v4013
      %4023 = vst [vmem:[#allocation2 + $0x620] sm:$0xff] %v4015
      %4024 = vst [vmem:[#allocation2 + $0x628] sm:$0xff] %v4016
      %4025 = vst [vmem:[#allocation2 + $0x630] sm:$0xff] %v4017
      %4026 = vst [vmem:[#allocation2 + $0x638] sm:$0xff] %v4018
      %v4027 = vpack.c.bf16 %v387, %v387
      %v4028 = vpack.c.bf16 %v388, %v388
      %v4031 = vunpack.c.l.b16 %v4027
      %v4032 = vunpack.c.l.b16 %v4028
      %v4033 = vpack.c.b16 %v4032, %v4031
      %4035 = vst [vmem:[#allocation2 + $0x640] sm:$0xff] %v4033
      %v4036 = vld [vmem:[%s3] sm:$0xff]
      %v4037 = vld [vmem:[%s3 + $0x8] sm:$0xff]
      %v4038 = vld [vmem:[%s3 + $0x10] sm:$0xff]
      %v4039 = vld [vmem:[%s3 + $0x18] sm:$0xff]
      %v4040 = vld [vmem:[%s3 + $0x20] sm:$0xff]
      %v4041 = vld [vmem:[%s3 + $0x28] sm:$0xff]
      %v4042 = vld [vmem:[%s3 + $0x30] sm:$0xf]
      %v4043 = vld [vmem:[%s3 + $0x34] sm:$0xff]
      %v4044 = vld [vmem:[%s3 + $0x3c] sm:$0xff]
      %v4045 = vld [vmem:[%s3 + $0x44] sm:$0xff]
      %v4046 = vld [vmem:[%s3 + $0x4c] sm:$0xff]
      %v4047 = vld [vmem:[%s3 + $0x54] sm:$0xff]
      %v4048 = vld [vmem:[%s3 + $0x5c] sm:$0xff]
      %v4049 = vld [vmem:[%s3 + $0x64] sm:$0xf]
      %v4050 = vld [vmem:[%s3 + $0x68] sm:$0xff]
      %v4051 = vld [vmem:[%s3 + $0x70] sm:$0xff]
      %v4052 = vld [vmem:[%s3 + $0x78] sm:$0xff]
      %v4053 = vld [vmem:[%s3 + $0x80] sm:$0xff]
      %v4054 = vld [vmem:[%s3 + $0x88] sm:$0xff]
      %v4055 = vld [vmem:[%s3 + $0x90] sm:$0xff]
      %v4056 = vld [vmem:[%s3 + $0x98] sm:$0xf]
      %v4057 = vld [vmem:[%s3 + $0x9c] sm:$0xff]
      %v4058 = vld [vmem:[%s3 + $0xa4] sm:$0xff]
      %v4059 = vld [vmem:[%s3 + $0xac] sm:$0xff]
      %v4060 = vld [vmem:[%s3 + $0xb4] sm:$0xff]
      %v4061 = vld [vmem:[%s3 + $0xbc] sm:$0xff]
      %v4062 = vld [vmem:[%s3 + $0xc4] sm:$0xff]
      %v4063 = vld [vmem:[%s3 + $0xcc] sm:$0xf]
      %v4064 = vld [vmem:[%s3 + $0xd0] sm:$0xff]
      %v4065 = vld [vmem:[%s3 + $0xd8] sm:$0xff]
      %v4066 = vld [vmem:[%s3 + $0xe0] sm:$0xff]
      %v4067 = vld [vmem:[%s3 + $0xe8] sm:$0xff]
      %v4068 = vld [vmem:[%s3 + $0xf0] sm:$0xff]
      %v4069 = vld [vmem:[%s3 + $0xf8] sm:$0xff]
      %v4070 = vld [vmem:[%s3 + $0x100] sm:$0xf]
      %v4071 = vld [vmem:[%s3 + $0x104] sm:$0xff]
      %v4072 = vld [vmem:[%s3 + $0x10c] sm:$0xff]
      %v4073 = vld [vmem:[%s3 + $0x114] sm:$0xff]
      %v4074 = vld [vmem:[%s3 + $0x11c] sm:$0xff]
      %v4075 = vld [vmem:[%s3 + $0x124] sm:$0xff]
      %v4076 = vld [vmem:[%s3 + $0x12c] sm:$0xff]
      %v4077 = vld [vmem:[%s3 + $0x134] sm:$0xf]
      %v4078 = vld [vmem:[%s3 + $0x138] sm:$0xff]
      %v4079 = vld [vmem:[%s3 + $0x140] sm:$0xff]
      %v4080 = vld [vmem:[%s3 + $0x148] sm:$0xff]
      %v4081 = vld [vmem:[%s3 + $0x150] sm:$0xff]
      %v4082 = vld [vmem:[%s3 + $0x158] sm:$0xff]
      %v4083 = vld [vmem:[%s3 + $0x160] sm:$0xff]
      %v4084 = vld [vmem:[%s3 + $0x168] sm:$0xf]
      %v4085 = vld [vmem:[%s3 + $0x16c] sm:$0xff]
      %v4086 = vld [vmem:[%s3 + $0x174] sm:$0xff]
      %v4087 = vld [vmem:[%s3 + $0x17c] sm:$0xff]
      %v4088 = vld [vmem:[%s3 + $0x184] sm:$0xff]
      %v4089 = vld [vmem:[%s3 + $0x18c] sm:$0xff]
      %v4090 = vld [vmem:[%s3 + $0x194] sm:$0xff]
      %v4091 = vld [vmem:[%s3 + $0x19c] sm:$0xf]
      %v4092 = vld [vmem:[%s3 + $0x1a0] sm:$0xff]
      %v4093 = vld [vmem:[%s3 + $0x1a8] sm:$0xff]
      %v4094 = vld [vmem:[%s3 + $0x1b0] sm:$0xff]
      %v4095 = vld [vmem:[%s3 + $0x1b8] sm:$0xff]
      %v4096 = vld [vmem:[%s3 + $0x1c0] sm:$0xff]
      %v4097 = vld [vmem:[%s3 + $0x1c8] sm:$0xff]
      %v4098 = vld [vmem:[%s3 + $0x1d0] sm:$0xf]
      %v4099 = vld [vmem:[%s3 + $0x1d4] sm:$0xff]
      %v4100 = vld [vmem:[%s3 + $0x1dc] sm:$0xff]
      %v4101 = vld [vmem:[%s3 + $0x1e4] sm:$0xff]
      %v4102 = vld [vmem:[%s3 + $0x1ec] sm:$0xff]
      %v4103 = vld [vmem:[%s3 + $0x1f4] sm:$0xff]
      %v4104 = vld [vmem:[%s3 + $0x1fc] sm:$0xff]
      %v4105 = vld [vmem:[%s3 + $0x204] sm:$0xf]
      %v4106 = vld [vmem:[%s3 + $0x208] sm:$0xff]
      %v4107 = vld [vmem:[%s3 + $0x210] sm:$0xff]
      %v4108 = vld [vmem:[%s3 + $0x218] sm:$0xff]
      %v4109 = vld [vmem:[%s3 + $0x220] sm:$0xff]
      %v4110 = vld [vmem:[%s3 + $0x228] sm:$0xff]
      %v4111 = vld [vmem:[%s3 + $0x230] sm:$0xff]
      %v4112 = vld [vmem:[%s3 + $0x238] sm:$0xf]
      %v4113 = vld [vmem:[%s3 + $0x23c] sm:$0xff]
      %v4114 = vld [vmem:[%s3 + $0x244] sm:$0xff]
      %v4115 = vld [vmem:[%s3 + $0x24c] sm:$0xff]
      %v4116 = vld [vmem:[%s3 + $0x254] sm:$0xff]
      %v4117 = vld [vmem:[%s3 + $0x25c] sm:$0xff]
      %v4118 = vld [vmem:[%s3 + $0x264] sm:$0xff]
      %v4119 = vld [vmem:[%s3 + $0x26c] sm:$0xf]
      %v4120 = vld [vmem:[%s3 + $0x270] sm:$0xff]
      %v4121 = vld [vmem:[%s3 + $0x278] sm:$0xff]
      %v4122 = vld [vmem:[%s3 + $0x280] sm:$0xff]
      %v4123 = vld [vmem:[%s3 + $0x288] sm:$0xff]
      %v4124 = vld [vmem:[%s3 + $0x290] sm:$0xff]
      %v4125 = vld [vmem:[%s3 + $0x298] sm:$0xff]
      %v4126 = vld [vmem:[%s3 + $0x2a0] sm:$0xf]
      %v4127 = vld [vmem:[%s3 + $0x2a4] sm:$0xff]
      %v4128 = vld [vmem:[%s3 + $0x2ac] sm:$0xff]
      %v4129 = vld [vmem:[%s3 + $0x2b4] sm:$0xff]
      %v4130 = vld [vmem:[%s3 + $0x2bc] sm:$0xff]
      %v4131 = vld [vmem:[%s3 + $0x2c4] sm:$0xff]
      %v4132 = vld [vmem:[%s3 + $0x2cc] sm:$0xff]
      %v4133 = vld [vmem:[%s3 + $0x2d4] sm:$0xf]
      %v4134 = vld [vmem:[%s3 + $0x2d8] sm:$0xff]
      %v4135 = vld [vmem:[%s3 + $0x2e0] sm:$0xff]
      %v4136 = vld [vmem:[%s3 + $0x2e8] sm:$0xff]
      %v4137 = vld [vmem:[%s3 + $0x2f0] sm:$0xff]
      %v4138 = vld [vmem:[%s3 + $0x2f8] sm:$0xff]
      %v4139 = vld [vmem:[%s3 + $0x300] sm:$0xff]
      %v4140 = vld [vmem:[%s3 + $0x308] sm:$0xf]
      %v4141 = vld [vmem:[%s3 + $0x30c] sm:$0xff]
      %v4142 = vld [vmem:[%s3 + $0x314] sm:$0xff]
      %v4143 = vld [vmem:[%s3 + $0x31c] sm:$0xff]
      %v4144 = vld [vmem:[%s3 + $0x324] sm:$0xff]
      %v4145 = vld [vmem:[%s3 + $0x32c] sm:$0xff]
      %v4146 = vld [vmem:[%s3 + $0x334] sm:$0xff]
      %v4147 = vld [vmem:[%s3 + $0x33c] sm:$0xf]
      %v4148 = vld [vmem:[#allocation2] sm:$0xff]
      %v4149 = vld [vmem:[#allocation2 + $0x8] sm:$0xff]
      %v4150 = vld [vmem:[#allocation2 + $0x10] sm:$0xff]
      %v4151 = vld [vmem:[#allocation2 + $0x18] sm:$0xff]
      %v4152 = vld [vmem:[#allocation2 + $0x20] sm:$0xff]
      %v4153 = vld [vmem:[#allocation2 + $0x28] sm:$0xff]
      %v4154 = vld [vmem:[#allocation2 + $0x30] sm:$0xff]
      %v4155 = vld [vmem:[#allocation2 + $0x38] sm:$0xff]
      %v4156 = vld [vmem:[#allocation2 + $0x40] sm:$0xff]
      %v4157 = vld [vmem:[#allocation2 + $0x48] sm:$0xff]
      %v4158 = vld [vmem:[#allocation2 + $0x50] sm:$0xff]
      %v4159 = vld [vmem:[#allocation2 + $0x58] sm:$0xff]
      %v4160 = vld [vmem:[#allocation2 + $0x60] sm:$0xff]
      %v4161 = vld [vmem:[#allocation2 + $0x68] sm:$0xff]
      %v4162 = vld [vmem:[#allocation2 + $0x70] sm:$0xff]
      %v4163 = vld [vmem:[#allocation2 + $0x78] sm:$0xff]
      %v4164 = vld [vmem:[#allocation2 + $0x80] sm:$0xff]
      %v4165 = vld [vmem:[#allocation2 + $0x88] sm:$0xff]
      %v4166 = vld [vmem:[#allocation2 + $0x90] sm:$0xff]
      %v4167 = vld [vmem:[#allocation2 + $0x98] sm:$0xff]
      %v4168 = vld [vmem:[#allocation2 + $0xa0] sm:$0xff]
      %v4169 = vld [vmem:[#allocation2 + $0xa8] sm:$0xff]
      %v4170 = vld [vmem:[#allocation2 + $0xb0] sm:$0xff]
      %v4171 = vld [vmem:[#allocation2 + $0xb8] sm:$0xff]
      %v4172 = vld [vmem:[#allocation2 + $0xc0] sm:$0xff]
      %v4173 = vld [vmem:[#allocation2 + $0xc8] sm:$0xff]
      %v4174 = vld [vmem:[#allocation2 + $0xd0] sm:$0xff]
      %v4175 = vld [vmem:[#allocation2 + $0xd8] sm:$0xff]
      %v4176 = vld [vmem:[#allocation2 + $0xe0] sm:$0xff]
      %v4177 = vld [vmem:[#allocation2 + $0xe8] sm:$0xff]
      %v4178 = vld [vmem:[#allocation2 + $0xf0] sm:$0xff]
      %v4179 = vld [vmem:[#allocation2 + $0xf8] sm:$0xff]
      %v4180 = vld [vmem:[#allocation2 + $0x100] sm:$0xff]
      %v4181 = vld [vmem:[#allocation2 + $0x108] sm:$0xff]
      %v4182 = vld [vmem:[#allocation2 + $0x110] sm:$0xff]
      %v4183 = vld [vmem:[#allocation2 + $0x118] sm:$0xff]
      %v4184 = vld [vmem:[#allocation2 + $0x120] sm:$0xff]
      %v4185 = vld [vmem:[#allocation2 + $0x128] sm:$0xff]
      %v4186 = vld [vmem:[#allocation2 + $0x130] sm:$0xff]
      %v4187 = vld [vmem:[#allocation2 + $0x138] sm:$0xff]
      %v4188 = vld [vmem:[#allocation2 + $0x140] sm:$0xff]
      %v4189 = vld [vmem:[#allocation2 + $0x148] sm:$0xff]
      %v4190 = vld [vmem:[#allocation2 + $0x150] sm:$0xff]
      %v4191 = vld [vmem:[#allocation2 + $0x158] sm:$0xff]
      %v4192 = vld [vmem:[#allocation2 + $0x160] sm:$0xff]
      %v4193 = vld [vmem:[#allocation2 + $0x168] sm:$0xff]
      %v4194 = vld [vmem:[#allocation2 + $0x170] sm:$0xff]
      %v4195 = vld [vmem:[#allocation2 + $0x178] sm:$0xff]
      %v4196 = vld [vmem:[#allocation2 + $0x180] sm:$0xff]
      %v4197 = vld [vmem:[#allocation2 + $0x188] sm:$0xff]
      %v4198 = vld [vmem:[#allocation2 + $0x190] sm:$0xff]
      %v4199 = vld [vmem:[#allocation2 + $0x198] sm:$0xff]
      %v4200 = vld [vmem:[#allocation2 + $0x1a0] sm:$0xff]
      %v4201 = vld [vmem:[#allocation2 + $0x1a8] sm:$0xff]
      %v4202 = vld [vmem:[#allocation2 + $0x1b0] sm:$0xff]
      %v4203 = vld [vmem:[#allocation2 + $0x1b8] sm:$0xff]
      %v4204 = vld [vmem:[#allocation2 + $0x1c0] sm:$0xff]
      %v4205 = vld [vmem:[#allocation2 + $0x1c8] sm:$0xff]
      %v4206 = vld [vmem:[#allocation2 + $0x1d0] sm:$0xff]
      %v4207 = vld [vmem:[#allocation2 + $0x1d8] sm:$0xff]
      %v4208 = vld [vmem:[#allocation2 + $0x1e0] sm:$0xff]
      %v4209 = vld [vmem:[#allocation2 + $0x1e8] sm:$0xff]
      %v4210 = vld [vmem:[#allocation2 + $0x1f0] sm:$0xff]
      %v4211 = vld [vmem:[#allocation2 + $0x1f8] sm:$0xff]
      %v4212 = vld [vmem:[#allocation2 + $0x200] sm:$0xff]
      %v4213 = vld [vmem:[#allocation2 + $0x208] sm:$0xff]
      %v4214 = vld [vmem:[#allocation2 + $0x210] sm:$0xff]
      %v4215 = vld [vmem:[#allocation2 + $0x218] sm:$0xff]
      %v4216 = vld [vmem:[#allocation2 + $0x220] sm:$0xff]
      %v4217 = vld [vmem:[#allocation2 + $0x228] sm:$0xff]
      %v4218 = vld [vmem:[#allocation2 + $0x230] sm:$0xff]
      %v4219 = vld [vmem:[#allocation2 + $0x238] sm:$0xff]
      %v4220 = vld [vmem:[#allocation2 + $0x240] sm:$0xff]
      %v4221 = vld [vmem:[#allocation2 + $0x248] sm:$0xff]
      %v4222 = vld [vmem:[#allocation2 + $0x250] sm:$0xff]
      %v4223 = vld [vmem:[#allocation2 + $0x258] sm:$0xff]
      %v4224 = vld [vmem:[#allocation2 + $0x260] sm:$0xff]
      %v4225 = vld [vmem:[#allocation2 + $0x268] sm:$0xff]
      %v4226 = vld [vmem:[#allocation2 + $0x270] sm:$0xff]
      %v4227 = vld [vmem:[#allocation2 + $0x278] sm:$0xff]
      %v4228 = vld [vmem:[#allocation2 + $0x280] sm:$0xff]
      %v4229 = vld [vmem:[#allocation2 + $0x288] sm:$0xff]
      %v4230 = vld [vmem:[#allocation2 + $0x290] sm:$0xff]
      %v4231 = vld [vmem:[#allocation2 + $0x298] sm:$0xff]
      %v4232 = vld [vmem:[#allocation2 + $0x2a0] sm:$0xff]
      %v4233 = vld [vmem:[#allocation2 + $0x2a8] sm:$0xff]
      %v4234 = vld [vmem:[#allocation2 + $0x2b0] sm:$0xff]
      %v4235 = vld [vmem:[#allocation2 + $0x2b8] sm:$0xff]
      %v4236 = vld [vmem:[#allocation2 + $0x2c0] sm:$0xff]
      %v4237 = vld [vmem:[#allocation2 + $0x2c8] sm:$0xff]
      %v4238 = vld [vmem:[#allocation2 + $0x2d0] sm:$0xff]
      %v4239 = vld [vmem:[#allocation2 + $0x2d8] sm:$0xff]
      %v4240 = vld [vmem:[#allocation2 + $0x2e0] sm:$0xff]
      %v4241 = vld [vmem:[#allocation2 + $0x2e8] sm:$0xff]
      %v4242 = vld [vmem:[#allocation2 + $0x2f0] sm:$0xff]
      %v4243 = vld [vmem:[#allocation2 + $0x2f8] sm:$0xff]
      %v4244 = vld [vmem:[#allocation2 + $0x300] sm:$0xff]
      %v4245 = vld [vmem:[#allocation2 + $0x308] sm:$0xff]
      %v4246 = vld [vmem:[#allocation2 + $0x310] sm:$0xff]
      %v4247 = vld [vmem:[#allocation2 + $0x318] sm:$0xff]
      %v4248 = vld [vmem:[#allocation2 + $0x320] sm:$0xff]
      %v4249 = vld [vmem:[#allocation2 + $0x328] sm:$0xff]
      %v4250 = vld [vmem:[#allocation2 + $0x330] sm:$0xff]
      %v4251 = vld [vmem:[#allocation2 + $0x338] sm:$0xff]
      %v4252 = vld [vmem:[#allocation2 + $0x340] sm:$0xff]
      %v4253 = vld [vmem:[#allocation2 + $0x348] sm:$0xff]
      %v4254 = vld [vmem:[#allocation2 + $0x350] sm:$0xff]
      %v4255 = vld [vmem:[#allocation2 + $0x358] sm:$0xff]
      %v4256 = vld [vmem:[#allocation2 + $0x360] sm:$0xff]
      %v4257 = vld [vmem:[#allocation2 + $0x368] sm:$0xff]
      %v4258 = vld [vmem:[#allocation2 + $0x370] sm:$0xff]
      %v4259 = vld [vmem:[#allocation2 + $0x378] sm:$0xff]
      %v4260 = vld [vmem:[#allocation2 + $0x380] sm:$0xff]
      %v4261 = vld [vmem:[#allocation2 + $0x388] sm:$0xff]
      %v4262 = vld [vmem:[#allocation2 + $0x390] sm:$0xff]
      %v4263 = vld [vmem:[#allocation2 + $0x398] sm:$0xff]
      %v4264 = vld [vmem:[#allocation2 + $0x3a0] sm:$0xff]
      %v4265 = vld [vmem:[#allocation2 + $0x3a8] sm:$0xff]
      %v4266 = vld [vmem:[#allocation2 + $0x3b0] sm:$0xff]
      %v4267 = vld [vmem:[#allocation2 + $0x3b8] sm:$0xff]
      %v4268 = vld [vmem:[#allocation2 + $0x3c0] sm:$0xff]
      %v4269 = vld [vmem:[#allocation2 + $0x3c8] sm:$0xff]
      %v4270 = vld [vmem:[#allocation2 + $0x3d0] sm:$0xff]
      %v4271 = vld [vmem:[#allocation2 + $0x3d8] sm:$0xff]
      %v4272 = vld [vmem:[#allocation2 + $0x3e0] sm:$0xff]
      %v4273 = vld [vmem:[#allocation2 + $0x3e8] sm:$0xff]
      %v4274 = vld [vmem:[#allocation2 + $0x3f0] sm:$0xff]
      %v4275 = vld [vmem:[#allocation2 + $0x3f8] sm:$0xff]
      %v4276 = vld [vmem:[#allocation2 + $0x400] sm:$0xff]
      %v4277 = vld [vmem:[#allocation2 + $0x408] sm:$0xff]
      %v4278 = vld [vmem:[#allocation2 + $0x410] sm:$0xff]
      %v4279 = vld [vmem:[#allocation2 + $0x418] sm:$0xff]
      %v4280 = vld [vmem:[#allocation2 + $0x420] sm:$0xff]
      %v4281 = vld [vmem:[#allocation2 + $0x428] sm:$0xff]
      %v4282 = vld [vmem:[#allocation2 + $0x430] sm:$0xff]
      %v4283 = vld [vmem:[#allocation2 + $0x438] sm:$0xff]
      %v4284 = vld [vmem:[#allocation2 + $0x440] sm:$0xff]
      %v4285 = vld [vmem:[#allocation2 + $0x448] sm:$0xff]
      %v4286 = vld [vmem:[#allocation2 + $0x450] sm:$0xff]
      %v4287 = vld [vmem:[#allocation2 + $0x458] sm:$0xff]
      %v4288 = vld [vmem:[#allocation2 + $0x460] sm:$0xff]
      %v4289 = vld [vmem:[#allocation2 + $0x468] sm:$0xff]
      %v4290 = vld [vmem:[#allocation2 + $0x470] sm:$0xff]
      %v4291 = vld [vmem:[#allocation2 + $0x478] sm:$0xff]
      %v4292 = vld [vmem:[#allocation2 + $0x480] sm:$0xff]
      %v4293 = vld [vmem:[#allocation2 + $0x488] sm:$0xff]
      %v4294 = vld [vmem:[#allocation2 + $0x490] sm:$0xff]
      %v4295 = vld [vmem:[#allocation2 + $0x498] sm:$0xff]
      %v4296 = vld [vmem:[#allocation2 + $0x4a0] sm:$0xff]
      %v4297 = vld [vmem:[#allocation2 + $0x4a8] sm:$0xff]
      %v4298 = vld [vmem:[#allocation2 + $0x4b0] sm:$0xff]
      %v4299 = vld [vmem:[#allocation2 + $0x4b8] sm:$0xff]
      %v4300 = vld [vmem:[#allocation2 + $0x4c0] sm:$0xff]
      %v4301 = vld [vmem:[#allocation2 + $0x4c8] sm:$0xff]
      %v4302 = vld [vmem:[#allocation2 + $0x4d0] sm:$0xff]
      %v4303 = vld [vmem:[#allocation2 + $0x4d8] sm:$0xff]
      %v4304 = vld [vmem:[#allocation2 + $0x4e0] sm:$0xff]
      %v4305 = vld [vmem:[#allocation2 + $0x4e8] sm:$0xff]
      %v4306 = vld [vmem:[#allocation2 + $0x4f0] sm:$0xff]
      %v4307 = vld [vmem:[#allocation2 + $0x4f8] sm:$0xff]
      %v4308 = vld [vmem:[#allocation2 + $0x500] sm:$0xff]
      %v4309 = vld [vmem:[#allocation2 + $0x508] sm:$0xff]
      %v4310 = vld [vmem:[#allocation2 + $0x510] sm:$0xff]
      %v4311 = vld [vmem:[#allocation2 + $0x518] sm:$0xff]
      %v4312 = vld [vmem:[#allocation2 + $0x520] sm:$0xff]
      %v4313 = vld [vmem:[#allocation2 + $0x528] sm:$0xff]
      %v4314 = vld [vmem:[#allocation2 + $0x530] sm:$0xff]
      %v4315 = vld [vmem:[#allocation2 + $0x538] sm:$0xff]
      %v4316 = vld [vmem:[#allocation2 + $0x540] sm:$0xff]
      %v4317 = vld [vmem:[#allocation2 + $0x548] sm:$0xff]
      %v4318 = vld [vmem:[#allocation2 + $0x550] sm:$0xff]
      %v4319 = vld [vmem:[#allocation2 + $0x558] sm:$0xff]
      %v4320 = vld [vmem:[#allocation2 + $0x560] sm:$0xff]
      %v4321 = vld [vmem:[#allocation2 + $0x568] sm:$0xff]
      %v4322 = vld [vmem:[#allocation2 + $0x570] sm:$0xff]
      %v4323 = vld [vmem:[#allocation2 + $0x578] sm:$0xff]
      %v4324 = vld [vmem:[#allocation2 + $0x580] sm:$0xff]
      %v4325 = vld [vmem:[#allocation2 + $0x588] sm:$0xff]
      %v4326 = vld [vmem:[#allocation2 + $0x590] sm:$0xff]
      %v4327 = vld [vmem:[#allocation2 + $0x598] sm:$0xff]
      %v4328 = vld [vmem:[#allocation2 + $0x5a0] sm:$0xff]
      %v4329 = vld [vmem:[#allocation2 + $0x5a8] sm:$0xff]
      %v4330 = vld [vmem:[#allocation2 + $0x5b0] sm:$0xff]
      %v4331 = vld [vmem:[#allocation2 + $0x5b8] sm:$0xff]
      %v4332 = vld [vmem:[#allocation2 + $0x5c0] sm:$0xff]
      %v4333 = vld [vmem:[#allocation2 + $0x5c8] sm:$0xff]
      %v4334 = vld [vmem:[#allocation2 + $0x5d0] sm:$0xff]
      %v4335 = vld [vmem:[#allocation2 + $0x5d8] sm:$0xff]
      %v4336 = vld [vmem:[#allocation2 + $0x5e0] sm:$0xff]
      %v4337 = vld [vmem:[#allocation2 + $0x5e8] sm:$0xff]
      %v4338 = vld [vmem:[#allocation2 + $0x5f0] sm:$0xff]
      %v4339 = vld [vmem:[#allocation2 + $0x5f8] sm:$0xff]
      %v4340 = vld [vmem:[#allocation2 + $0x600] sm:$0xff]
      %v4341 = vld [vmem:[#allocation2 + $0x608] sm:$0xff]
      %v4342 = vld [vmem:[#allocation2 + $0x610] sm:$0xff]
      %v4343 = vld [vmem:[#allocation2 + $0x618] sm:$0xff]
      %v4344 = vld [vmem:[#allocation2 + $0x620] sm:$0xff]
      %v4345 = vld [vmem:[#allocation2 + $0x628] sm:$0xff]
      %v4346 = vld [vmem:[#allocation2 + $0x630] sm:$0xff]
      %v4347 = vld [vmem:[#allocation2 + $0x638] sm:$0xff]
      %v4348 = vld [vmem:[#allocation2 + $0x640] sm:$0xff]
      %v4349 = vld [vmem:[%s4] sm:$0xff]
      %v4350 = vld [vmem:[%s4 + $0x8] sm:$0xff]
      %v4351 = vld [vmem:[%s4 + $0x10] sm:$0xff]
      %v4352 = vld [vmem:[%s4 + $0x18] sm:$0xff]
      %v4353 = vld [vmem:[%s4 + $0x20] sm:$0xff]
      %v4354 = vld [vmem:[%s4 + $0x28] sm:$0xff]
      %v4355 = vld [vmem:[%s4 + $0x30] sm:$0xff]
      %v4356 = vld [vmem:[%s4 + $0x38] sm:$0xff]
      %v4357 = vld [vmem:[%s4 + $0x40] sm:$0xff]
      %v4358 = vld [vmem:[%s4 + $0x48] sm:$0xff]
      %v4359 = vld [vmem:[%s4 + $0x50] sm:$0xff]
      %v4360 = vld [vmem:[%s4 + $0x58] sm:$0xff]
      %v4361 = vld [vmem:[%s4 + $0x60] sm:$0xff]
      %v4362 = vld [vmem:[%s4 + $0x68] sm:$0xff]
      %v4363 = vld [vmem:[%s4 + $0x70] sm:$0xff]
      %v4364 = vld [vmem:[%s4 + $0x78] sm:$0xff]
      %4366 = vset.pattern.permute.xlu0 0
      %4367 = vperm.xlu0 %4366, %v4349
      %v4368 = vpop.permute.xlu0 %4367
      %4371 = vset.pattern.permute.xlu0 0
      %4372 = vperm.xlu0 %4371, %v4350
      %v4373 = vpop.permute.xlu0 %4372
      %4376 = vset.pattern.permute.xlu0 0
      %4377 = vperm.xlu0 %4376, %v4351
      %v4378 = vpop.permute.xlu0 %4377
      %4381 = vset.pattern.permute.xlu0 0
      %4382 = vperm.xlu0 %4381, %v4352
      %v4383 = vpop.permute.xlu0 %4382
      %4386 = vset.pattern.permute.xlu0 0
      %4387 = vperm.xlu0 %4386, %v4353
      %v4388 = vpop.permute.xlu0 %4387
      %4391 = vset.pattern.permute.xlu0 0
      %4392 = vperm.xlu0 %4391, %v4354
      %v4393 = vpop.permute.xlu0 %4392
      %4396 = vset.pattern.permute.xlu0 0
      %4397 = vperm.xlu0 %4396, %v4355
      %v4398 = vpop.permute.xlu0 %4397
      %4401 = vset.pattern.permute.xlu0 0
      %4402 = vperm.xlu0 %4401, %v4356
      %v4403 = vpop.permute.xlu0 %4402
      %4406 = vset.pattern.permute.xlu0 0
      %4407 = vperm.xlu0 %4406, %v4357
      %v4408 = vpop.permute.xlu0 %4407
      %4411 = vset.pattern.permute.xlu0 0
      %4412 = vperm.xlu0 %4411, %v4358
      %v4413 = vpop.permute.xlu0 %4412
      %4416 = vset.pattern.permute.xlu0 0
      %4417 = vperm.xlu0 %4416, %v4359
      %v4418 = vpop.permute.xlu0 %4417
      %4421 = vset.pattern.permute.xlu0 0
      %4422 = vperm.xlu0 %4421, %v4360
      %v4423 = vpop.permute.xlu0 %4422
      %4426 = vset.pattern.permute.xlu0 0
      %4427 = vperm.xlu0 %4426, %v4361
      %v4428 = vpop.permute.xlu0 %4427
      %4431 = vset.pattern.permute.xlu0 0
      %4432 = vperm.xlu0 %4431, %v4362
      %v4433 = vpop.permute.xlu0 %4432
      %4436 = vset.pattern.permute.xlu0 0
      %4437 = vperm.xlu0 %4436, %v4363
      %v4438 = vpop.permute.xlu0 %4437
      %4441 = vset.pattern.permute.xlu0 0
      %4442 = vperm.xlu0 %4441, %v4364
      %v4443 = vpop.permute.xlu0 %4442
      %v4557 = vunpack.c.l.b16 %v4036
      %v4558 = vunpack.c.h.b16 %v4036
      %v4559 = vunpack.c.l.b16 %v4037
      %v4560 = vunpack.c.h.b16 %v4037
      %v4561 = vunpack.c.l.b16 %v4038
      %v4562 = vunpack.c.h.b16 %v4038
      %v4563 = vunpack.c.l.b16 %v4039
      %v4564 = vunpack.c.h.b16 %v4039
      %v4565 = vunpack.c.l.b16 %v4040
      %v4566 = vunpack.c.h.b16 %v4040
      %v4567 = vunpack.c.l.b16 %v4041
      %v4568 = vunpack.c.h.b16 %v4041
      %v4569 = vunpack.c.l.b16 %v4042
      %v4570 = vunpack.c.l.b16 %v4043
      %v4571 = vunpack.c.h.b16 %v4043
      %v4572 = vunpack.c.l.b16 %v4044
      %v4573 = vunpack.c.h.b16 %v4044
      %v4574 = vunpack.c.l.b16 %v4045
      %v4575 = vunpack.c.h.b16 %v4045
      %v4576 = vunpack.c.l.b16 %v4046
      %v4577 = vunpack.c.h.b16 %v4046
      %v4578 = vunpack.c.l.b16 %v4047
      %v4579 = vunpack.c.h.b16 %v4047
      %v4580 = vunpack.c.l.b16 %v4048
      %v4581 = vunpack.c.h.b16 %v4048
      %v4582 = vunpack.c.l.b16 %v4049
      %v4583 = vunpack.c.l.b16 %v4050
      %v4584 = vunpack.c.h.b16 %v4050
      %v4585 = vunpack.c.l.b16 %v4051
      %v4586 = vunpack.c.h.b16 %v4051
      %v4587 = vunpack.c.l.b16 %v4052
      %v4588 = vunpack.c.h.b16 %v4052
      %v4589 = vunpack.c.l.b16 %v4053
      %v4590 = vunpack.c.h.b16 %v4053
      %v4591 = vunpack.c.l.b16 %v4054
      %v4592 = vunpack.c.h.b16 %v4054
      %v4593 = vunpack.c.l.b16 %v4055
      %v4594 = vunpack.c.h.b16 %v4055
      %v4595 = vunpack.c.l.b16 %v4056
      %v4596 = vunpack.c.l.b16 %v4057
      %v4597 = vunpack.c.h.b16 %v4057
      %v4598 = vunpack.c.l.b16 %v4058
      %v4599 = vunpack.c.h.b16 %v4058
      %v4600 = vunpack.c.l.b16 %v4059
      %v4601 = vunpack.c.h.b16 %v4059
      %v4602 = vunpack.c.l.b16 %v4060
      %v4603 = vunpack.c.h.b16 %v4060
      %v4604 = vunpack.c.l.b16 %v4061
      %v4605 = vunpack.c.h.b16 %v4061
      %v4606 = vunpack.c.l.b16 %v4062
      %v4607 = vunpack.c.h.b16 %v4062
      %v4608 = vunpack.c.l.b16 %v4063
      %v4609 = vunpack.c.l.b16 %v4064
      %v4610 = vunpack.c.h.b16 %v4064
      %v4611 = vunpack.c.l.b16 %v4065
      %v4612 = vunpack.c.h.b16 %v4065
      %v4613 = vunpack.c.l.b16 %v4066
      %v4614 = vunpack.c.h.b16 %v4066
      %v4615 = vunpack.c.l.b16 %v4067
      %v4616 = vunpack.c.h.b16 %v4067
      %v4617 = vunpack.c.l.b16 %v4068
      %v4618 = vunpack.c.h.b16 %v4068
      %v4619 = vunpack.c.l.b16 %v4069
      %v4620 = vunpack.c.h.b16 %v4069
      %v4621 = vunpack.c.l.b16 %v4070
      %v4622 = vunpack.c.l.b16 %v4071
      %v4623 = vunpack.c.h.b16 %v4071
      %v4624 = vunpack.c.l.b16 %v4072
      %v4625 = vunpack.c.h.b16 %v4072
      %v4626 = vunpack.c.l.b16 %v4073
      %v4627 = vunpack.c.h.b16 %v4073
      %v4628 = vunpack.c.l.b16 %v4074
      %v4629 = vunpack.c.h.b16 %v4074
      %v4630 = vunpack.c.l.b16 %v4075
      %v4631 = vunpack.c.h.b16 %v4075
      %v4632 = vunpack.c.l.b16 %v4076
      %v4633 = vunpack.c.h.b16 %v4076
      %v4634 = vunpack.c.l.b16 %v4077
      %v4635 = vunpack.c.l.b16 %v4078
      %v4636 = vunpack.c.h.b16 %v4078
      %v4637 = vunpack.c.l.b16 %v4079
      %v4638 = vunpack.c.h.b16 %v4079
      %v4639 = vunpack.c.l.b16 %v4080
      %v4640 = vunpack.c.h.b16 %v4080
      %v4641 = vunpack.c.l.b16 %v4081
      %v4642 = vunpack.c.h.b16 %v4081
      %v4643 = vunpack.c.l.b16 %v4082
      %v4644 = vunpack.c.h.b16 %v4082
      %v4645 = vunpack.c.l.b16 %v4083
      %v4646 = vunpack.c.h.b16 %v4083
      %v4647 = vunpack.c.l.b16 %v4084
      %v4648 = vunpack.c.l.b16 %v4085
      %v4649 = vunpack.c.h.b16 %v4085
      %v4650 = vunpack.c.l.b16 %v4086
      %v4651 = vunpack.c.h.b16 %v4086
      %v4652 = vunpack.c.l.b16 %v4087
      %v4653 = vunpack.c.h.b16 %v4087
      %v4654 = vunpack.c.l.b16 %v4088
      %v4655 = vunpack.c.h.b16 %v4088
      %v4656 = vunpack.c.l.b16 %v4089
      %v4657 = vunpack.c.h.b16 %v4089
      %v4658 = vunpack.c.l.b16 %v4090
      %v4659 = vunpack.c.h.b16 %v4090
      %v4660 = vunpack.c.l.b16 %v4091
      %v4661 = vunpack.c.l.b16 %v4092
      %v4662 = vunpack.c.h.b16 %v4092
      %v4663 = vunpack.c.l.b16 %v4093
      %v4664 = vunpack.c.h.b16 %v4093
      %v4665 = vunpack.c.l.b16 %v4094
      %v4666 = vunpack.c.h.b16 %v4094
      %v4667 = vunpack.c.l.b16 %v4095
      %v4668 = vunpack.c.h.b16 %v4095
      %v4669 = vunpack.c.l.b16 %v4096
      %v4670 = vunpack.c.h.b16 %v4096
      %v4671 = vunpack.c.l.b16 %v4097
      %v4672 = vunpack.c.h.b16 %v4097
      %v4673 = vunpack.c.l.b16 %v4098
      %v4674 = vunpack.c.l.b16 %v4099
      %v4675 = vunpack.c.h.b16 %v4099
      %v4676 = vunpack.c.l.b16 %v4100
      %v4677 = vunpack.c.h.b16 %v4100
      %v4678 = vunpack.c.l.b16 %v4101
      %v4679 = vunpack.c.h.b16 %v4101
      %v4680 = vunpack.c.l.b16 %v4102
      %v4681 = vunpack.c.h.b16 %v4102
      %v4682 = vunpack.c.l.b16 %v4103
      %v4683 = vunpack.c.h.b16 %v4103
      %v4684 = vunpack.c.l.b16 %v4104
      %v4685 = vunpack.c.h.b16 %v4104
      %v4686 = vunpack.c.l.b16 %v4105
      %v4687 = vunpack.c.l.b16 %v4106
      %v4688 = vunpack.c.h.b16 %v4106
      %v4689 = vunpack.c.l.b16 %v4107
      %v4690 = vunpack.c.h.b16 %v4107
      %v4691 = vunpack.c.l.b16 %v4108
      %v4692 = vunpack.c.h.b16 %v4108
      %v4693 = vunpack.c.l.b16 %v4109
      %v4694 = vunpack.c.h.b16 %v4109
      %v4695 = vunpack.c.l.b16 %v4110
      %v4696 = vunpack.c.h.b16 %v4110
      %v4697 = vunpack.c.l.b16 %v4111
      %v4698 = vunpack.c.h.b16 %v4111
      %v4699 = vunpack.c.l.b16 %v4112
      %v4700 = vunpack.c.l.b16 %v4113
      %v4701 = vunpack.c.h.b16 %v4113
      %v4702 = vunpack.c.l.b16 %v4114
      %v4703 = vunpack.c.h.b16 %v4114
      %v4704 = vunpack.c.l.b16 %v4115
      %v4705 = vunpack.c.h.b16 %v4115
      %v4706 = vunpack.c.l.b16 %v4116
      %v4707 = vunpack.c.h.b16 %v4116
      %v4708 = vunpack.c.l.b16 %v4117
      %v4709 = vunpack.c.h.b16 %v4117
      %v4710 = vunpack.c.l.b16 %v4118
      %v4711 = vunpack.c.h.b16 %v4118
      %v4712 = vunpack.c.l.b16 %v4119
      %v4713 = vunpack.c.l.b16 %v4120
      %v4714 = vunpack.c.h.b16 %v4120
      %v4715 = vunpack.c.l.b16 %v4121
      %v4716 = vunpack.c.h.b16 %v4121
      %v4717 = vunpack.c.l.b16 %v4122
      %v4718 = vunpack.c.h.b16 %v4122
      %v4719 = vunpack.c.l.b16 %v4123
      %v4720 = vunpack.c.h.b16 %v4123
      %v4721 = vunpack.c.l.b16 %v4124
      %v4722 = vunpack.c.h.b16 %v4124
      %v4723 = vunpack.c.l.b16 %v4125
      %v4724 = vunpack.c.h.b16 %v4125
      %v4725 = vunpack.c.l.b16 %v4126
      %v4726 = vunpack.c.l.b16 %v4127
      %v4727 = vunpack.c.h.b16 %v4127
      %v4728 = vunpack.c.l.b16 %v4128
      %v4729 = vunpack.c.h.b16 %v4128
      %v4730 = vunpack.c.l.b16 %v4129
      %v4731 = vunpack.c.h.b16 %v4129
      %v4732 = vunpack.c.l.b16 %v4130
      %v4733 = vunpack.c.h.b16 %v4130
      %v4734 = vunpack.c.l.b16 %v4131
      %v4735 = vunpack.c.h.b16 %v4131
      %v4736 = vunpack.c.l.b16 %v4132
      %v4737 = vunpack.c.h.b16 %v4132
      %v4738 = vunpack.c.l.b16 %v4133
      %v4739 = vunpack.c.l.b16 %v4134
      %v4740 = vunpack.c.h.b16 %v4134
      %v4741 = vunpack.c.l.b16 %v4135
      %v4742 = vunpack.c.h.b16 %v4135
      %v4743 = vunpack.c.l.b16 %v4136
      %v4744 = vunpack.c.h.b16 %v4136
      %v4745 = vunpack.c.l.b16 %v4137
      %v4746 = vunpack.c.h.b16 %v4137
      %v4747 = vunpack.c.l.b16 %v4138
      %v4748 = vunpack.c.h.b16 %v4138
      %v4749 = vunpack.c.l.b16 %v4139
      %v4750 = vunpack.c.h.b16 %v4139
      %v4751 = vunpack.c.l.b16 %v4140
      %v4752 = vunpack.c.l.b16 %v4141
      %v4753 = vunpack.c.h.b16 %v4141
      %v4754 = vunpack.c.l.b16 %v4142
      %v4755 = vunpack.c.h.b16 %v4142
      %v4756 = vunpack.c.l.b16 %v4143
      %v4757 = vunpack.c.h.b16 %v4143
      %v4758 = vunpack.c.l.b16 %v4144
      %v4759 = vunpack.c.h.b16 %v4144
      %v4760 = vunpack.c.l.b16 %v4145
      %v4761 = vunpack.c.h.b16 %v4145
      %v4762 = vunpack.c.l.b16 %v4146
      %v4763 = vunpack.c.h.b16 %v4146
      %v4764 = vunpack.c.l.b16 %v4147
      %v4765 = vpack.c.b16 %v4570, %v4557
      %v4766 = vpack.c.b16 %v4571, %v4558
      %v4767 = vpack.c.b16 %v4572, %v4559
      %v4768 = vpack.c.b16 %v4573, %v4560
      %v4769 = vpack.c.b16 %v4574, %v4561
      %v4770 = vpack.c.b16 %v4575, %v4562
      %v4771 = vpack.c.b16 %v4576, %v4563
      %v4772 = vpack.c.b16 %v4577, %v4564
      %v4773 = vpack.c.b16 %v4578, %v4565
      %v4774 = vpack.c.b16 %v4579, %v4566
      %v4775 = vpack.c.b16 %v4580, %v4567
      %v4776 = vpack.c.b16 %v4581, %v4568
      %v4777 = vpack.c.b16 %v4582, %v4569
      %v4778 = vpack.c.b16 %v4596, %v4583
      %v4779 = vpack.c.b16 %v4597, %v4584
      %v4780 = vpack.c.b16 %v4598, %v4585
      %v4781 = vpack.c.b16 %v4599, %v4586
      %v4782 = vpack.c.b16 %v4600, %v4587
      %v4783 = vpack.c.b16 %v4601, %v4588
      %v4784 = vpack.c.b16 %v4602, %v4589
      %v4785 = vpack.c.b16 %v4603, %v4590
      %v4786 = vpack.c.b16 %v4604, %v4591
      %v4787 = vpack.c.b16 %v4605, %v4592
      %v4788 = vpack.c.b16 %v4606, %v4593
      %v4789 = vpack.c.b16 %v4607, %v4594
      %v4790 = vpack.c.b16 %v4608, %v4595
      %v4791 = vpack.c.b16 %v4622, %v4609
      %v4792 = vpack.c.b16 %v4623, %v4610
      %v4793 = vpack.c.b16 %v4624, %v4611
      %v4794 = vpack.c.b16 %v4625, %v4612
      %v4795 = vpack.c.b16 %v4626, %v4613
      %v4796 = vpack.c.b16 %v4627, %v4614
      %v4797 = vpack.c.b16 %v4628, %v4615
      %v4798 = vpack.c.b16 %v4629, %v4616
      %v4799 = vpack.c.b16 %v4630, %v4617
      %v4800 = vpack.c.b16 %v4631, %v4618
      %v4801 = vpack.c.b16 %v4632, %v4619
      %v4802 = vpack.c.b16 %v4633, %v4620
      %v4803 = vpack.c.b16 %v4634, %v4621
      %v4804 = vpack.c.b16 %v4648, %v4635
      %v4805 = vpack.c.b16 %v4649, %v4636
      %v4806 = vpack.c.b16 %v4650, %v4637
      %v4807 = vpack.c.b16 %v4651, %v4638
      %v4808 = vpack.c.b16 %v4652, %v4639
      %v4809 = vpack.c.b16 %v4653, %v4640
      %v4810 = vpack.c.b16 %v4654, %v4641
      %v4811 = vpack.c.b16 %v4655, %v4642
      %v4812 = vpack.c.b16 %v4656, %v4643
      %v4813 = vpack.c.b16 %v4657, %v4644
      %v4814 = vpack.c.b16 %v4658, %v4645
      %v4815 = vpack.c.b16 %v4659, %v4646
      %v4816 = vpack.c.b16 %v4660, %v4647
      %v4817 = vpack.c.b16 %v4674, %v4661
      %v4818 = vpack.c.b16 %v4675, %v4662
      %v4819 = vpack.c.b16 %v4676, %v4663
      %v4820 = vpack.c.b16 %v4677, %v4664
      %v4821 = vpack.c.b16 %v4678, %v4665
      %v4822 = vpack.c.b16 %v4679, %v4666
      %v4823 = vpack.c.b16 %v4680, %v4667
      %v4824 = vpack.c.b16 %v4681, %v4668
      %v4825 = vpack.c.b16 %v4682, %v4669
      %v4826 = vpack.c.b16 %v4683, %v4670
      %v4827 = vpack.c.b16 %v4684, %v4671
      %v4828 = vpack.c.b16 %v4685, %v4672
      %v4829 = vpack.c.b16 %v4686, %v4673
      %v4830 = vpack.c.b16 %v4700, %v4687
      %v4831 = vpack.c.b16 %v4701, %v4688
      %v4832 = vpack.c.b16 %v4702, %v4689
      %v4833 = vpack.c.b16 %v4703, %v4690
      %v4834 = vpack.c.b16 %v4704, %v4691
      %v4835 = vpack.c.b16 %v4705, %v4692
      %v4836 = vpack.c.b16 %v4706, %v4693
      %v4837 = vpack.c.b16 %v4707, %v4694
      %v4838 = vpack.c.b16 %v4708, %v4695
      %v4839 = vpack.c.b16 %v4709, %v4696
      %v4840 = vpack.c.b16 %v4710, %v4697
      %v4841 = vpack.c.b16 %v4711, %v4698
      %v4842 = vpack.c.b16 %v4712, %v4699
      %v4843 = vpack.c.b16 %v4726, %v4713
      %v4844 = vpack.c.b16 %v4727, %v4714
      %v4845 = vpack.c.b16 %v4728, %v4715
      %v4846 = vpack.c.b16 %v4729, %v4716
      %v4847 = vpack.c.b16 %v4730, %v4717
      %v4848 = vpack.c.b16 %v4731, %v4718
      %v4849 = vpack.c.b16 %v4732, %v4719
      %v4850 = vpack.c.b16 %v4733, %v4720
      %v4851 = vpack.c.b16 %v4734, %v4721
      %v4852 = vpack.c.b16 %v4735, %v4722
      %v4853 = vpack.c.b16 %v4736, %v4723
      %v4854 = vpack.c.b16 %v4737, %v4724
      %v4855 = vpack.c.b16 %v4738, %v4725
      %v4856 = vpack.c.b16 %v4752, %v4739
      %v4857 = vpack.c.b16 %v4753, %v4740
      %v4858 = vpack.c.b16 %v4754, %v4741
      %v4859 = vpack.c.b16 %v4755, %v4742
      %v4860 = vpack.c.b16 %v4756, %v4743
      %v4861 = vpack.c.b16 %v4757, %v4744
      %v4862 = vpack.c.b16 %v4758, %v4745
      %v4863 = vpack.c.b16 %v4759, %v4746
      %v4864 = vpack.c.b16 %v4760, %v4747
      %v4865 = vpack.c.b16 %v4761, %v4748
      %v4866 = vpack.c.b16 %v4762, %v4749
      %v4867 = vpack.c.b16 %v4763, %v4750
      %v4868 = vpack.c.b16 %v4764, %v4751
      %v5166 = vunpack.c.l.b16 %v4148
      %v5167 = vunpack.c.h.b16 %v4148
      %v5168 = vunpack.c.l.b16 %v4149
      %v5169 = vunpack.c.h.b16 %v4149
      %v5170 = vunpack.c.l.b16 %v4150
      %v5171 = vunpack.c.h.b16 %v4150
      %v5172 = vunpack.c.l.b16 %v4151
      %v5173 = vunpack.c.h.b16 %v4151
      %v5174 = vunpack.c.l.b16 %v4152
      %v5175 = vunpack.c.h.b16 %v4152
      %v5176 = vunpack.c.l.b16 %v4153
      %v5177 = vunpack.c.h.b16 %v4153
      %v5178 = vunpack.c.l.b16 %v4154
      %v5179 = vunpack.c.h.b16 %v4154
      %v5180 = vunpack.c.l.b16 %v4155
      %v5181 = vunpack.c.h.b16 %v4155
      %v5182 = vunpack.c.l.b16 %v4156
      %v5183 = vunpack.c.h.b16 %v4156
      %v5184 = vunpack.c.l.b16 %v4157
      %v5185 = vunpack.c.h.b16 %v4157
      %v5186 = vunpack.c.l.b16 %v4158
      %v5187 = vunpack.c.h.b16 %v4158
      %v5188 = vunpack.c.l.b16 %v4159
      %v5189 = vunpack.c.h.b16 %v4159
      %v5190 = vunpack.c.l.b16 %v4160
      %v5191 = vunpack.c.h.b16 %v4160
      %v5192 = vunpack.c.l.b16 %v4161
      %v5193 = vunpack.c.h.b16 %v4161
      %v5194 = vunpack.c.l.b16 %v4162
      %v5195 = vunpack.c.h.b16 %v4162
      %v5196 = vunpack.c.l.b16 %v4163
      %v5197 = vunpack.c.h.b16 %v4163
      %v5198 = vunpack.c.l.b16 %v4164
      %v5199 = vunpack.c.h.b16 %v4164
      %v5200 = vunpack.c.l.b16 %v4165
      %v5201 = vunpack.c.h.b16 %v4165
      %v5202 = vunpack.c.l.b16 %v4166
      %v5203 = vunpack.c.h.b16 %v4166
      %v5204 = vunpack.c.l.b16 %v4167
      %v5205 = vunpack.c.h.b16 %v4167
      %v5206 = vunpack.c.l.b16 %v4168
      %v5207 = vunpack.c.h.b16 %v4168
      %v5208 = vunpack.c.l.b16 %v4169
      %v5209 = vunpack.c.h.b16 %v4169
      %v5210 = vunpack.c.l.b16 %v4170
      %v5211 = vunpack.c.h.b16 %v4170
      %v5212 = vunpack.c.l.b16 %v4171
      %v5213 = vunpack.c.h.b16 %v4171
      %v5214 = vunpack.c.l.b16 %v4172
      %v5215 = vunpack.c.h.b16 %v4172
      %v5216 = vunpack.c.l.b16 %v4173
      %v5217 = vunpack.c.h.b16 %v4173
      %v5218 = vunpack.c.l.b16 %v4174
      %v5219 = vunpack.c.h.b16 %v4174
      %v5220 = vunpack.c.l.b16 %v4175
      %v5221 = vunpack.c.h.b16 %v4175
      %v5222 = vunpack.c.l.b16 %v4176
      %v5223 = vunpack.c.h.b16 %v4176
      %v5224 = vunpack.c.l.b16 %v4177
      %v5225 = vunpack.c.h.b16 %v4177
      %v5226 = vunpack.c.l.b16 %v4178
      %v5227 = vunpack.c.h.b16 %v4178
      %v5228 = vunpack.c.l.b16 %v4179
      %v5229 = vunpack.c.h.b16 %v4179
      %v5230 = vunpack.c.l.b16 %v4180
      %v5231 = vunpack.c.h.b16 %v4180
      %v5232 = vunpack.c.l.b16 %v4181
      %v5233 = vunpack.c.h.b16 %v4181
      %v5234 = vunpack.c.l.b16 %v4182
      %v5235 = vunpack.c.h.b16 %v4182
      %v5236 = vunpack.c.l.b16 %v4183
      %v5237 = vunpack.c.h.b16 %v4183
      %v5238 = vunpack.c.l.b16 %v4184
      %v5239 = vunpack.c.h.b16 %v4184
      %v5240 = vunpack.c.l.b16 %v4185
      %v5241 = vunpack.c.h.b16 %v4185
      %v5242 = vunpack.c.l.b16 %v4186
      %v5243 = vunpack.c.h.b16 %v4186
      %v5244 = vunpack.c.l.b16 %v4187
      %v5245 = vunpack.c.h.b16 %v4187
      %v5246 = vunpack.c.l.b16 %v4188
      %v5247 = vunpack.c.h.b16 %v4188
      %v5248 = vunpack.c.l.b16 %v4189
      %v5249 = vunpack.c.h.b16 %v4189
      %v5250 = vunpack.c.l.b16 %v4190
      %v5251 = vunpack.c.h.b16 %v4190
      %v5252 = vunpack.c.l.b16 %v4191
      %v5253 = vunpack.c.h.b16 %v4191
      %v5254 = vunpack.c.l.b16 %v4192
      %v5255 = vunpack.c.h.b16 %v4192
      %v5256 = vunpack.c.l.b16 %v4193
      %v5257 = vunpack.c.h.b16 %v4193
      %v5258 = vunpack.c.l.b16 %v4194
      %v5259 = vunpack.c.h.b16 %v4194
      %v5260 = vunpack.c.l.b16 %v4195
      %v5261 = vunpack.c.h.b16 %v4195
      %v5262 = vunpack.c.l.b16 %v4196
      %v5263 = vunpack.c.h.b16 %v4196
      %v5264 = vunpack.c.l.b16 %v4197
      %v5265 = vunpack.c.h.b16 %v4197
      %v5266 = vunpack.c.l.b16 %v4198
      %v5267 = vunpack.c.h.b16 %v4198
      %v5268 = vunpack.c.l.b16 %v4199
      %v5269 = vunpack.c.h.b16 %v4199
      %v5270 = vunpack.c.l.b16 %v4200
      %v5271 = vunpack.c.h.b16 %v4200
      %v5272 = vunpack.c.l.b16 %v4201
      %v5273 = vunpack.c.h.b16 %v4201
      %v5274 = vunpack.c.l.b16 %v4202
      %v5275 = vunpack.c.h.b16 %v4202
      %v5276 = vunpack.c.l.b16 %v4203
      %v5277 = vunpack.c.h.b16 %v4203
      %v5278 = vunpack.c.l.b16 %v4204
      %v5279 = vunpack.c.h.b16 %v4204
      %v5280 = vunpack.c.l.b16 %v4205
      %v5281 = vunpack.c.h.b16 %v4205
      %v5282 = vunpack.c.l.b16 %v4206
      %v5283 = vunpack.c.h.b16 %v4206
      %v5284 = vunpack.c.l.b16 %v4207
      %v5285 = vunpack.c.h.b16 %v4207
      %v5286 = vunpack.c.l.b16 %v4208
      %v5287 = vunpack.c.h.b16 %v4208
      %v5288 = vunpack.c.l.b16 %v4209
      %v5289 = vunpack.c.h.b16 %v4209
      %v5290 = vunpack.c.l.b16 %v4210
      %v5291 = vunpack.c.h.b16 %v4210
      %v5292 = vunpack.c.l.b16 %v4211
      %v5293 = vunpack.c.h.b16 %v4211
      %v5294 = vunpack.c.l.b16 %v4212
      %v5295 = vunpack.c.h.b16 %v4212
      %v5296 = vunpack.c.l.b16 %v4213
      %v5297 = vunpack.c.h.b16 %v4213
      %v5298 = vunpack.c.l.b16 %v4214
      %v5299 = vunpack.c.h.b16 %v4214
      %v5300 = vunpack.c.l.b16 %v4215
      %v5301 = vunpack.c.h.b16 %v4215
      %v5302 = vunpack.c.l.b16 %v4216
      %v5303 = vunpack.c.h.b16 %v4216
      %v5304 = vunpack.c.l.b16 %v4217
      %v5305 = vunpack.c.h.b16 %v4217
      %v5306 = vunpack.c.l.b16 %v4218
      %v5307 = vunpack.c.h.b16 %v4218
      %v5308 = vunpack.c.l.b16 %v4219
      %v5309 = vunpack.c.h.b16 %v4219
      %v5310 = vunpack.c.l.b16 %v4220
      %v5311 = vunpack.c.h.b16 %v4220
      %v5312 = vunpack.c.l.b16 %v4221
      %v5313 = vunpack.c.h.b16 %v4221
      %v5314 = vunpack.c.l.b16 %v4222
      %v5315 = vunpack.c.h.b16 %v4222
      %v5316 = vunpack.c.l.b16 %v4223
      %v5317 = vunpack.c.h.b16 %v4223
      %v5318 = vunpack.c.l.b16 %v4224
      %v5319 = vunpack.c.h.b16 %v4224
      %v5320 = vunpack.c.l.b16 %v4225
      %v5321 = vunpack.c.h.b16 %v4225
      %v5322 = vunpack.c.l.b16 %v4226
      %v5323 = vunpack.c.h.b16 %v4226
      %v5324 = vunpack.c.l.b16 %v4227
      %v5325 = vunpack.c.h.b16 %v4227
      %v5326 = vunpack.c.l.b16 %v4228
      %v5327 = vunpack.c.h.b16 %v4228
      %v5328 = vunpack.c.l.b16 %v4229
      %v5329 = vunpack.c.h.b16 %v4229
      %v5330 = vunpack.c.l.b16 %v4230
      %v5331 = vunpack.c.h.b16 %v4230
      %v5332 = vunpack.c.l.b16 %v4231
      %v5333 = vunpack.c.h.b16 %v4231
      %v5334 = vunpack.c.l.b16 %v4232
      %v5335 = vunpack.c.h.b16 %v4232
      %v5336 = vunpack.c.l.b16 %v4233
      %v5337 = vunpack.c.h.b16 %v4233
      %v5338 = vunpack.c.l.b16 %v4234
      %v5339 = vunpack.c.h.b16 %v4234
      %v5340 = vunpack.c.l.b16 %v4235
      %v5341 = vunpack.c.h.b16 %v4235
      %v5342 = vunpack.c.l.b16 %v4236
      %v5343 = vunpack.c.h.b16 %v4236
      %v5344 = vunpack.c.l.b16 %v4237
      %v5345 = vunpack.c.h.b16 %v4237
      %v5346 = vunpack.c.l.b16 %v4238
      %v5347 = vunpack.c.h.b16 %v4238
      %v5348 = vunpack.c.l.b16 %v4239
      %v5349 = vunpack.c.h.b16 %v4239
      %v5350 = vunpack.c.l.b16 %v4240
      %v5351 = vunpack.c.h.b16 %v4240
      %v5352 = vunpack.c.l.b16 %v4241
      %v5353 = vunpack.c.h.b16 %v4241
      %v5354 = vunpack.c.l.b16 %v4242
      %v5355 = vunpack.c.h.b16 %v4242
      %v5356 = vunpack.c.l.b16 %v4243
      %v5357 = vunpack.c.h.b16 %v4243
      %v5358 = vunpack.c.l.b16 %v4244
      %v5359 = vunpack.c.h.b16 %v4244
      %v5360 = vunpack.c.l.b16 %v4245
      %v5361 = vunpack.c.h.b16 %v4245
      %v5362 = vunpack.c.l.b16 %v4246
      %v5363 = vunpack.c.h.b16 %v4246
      %v5364 = vunpack.c.l.b16 %v4247
      %v5365 = vunpack.c.h.b16 %v4247
      %v5366 = vunpack.c.l.b16 %v4248
      %v5367 = vunpack.c.h.b16 %v4248
      %v5368 = vunpack.c.l.b16 %v4249
      %v5369 = vunpack.c.h.b16 %v4249
      %v5370 = vunpack.c.l.b16 %v4250
      %v5371 = vunpack.c.h.b16 %v4250
      %v5372 = vunpack.c.l.b16 %v4251
      %v5373 = vunpack.c.h.b16 %v4251
      %v5374 = vunpack.c.l.b16 %v4252
      %v5375 = vunpack.c.h.b16 %v4252
      %v5376 = vunpack.c.l.b16 %v4253
      %v5377 = vunpack.c.h.b16 %v4253
      %v5378 = vunpack.c.l.b16 %v4254
      %v5379 = vunpack.c.h.b16 %v4254
      %v5380 = vunpack.c.l.b16 %v4255
      %v5381 = vunpack.c.h.b16 %v4255
      %v5382 = vunpack.c.l.b16 %v4256
      %v5383 = vunpack.c.h.b16 %v4256
      %v5384 = vunpack.c.l.b16 %v4257
      %v5385 = vunpack.c.h.b16 %v4257
      %v5386 = vunpack.c.l.b16 %v4258
      %v5387 = vunpack.c.h.b16 %v4258
      %v5388 = vunpack.c.l.b16 %v4259
      %v5389 = vunpack.c.h.b16 %v4259
      %v5390 = vunpack.c.l.b16 %v4260
      %v5391 = vunpack.c.h.b16 %v4260
      %v5392 = vunpack.c.l.b16 %v4261
      %v5393 = vunpack.c.h.b16 %v4261
      %v5394 = vunpack.c.l.b16 %v4262
      %v5395 = vunpack.c.h.b16 %v4262
      %v5396 = vunpack.c.l.b16 %v4263
      %v5397 = vunpack.c.h.b16 %v4263
      %v5398 = vunpack.c.l.b16 %v4264
      %v5399 = vunpack.c.h.b16 %v4264
      %v5400 = vunpack.c.l.b16 %v4265
      %v5401 = vunpack.c.h.b16 %v4265
      %v5402 = vunpack.c.l.b16 %v4266
      %v5403 = vunpack.c.h.b16 %v4266
      %v5404 = vunpack.c.l.b16 %v4267
      %v5405 = vunpack.c.h.b16 %v4267
      %v5406 = vunpack.c.l.b16 %v4268
      %v5407 = vunpack.c.h.b16 %v4268
      %v5408 = vunpack.c.l.b16 %v4269
      %v5409 = vunpack.c.h.b16 %v4269
      %v5410 = vunpack.c.l.b16 %v4270
      %v5411 = vunpack.c.h.b16 %v4270
      %v5412 = vunpack.c.l.b16 %v4271
      %v5413 = vunpack.c.h.b16 %v4271
      %v5414 = vunpack.c.l.b16 %v4272
      %v5415 = vunpack.c.h.b16 %v4272
      %v5416 = vunpack.c.l.b16 %v4273
      %v5417 = vunpack.c.h.b16 %v4273
      %v5418 = vunpack.c.l.b16 %v4274
      %v5419 = vunpack.c.h.b16 %v4274
      %v5420 = vunpack.c.l.b16 %v4275
      %v5421 = vunpack.c.h.b16 %v4275
      %v5422 = vunpack.c.l.b16 %v4276
      %v5423 = vunpack.c.h.b16 %v4276
      %v5424 = vunpack.c.l.b16 %v4277
      %v5425 = vunpack.c.h.b16 %v4277
      %v5426 = vunpack.c.l.b16 %v4278
      %v5427 = vunpack.c.h.b16 %v4278
      %v5428 = vunpack.c.l.b16 %v4279
      %v5429 = vunpack.c.h.b16 %v4279
      %v5430 = vunpack.c.l.b16 %v4280
      %v5431 = vunpack.c.h.b16 %v4280
      %v5432 = vunpack.c.l.b16 %v4281
      %v5433 = vunpack.c.h.b16 %v4281
      %v5434 = vunpack.c.l.b16 %v4282
      %v5435 = vunpack.c.h.b16 %v4282
      %v5436 = vunpack.c.l.b16 %v4283
      %v5437 = vunpack.c.h.b16 %v4283
      %v5438 = vunpack.c.l.b16 %v4284
      %v5439 = vunpack.c.h.b16 %v4284
      %v5440 = vunpack.c.l.b16 %v4285
      %v5441 = vunpack.c.h.b16 %v4285
      %v5442 = vunpack.c.l.b16 %v4286
      %v5443 = vunpack.c.h.b16 %v4286
      %v5444 = vunpack.c.l.b16 %v4287
      %v5445 = vunpack.c.h.b16 %v4287
      %v5446 = vunpack.c.l.b16 %v4288
      %v5447 = vunpack.c.h.b16 %v4288
      %v5448 = vunpack.c.l.b16 %v4289
      %v5449 = vunpack.c.h.b16 %v4289
      %v5450 = vunpack.c.l.b16 %v4290
      %v5451 = vunpack.c.h.b16 %v4290
      %v5452 = vunpack.c.l.b16 %v4291
      %v5453 = vunpack.c.h.b16 %v4291
      %v5454 = vunpack.c.l.b16 %v4292
      %v5455 = vunpack.c.h.b16 %v4292
      %v5456 = vunpack.c.l.b16 %v4293
      %v5457 = vunpack.c.h.b16 %v4293
      %v5458 = vunpack.c.l.b16 %v4294
      %v5459 = vunpack.c.h.b16 %v4294
      %v5460 = vunpack.c.l.b16 %v4295
      %v5461 = vunpack.c.h.b16 %v4295
      %v5462 = vunpack.c.l.b16 %v4296
      %v5463 = vunpack.c.h.b16 %v4296
      %v5464 = vunpack.c.l.b16 %v4297
      %v5465 = vunpack.c.h.b16 %v4297
      %v5466 = vunpack.c.l.b16 %v4298
      %v5467 = vunpack.c.h.b16 %v4298
      %v5468 = vunpack.c.l.b16 %v4299
      %v5469 = vunpack.c.h.b16 %v4299
      %v5470 = vunpack.c.l.b16 %v4300
      %v5471 = vunpack.c.h.b16 %v4300
      %v5472 = vunpack.c.l.b16 %v4301
      %v5473 = vunpack.c.h.b16 %v4301
      %v5474 = vunpack.c.l.b16 %v4302
      %v5475 = vunpack.c.h.b16 %v4302
      %v5476 = vunpack.c.l.b16 %v4303
      %v5477 = vunpack.c.h.b16 %v4303
      %v5478 = vunpack.c.l.b16 %v4304
      %v5479 = vunpack.c.h.b16 %v4304
      %v5480 = vunpack.c.l.b16 %v4305
      %v5481 = vunpack.c.h.b16 %v4305
      %v5482 = vunpack.c.l.b16 %v4306
      %v5483 = vunpack.c.h.b16 %v4306
      %v5484 = vunpack.c.l.b16 %v4307
      %v5485 = vunpack.c.h.b16 %v4307
      %v5486 = vunpack.c.l.b16 %v4308
      %v5487 = vunpack.c.h.b16 %v4308
      %v5488 = vunpack.c.l.b16 %v4309
      %v5489 = vunpack.c.h.b16 %v4309
      %v5490 = vunpack.c.l.b16 %v4310
      %v5491 = vunpack.c.h.b16 %v4310
      %v5492 = vunpack.c.l.b16 %v4311
      %v5493 = vunpack.c.h.b16 %v4311
      %v5494 = vunpack.c.l.b16 %v4312
      %v5495 = vunpack.c.h.b16 %v4312
      %v5496 = vunpack.c.l.b16 %v4313
      %v5497 = vunpack.c.h.b16 %v4313
      %v5498 = vunpack.c.l.b16 %v4314
      %v5499 = vunpack.c.h.b16 %v4314
      %v5500 = vunpack.c.l.b16 %v4315
      %v5501 = vunpack.c.h.b16 %v4315
      %v5502 = vunpack.c.l.b16 %v4316
      %v5503 = vunpack.c.h.b16 %v4316
      %v5504 = vunpack.c.l.b16 %v4317
      %v5505 = vunpack.c.h.b16 %v4317
      %v5506 = vunpack.c.l.b16 %v4318
      %v5507 = vunpack.c.h.b16 %v4318
      %v5508 = vunpack.c.l.b16 %v4319
      %v5509 = vunpack.c.h.b16 %v4319
      %v5510 = vunpack.c.l.b16 %v4320
      %v5511 = vunpack.c.h.b16 %v4320
      %v5512 = vunpack.c.l.b16 %v4321
      %v5513 = vunpack.c.h.b16 %v4321
      %v5514 = vunpack.c.l.b16 %v4322
      %v5515 = vunpack.c.h.b16 %v4322
      %v5516 = vunpack.c.l.b16 %v4323
      %v5517 = vunpack.c.h.b16 %v4323
      %v5518 = vunpack.c.l.b16 %v4324
      %v5519 = vunpack.c.h.b16 %v4324
      %v5520 = vunpack.c.l.b16 %v4325
      %v5521 = vunpack.c.h.b16 %v4325
      %v5522 = vunpack.c.l.b16 %v4326
      %v5523 = vunpack.c.h.b16 %v4326
      %v5524 = vunpack.c.l.b16 %v4327
      %v5525 = vunpack.c.h.b16 %v4327
      %v5526 = vunpack.c.l.b16 %v4328
      %v5527 = vunpack.c.h.b16 %v4328
      %v5528 = vunpack.c.l.b16 %v4329
      %v5529 = vunpack.c.h.b16 %v4329
      %v5530 = vunpack.c.l.b16 %v4330
      %v5531 = vunpack.c.h.b16 %v4330
      %v5532 = vunpack.c.l.b16 %v4331
      %v5533 = vunpack.c.h.b16 %v4331
      %v5534 = vunpack.c.l.b16 %v4332
      %v5535 = vunpack.c.h.b16 %v4332
      %v5536 = vunpack.c.l.b16 %v4333
      %v5537 = vunpack.c.h.b16 %v4333
      %v5538 = vunpack.c.l.b16 %v4334
      %v5539 = vunpack.c.h.b16 %v4334
      %v5540 = vunpack.c.l.b16 %v4335
      %v5541 = vunpack.c.h.b16 %v4335
      %v5542 = vunpack.c.l.b16 %v4336
      %v5543 = vunpack.c.h.b16 %v4336
      %v5544 = vunpack.c.l.b16 %v4337
      %v5545 = vunpack.c.h.b16 %v4337
      %v5546 = vunpack.c.l.b16 %v4338
      %v5547 = vunpack.c.h.b16 %v4338
      %v5548 = vunpack.c.l.b16 %v4339
      %v5549 = vunpack.c.h.b16 %v4339
      %v5550 = vunpack.c.l.b16 %v4340
      %v5551 = vunpack.c.h.b16 %v4340
      %v5552 = vunpack.c.l.b16 %v4341
      %v5553 = vunpack.c.h.b16 %v4341
      %v5554 = vunpack.c.l.b16 %v4342
      %v5555 = vunpack.c.h.b16 %v4342
      %v5556 = vunpack.c.l.b16 %v4343
      %v5557 = vunpack.c.h.b16 %v4343
      %v5558 = vunpack.c.l.b16 %v4344
      %v5559 = vunpack.c.h.b16 %v4344
      %v5560 = vunpack.c.l.b16 %v4345
      %v5561 = vunpack.c.h.b16 %v4345
      %v5562 = vunpack.c.l.b16 %v4346
      %v5563 = vunpack.c.h.b16 %v4346
      %v5564 = vunpack.c.l.b16 %v4347
      %v5565 = vunpack.c.h.b16 %v4347
      %v5566 = vunpack.c.l.b16 %v4348
      %v5567 = vunpack.c.h.b16 %v4348
      %v5568 = vpack.c.b16 %v5168, %v5166
      %v5569 = vpack.c.b16 %v5169, %v5167
      %v5570 = vpack.c.b16 %v5172, %v5170
      %v5571 = vpack.c.b16 %v5173, %v5171
      %v5572 = vpack.c.b16 %v5176, %v5174
      %v5573 = vpack.c.b16 %v5177, %v5175
      %v5574 = vpack.c.b16 %v5180, %v5178
      %v5575 = vpack.c.b16 %v5181, %v5179
      %v5576 = vpack.c.b16 %v5184, %v5182
      %v5577 = vpack.c.b16 %v5185, %v5183
      %v5578 = vpack.c.b16 %v5188, %v5186
      %v5579 = vpack.c.b16 %v5189, %v5187
      %v5580 = vpack.c.b16 %v5192, %v5190
      %v5581 = vpack.c.b16 %v5193, %v5191
      %v5582 = vpack.c.b16 %v5196, %v5194
      %v5583 = vpack.c.b16 %v5197, %v5195
      %v5584 = vpack.c.b16 %v5200, %v5198
      %v5585 = vpack.c.b16 %v5201, %v5199
      %v5586 = vpack.c.b16 %v5204, %v5202
      %v5587 = vpack.c.b16 %v5205, %v5203
      %v5588 = vpack.c.b16 %v5208, %v5206
      %v5589 = vpack.c.b16 %v5209, %v5207
      %v5590 = vpack.c.b16 %v5212, %v5210
      %v5591 = vpack.c.b16 %v5213, %v5211
      %v5592 = vpack.c.b16 %v5216, %v5214
      %v5593 = vpack.c.b16 %v5217, %v5215
      %v5594 = vpack.c.b16 %v5220, %v5218
      %v5595 = vpack.c.b16 %v5221, %v5219
      %v5596 = vpack.c.b16 %v5224, %v5222
      %v5597 = vpack.c.b16 %v5225, %v5223
      %v5598 = vpack.c.b16 %v5228, %v5226
      %v5599 = vpack.c.b16 %v5229, %v5227
      %v5600 = vpack.c.b16 %v5232, %v5230
      %v5601 = vpack.c.b16 %v5233, %v5231
      %v5602 = vpack.c.b16 %v5236, %v5234
      %v5603 = vpack.c.b16 %v5237, %v5235
      %v5604 = vpack.c.b16 %v5240, %v5238
      %v5605 = vpack.c.b16 %v5241, %v5239
      %v5606 = vpack.c.b16 %v5244, %v5242
      %v5607 = vpack.c.b16 %v5245, %v5243
      %v5608 = vpack.c.b16 %v5248, %v5246
      %v5609 = vpack.c.b16 %v5249, %v5247
      %v5610 = vpack.c.b16 %v5252, %v5250
      %v5611 = vpack.c.b16 %v5253, %v5251
      %v5612 = vpack.c.b16 %v5256, %v5254
      %v5613 = vpack.c.b16 %v5257, %v5255
      %v5614 = vpack.c.b16 %v5260, %v5258
      %v5615 = vpack.c.b16 %v5261, %v5259
      %v5616 = vpack.c.b16 %v5264, %v5262
      %v5617 = vpack.c.b16 %v5265, %v5263
      %v5618 = vpack.c.b16 %v5268, %v5266
      %v5619 = vpack.c.b16 %v5269, %v5267
      %v5620 = vpack.c.b16 %v5272, %v5270
      %v5621 = vpack.c.b16 %v5273, %v5271
      %v5622 = vpack.c.b16 %v5276, %v5274
      %v5623 = vpack.c.b16 %v5277, %v5275
      %v5624 = vpack.c.b16 %v5280, %v5278
      %v5625 = vpack.c.b16 %v5281, %v5279
      %v5626 = vpack.c.b16 %v5284, %v5282
      %v5627 = vpack.c.b16 %v5285, %v5283
      %v5628 = vpack.c.b16 %v5288, %v5286
      %v5629 = vpack.c.b16 %v5289, %v5287
      %v5630 = vpack.c.b16 %v5292, %v5290
      %v5631 = vpack.c.b16 %v5293, %v5291
      %v5632 = vpack.c.b16 %v5296, %v5294
      %v5633 = vpack.c.b16 %v5297, %v5295
      %v5634 = vpack.c.b16 %v5300, %v5298
      %v5635 = vpack.c.b16 %v5301, %v5299
      %v5636 = vpack.c.b16 %v5304, %v5302
      %v5637 = vpack.c.b16 %v5305, %v5303
      %v5638 = vpack.c.b16 %v5308, %v5306
      %v5639 = vpack.c.b16 %v5309, %v5307
      %v5640 = vpack.c.b16 %v5312, %v5310
      %v5641 = vpack.c.b16 %v5313, %v5311
      %v5642 = vpack.c.b16 %v5316, %v5314
      %v5643 = vpack.c.b16 %v5317, %v5315
      %v5644 = vpack.c.b16 %v5320, %v5318
      %v5645 = vpack.c.b16 %v5321, %v5319
      %v5646 = vpack.c.b16 %v5324, %v5322
      %v5647 = vpack.c.b16 %v5325, %v5323
      %v5648 = vpack.c.b16 %v5328, %v5326
      %v5649 = vpack.c.b16 %v5329, %v5327
      %v5650 = vpack.c.b16 %v5332, %v5330
      %v5651 = vpack.c.b16 %v5333, %v5331
      %v5652 = vpack.c.b16 %v5336, %v5334
      %v5653 = vpack.c.b16 %v5337, %v5335
      %v5654 = vpack.c.b16 %v5340, %v5338
      %v5655 = vpack.c.b16 %v5341, %v5339
      %v5656 = vpack.c.b16 %v5344, %v5342
      %v5657 = vpack.c.b16 %v5345, %v5343
      %v5658 = vpack.c.b16 %v5348, %v5346
      %v5659 = vpack.c.b16 %v5349, %v5347
      %v5660 = vpack.c.b16 %v5352, %v5350
      %v5661 = vpack.c.b16 %v5353, %v5351
      %v5662 = vpack.c.b16 %v5356, %v5354
      %v5663 = vpack.c.b16 %v5357, %v5355
      %v5664 = vpack.c.b16 %v5360, %v5358
      %v5665 = vpack.c.b16 %v5361, %v5359
      %v5666 = vpack.c.b16 %v5364, %v5362
      %v5667 = vpack.c.b16 %v5365, %v5363
      %v5668 = vpack.c.b16 %v5368, %v5366
      %v5669 = vpack.c.b16 %v5369, %v5367
      %v5670 = vpack.c.b16 %v5372, %v5370
      %v5671 = vpack.c.b16 %v5373, %v5371
      %v5672 = vpack.c.b16 %v5376, %v5374
      %v5673 = vpack.c.b16 %v5377, %v5375
      %v5674 = vpack.c.b16 %v5380, %v5378
      %v5675 = vpack.c.b16 %v5381, %v5379
      %v5676 = vpack.c.b16 %v5384, %v5382
      %v5677 = vpack.c.b16 %v5385, %v5383
      %v5678 = vpack.c.b16 %v5388, %v5386
      %v5679 = vpack.c.b16 %v5389, %v5387
      %v5680 = vpack.c.b16 %v5392, %v5390
      %v5681 = vpack.c.b16 %v5393, %v5391
      %v5682 = vpack.c.b16 %v5396, %v5394
      %v5683 = vpack.c.b16 %v5397, %v5395
      %v5684 = vpack.c.b16 %v5400, %v5398
      %v5685 = vpack.c.b16 %v5401, %v5399
      %v5686 = vpack.c.b16 %v5404, %v5402
      %v5687 = vpack.c.b16 %v5405, %v5403
      %v5688 = vpack.c.b16 %v5408, %v5406
      %v5689 = vpack.c.b16 %v5409, %v5407
      %v5690 = vpack.c.b16 %v5412, %v5410
      %v5691 = vpack.c.b16 %v5413, %v5411
      %v5692 = vpack.c.b16 %v5416, %v5414
      %v5693 = vpack.c.b16 %v5417, %v5415
      %v5694 = vpack.c.b16 %v5420, %v5418
      %v5695 = vpack.c.b16 %v5421, %v5419
      %v5696 = vpack.c.b16 %v5424, %v5422
      %v5697 = vpack.c.b16 %v5425, %v5423
      %v5698 = vpack.c.b16 %v5428, %v5426
      %v5699 = vpack.c.b16 %v5429, %v5427
      %v5700 = vpack.c.b16 %v5432, %v5430
      %v5701 = vpack.c.b16 %v5433, %v5431
      %v5702 = vpack.c.b16 %v5436, %v5434
      %v5703 = vpack.c.b16 %v5437, %v5435
      %v5704 = vpack.c.b16 %v5440, %v5438
      %v5705 = vpack.c.b16 %v5441, %v5439
      %v5706 = vpack.c.b16 %v5444, %v5442
      %v5707 = vpack.c.b16 %v5445, %v5443
      %v5708 = vpack.c.b16 %v5448, %v5446
      %v5709 = vpack.c.b16 %v5449, %v5447
      %v5710 = vpack.c.b16 %v5452, %v5450
      %v5711 = vpack.c.b16 %v5453, %v5451
      %v5712 = vpack.c.b16 %v5456, %v5454
      %v5713 = vpack.c.b16 %v5457, %v5455
      %v5714 = vpack.c.b16 %v5460, %v5458
      %v5715 = vpack.c.b16 %v5461, %v5459
      %v5716 = vpack.c.b16 %v5464, %v5462
      %v5717 = vpack.c.b16 %v5465, %v5463
      %v5718 = vpack.c.b16 %v5468, %v5466
      %v5719 = vpack.c.b16 %v5469, %v5467
      %v5720 = vpack.c.b16 %v5472, %v5470
      %v5721 = vpack.c.b16 %v5473, %v5471
      %v5722 = vpack.c.b16 %v5476, %v5474
      %v5723 = vpack.c.b16 %v5477, %v5475
      %v5724 = vpack.c.b16 %v5480, %v5478
      %v5725 = vpack.c.b16 %v5481, %v5479
      %v5726 = vpack.c.b16 %v5484, %v5482
      %v5727 = vpack.c.b16 %v5485, %v5483
      %v5728 = vpack.c.b16 %v5488, %v5486
      %v5729 = vpack.c.b16 %v5489, %v5487
      %v5730 = vpack.c.b16 %v5492, %v5490
      %v5731 = vpack.c.b16 %v5493, %v5491
      %v5732 = vpack.c.b16 %v5496, %v5494
      %v5733 = vpack.c.b16 %v5497, %v5495
      %v5734 = vpack.c.b16 %v5500, %v5498
      %v5735 = vpack.c.b16 %v5501, %v5499
      %v5736 = vpack.c.b16 %v5504, %v5502
      %v5737 = vpack.c.b16 %v5505, %v5503
      %v5738 = vpack.c.b16 %v5508, %v5506
      %v5739 = vpack.c.b16 %v5509, %v5507
      %v5740 = vpack.c.b16 %v5512, %v5510
      %v5741 = vpack.c.b16 %v5513, %v5511
      %v5742 = vpack.c.b16 %v5516, %v5514
      %v5743 = vpack.c.b16 %v5517, %v5515
      %v5744 = vpack.c.b16 %v5520, %v5518
      %v5745 = vpack.c.b16 %v5521, %v5519
      %v5746 = vpack.c.b16 %v5524, %v5522
      %v5747 = vpack.c.b16 %v5525, %v5523
      %v5748 = vpack.c.b16 %v5528, %v5526
      %v5749 = vpack.c.b16 %v5529, %v5527
      %v5750 = vpack.c.b16 %v5532, %v5530
      %v5751 = vpack.c.b16 %v5533, %v5531
      %v5752 = vpack.c.b16 %v5536, %v5534
      %v5753 = vpack.c.b16 %v5537, %v5535
      %v5754 = vpack.c.b16 %v5540, %v5538
      %v5755 = vpack.c.b16 %v5541, %v5539
      %v5756 = vpack.c.b16 %v5544, %v5542
      %v5757 = vpack.c.b16 %v5545, %v5543
      %v5758 = vpack.c.b16 %v5548, %v5546
      %v5759 = vpack.c.b16 %v5549, %v5547
      %v5760 = vpack.c.b16 %v5552, %v5550
      %v5761 = vpack.c.b16 %v5553, %v5551
      %v5762 = vpack.c.b16 %v5556, %v5554
      %v5763 = vpack.c.b16 %v5557, %v5555
      %v5764 = vpack.c.b16 %v5560, %v5558
      %v5765 = vpack.c.b16 %v5561, %v5559
      %v5766 = vpack.c.b16 %v5564, %v5562
      %v5767 = vpack.c.b16 %v5565, %v5563
      %v5768 = vpack.c.b16 %v5566, %v5566
      %v5769 = vpack.c.b16 %v5567, %v5567
      %vm5970 = vcmask 588800
      %v5972 = vsel %vm5970, %v4777, 0
      %v5975 = vsel %vm5970, %v4790, 0
      %v5978 = vsel %vm5970, %v4803, 0
      %v5981 = vsel %vm5970, %v4816, 0
      %v5984 = vsel %vm5970, %v4829, 0
      %v5987 = vsel %vm5970, %v4842, 0
      %v5990 = vsel %vm5970, %v4855, 0
      %v5993 = vsel %vm5970, %v4868, 0
      %vm5995 = vcmask 1043456
      %v5997 = vsel %vm5995, %v5768, 0
      %v6000 = vsel %vm5995, %v5769, 0
      %6002 = vmatprep.subr.bf16.mxu0 %v5569
      %6003 = vmatpush1.bf16.msra.mxu0 %v5568
      %6004 = vmatprep.subr.bf16.mxu0 %v5571
      %6005 = vmatpush1.bf16.msra.mxu0 %v5570
      %6006 = vmatprep.subr.bf16.mxu0 %v5573
      %6007 = vmatpush1.bf16.msra.mxu0 %v5572
      %6008 = vmatprep.subr.bf16.mxu0 %v5575
      %6009 = vmatpush1.bf16.msra.mxu0 %v5574
      %6010 = vmatprep.subr.bf16.mxu0 %v5577
      %6011 = vmatpush1.bf16.msra.mxu0 %v5576
      %6012 = vmatprep.subr.bf16.mxu0 %v5579
      %6013 = vmatpush1.bf16.msra.mxu0 %v5578
      %6014 = vmatprep.subr.bf16.mxu0 %v5581
      %6015 = vmatpush1.bf16.msra.mxu0 %v5580
      %6016 = vmatprep.subr.bf16.mxu0 %v5583
      %6017 = vmatpush1.bf16.msra.mxu0 %v5582
      %6018 = vmatprep.subr.bf16.mxu0 %v5585
      %6019 = vmatpush1.bf16.msra.mxu0 %v5584
      %6020 = vmatprep.subr.bf16.mxu0 %v5587
      %6021 = vmatpush1.bf16.msra.mxu0 %v5586
      %6022 = vmatprep.subr.bf16.mxu0 %v5589
      %6023 = vmatpush1.bf16.msra.mxu0 %v5588
      %6024 = vmatprep.subr.bf16.mxu0 %v5591
      %6025 = vmatpush1.bf16.msra.mxu0 %v5590
      %6026 = vmatprep.subr.bf16.mxu0 %v5593
      %6027 = vmatpush1.bf16.msra.mxu0 %v5592
      %6028 = vmatprep.subr.bf16.mxu0 %v5595
      %6029 = vmatpush1.bf16.msra.mxu0 %v5594
      %6030 = vmatprep.subr.bf16.mxu0 %v5597
      %6031 = vmatpush1.bf16.msra.mxu0 %v5596
      %6032 = vmatprep.subr.bf16.mxu0 %v5599
      %6033 = vmatpush1.bf16.msra.mxu0 %v5598
      %6034 = vmatprep.mubr.bf16.mxu0 %v4766
      %6035 = vmatmul.mubr.bf16.gmra.mrb[0].mxu0 %v4765
      %v6036 = vpop.f32.mrb[0].mxu0
      %v6037 = vadd.f32 %v4368, %v6036
      %v6038 = vpop.f32.mrb[0].mxu0
      %v6039 = vadd.f32 %v4368, %v6038
      %v6040 = vpop.f32.mrb[0].mxu0
      %v6041 = vadd.f32 %v4373, %v6040
      %v6042 = vpop.f32.mrb[0].mxu0
      %v6043 = vadd.f32 %v4373, %v6042
      %6044 = vmatprep.mubr.bf16.mxu0 %v4779
      %6045 = vmatmul.mubr.bf16.gmra.mrb[0].mxu0 %v4778
      %v6046 = vpop.f32.mrb[0].mxu0
      %v6047 = vadd.f32 %v4378, %v6046
      %v6048 = vpop.f32.mrb[0].mxu0
      %v6049 = vadd.f32 %v4378, %v6048
      %v6050 = vpop.f32.mrb[0].mxu0
      %v6051 = vadd.f32 %v4383, %v6050
      %v6052 = vpop.f32.mrb[0].mxu0
      %v6053 = vadd.f32 %v4383, %v6052
      %6054 = vmatprep.mubr.bf16.mxu0 %v4792
      %6055 = vmatmul.mubr.bf16.gmra.mrb[0].mxu0 %v4791
      %v6056 = vpop.f32.mrb[0].mxu0
      %v6057 = vadd.f32 %v4388, %v6056
      %v6058 = vpop.f32.mrb[0].mxu0
      %v6059 = vadd.f32 %v4388, %v6058
      %v6060 = vpop.f32.mrb[0].mxu0
      %v6061 = vadd.f32 %v4393, %v6060
      %v6062 = vpop.f32.mrb[0].mxu0
      %v6063 = vadd.f32 %v4393, %v6062
      %6064 = vmatprep.mubr.bf16.mxu0 %v4805
      %6065 = vmatmul.mubr.bf16.gmra.mrb[0].mxu0 %v4804
      %v6066 = vpop.f32.mrb[0].mxu0
      %v6067 = vadd.f32 %v4398, %v6066
      %v6068 = vpop.f32.mrb[0].mxu0
      %v6069 = vadd.f32 %v4398, %v6068
      %v6070 = vpop.f32.mrb[0].mxu0
      %v6071 = vadd.f32 %v4403, %v6070
      %v6072 = vpop.f32.mrb[0].mxu0
      %v6073 = vadd.f32 %v4403, %v6072
      %6074 = vmatprep.mubr.bf16.mxu0 %v4818
      %6075 = vmatmul.mubr.bf16.gmra.mrb[0].mxu0 %v4817
      %v6076 = vpop.f32.mrb[0].mxu0
      %v6077 = vadd.f32 %v4408, %v6076
      %v6078 = vpop.f32.mrb[0].mxu0
      %v6079 = vadd.f32 %v4408, %v6078
      %v6080 = vpop.f32.mrb[0].mxu0
      %v6081 = vadd.f32 %v4413, %v6080
      %v6082 = vpop.f32.mrb[0].mxu0
      %v6083 = vadd.f32 %v4413, %v6082
      %6084 = vmatprep.mubr.bf16.mxu0 %v4831
      %6085 = vmatmul.mubr.bf16.gmra.mrb[0].mxu0 %v4830
      %v6086 = vpop.f32.mrb[0].mxu0
      %v6087 = vadd.f32 %v4418, %v6086
      %v6088 = vpop.f32.mrb[0].mxu0
      %v6089 = vadd.f32 %v4418, %v6088
      %v6090 = vpop.f32.mrb[0].mxu0
      %v6091 = vadd.f32 %v4423, %v6090
      %v6092 = vpop.f32.mrb[0].mxu0
      %v6093 = vadd.f32 %v4423, %v6092
      %6094 = vmatprep.mubr.bf16.mxu0 %v4844
      %6095 = vmatmul.mubr.bf16.gmra.mrb[0].mxu0 %v4843
      %v6096 = vpop.f32.mrb[0].mxu0
      %v6097 = vadd.f32 %v4428, %v6096
      %v6098 = vpop.f32.mrb[0].mxu0
      %v6099 = vadd.f32 %v4428, %v6098
      %v6100 = vpop.f32.mrb[0].mxu0
      %v6101 = vadd.f32 %v4433, %v6100
      %v6102 = vpop.f32.mrb[0].mxu0
      %v6103 = vadd.f32 %v4433, %v6102
      %6104 = vmatprep.mubr.bf16.mxu0 %v4857
      %6105 = vmatmul.mubr.bf16.gmra.mrb[0].mxu0 %v4856
      %v6106 = vpop.f32.mrb[0].mxu0
      %v6107 = vadd.f32 %v4438, %v6106
      %v6108 = vpop.f32.mrb[0].mxu0
      %v6109 = vadd.f32 %v4438, %v6108
      %v6110 = vpop.f32.mrb[0].mxu0
      %v6111 = vadd.f32 %v4443, %v6110
      %v6112 = vpop.f32.mrb[0].mxu0
      %v6113 = vadd.f32 %v4443, %v6112
      %6114 = vdwg.mxu0
      %6115 = vmatprep.subr.bf16.mxu0 %v5601
      %6116 = vmatpush1.bf16.msra.mxu0 %v5600
      %6117 = vmatprep.subr.bf16.mxu0 %v5603
      %6118 = vmatpush1.bf16.msra.mxu0 %v5602
      %6119 = vmatprep.subr.bf16.mxu0 %v5605
      %6120 = vmatpush1.bf16.msra.mxu0 %v5604
      %6121 = vmatprep.subr.bf16.mxu0 %v5607
      %6122 = vmatpush1.bf16.msra.mxu0 %v5606
      %6123 = vmatprep.subr.bf16.mxu0 %v5609
      %6124 = vmatpush1.bf16.msra.mxu0 %v5608
      %6125 = vmatprep.subr.bf16.mxu0 %v5611
      %6126 = vmatpush1.bf16.msra.mxu0 %v5610
      %6127 = vmatprep.subr.bf16.mxu0 %v5613
      %6128 = vmatpush1.bf16.msra.mxu0 %v5612
      %6129 = vmatprep.subr.bf16.mxu0 %v5615
      %6130 = vmatpush1.bf16.msra.mxu0 %v5614
      %6131 = vmatprep.subr.bf16.mxu0 %v5617
      %6132 = vmatpush1.bf16.msra.mxu0 %v5616
      %6133 = vmatprep.subr.bf16.mxu0 %v5619
      %6134 = vmatpush1.bf16.msra.mxu0 %v5618
      %6135 = vmatprep.subr.bf16.mxu0 %v5621
      %6136 = vmatpush1.bf16.msra.mxu0 %v5620
      %6137 = vmatprep.subr.bf16.mxu0 %v5623
      %6138 = vmatpush1.bf16.msra.mxu0 %v5622
      %6139 = vmatprep.subr.bf16.mxu0 %v5625
      %6140 = vmatpush1.bf16.msra.mxu0 %v5624
      %6141 = vmatprep.subr.bf16.mxu0 %v5627
      %6142 = vmatpush1.bf16.msra.mxu0 %v5626
      %6143 = vmatprep.subr.bf16.mxu0 %v5629
      %6144 = vmatpush1.bf16.msra.mxu0 %v5628
      %6145 = vmatprep.subr.bf16.mxu0 %v5631
      %6146 = vmatpush1.bf16.msra.mxu0 %v5630
      %6147 = vmatprep.mubr.bf16.mxu0 %v4768
      %6148 = vmatmul.mubr.bf16.gmra.mrb[0].mxu0 %v4767
      %v6149 = vpop.f32.mrb[0].mxu0
      %v6150 = vadd.f32 %v6037, %v6149
      %v6151 = vpop.f32.mrb[0].mxu0
      %v6152 = vadd.f32 %v6039, %v6151
      %v6153 = vpop.f32.mrb[0].mxu0
      %v6154 = vadd.f32 %v6041, %v6153
      %v6155 = vpop.f32.mrb[0].mxu0
      %v6156 = vadd.f32 %v6043, %v6155
      %6157 = vmatprep.mubr.bf16.mxu0 %v4781
      %6158 = vmatmul.mubr.bf16.gmra.mrb[0].mxu0 %v4780
      %v6159 = vpop.f32.mrb[0].mxu0
      %v6160 = vadd.f32 %v6047, %v6159
      %v6161 = vpop.f32.mrb[0].mxu0
      %v6162 = vadd.f32 %v6049, %v6161
      %v6163 = vpop.f32.mrb[0].mxu0
      %v6164 = vadd.f32 %v6051, %v6163
      %v6165 = vpop.f32.mrb[0].mxu0
      %v6166 = vadd.f32 %v6053, %v6165
      %6167 = vmatprep.mubr.bf16.mxu0 %v4794
      %6168 = vmatmul.mubr.bf16.gmra.mrb[0].mxu0 %v4793
      %v6169 = vpop.f32.mrb[0].mxu0
      %v6170 = vadd.f32 %v6057, %v6169
      %v6171 = vpop.f32.mrb[0].mxu0
      %v6172 = vadd.f32 %v6059, %v6171
      %v6173 = vpop.f32.mrb[0].mxu0
      %v6174 = vadd.f32 %v6061, %v6173
      %v6175 = vpop.f32.mrb[0].mxu0
      %v6176 = vadd.f32 %v6063, %v6175
      %6177 = vmatprep.mubr.bf16.mxu0 %v4807
      %6178 = vmatmul.mubr.bf16.gmra.mrb[0].mxu0 %v4806
      %v6179 = vpop.f32.mrb[0].mxu0
      %v6180 = vadd.f32 %v6067, %v6179
      %v6181 = vpop.f32.mrb[0].mxu0
      %v6182 = vadd.f32 %v6069, %v6181
      %v6183 = vpop.f32.mrb[0].mxu0
      %v6184 = vadd.f32 %v6071, %v6183
      %v6185 = vpop.f32.mrb[0].mxu0
      %v6186 = vadd.f32 %v6073, %v6185
      %6187 = vmatprep.mubr.bf16.mxu0 %v4820
      %6188 = vmatmul.mubr.bf16.gmra.mrb[0].mxu0 %v4819
      %v6189 = vpop.f32.mrb[0].mxu0
      %v6190 = vadd.f32 %v6077, %v6189
      %v6191 = vpop.f32.mrb[0].mxu0
      %v6192 = vadd.f32 %v6079, %v6191
      %v6193 = vpop.f32.mrb[0].mxu0
      %v6194 = vadd.f32 %v6081, %v6193
      %v6195 = vpop.f32.mrb[0].mxu0
      %v6196 = vadd.f32 %v6083, %v6195
      %6197 = vmatprep.mubr.bf16.mxu0 %v4833
      %6198 = vmatmul.mubr.bf16.gmra.mrb[0].mxu0 %v4832
      %v6199 = vpop.f32.mrb[0].mxu0
      %v6200 = vadd.f32 %v6087, %v6199
      %v6201 = vpop.f32.mrb[0].mxu0
      %v6202 = vadd.f32 %v6089, %v6201
      %v6203 = vpop.f32.mrb[0].mxu0
      %v6204 = vadd.f32 %v6091, %v6203
      %v6205 = vpop.f32.mrb[0].mxu0
      %v6206 = vadd.f32 %v6093, %v6205
      %6207 = vmatprep.mubr.bf16.mxu0 %v4846
      %6208 = vmatmul.mubr.bf16.gmra.mrb[0].mxu0 %v4845
      %v6209 = vpop.f32.mrb[0].mxu0
      %v6210 = vadd.f32 %v6097, %v6209
      %v6211 = vpop.f32.mrb[0].mxu0
      %v6212 = vadd.f32 %v6099, %v6211
      %v6213 = vpop.f32.mrb[0].mxu0
      %v6214 = vadd.f32 %v6101, %v6213
      %v6215 = vpop.f32.mrb[0].mxu0
      %v6216 = vadd.f32 %v6103, %v6215
      %6217 = vmatprep.mubr.bf16.mxu0 %v4859
      %6218 = vmatmul.mubr.bf16.gmra.mrb[0].mxu0 %v4858
      %v6219 = vpop.f32.mrb[0].mxu0
      %v6220 = vadd.f32 %v6107, %v6219
      %v6221 = vpop.f32.mrb[0].mxu0
      %v6222 = vadd.f32 %v6109, %v6221
      %v6223 = vpop.f32.mrb[0].mxu0
      %v6224 = vadd.f32 %v6111, %v6223
      %v6225 = vpop.f32.mrb[0].mxu0
      %v6226 = vadd.f32 %v6113, %v6225
      %6227 = vdwg.mxu0
      %6228 = vmatprep.subr.bf16.mxu0 %v5633
      %6229 = vmatpush1.bf16.msra.mxu0 %v5632
      %6230 = vmatprep.subr.bf16.mxu0 %v5635
      %6231 = vmatpush1.bf16.msra.mxu0 %v5634
      %6232 = vmatprep.subr.bf16.mxu0 %v5637
      %6233 = vmatpush1.bf16.msra.mxu0 %v5636
      %6234 = vmatprep.subr.bf16.mxu0 %v5639
      %6235 = vmatpush1.bf16.msra.mxu0 %v5638
      %6236 = vmatprep.subr.bf16.mxu0 %v5641
      %6237 = vmatpush1.bf16.msra.mxu0 %v5640
      %6238 = vmatprep.subr.bf16.mxu0 %v5643
      %6239 = vmatpush1.bf16.msra.mxu0 %v5642
      %6240 = vmatprep.subr.bf16.mxu0 %v5645
      %6241 = vmatpush1.bf16.msra.mxu0 %v5644
      %6242 = vmatprep.subr.bf16.mxu0 %v5647
      %6243 = vmatpush1.bf16.msra.mxu0 %v5646
      %6244 = vmatprep.subr.bf16.mxu0 %v5649
      %6245 = vmatpush1.bf16.msra.mxu0 %v5648
      %6246 = vmatprep.subr.bf16.mxu0 %v5651
      %6247 = vmatpush1.bf16.msra.mxu0 %v5650
      %6248 = vmatprep.subr.bf16.mxu0 %v5653
      %6249 = vmatpush1.bf16.msra.mxu0 %v5652
      %6250 = vmatprep.subr.bf16.mxu0 %v5655
      %6251 = vmatpush1.bf16.msra.mxu0 %v5654
      %6252 = vmatprep.subr.bf16.mxu0 %v5657
      %6253 = vmatpush1.bf16.msra.mxu0 %v5656
      %6254 = vmatprep.subr.bf16.mxu0 %v5659
      %6255 = vmatpush1.bf16.msra.mxu0 %v5658
      %6256 = vmatprep.subr.bf16.mxu0 %v5661
      %6257 = vmatpush1.bf16.msra.mxu0 %v5660
      %6258 = vmatprep.subr.bf16.mxu0 %v5663
      %6259 = vmatpush1.bf16.msra.mxu0 %v5662
      %6260 = vmatprep.mubr.bf16.mxu0 %v4770
      %6261 = vmatmul.mubr.bf16.gmra.mrb[0].mxu0 %v4769
      %v6262 = vpop.f32.mrb[0].mxu0
      %v6263 = vadd.f32 %v6150, %v6262
      %v6264 = vpop.f32.mrb[0].mxu0
      %v6265 = vadd.f32 %v6152, %v6264
      %v6266 = vpop.f32.mrb[0].mxu0
      %v6267 = vadd.f32 %v6154, %v6266
      %v6268 = vpop.f32.mrb[0].mxu0
      %v6269 = vadd.f32 %v6156, %v6268
      %6270 = vmatprep.mubr.bf16.mxu0 %v4783
      %6271 = vmatmul.mubr.bf16.gmra.mrb[0].mxu0 %v4782
      %v6272 = vpop.f32.mrb[0].mxu0
      %v6273 = vadd.f32 %v6160, %v6272
      %v6274 = vpop.f32.mrb[0].mxu0
      %v6275 = vadd.f32 %v6162, %v6274
      %v6276 = vpop.f32.mrb[0].mxu0
      %v6277 = vadd.f32 %v6164, %v6276
      %v6278 = vpop.f32.mrb[0].mxu0
      %v6279 = vadd.f32 %v6166, %v6278
      %6280 = vmatprep.mubr.bf16.mxu0 %v4796
      %6281 = vmatmul.mubr.bf16.gmra.mrb[0].mxu0 %v4795
      %v6282 = vpop.f32.mrb[0].mxu0
      %v6283 = vadd.f32 %v6170, %v6282
      %v6284 = vpop.f32.mrb[0].mxu0
      %v6285 = vadd.f32 %v6172, %v6284
      %v6286 = vpop.f32.mrb[0].mxu0
      %v6287 = vadd.f32 %v6174, %v6286
      %v6288 = vpop.f32.mrb[0].mxu0
      %v6289 = vadd.f32 %v6176, %v6288
      %6290 = vmatprep.mubr.bf16.mxu0 %v4809
      %6291 = vmatmul.mubr.bf16.gmra.mrb[0].mxu0 %v4808
      %v6292 = vpop.f32.mrb[0].mxu0
      %v6293 = vadd.f32 %v6180, %v6292
      %v6294 = vpop.f32.mrb[0].mxu0
      %v6295 = vadd.f32 %v6182, %v6294
      %v6296 = vpop.f32.mrb[0].mxu0
      %v6297 = vadd.f32 %v6184, %v6296
      %v6298 = vpop.f32.mrb[0].mxu0
      %v6299 = vadd.f32 %v6186, %v6298
      %6300 = vmatprep.mubr.bf16.mxu0 %v4822
      %6301 = vmatmul.mubr.bf16.gmra.mrb[0].mxu0 %v4821
      %v6302 = vpop.f32.mrb[0].mxu0
      %v6303 = vadd.f32 %v6190, %v6302
      %v6304 = vpop.f32.mrb[0].mxu0
      %v6305 = vadd.f32 %v6192, %v6304
      %v6306 = vpop.f32.mrb[0].mxu0
      %v6307 = vadd.f32 %v6194, %v6306
      %v6308 = vpop.f32.mrb[0].mxu0
      %v6309 = vadd.f32 %v6196, %v6308
      %6310 = vmatprep.mubr.bf16.mxu0 %v4835
      %6311 = vmatmul.mubr.bf16.gmra.mrb[0].mxu0 %v4834
      %v6312 = vpop.f32.mrb[0].mxu0
      %v6313 = vadd.f32 %v6200, %v6312
      %v6314 = vpop.f32.mrb[0].mxu0
      %v6315 = vadd.f32 %v6202, %v6314
      %v6316 = vpop.f32.mrb[0].mxu0
      %v6317 = vadd.f32 %v6204, %v6316
      %v6318 = vpop.f32.mrb[0].mxu0
      %v6319 = vadd.f32 %v6206, %v6318
      %6320 = vmatprep.mubr.bf16.mxu0 %v4848
      %6321 = vmatmul.mubr.bf16.gmra.mrb[0].mxu0 %v4847
      %v6322 = vpop.f32.mrb[0].mxu0
      %v6323 = vadd.f32 %v6210, %v6322
      %v6324 = vpop.f32.mrb[0].mxu0
      %v6325 = vadd.f32 %v6212, %v6324
      %v6326 = vpop.f32.mrb[0].mxu0
      %v6327 = vadd.f32 %v6214, %v6326
      %v6328 = vpop.f32.mrb[0].mxu0
      %v6329 = vadd.f32 %v6216, %v6328
      %6330 = vmatprep.mubr.bf16.mxu0 %v4861
      %6331 = vmatmul.mubr.bf16.gmra.mrb[0].mxu0 %v4860
      %v6332 = vpop.f32.mrb[0].mxu0
      %v6333 = vadd.f32 %v6220, %v6332
      %v6334 = vpop.f32.mrb[0].mxu0
      %v6335 = vadd.f32 %v6222, %v6334
      %v6336 = vpop.f32.mrb[0].mxu0
      %v6337 = vadd.f32 %v6224, %v6336
      %v6338 = vpop.f32.mrb[0].mxu0
      %v6339 = vadd.f32 %v6226, %v6338
      %6340 = vdwg.mxu0
      %6341 = vmatprep.subr.bf16.mxu0 %v5665
      %6342 = vmatpush1.bf16.msra.mxu0 %v5664
      %6343 = vmatprep.subr.bf16.mxu0 %v5667
      %6344 = vmatpush1.bf16.msra.mxu0 %v5666
      %6345 = vmatprep.subr.bf16.mxu0 %v5669
      %6346 = vmatpush1.bf16.msra.mxu0 %v5668
      %6347 = vmatprep.subr.bf16.mxu0 %v5671
      %6348 = vmatpush1.bf16.msra.mxu0 %v5670
      %6349 = vmatprep.subr.bf16.mxu0 %v5673
      %6350 = vmatpush1.bf16.msra.mxu0 %v5672
      %6351 = vmatprep.subr.bf16.mxu0 %v5675
      %6352 = vmatpush1.bf16.msra.mxu0 %v5674
      %6353 = vmatprep.subr.bf16.mxu0 %v5677
      %6354 = vmatpush1.bf16.msra.mxu0 %v5676
      %6355 = vmatprep.subr.bf16.mxu0 %v5679
      %6356 = vmatpush1.bf16.msra.mxu0 %v5678
      %6357 = vmatprep.subr.bf16.mxu0 %v5681
      %6358 = vmatpush1.bf16.msra.mxu0 %v5680
      %6359 = vmatprep.subr.bf16.mxu0 %v5683
      %6360 = vmatpush1.bf16.msra.mxu0 %v5682
      %6361 = vmatprep.subr.bf16.mxu0 %v5685
      %6362 = vmatpush1.bf16.msra.mxu0 %v5684
      %6363 = vmatprep.subr.bf16.mxu0 %v5687
      %6364 = vmatpush1.bf16.msra.mxu0 %v5686
      %6365 = vmatprep.subr.bf16.mxu0 %v5689
      %6366 = vmatpush1.bf16.msra.mxu0 %v5688
      %6367 = vmatprep.subr.bf16.mxu0 %v5691
      %6368 = vmatpush1.bf16.msra.mxu0 %v5690
      %6369 = vmatprep.subr.bf16.mxu0 %v5693
      %6370 = vmatpush1.bf16.msra.mxu0 %v5692
      %6371 = vmatprep.subr.bf16.mxu0 %v5695
      %6372 = vmatpush1.bf16.msra.mxu0 %v5694
      %6373 = vmatprep.mubr.bf16.mxu0 %v4772
      %6374 = vmatmul.mubr.bf16.gmra.mrb[0].mxu0 %v4771
      %v6375 = vpop.f32.mrb[0].mxu0
      %v6376 = vadd.f32 %v6263, %v6375
      %v6377 = vpop.f32.mrb[0].mxu0
      %v6378 = vadd.f32 %v6265, %v6377
      %v6379 = vpop.f32.mrb[0].mxu0
      %v6380 = vadd.f32 %v6267, %v6379
      %v6381 = vpop.f32.mrb[0].mxu0
      %v6382 = vadd.f32 %v6269, %v6381
      %6383 = vmatprep.mubr.bf16.mxu0 %v4785
      %6384 = vmatmul.mubr.bf16.gmra.mrb[0].mxu0 %v4784
      %v6385 = vpop.f32.mrb[0].mxu0
      %v6386 = vadd.f32 %v6273, %v6385
      %v6387 = vpop.f32.mrb[0].mxu0
      %v6388 = vadd.f32 %v6275, %v6387
      %v6389 = vpop.f32.mrb[0].mxu0
      %v6390 = vadd.f32 %v6277, %v6389
      %v6391 = vpop.f32.mrb[0].mxu0
      %v6392 = vadd.f32 %v6279, %v6391
      %6393 = vmatprep.mubr.bf16.mxu0 %v4798
      %6394 = vmatmul.mubr.bf16.gmra.mrb[0].mxu0 %v4797
      %v6395 = vpop.f32.mrb[0].mxu0
      %v6396 = vadd.f32 %v6283, %v6395
      %v6397 = vpop.f32.mrb[0].mxu0
      %v6398 = vadd.f32 %v6285, %v6397
      %v6399 = vpop.f32.mrb[0].mxu0
      %v6400 = vadd.f32 %v6287, %v6399
      %v6401 = vpop.f32.mrb[0].mxu0
      %v6402 = vadd.f32 %v6289, %v6401
      %6403 = vmatprep.mubr.bf16.mxu0 %v4811
      %6404 = vmatmul.mubr.bf16.gmra.mrb[0].mxu0 %v4810
      %v6405 = vpop.f32.mrb[0].mxu0
      %v6406 = vadd.f32 %v6293, %v6405
      %v6407 = vpop.f32.mrb[0].mxu0
      %v6408 = vadd.f32 %v6295, %v6407
      %v6409 = vpop.f32.mrb[0].mxu0
      %v6410 = vadd.f32 %v6297, %v6409
      %v6411 = vpop.f32.mrb[0].mxu0
      %v6412 = vadd.f32 %v6299, %v6411
      %6413 = vmatprep.mubr.bf16.mxu0 %v4824
      %6414 = vmatmul.mubr.bf16.gmra.mrb[0].mxu0 %v4823
      %v6415 = vpop.f32.mrb[0].mxu0
      %v6416 = vadd.f32 %v6303, %v6415
      %v6417 = vpop.f32.mrb[0].mxu0
      %v6418 = vadd.f32 %v6305, %v6417
      %v6419 = vpop.f32.mrb[0].mxu0
      %v6420 = vadd.f32 %v6307, %v6419
      %v6421 = vpop.f32.mrb[0].mxu0
      %v6422 = vadd.f32 %v6309, %v6421
      %6423 = vmatprep.mubr.bf16.mxu0 %v4837
      %6424 = vmatmul.mubr.bf16.gmra.mrb[0].mxu0 %v4836
      %v6425 = vpop.f32.mrb[0].mxu0
      %v6426 = vadd.f32 %v6313, %v6425
      %v6427 = vpop.f32.mrb[0].mxu0
      %v6428 = vadd.f32 %v6315, %v6427
      %v6429 = vpop.f32.mrb[0].mxu0
      %v6430 = vadd.f32 %v6317, %v6429
      %v6431 = vpop.f32.mrb[0].mxu0
      %v6432 = vadd.f32 %v6319, %v6431
      %6433 = vmatprep.mubr.bf16.mxu0 %v4850
      %6434 = vmatmul.mubr.bf16.gmra.mrb[0].mxu0 %v4849
      %v6435 = vpop.f32.mrb[0].mxu0
      %v6436 = vadd.f32 %v6323, %v6435
      %v6437 = vpop.f32.mrb[0].mxu0
      %v6438 = vadd.f32 %v6325, %v6437
      %v6439 = vpop.f32.mrb[0].mxu0
      %v6440 = vadd.f32 %v6327, %v6439
      %v6441 = vpop.f32.mrb[0].mxu0
      %v6442 = vadd.f32 %v6329, %v6441
      %6443 = vmatprep.mubr.bf16.mxu0 %v4863
      %6444 = vmatmul.mubr.bf16.gmra.mrb[0].mxu0 %v4862
      %v6445 = vpop.f32.mrb[0].mxu0
      %v6446 = vadd.f32 %v6333, %v6445
      %v6447 = vpop.f32.mrb[0].mxu0
      %v6448 = vadd.f32 %v6335, %v6447
      %v6449 = vpop.f32.mrb[0].mxu0
      %v6450 = vadd.f32 %v6337, %v6449
      %v6451 = vpop.f32.mrb[0].mxu0
      %v6452 = vadd.f32 %v6339, %v6451
      %6453 = vdwg.mxu0
      %6454 = vmatprep.subr.bf16.mxu0 %v5697
      %6455 = vmatpush1.bf16.msra.mxu0 %v5696
      %6456 = vmatprep.subr.bf16.mxu0 %v5699
      %6457 = vmatpush1.bf16.msra.mxu0 %v5698
      %6458 = vmatprep.subr.bf16.mxu0 %v5701
      %6459 = vmatpush1.bf16.msra.mxu0 %v5700
      %6460 = vmatprep.subr.bf16.mxu0 %v5703
      %6461 = vmatpush1.bf16.msra.mxu0 %v5702
      %6462 = vmatprep.subr.bf16.mxu0 %v5705
      %6463 = vmatpush1.bf16.msra.mxu0 %v5704
      %6464 = vmatprep.subr.bf16.mxu0 %v5707
      %6465 = vmatpush1.bf16.msra.mxu0 %v5706
      %6466 = vmatprep.subr.bf16.mxu0 %v5709
      %6467 = vmatpush1.bf16.msra.mxu0 %v5708
      %6468 = vmatprep.subr.bf16.mxu0 %v5711
      %6469 = vmatpush1.bf16.msra.mxu0 %v5710
      %6470 = vmatprep.subr.bf16.mxu0 %v5713
      %6471 = vmatpush1.bf16.msra.mxu0 %v5712
      %6472 = vmatprep.subr.bf16.mxu0 %v5715
      %6473 = vmatpush1.bf16.msra.mxu0 %v5714
      %6474 = vmatprep.subr.bf16.mxu0 %v5717
      %6475 = vmatpush1.bf16.msra.mxu0 %v5716
      %6476 = vmatprep.subr.bf16.mxu0 %v5719
      %6477 = vmatpush1.bf16.msra.mxu0 %v5718
      %6478 = vmatprep.subr.bf16.mxu0 %v5721
      %6479 = vmatpush1.bf16.msra.mxu0 %v5720
      %6480 = vmatprep.subr.bf16.mxu0 %v5723
      %6481 = vmatpush1.bf16.msra.mxu0 %v5722
      %6482 = vmatprep.subr.bf16.mxu0 %v5725
      %6483 = vmatpush1.bf16.msra.mxu0 %v5724
      %6484 = vmatprep.subr.bf16.mxu0 %v5727
      %6485 = vmatpush1.bf16.msra.mxu0 %v5726
      %6486 = vmatprep.mubr.bf16.mxu0 %v4774
      %6487 = vmatmul.mubr.bf16.gmra.mrb[0].mxu0 %v4773
      %v6488 = vpop.f32.mrb[0].mxu0
      %v6489 = vadd.f32 %v6376, %v6488
      %v6490 = vpop.f32.mrb[0].mxu0
      %v6491 = vadd.f32 %v6378, %v6490
      %v6492 = vpop.f32.mrb[0].mxu0
      %v6493 = vadd.f32 %v6380, %v6492
      %v6494 = vpop.f32.mrb[0].mxu0
      %v6495 = vadd.f32 %v6382, %v6494
      %6496 = vmatprep.mubr.bf16.mxu0 %v4787
      %6497 = vmatmul.mubr.bf16.gmra.mrb[0].mxu0 %v4786
      %v6498 = vpop.f32.mrb[0].mxu0
      %v6499 = vadd.f32 %v6386, %v6498
      %v6500 = vpop.f32.mrb[0].mxu0
      %v6501 = vadd.f32 %v6388, %v6500
      %v6502 = vpop.f32.mrb[0].mxu0
      %v6503 = vadd.f32 %v6390, %v6502
      %v6504 = vpop.f32.mrb[0].mxu0
      %v6505 = vadd.f32 %v6392, %v6504
      %6506 = vmatprep.mubr.bf16.mxu0 %v4800
      %6507 = vmatmul.mubr.bf16.gmra.mrb[0].mxu0 %v4799
      %v6508 = vpop.f32.mrb[0].mxu0
      %v6509 = vadd.f32 %v6396, %v6508
      %v6510 = vpop.f32.mrb[0].mxu0
      %v6511 = vadd.f32 %v6398, %v6510
      %v6512 = vpop.f32.mrb[0].mxu0
      %v6513 = vadd.f32 %v6400, %v6512
      %v6514 = vpop.f32.mrb[0].mxu0
      %v6515 = vadd.f32 %v6402, %v6514
      %6516 = vmatprep.mubr.bf16.mxu0 %v4813
      %6517 = vmatmul.mubr.bf16.gmra.mrb[0].mxu0 %v4812
      %v6518 = vpop.f32.mrb[0].mxu0
      %v6519 = vadd.f32 %v6406, %v6518
      %v6520 = vpop.f32.mrb[0].mxu0
      %v6521 = vadd.f32 %v6408, %v6520
      %v6522 = vpop.f32.mrb[0].mxu0
      %v6523 = vadd.f32 %v6410, %v6522
      %v6524 = vpop.f32.mrb[0].mxu0
      %v6525 = vadd.f32 %v6412, %v6524
      %6526 = vmatprep.mubr.bf16.mxu0 %v4826
      %6527 = vmatmul.mubr.bf16.gmra.mrb[0].mxu0 %v4825
      %v6528 = vpop.f32.mrb[0].mxu0
      %v6529 = vadd.f32 %v6416, %v6528
      %v6530 = vpop.f32.mrb[0].mxu0
      %v6531 = vadd.f32 %v6418, %v6530
      %v6532 = vpop.f32.mrb[0].mxu0
      %v6533 = vadd.f32 %v6420, %v6532
      %v6534 = vpop.f32.mrb[0].mxu0
      %v6535 = vadd.f32 %v6422, %v6534
      %6536 = vmatprep.mubr.bf16.mxu0 %v4839
      %6537 = vmatmul.mubr.bf16.gmra.mrb[0].mxu0 %v4838
      %v6538 = vpop.f32.mrb[0].mxu0
      %v6539 = vadd.f32 %v6426, %v6538
      %v6540 = vpop.f32.mrb[0].mxu0
      %v6541 = vadd.f32 %v6428, %v6540
      %v6542 = vpop.f32.mrb[0].mxu0
      %v6543 = vadd.f32 %v6430, %v6542
      %v6544 = vpop.f32.mrb[0].mxu0
      %v6545 = vadd.f32 %v6432, %v6544
      %6546 = vmatprep.mubr.bf16.mxu0 %v4852
      %6547 = vmatmul.mubr.bf16.gmra.mrb[0].mxu0 %v4851
      %v6548 = vpop.f32.mrb[0].mxu0
      %v6549 = vadd.f32 %v6436, %v6548
      %v6550 = vpop.f32.mrb[0].mxu0
      %v6551 = vadd.f32 %v6438, %v6550
      %v6552 = vpop.f32.mrb[0].mxu0
      %v6553 = vadd.f32 %v6440, %v6552
      %v6554 = vpop.f32.mrb[0].mxu0
      %v6555 = vadd.f32 %v6442, %v6554
      %6556 = vmatprep.mubr.bf16.mxu0 %v4865
      %6557 = vmatmul.mubr.bf16.gmra.mrb[0].mxu0 %v4864
      %v6558 = vpop.f32.mrb[0].mxu0
      %v6559 = vadd.f32 %v6446, %v6558
      %v6560 = vpop.f32.mrb[0].mxu0
      %v6561 = vadd.f32 %v6448, %v6560
      %v6562 = vpop.f32.mrb[0].mxu0
      %v6563 = vadd.f32 %v6450, %v6562
      %v6564 = vpop.f32.mrb[0].mxu0
      %v6565 = vadd.f32 %v6452, %v6564
      %6566 = vdwg.mxu0
      %6567 = vmatprep.subr.bf16.mxu0 %v5729
      %6568 = vmatpush1.bf16.msra.mxu0 %v5728
      %6569 = vmatprep.subr.bf16.mxu0 %v5731
      %6570 = vmatpush1.bf16.msra.mxu0 %v5730
      %6571 = vmatprep.subr.bf16.mxu0 %v5733
      %6572 = vmatpush1.bf16.msra.mxu0 %v5732
      %6573 = vmatprep.subr.bf16.mxu0 %v5735
      %6574 = vmatpush1.bf16.msra.mxu0 %v5734
      %6575 = vmatprep.subr.bf16.mxu0 %v5737
      %6576 = vmatpush1.bf16.msra.mxu0 %v5736
      %6577 = vmatprep.subr.bf16.mxu0 %v5739
      %6578 = vmatpush1.bf16.msra.mxu0 %v5738
      %6579 = vmatprep.subr.bf16.mxu0 %v5741
      %6580 = vmatpush1.bf16.msra.mxu0 %v5740
      %6581 = vmatprep.subr.bf16.mxu0 %v5743
      %6582 = vmatpush1.bf16.msra.mxu0 %v5742
      %6583 = vmatprep.subr.bf16.mxu0 %v5745
      %6584 = vmatpush1.bf16.msra.mxu0 %v5744
      %6585 = vmatprep.subr.bf16.mxu0 %v5747
      %6586 = vmatpush1.bf16.msra.mxu0 %v5746
      %6587 = vmatprep.subr.bf16.mxu0 %v5749
      %6588 = vmatpush1.bf16.msra.mxu0 %v5748
      %6589 = vmatprep.subr.bf16.mxu0 %v5751
      %6590 = vmatpush1.bf16.msra.mxu0 %v5750
      %6591 = vmatprep.subr.bf16.mxu0 %v5753
      %6592 = vmatpush1.bf16.msra.mxu0 %v5752
      %6593 = vmatprep.subr.bf16.mxu0 %v5755
      %6594 = vmatpush1.bf16.msra.mxu0 %v5754
      %6595 = vmatprep.subr.bf16.mxu0 %v5757
      %6596 = vmatpush1.bf16.msra.mxu0 %v5756
      %6597 = vmatprep.subr.bf16.mxu0 %v5759
      %6598 = vmatpush1.bf16.msra.mxu0 %v5758
      %6599 = vmatprep.mubr.bf16.mxu0 %v4776
      %6600 = vmatmul.mubr.bf16.gmra.mrb[0].mxu0 %v4775
      %v6601 = vpop.f32.mrb[0].mxu0
      %v6602 = vadd.f32 %v6489, %v6601
      %v6603 = vpop.f32.mrb[0].mxu0
      %v6604 = vadd.f32 %v6491, %v6603
      %v6605 = vpop.f32.mrb[0].mxu0
      %v6606 = vadd.f32 %v6493, %v6605
      %v6607 = vpop.f32.mrb[0].mxu0
      %v6608 = vadd.f32 %v6495, %v6607
      %6609 = vmatprep.mubr.bf16.mxu0 %v4789
      %6610 = vmatmul.mubr.bf16.gmra.mrb[0].mxu0 %v4788
      %v6611 = vpop.f32.mrb[0].mxu0
      %v6612 = vadd.f32 %v6499, %v6611
      %v6613 = vpop.f32.mrb[0].mxu0
      %v6614 = vadd.f32 %v6501, %v6613
      %v6615 = vpop.f32.mrb[0].mxu0
      %v6616 = vadd.f32 %v6503, %v6615
      %v6617 = vpop.f32.mrb[0].mxu0
      %v6618 = vadd.f32 %v6505, %v6617
      %6619 = vmatprep.mubr.bf16.mxu0 %v4802
      %6620 = vmatmul.mubr.bf16.gmra.mrb[0].mxu0 %v4801
      %v6621 = vpop.f32.mrb[0].mxu0
      %v6622 = vadd.f32 %v6509, %v6621
      %v6623 = vpop.f32.mrb[0].mxu0
      %v6624 = vadd.f32 %v6511, %v6623
      %v6625 = vpop.f32.mrb[0].mxu0
      %v6626 = vadd.f32 %v6513, %v6625
      %v6627 = vpop.f32.mrb[0].mxu0
      %v6628 = vadd.f32 %v6515, %v6627
      %6629 = vmatprep.mubr.bf16.mxu0 %v4815
      %6630 = vmatmul.mubr.bf16.gmra.mrb[0].mxu0 %v4814
      %v6631 = vpop.f32.mrb[0].mxu0
      %v6632 = vadd.f32 %v6519, %v6631
      %v6633 = vpop.f32.mrb[0].mxu0
      %v6634 = vadd.f32 %v6521, %v6633
      %v6635 = vpop.f32.mrb[0].mxu0
      %v6636 = vadd.f32 %v6523, %v6635
      %v6637 = vpop.f32.mrb[0].mxu0
      %v6638 = vadd.f32 %v6525, %v6637
      %6639 = vmatprep.mubr.bf16.mxu0 %v4828
      %6640 = vmatmul.mubr.bf16.gmra.mrb[0].mxu0 %v4827
      %v6641 = vpop.f32.mrb[0].mxu0
      %v6642 = vadd.f32 %v6529, %v6641
      %v6643 = vpop.f32.mrb[0].mxu0
      %v6644 = vadd.f32 %v6531, %v6643
      %v6645 = vpop.f32.mrb[0].mxu0
      %v6646 = vadd.f32 %v6533, %v6645
      %v6647 = vpop.f32.mrb[0].mxu0
      %v6648 = vadd.f32 %v6535, %v6647
      %6649 = vmatprep.mubr.bf16.mxu0 %v4841
      %6650 = vmatmul.mubr.bf16.gmra.mrb[0].mxu0 %v4840
      %v6651 = vpop.f32.mrb[0].mxu0
      %v6652 = vadd.f32 %v6539, %v6651
      %v6653 = vpop.f32.mrb[0].mxu0
      %v6654 = vadd.f32 %v6541, %v6653
      %v6655 = vpop.f32.mrb[0].mxu0
      %v6656 = vadd.f32 %v6543, %v6655
      %v6657 = vpop.f32.mrb[0].mxu0
      %v6658 = vadd.f32 %v6545, %v6657
      %6659 = vmatprep.mubr.bf16.mxu0 %v4854
      %6660 = vmatmul.mubr.bf16.gmra.mrb[0].mxu0 %v4853
      %v6661 = vpop.f32.mrb[0].mxu0
      %v6662 = vadd.f32 %v6549, %v6661
      %v6663 = vpop.f32.mrb[0].mxu0
      %v6664 = vadd.f32 %v6551, %v6663
      %v6665 = vpop.f32.mrb[0].mxu0
      %v6666 = vadd.f32 %v6553, %v6665
      %v6667 = vpop.f32.mrb[0].mxu0
      %v6668 = vadd.f32 %v6555, %v6667
      %6669 = vmatprep.mubr.bf16.mxu0 %v4867
      %6670 = vmatmul.mubr.bf16.gmra.mrb[0].mxu0 %v4866
      %v6671 = vpop.f32.mrb[0].mxu0
      %v6672 = vadd.f32 %v6559, %v6671
      %v6673 = vpop.f32.mrb[0].mxu0
      %v6674 = vadd.f32 %v6561, %v6673
      %v6675 = vpop.f32.mrb[0].mxu0
      %v6676 = vadd.f32 %v6563, %v6675
      %v6677 = vpop.f32.mrb[0].mxu0
      %v6678 = vadd.f32 %v6565, %v6677
      %6679 = vdwg.mxu0
      %6680 = vmatprep.subr.bf16.mxu0 %v5761
      %6681 = vmatpush1.bf16.msra.mxu0 %v5760
      %6682 = vmatprep.subr.bf16.mxu0 %v5763
      %6683 = vmatpush1.bf16.msra.mxu0 %v5762
      %6684 = vmatprep.subr.bf16.mxu0 %v5765
      %6685 = vmatpush1.bf16.msra.mxu0 %v5764
      %6686 = vmatprep.subr.bf16.mxu0 %v5767
      %6687 = vmatpush1.bf16.msra.mxu0 %v5766
      %6688 = vmatprep.subr.bf16.mxu0 %v6000
      %6689 = vmatpush1.bf16.msra.mxu0 %v5997
      %6690 = vmatprep.subr.bf16.mxu0 0
      %6691 = vmatpush1.bf16.msra.mxu0 0
      %6692 = vmatprep.subr.bf16.mxu0 0
      %6693 = vmatpush1.bf16.msra.mxu0 0
      %6694 = vmatprep.subr.bf16.mxu0 0
      %6695 = vmatpush1.bf16.msra.mxu0 0
      %6696 = vmatprep.subr.bf16.mxu0 0
      %6697 = vmatpush1.bf16.msra.mxu0 0
      %6698 = vmatprep.subr.bf16.mxu0 0
      %6699 = vmatpush1.bf16.msra.mxu0 0
      %6700 = vmatprep.subr.bf16.mxu0 0
      %6701 = vmatpush1.bf16.msra.mxu0 0
      %6702 = vmatprep.subr.bf16.mxu0 0
      %6703 = vmatpush1.bf16.msra.mxu0 0
      %6704 = vmatprep.subr.bf16.mxu0 0
      %6705 = vmatpush1.bf16.msra.mxu0 0
      %6706 = vmatprep.subr.bf16.mxu0 0
      %6707 = vmatpush1.bf16.msra.mxu0 0
      %6708 = vmatprep.subr.bf16.mxu0 0
      %6709 = vmatpush1.bf16.msra.mxu0 0
      %6710 = vmatprep.subr.bf16.mxu0 0
      %6711 = vmatpush1.bf16.msra.mxu0 0
      %6712 = vmatprep.mubr.bf16.mxu0 0
      %6713 = vmatmul.mubr.bf16.gmra.mrb[0].mxu0 %v5972
      %v6714 = vpop.f32.mrb[0].mxu0
      %v6715 = vadd.f32 %v6602, %v6714
      %v6716 = vpop.f32.mrb[0].mxu0
      %v6717 = vadd.f32 %v6604, %v6716
      %v6718 = vpop.f32.mrb[0].mxu0
      %v6719 = vadd.f32 %v6606, %v6718
      %v6720 = vpop.f32.mrb[0].mxu0
      %v6721 = vadd.f32 %v6608, %v6720
      %6722 = vmatprep.mubr.bf16.mxu0 0
      %6723 = vmatmul.mubr.bf16.gmra.mrb[0].mxu0 %v5975
      %v6724 = vpop.f32.mrb[0].mxu0
      %v6725 = vadd.f32 %v6612, %v6724
      %v6726 = vpop.f32.mrb[0].mxu0
      %v6727 = vadd.f32 %v6614, %v6726
      %v6728 = vpop.f32.mrb[0].mxu0
      %v6729 = vadd.f32 %v6616, %v6728
      %v6730 = vpop.f32.mrb[0].mxu0
      %v6731 = vadd.f32 %v6618, %v6730
      %6732 = vmatprep.mubr.bf16.mxu0 0
      %6733 = vmatmul.mubr.bf16.gmra.mrb[0].mxu0 %v5978
      %v6734 = vpop.f32.mrb[0].mxu0
      %v6735 = vadd.f32 %v6622, %v6734
      %v6736 = vpop.f32.mrb[0].mxu0
      %v6737 = vadd.f32 %v6624, %v6736
      %v6738 = vpop.f32.mrb[0].mxu0
      %v6739 = vadd.f32 %v6626, %v6738
      %v6740 = vpop.f32.mrb[0].mxu0
      %v6741 = vadd.f32 %v6628, %v6740
      %6742 = vmatprep.mubr.bf16.mxu0 0
      %6743 = vmatmul.mubr.bf16.gmra.mrb[0].mxu0 %v5981
      %v6744 = vpop.f32.mrb[0].mxu0
      %v6745 = vadd.f32 %v6632, %v6744
      %v6746 = vpop.f32.mrb[0].mxu0
      %v6747 = vadd.f32 %v6634, %v6746
      %v6748 = vpop.f32.mrb[0].mxu0
      %v6749 = vadd.f32 %v6636, %v6748
      %v6750 = vpop.f32.mrb[0].mxu0
      %v6751 = vadd.f32 %v6638, %v6750
      %6752 = vmatprep.mubr.bf16.mxu0 0
      %6753 = vmatmul.mubr.bf16.gmra.mrb[0].mxu0 %v5984
      %v6754 = vpop.f32.mrb[0].mxu0
      %v6755 = vadd.f32 %v6642, %v6754
      %v6756 = vpop.f32.mrb[0].mxu0
      %v6757 = vadd.f32 %v6644, %v6756
      %v6758 = vpop.f32.mrb[0].mxu0
      %v6759 = vadd.f32 %v6646, %v6758
      %v6760 = vpop.f32.mrb[0].mxu0
      %v6761 = vadd.f32 %v6648, %v6760
      %6762 = vmatprep.mubr.bf16.mxu0 0
      %6763 = vmatmul.mubr.bf16.gmra.mrb[0].mxu0 %v5987
      %v6764 = vpop.f32.mrb[0].mxu0
      %v6765 = vadd.f32 %v6652, %v6764
      %v6766 = vpop.f32.mrb[0].mxu0
      %v6767 = vadd.f32 %v6654, %v6766
      %v6768 = vpop.f32.mrb[0].mxu0
      %v6769 = vadd.f32 %v6656, %v6768
      %v6770 = vpop.f32.mrb[0].mxu0
      %v6771 = vadd.f32 %v6658, %v6770
      %6772 = vmatprep.mubr.bf16.mxu0 0
      %6773 = vmatmul.mubr.bf16.gmra.mrb[0].mxu0 %v5990
      %v6774 = vpop.f32.mrb[0].mxu0
      %v6775 = vadd.f32 %v6662, %v6774
      %v6776 = vpop.f32.mrb[0].mxu0
      %v6777 = vadd.f32 %v6664, %v6776
      %v6778 = vpop.f32.mrb[0].mxu0
      %v6779 = vadd.f32 %v6666, %v6778
      %v6780 = vpop.f32.mrb[0].mxu0
      %v6781 = vadd.f32 %v6668, %v6780
      %6782 = vmatprep.mubr.bf16.mxu0 0
      %6783 = vmatmul.mubr.bf16.gmra.mrb[0].mxu0 %v5993
      %v6784 = vpop.f32.mrb[0].mxu0
      %v6785 = vadd.f32 %v6672, %v6784
      %v6786 = vpop.f32.mrb[0].mxu0
      %v6787 = vadd.f32 %v6674, %v6786
      %v6788 = vpop.f32.mrb[0].mxu0
      %v6789 = vadd.f32 %v6676, %v6788
      %v6790 = vpop.f32.mrb[0].mxu0
      %v6791 = vadd.f32 %v6678, %v6790
      %6792 = vdwg.mxu0
      %v6793 = vmul.f32 %v6715, %v6715
      %v6794 = vmul.f32 %v6717, %v6717
      %v6795 = vmul.f32 %v6719, %v6719
      %v6796 = vmul.f32 %v6721, %v6721
      %v6797 = vmul.f32 %v6725, %v6725
      %v6798 = vmul.f32 %v6727, %v6727
      %v6799 = vmul.f32 %v6729, %v6729
      %v6800 = vmul.f32 %v6731, %v6731
      %v6801 = vmul.f32 %v6755, %v6755
      %v6802 = vmul.f32 %v6757, %v6757
      %v6803 = vmul.f32 %v6759, %v6759
      %v6804 = vmul.f32 %v6761, %v6761
      %v6805 = vmul.f32 %v6765, %v6765
      %v6806 = vmul.f32 %v6767, %v6767
      %v6807 = vmul.f32 %v6769, %v6769
      %v6808 = vmul.f32 %v6771, %v6771
      %v6809 = vadd.f32 %v6715, %v6717
      %6810 = vadd.xlane.f32.xlu0 %v6809
      %v6811 = vpop.xlane.xlu0 %6810
      %v6812 = vadd.f32 %v6719, %v6721
      %6813 = vadd.xlane.f32.xlu0 %v6812
      %v6814 = vpop.xlane.xlu0 %6813
      %v6815 = vadd.f32 %v6725, %v6727
      %6816 = vadd.xlane.f32.xlu0 %v6815
      %v6817 = vpop.xlane.xlu0 %6816
      %v6818 = vadd.f32 %v6729, %v6731
      %6819 = vadd.xlane.f32.xlu0 %v6818
      %v6820 = vpop.xlane.xlu0 %6819
      %v6821 = vadd.f32 %v6755, %v6757
      %6822 = vadd.xlane.f32.xlu0 %v6821
      %v6823 = vpop.xlane.xlu0 %6822
      %v6824 = vadd.f32 %v6759, %v6761
      %6825 = vadd.xlane.f32.xlu0 %v6824
      %v6826 = vpop.xlane.xlu0 %6825
      %v6827 = vadd.f32 %v6765, %v6767
      %6828 = vadd.xlane.f32.xlu0 %v6827
      %v6829 = vpop.xlane.xlu0 %6828
      %v6830 = vadd.f32 %v6769, %v6771
      %6831 = vadd.xlane.f32.xlu0 %v6830
      %v6832 = vpop.xlane.xlu0 %6831
      %v6833 = vadd.f32 %v6793, %v6794
      %6834 = vadd.xlane.f32.xlu0 %v6833
      %v6835 = vpop.xlane.xlu0 %6834
      %v6836 = vadd.f32 %v6795, %v6796
      %6837 = vadd.xlane.f32.xlu0 %v6836
      %v6838 = vpop.xlane.xlu0 %6837
      %v6839 = vadd.f32 %v6797, %v6798
      %6840 = vadd.xlane.f32.xlu0 %v6839
      %v6841 = vpop.xlane.xlu0 %6840
      %v6842 = vadd.f32 %v6799, %v6800
      %6843 = vadd.xlane.f32.xlu0 %v6842
      %v6844 = vpop.xlane.xlu0 %6843
      %v6845 = vadd.f32 %v6801, %v6802
      %6846 = vadd.xlane.f32.xlu0 %v6845
      %v6847 = vpop.xlane.xlu0 %6846
      %v6848 = vadd.f32 %v6803, %v6804
      %6849 = vadd.xlane.f32.xlu0 %v6848
      %v6850 = vpop.xlane.xlu0 %6849
      %v6851 = vadd.f32 %v6805, %v6806
      %6852 = vadd.xlane.f32.xlu0 %v6851
      %v6853 = vpop.xlane.xlu0 %6852
      %v6854 = vadd.f32 %v6807, %v6808
      %6855 = vadd.xlane.f32.xlu0 %v6854
      %v6856 = vpop.xlane.xlu0 %6855
      %v6857 = vadd.f32 %v6811, %v6814
      %v6858 = vrot.slane %v6857, 4
      %v6859 = vadd.f32 %v6857, %v6858
      %v6860 = vrot.slane %v6859, 2
      %v6861 = vadd.f32 %v6859, %v6860
      %v6862 = vrot.slane %v6861, 1
      %v6863 = vadd.f32 %v6861, %v6862
      %v6864 = vmul.f32 %v6863, 0.00024414063
      %v6865 = vadd.f32 %v6835, %v6838
      %v6866 = vrot.slane %v6865, 4
      %v6867 = vadd.f32 %v6865, %v6866
      %v6868 = vrot.slane %v6867, 2
      %v6869 = vadd.f32 %v6867, %v6868
      %v6870 = vrot.slane %v6869, 1
      %v6871 = vadd.f32 %v6869, %v6870
      %v6872 = vmul.f32 %v6871, 0.00024414063
      %v6873 = vmul.f32 %v6864, %v6864
      %v6874 = vsub.f32 %v6872, %v6873
      %v6875 = vmax.f32 %v6874, 0.0
      %v6876 = vadd.f32 %v6817, %v6820
      %v6877 = vrot.slane %v6876, 4
      %v6878 = vadd.f32 %v6876, %v6877
      %v6879 = vrot.slane %v6878, 2
      %v6880 = vadd.f32 %v6878, %v6879
      %v6881 = vrot.slane %v6880, 1
      %v6882 = vadd.f32 %v6880, %v6881
      %v6883 = vmul.f32 %v6882, 0.00024414063
      %v6884 = vadd.f32 %v6841, %v6844
      %v6885 = vrot.slane %v6884, 4
      %v6886 = vadd.f32 %v6884, %v6885
      %v6887 = vrot.slane %v6886, 2
      %v6888 = vadd.f32 %v6886, %v6887
      %v6889 = vrot.slane %v6888, 1
      %v6890 = vadd.f32 %v6888, %v6889
      %v6891 = vmul.f32 %v6890, 0.00024414063
      %v6892 = vmul.f32 %v6883, %v6883
      %v6893 = vsub.f32 %v6891, %v6892
      %v6894 = vmax.f32 %v6893, 0.0
      %v6895 = vadd.f32 %v6823, %v6826
      %v6896 = vrot.slane %v6895, 4
      %v6897 = vadd.f32 %v6895, %v6896
      %v6898 = vrot.slane %v6897, 2
      %v6899 = vadd.f32 %v6897, %v6898
      %v6900 = vrot.slane %v6899, 1
      %v6901 = vadd.f32 %v6899, %v6900
      %v6902 = vmul.f32 %v6901, 0.00024414063
      %v6903 = vadd.f32 %v6847, %v6850
      %v6904 = vrot.slane %v6903, 4
      %v6905 = vadd.f32 %v6903, %v6904
      %v6906 = vrot.slane %v6905, 2
      %v6907 = vadd.f32 %v6905, %v6906
      %v6908 = vrot.slane %v6907, 1
      %v6909 = vadd.f32 %v6907, %v6908
      %v6910 = vmul.f32 %v6909, 0.00024414063
      %v6911 = vmul.f32 %v6902, %v6902
      %v6912 = vsub.f32 %v6910, %v6911
      %v6913 = vmax.f32 %v6912, 0.0
      %v6914 = vadd.f32 %v6829, %v6832
      %v6915 = vrot.slane %v6914, 4
      %v6916 = vadd.f32 %v6914, %v6915
      %v6917 = vrot.slane %v6916, 2
      %v6918 = vadd.f32 %v6916, %v6917
      %v6919 = vrot.slane %v6918, 1
      %v6920 = vadd.f32 %v6918, %v6919
      %v6921 = vmul.f32 %v6920, 0.00024414063
      %v6922 = vadd.f32 %v6853, %v6856
      %v6923 = vrot.slane %v6922, 4
      %v6924 = vadd.f32 %v6922, %v6923
      %v6925 = vrot.slane %v6924, 2
      %v6926 = vadd.f32 %v6924, %v6925
      %v6927 = vrot.slane %v6926, 1
      %v6928 = vadd.f32 %v6926, %v6927
      %v6929 = vmul.f32 %v6928, 0.00024414063
      %v6930 = vmul.f32 %v6921, %v6921
      %v6931 = vsub.f32 %v6929, %v6930
      %v6932 = vmax.f32 %v6931, 0.0
      %v6933 = vsub.f32 %v6715, %v6864
      %v6934 = vsub.f32 %v6717, %v6864
      %v6935 = vsub.f32 %v6719, %v6864
      %v6936 = vsub.f32 %v6721, %v6864
      %v6937 = vadd.f32 %v6875, 1e-05
      %v6938 = vrsqrt.pop %v6937
      %v6939 = vmul.f32 %v6933, %v6938
      %v6940 = vmul.f32 %v6934, %v6938
      %v6941 = vmul.f32 %v6935, %v6938
      %v6942 = vmul.f32 %v6936, %v6938
      %v6943 = vld [vmem:[%s6] sm:$0xff]
      %v6944 = vld [vmem:[%s6 + $0x8] sm:$0xff]
      %6946 = vset.pattern.permute.xlu0 0
      %6947 = vperm.xlu0 %6946, %v6943
      %v6948 = vpop.permute.xlu0 %6947
      %6951 = vset.pattern.permute.xlu0 0
      %6952 = vperm.xlu0 %6951, %v6944
      %v6953 = vpop.permute.xlu0 %6952
      %v6955 = vmul.f32 %v6939, %v6948
      %v6956 = vmul.f32 %v6940, %v6948
      %v6957 = vmul.f32 %v6941, %v6953
      %v6958 = vmul.f32 %v6942, %v6953
      %v6959 = vld [vmem:[%s7] sm:$0xff]
      %v6960 = vld [vmem:[%s7 + $0x8] sm:$0xff]
      %6962 = vset.pattern.permute.xlu0 0
      %6963 = vperm.xlu0 %6962, %v6959
      %v6964 = vpop.permute.xlu0 %6963
      %6967 = vset.pattern.permute.xlu0 0
      %6968 = vperm.xlu0 %6967, %v6960
      %v6969 = vpop.permute.xlu0 %6968
      %v6971 = vadd.f32 %v6955, %v6964
      %v6972 = vadd.f32 %v6956, %v6964
      %v6973 = vadd.f32 %v6957, %v6969
      %v6974 = vadd.f32 %v6958, %v6969
      %v6975 = vsub.f32 %v6755, %v6902
      %v6976 = vsub.f32 %v6757, %v6902
      %v6977 = vsub.f32 %v6759, %v6902
      %v6978 = vsub.f32 %v6761, %v6902
      %v6979 = vadd.f32 %v6913, 1e-05
      %v6980 = vrsqrt.pop %v6979
      %v6981 = vmul.f32 %v6975, %v6980
      %v6982 = vmul.f32 %v6976, %v6980
      %v6983 = vmul.f32 %v6977, %v6980
      %v6984 = vmul.f32 %v6978, %v6980
      %s6985 = scalar_lea.vmem %s6, 16
      %v6986 = vld [vmem:[%s6985] sm:$0xff]
      %v6987 = vld [vmem:[%s6985 + $0x8] sm:$0xff]
      %6989 = vset.pattern.permute.xlu0 0
      %6990 = vperm.xlu0 %6989, %v6986
      %v6991 = vpop.permute.xlu0 %6990
      %6994 = vset.pattern.permute.xlu0 0
      %6995 = vperm.xlu0 %6994, %v6987
      %v6996 = vpop.permute.xlu0 %6995
      %v6998 = vmul.f32 %v6981, %v6991
      %v6999 = vmul.f32 %v6982, %v6991
      %v7000 = vmul.f32 %v6983, %v6996
      %v7001 = vmul.f32 %v6984, %v6996
      %s7002 = scalar_lea.vmem %s7, 16
      %v7003 = vld [vmem:[%s7002] sm:$0xff]
      %v7004 = vld [vmem:[%s7002 + $0x8] sm:$0xff]
      %7006 = vset.pattern.permute.xlu0 0
      %7007 = vperm.xlu0 %7006, %v7003
      %v7008 = vpop.permute.xlu0 %7007
      %7011 = vset.pattern.permute.xlu0 0
      %7012 = vperm.xlu0 %7011, %v7004
      %v7013 = vpop.permute.xlu0 %7012
      %v7015 = vadd.f32 %v6998, %v7008
      %v7016 = vadd.f32 %v6999, %v7008
      %v7017 = vadd.f32 %v7000, %v7013
      %v7018 = vadd.f32 %v7001, %v7013
      %v7019 = vadd.f32 %v6971, %v7015
      %v7020 = vadd.f32 %v6972, %v7016
      %v7021 = vadd.f32 %v6973, %v7017
      %v7022 = vadd.f32 %v6974, %v7018
      %v7023 = vxor.u32 %v7019, 2147483648
      %v7024 = vxor.u32 %v7020, 2147483648
      %v7025 = vxor.u32 %v7021, 2147483648
      %v7026 = vxor.u32 %v7022, 2147483648
      %v7027 = vmul.f32 %v7023, 1.442695
      %v7028 = vpow.pop %v7027
      %v7029 = vmul.f32 %v7024, 1.442695
      %v7030 = vpow.pop %v7029
      %v7031 = vmul.f32 %v7025, 1.442695
      %v7032 = vpow.pop %v7031
      %v7033 = vmul.f32 %v7026, 1.442695
      %v7034 = vpow.pop %v7033
      %v7035 = vadd.f32 %v7028, 1.0
      %v7036 = vadd.f32 %v7030, 1.0
      %v7037 = vadd.f32 %v7032, 1.0
      %v7038 = vadd.f32 %v7034, 1.0
      %v7039 = vrcp.pop %v7035
      %v7040 = vmul.f32 1.0, %v7039
      %v7041 = vrcp.pop %v7036
      %v7042 = vmul.f32 1.0, %v7041
      %v7043 = vrcp.pop %v7037
      %v7044 = vmul.f32 1.0, %v7043
      %v7045 = vrcp.pop %v7038
      %v7046 = vmul.f32 1.0, %v7045
      %v7047 = vsub.f32 %v6725, %v6883
      %v7048 = vsub.f32 %v6727, %v6883
      %v7049 = vsub.f32 %v6729, %v6883
      %v7050 = vsub.f32 %v6731, %v6883
      %v7051 = vadd.f32 %v6894, 1e-05
      %v7052 = vrsqrt.pop %v7051
      %v7053 = vmul.f32 %v7047, %v7052
      %v7054 = vmul.f32 %v7048, %v7052
      %v7055 = vmul.f32 %v7049, %v7052
      %v7056 = vmul.f32 %v7050, %v7052
      %s7057 = scalar_lea.vmem %s6, 32
      %v7058 = vld [vmem:[%s7057] sm:$0xff]
      %v7059 = vld [vmem:[%s7057 + $0x8] sm:$0xff]
      %7061 = vset.pattern.permute.xlu0 0
      %7062 = vperm.xlu0 %7061, %v7058
      %v7063 = vpop.permute.xlu0 %7062
      %7066 = vset.pattern.permute.xlu0 0
      %7067 = vperm.xlu0 %7066, %v7059
      %v7068 = vpop.permute.xlu0 %7067
      %v7070 = vmul.f32 %v7053, %v7063
      %v7071 = vmul.f32 %v7054, %v7063
      %v7072 = vmul.f32 %v7055, %v7068
      %v7073 = vmul.f32 %v7056, %v7068
      %s7074 = scalar_lea.vmem %s7, 32
      %v7075 = vld [vmem:[%s7074] sm:$0xff]
      %v7076 = vld [vmem:[%s7074 + $0x8] sm:$0xff]
      %7078 = vset.pattern.permute.xlu0 0
      %7079 = vperm.xlu0 %7078, %v7075
      %v7080 = vpop.permute.xlu0 %7079
      %7083 = vset.pattern.permute.xlu0 0
      %7084 = vperm.xlu0 %7083, %v7076
      %v7085 = vpop.permute.xlu0 %7084
      %v7087 = vadd.f32 %v7070, %v7080
      %v7088 = vadd.f32 %v7071, %v7080
      %v7089 = vadd.f32 %v7072, %v7085
      %v7090 = vadd.f32 %v7073, %v7085
      %v7091 = vsub.f32 %v6765, %v6921
      %v7092 = vsub.f32 %v6767, %v6921
      %v7093 = vsub.f32 %v6769, %v6921
      %v7094 = vsub.f32 %v6771, %v6921
      %v7095 = vadd.f32 %v6932, 1e-05
      %v7096 = vrsqrt.pop %v7095
      %v7097 = vmul.f32 %v7091, %v7096
      %v7098 = vmul.f32 %v7092, %v7096
      %v7099 = vmul.f32 %v7093, %v7096
      %v7100 = vmul.f32 %v7094, %v7096
      %s7101 = scalar_lea.vmem %s6, 48
      %v7102 = vld [vmem:[%s7101] sm:$0xff]
      %v7103 = vld [vmem:[%s7101 + $0x8] sm:$0xff]
      %7105 = vset.pattern.permute.xlu0 0
      %7106 = vperm.xlu0 %7105, %v7102
      %v7107 = vpop.permute.xlu0 %7106
      %7110 = vset.pattern.permute.xlu0 0
      %7111 = vperm.xlu0 %7110, %v7103
      %v7112 = vpop.permute.xlu0 %7111
      %v7114 = vmul.f32 %v7097, %v7107
      %v7115 = vmul.f32 %v7098, %v7107
      %v7116 = vmul.f32 %v7099, %v7112
      %v7117 = vmul.f32 %v7100, %v7112
      %s7118 = scalar_lea.vmem %s7, 48
      %v7119 = vld [vmem:[%s7118] sm:$0xff]
      %v7120 = vld [vmem:[%s7118 + $0x8] sm:$0xff]
      %7122 = vset.pattern.permute.xlu0 0
      %7123 = vperm.xlu0 %7122, %v7119
      %v7124 = vpop.permute.xlu0 %7123
      %7127 = vset.pattern.permute.xlu0 0
      %7128 = vperm.xlu0 %7127, %v7120
      %v7129 = vpop.permute.xlu0 %7128
      %v7131 = vadd.f32 %v7114, %v7124
      %v7132 = vadd.f32 %v7115, %v7124
      %v7133 = vadd.f32 %v7116, %v7129
      %v7134 = vadd.f32 %v7117, %v7129
      %v7135 = vadd.f32 %v7087, %v7131
      %v7136 = vadd.f32 %v7088, %v7132
      %v7137 = vadd.f32 %v7089, %v7133
      %v7138 = vadd.f32 %v7090, %v7134
      %v7139 = vxor.u32 %v7135, 2147483648
      %v7140 = vxor.u32 %v7136, 2147483648
      %v7141 = vxor.u32 %v7137, 2147483648
      %v7142 = vxor.u32 %v7138, 2147483648
      %v7143 = vmul.f32 %v7139, 1.442695
      %v7144 = vpow.pop %v7143
      %v7145 = vmul.f32 %v7140, 1.442695
      %v7146 = vpow.pop %v7145
      %v7147 = vmul.f32 %v7141, 1.442695
      %v7148 = vpow.pop %v7147
      %v7149 = vmul.f32 %v7142, 1.442695
      %v7150 = vpow.pop %v7149
      %v7151 = vadd.f32 %v7144, 1.0
      %v7152 = vadd.f32 %v7146, 1.0
      %v7153 = vadd.f32 %v7148, 1.0
      %v7154 = vadd.f32 %v7150, 1.0
      %v7155 = vrcp.pop %v7151
      %v7156 = vmul.f32 1.0, %v7155
      %v7157 = vrcp.pop %v7152
      %v7158 = vmul.f32 1.0, %v7157
      %v7159 = vrcp.pop %v7153
      %v7160 = vmul.f32 1.0, %v7159
      %v7161 = vrcp.pop %v7154
      %v7162 = vmul.f32 1.0, %v7161
      %v7163 = vadd.f32 %v6735, %v6775
      %v7164 = vadd.f32 %v6737, %v6777
      %v7165 = vadd.f32 %v6739, %v6779
      %v7166 = vadd.f32 %v6741, %v6781
      %v7167 = vmax.f32 %v7163, 0.0
      %v7168 = vmax.f32 %v7164, 0.0
      %v7169 = vmax.f32 %v7165, 0.0
      %v7170 = vmax.f32 %v7166, 0.0
      %v7171 = vadd.f32 %v6745, %v6785
      %v7172 = vadd.f32 %v6747, %v6787
      %v7173 = vadd.f32 %v6749, %v6789
      %v7174 = vadd.f32 %v6751, %v6791
      %v7175 = vmax.f32 %v7171, 0.0
      %v7176 = vmax.f32 %v7172, 0.0
      %v7177 = vmax.f32 %v7173, 0.0
      %v7178 = vmax.f32 %v7174, 0.0
      %v7179 = vmul.f32 %v7040, %v7167
      %v7180 = vmul.f32 %v7042, %v7168
      %v7181 = vmul.f32 %v7044, %v7169
      %v7182 = vmul.f32 %v7046, %v7170
      %v7183 = vsub.f32 1.0, %v7040
      %v7184 = vsub.f32 1.0, %v7042
      %v7185 = vsub.f32 1.0, %v7044
      %v7186 = vsub.f32 1.0, %v7046
      %v7187 = vmul.f32 %v7183, %v389
      %v7188 = vmul.f32 %v7184, %v390
      %v7189 = vmul.f32 %v7185, %v391
      %v7190 = vmul.f32 %v7186, %v392
      %v7191 = vadd.f32 %v7179, %v7187
      %v7192 = vadd.f32 %v7180, %v7188
      %v7193 = vadd.f32 %v7181, %v7189
      %v7194 = vadd.f32 %v7182, %v7190
      %v7195 = vmul.f32 %v7156, %v7175
      %v7196 = vmul.f32 %v7158, %v7176
      %v7197 = vmul.f32 %v7160, %v7177
      %v7198 = vmul.f32 %v7162, %v7178
      %v7199 = vsub.f32 1.0, %v7156
      %v7200 = vsub.f32 1.0, %v7158
      %v7201 = vsub.f32 1.0, %v7160
      %v7202 = vsub.f32 1.0, %v7162
      %v7203 = vmul.f32 %v7199, %v393
      %v7204 = vmul.f32 %v7200, %v394
      %v7205 = vmul.f32 %v7201, %v395
      %v7206 = vmul.f32 %v7202, %v396
      %v7207 = vadd.f32 %v7195, %v7203
      %v7208 = vadd.f32 %v7196, %v7204
      %v7209 = vadd.f32 %v7197, %v7205
      %v7210 = vadd.f32 %v7198, %v7206
      %v7211 = vmul.f32 %v7191, %v7191
      %v7212 = vmul.f32 %v7192, %v7192
      %v7213 = vmul.f32 %v7193, %v7193
      %v7214 = vmul.f32 %v7194, %v7194
      %v7215 = vmul.f32 %v7207, %v7207
      %v7216 = vmul.f32 %v7208, %v7208
      %v7217 = vmul.f32 %v7209, %v7209
      %v7218 = vmul.f32 %v7210, %v7210
      %v7219 = vadd.f32 %v7191, %v7192
      %7220 = vadd.xlane.f32.xlu0 %v7219
      %v7221 = vpop.xlane.xlu0 %7220
      %v7222 = vadd.f32 %v7193, %v7194
      %7223 = vadd.xlane.f32.xlu0 %v7222
      %v7224 = vpop.xlane.xlu0 %7223
      %v7225 = vadd.f32 %v7207, %v7208
      %7226 = vadd.xlane.f32.xlu0 %v7225
      %v7227 = vpop.xlane.xlu0 %7226
      %v7228 = vadd.f32 %v7209, %v7210
      %7229 = vadd.xlane.f32.xlu0 %v7228
      %v7230 = vpop.xlane.xlu0 %7229
      %v7231 = vadd.f32 %v7211, %v7212
      %7232 = vadd.xlane.f32.xlu0 %v7231
      %v7233 = vpop.xlane.xlu0 %7232
      %v7234 = vadd.f32 %v7213, %v7214
      %7235 = vadd.xlane.f32.xlu0 %v7234
      %v7236 = vpop.xlane.xlu0 %7235
      %v7237 = vadd.f32 %v7215, %v7216
      %7238 = vadd.xlane.f32.xlu0 %v7237
      %v7239 = vpop.xlane.xlu0 %7238
      %v7240 = vadd.f32 %v7217, %v7218
      %7241 = vadd.xlane.f32.xlu0 %v7240
      %v7242 = vpop.xlane.xlu0 %7241
      %v7243 = vadd.f32 %v7221, %v7224
      %v7244 = vrot.slane %v7243, 4
      %v7245 = vadd.f32 %v7243, %v7244
      %v7246 = vrot.slane %v7245, 2
      %v7247 = vadd.f32 %v7245, %v7246
      %v7248 = vrot.slane %v7247, 1
      %v7249 = vadd.f32 %v7247, %v7248
      %v7250 = vmul.f32 %v7249, 0.00024414063
      %v7251 = vadd.f32 %v7233, %v7236
      %v7252 = vrot.slane %v7251, 4
      %v7253 = vadd.f32 %v7251, %v7252
      %v7254 = vrot.slane %v7253, 2
      %v7255 = vadd.f32 %v7253, %v7254
      %v7256 = vrot.slane %v7255, 1
      %v7257 = vadd.f32 %v7255, %v7256
      %v7258 = vmul.f32 %v7257, 0.00024414063
      %v7259 = vmul.f32 %v7250, %v7250
      %v7260 = vsub.f32 %v7258, %v7259
      %v7261 = vmax.f32 %v7260, 0.0
      %v7262 = vadd.f32 %v7227, %v7230
      %v7263 = vrot.slane %v7262, 4
      %v7264 = vadd.f32 %v7262, %v7263
      %v7265 = vrot.slane %v7264, 2
      %v7266 = vadd.f32 %v7264, %v7265
      %v7267 = vrot.slane %v7266, 1
      %v7268 = vadd.f32 %v7266, %v7267
      %v7269 = vmul.f32 %v7268, 0.00024414063
      %v7270 = vadd.f32 %v7239, %v7242
      %v7271 = vrot.slane %v7270, 4
      %v7272 = vadd.f32 %v7270, %v7271
      %v7273 = vrot.slane %v7272, 2
      %v7274 = vadd.f32 %v7272, %v7273
      %v7275 = vrot.slane %v7274, 1
      %v7276 = vadd.f32 %v7274, %v7275
      %v7277 = vmul.f32 %v7276, 0.00024414063
      %v7278 = vmul.f32 %v7269, %v7269
      %v7279 = vsub.f32 %v7277, %v7278
      %v7280 = vmax.f32 %v7279, 0.0
      %v7281 = vsub.f32 %v7191, %v7250
      %v7282 = vsub.f32 %v7192, %v7250
      %v7283 = vsub.f32 %v7193, %v7250
      %v7284 = vsub.f32 %v7194, %v7250
      %v7285 = vadd.f32 %v7261, 1e-05
      %v7286 = vrsqrt.pop %v7285
      %v7287 = vmul.f32 %v7281, %v7286
      %v7288 = vmul.f32 %v7282, %v7286
      %v7289 = vmul.f32 %v7283, %v7286
      %v7290 = vmul.f32 %v7284, %v7286
      %s7291 = scalar_lea.vmem %s6, 64
      %v7292 = vld [vmem:[%s7291] sm:$0xff]
      %v7293 = vld [vmem:[%s7291 + $0x8] sm:$0xff]
      %7295 = vset.pattern.permute.xlu0 0
      %7296 = vperm.xlu0 %7295, %v7292
      %v7297 = vpop.permute.xlu0 %7296
      %7300 = vset.pattern.permute.xlu0 0
      %7301 = vperm.xlu0 %7300, %v7293
      %v7302 = vpop.permute.xlu0 %7301
      %v7304 = vmul.f32 %v7287, %v7297
      %v7305 = vmul.f32 %v7288, %v7297
      %v7306 = vmul.f32 %v7289, %v7302
      %v7307 = vmul.f32 %v7290, %v7302
      %s7308 = scalar_lea.vmem %s7, 64
      %v7309 = vld [vmem:[%s7308] sm:$0xff]
      %v7310 = vld [vmem:[%s7308 + $0x8] sm:$0xff]
      %7312 = vset.pattern.permute.xlu0 0
      %7313 = vperm.xlu0 %7312, %v7309
      %v7314 = vpop.permute.xlu0 %7313
      %7317 = vset.pattern.permute.xlu0 0
      %7318 = vperm.xlu0 %7317, %v7310
      %v7319 = vpop.permute.xlu0 %7318
      %v7321 = vadd.f32 %v7304, %v7314
      %v7322 = vadd.f32 %v7305, %v7314
      %v7323 = vadd.f32 %v7306, %v7319
      %v7324 = vadd.f32 %v7307, %v7319
      %v7325 = vmax.f32 %v7321, 0.0
      %v7326 = vmax.f32 %v7322, 0.0
      %v7327 = vmax.f32 %v7323, 0.0
      %v7328 = vmax.f32 %v7324, 0.0
      %7329 = vst [vmem:[%s380] sm:$0xff] %v7325
      %7330 = vst [vmem:[%s380 + $0x8] sm:$0xff] %v7326
      %7331 = vst [vmem:[%s380 + $0x10] sm:$0xff] %v7327
      %7332 = vst [vmem:[%s380 + $0x18] sm:$0xff] %v7328
      %v7333 = vsub.f32 %v7207, %v7269
      %v7334 = vsub.f32 %v7208, %v7269
      %v7335 = vsub.f32 %v7209, %v7269
      %v7336 = vsub.f32 %v7210, %v7269
      %v7337 = vadd.f32 %v7280, 1e-05
      %v7338 = vrsqrt.pop %v7337
      %v7339 = vmul.f32 %v7333, %v7338
      %v7340 = vmul.f32 %v7334, %v7338
      %v7341 = vmul.f32 %v7335, %v7338
      %v7342 = vmul.f32 %v7336, %v7338
      %s7343 = scalar_lea.vmem %s6, 80
      %v7344 = vld [vmem:[%s7343] sm:$0xff]
      %v7345 = vld [vmem:[%s7343 + $0x8] sm:$0xff]
      %7347 = vset.pattern.permute.xlu0 0
      %7348 = vperm.xlu0 %7347, %v7344
      %v7349 = vpop.permute.xlu0 %7348
      %7352 = vset.pattern.permute.xlu0 0
      %7353 = vperm.xlu0 %7352, %v7345
      %v7354 = vpop.permute.xlu0 %7353
      %v7356 = vmul.f32 %v7339, %v7349
      %v7357 = vmul.f32 %v7340, %v7349
      %v7358 = vmul.f32 %v7341, %v7354
      %v7359 = vmul.f32 %v7342, %v7354
      %s7360 = scalar_lea.vmem %s7, 80
      %v7361 = vld [vmem:[%s7360] sm:$0xff]
      %v7362 = vld [vmem:[%s7360 + $0x8] sm:$0xff]
      %7364 = vset.pattern.permute.xlu0 0
      %7365 = vperm.xlu0 %7364, %v7361
      %v7366 = vpop.permute.xlu0 %7365
      %7369 = vset.pattern.permute.xlu0 0
      %7370 = vperm.xlu0 %7369, %v7362
      %v7371 = vpop.permute.xlu0 %7370
      %v7373 = vadd.f32 %v7356, %v7366
      %v7374 = vadd.f32 %v7357, %v7366
      %v7375 = vadd.f32 %v7358, %v7371
      %v7376 = vadd.f32 %v7359, %v7371
      %v7377 = vmax.f32 %v7373, 0.0
      %v7378 = vmax.f32 %v7374, 0.0
      %v7379 = vmax.f32 %v7375, 0.0
      %v7380 = vmax.f32 %v7376, 0.0
      %7381 = vst [vmem:[%s385] sm:$0xff] %v7377
      %7382 = vst [vmem:[%s385 + $0x8] sm:$0xff] %v7378
      %7383 = vst [vmem:[%s385 + $0x10] sm:$0xff] %v7379
      %7384 = vst [vmem:[%s385 + $0x18] sm:$0xff] %v7380
      %p7385 = scmp.lt.s32.totalorder %s21, 1
      %s7386 = scalar_select %p7385, %s21, 1
      %s7387 = smul.addr %s7386, 4
      %s7388 = smul.addr %s7387, 8
      %s7389 = scalar_lea.vmem %s8, %s7388
      %p7390 = scmp.lt.s32.totalorder %s21, 1
      %s7391 = scalar_select %p7390, %s21, 1
      %s7392 = smul.addr %s7391, 4
      %s7393 = smul.addr %s7392, 8
      %s7394 = scalar_lea.vmem %s9, %s7393
      // Predicated region
      $region53: #{dale_rnn_cell.1} parent=51 // pred_check
        %p7395 = pneg %p222
      $region54: #{dale_rnn_cell.1} parent=51 // pred_check_branch
        %7397 = sbr.rel (%p7395) target = $region56
      $region55: #{dale_rnn_cell.1} parent=51 // pred_region
        _
      $region56: #{dale_rnn_cell.1} parent=51 // pred_fallthru
        _
      // Predicated region
      $region57: #{dale_rnn_cell.1} parent=51 // pred_check
        %p7398 = pneg %p248
      $region58: #{dale_rnn_cell.1} parent=51 // pred_check_branch
        %7400 = sbr.rel (%p7398) target = $region60
      $region59: #{dale_rnn_cell.1} parent=51 // pred_region
        _
      $region60: #{dale_rnn_cell.1} parent=51 // pred_fallthru
        _
    $region52: #{dale_rnn_cell.1} parent=5 // pred_fallthru
      _
    %p7401 = scmp.le.s32.totalorder 2, %s16
    // Predicated region
    $region61: #{dale_rnn_cell.1} parent=5 // pred_check
      %p7402 = pneg %p7401
    $region62: #{dale_rnn_cell.1} parent=5 // pred_check_branch
      %7404 = sbr.rel (%p7402) target = $region64
    $region63: #{dale_rnn_cell.1} parent=5 // pred_region
      %s7405 = ssub.s32 %s16, 2
      // Predicated region
      $region65: #{dale_rnn_cell.1} parent=63 // pred_check
        %p7406 = pneg %p228
      $region66: #{dale_rnn_cell.1} parent=63 // pred_check_branch
        %7408 = sbr.rel (%p7406) target = $region68
      $region67: #{dale_rnn_cell.1} parent=63 // pred_region
        %p7409 = scmp.lt.s32.totalorder %s22, 1
        %s7410 = scalar_select %p7409, %s22, 1
        %s7411 = smul.addr %s7410, 4
        %s7412 = smul.addr %s7411, 8
        %s7413 = scalar_lea.vmem %s8, %s7412
      $region68: #{dale_rnn_cell.1} parent=63 // pred_fallthru
        _
      // Predicated region
      $region69: #{dale_rnn_cell.1} parent=63 // pred_check
        %p7414 = pneg %p254
      $region70: #{dale_rnn_cell.1} parent=63 // pred_check_branch
        %7416 = sbr.rel (%p7414) target = $region72
      $region71: #{dale_rnn_cell.1} parent=63 // pred_region
        %p7417 = scmp.lt.s32.totalorder %s22, 1
        %s7418 = scalar_select %p7417, %s22, 1
        %s7419 = smul.addr %s7418, 4
        %s7420 = smul.addr %s7419, 8
        %s7421 = scalar_lea.vmem %s9, %s7420
      $region72: #{dale_rnn_cell.1} parent=63 // pred_fallthru
        _
    $region64: #{dale_rnn_cell.1} parent=5 // pred_fallthru
      _
  $region6: #{dale_rnn_cell.1} parent=0 // loop_footer
    %s20 = sadd.s32 1, %s16
  $region7: #{dale_rnn_cell.1} parent=0 // loop_footer_branch
    %15 = sbr.rel target = $region3
  $region8: #{dale_rnn_cell.1} parent=0 // loop_exit
    _

</llo_original>
